<compile_context>
chip_gen: v7x
topology: tpu7x:2x2x1
jax: 0.10.0
libtpu: 0.0.40
codegen_flags: <defaults>
</compile_context>

<pallas_src>
import jax
import jax.numpy as jnp
import numpy as np
from jax.experimental import pallas as pl
from jax.experimental.pallas import tpu as pltpu


def _vgg_head_kernel(x_ref, w1_ref, b1_ref, w2_ref, b2_ref, w3_ref, b3_ref,
                     o_ref, acc_ref):
    """Fused classifier head.

    grid = (K // tk,): one 'arbitrary' axis that streams the big W1 weight.
    Layer 1 is accumulated in a resident f32 VMEM scratch; layers 2 and 3
    (microscopic) run in the final-step epilogue, so the whole network is a
    single weight-streaming pass.
    """
    k = pl.program_id(0)

    @pl.when(k == 0)
    def _():
        acc_ref[...] = jnp.zeros_like(acc_ref)

    # Layer 1 partial product: (M, tk) @ (tk, 1024), f32 accumulation on MXU.
    acc_ref[...] += jnp.dot(
        x_ref[...], w1_ref[...], preferred_element_type=jnp.float32
    )

    @pl.when(k == pl.num_programs(0) - 1)
    def _():
        # Dropout (eval) -> bias + ReLU
        h1 = jnp.maximum(acc_ref[...] + b1_ref[...], 0.0)           # (M, 1024)
        # Dropout (eval) -> Linear(1024, 128) -> Sigmoid
        h2 = jax.nn.sigmoid(
            jnp.dot(h1, w2_ref[...], preferred_element_type=jnp.float32)
            + b2_ref[...]
        )                                                            # (M, 128)
        # Linear(128, 2)
        o_ref[...] = (
            jnp.dot(h2, w3_ref[...], preferred_element_type=jnp.float32)
            + b3_ref[...]
        ).astype(o_ref.dtype)                                        # (M, 2)


def vgg_head(x, params, *, tk=3456):
    """Fused y = Linear3(sigmoid(Linear2(relu(Linear1(x))))) in one pallas_call.

    x: (M, K) activations; params["w1_t"]: (K, 1024) bf16 (streamed),
    params["w2_t"]/(b*) small f32 tensors kept VMEM-resident.
    """
    M, K = x.shape
    H1 = params["w1_t"].shape[1]
    H2 = params["w2_t"].shape[1]
    OUT = params["w3_t"].shape[1]

    tk = min(tk, K)
    assert K % tk == 0, (K, tk)

    # Cast activations once to match the bf16 weight stream (MXU accumulates f32).
    x_lp = x.astype(params["w1_t"].dtype)

    b1 = params["b1"].reshape(1, H1)
    b2 = params["b2"].reshape(1, H2)
    b3 = params["b3"].reshape(1, OUT)

    w_bytes = (params["w1_t"].size * params["w1_t"].dtype.itemsize
               + params["w2_t"].size * 4 + params["w3_t"].size * 4)
    cost = pl.CostEstimate(
        flops=2 * M * K * H1 + 2 * M * H1 * H2 + 2 * M * H2 * OUT,
        transcendentals=M * H2,
        bytes_accessed=(x_lp.size * x_lp.dtype.itemsize + w_bytes
                        + 4 * (H1 + H2 + OUT) + 4 * M * OUT),
    )

    return pl.pallas_call(
        _vgg_head_kernel,
        out_shape=jax.ShapeDtypeStruct((M, OUT), jnp.float32),
        grid_spec=pltpu.PrefetchScalarGridSpec(
            num_scalar_prefetch=0,
            grid=(K // tk,),
            in_specs=[
                pl.BlockSpec((M, tk), lambda k: (0, k)),     # x   (streamed over K)
                pl.BlockSpec((tk, H1), lambda k: (k, 0)),    # W1  (streamed over K)
                pl.BlockSpec((1, H1), lambda k: (0, 0)),     # b1  (resident)
                pl.BlockSpec((H1, H2), lambda k: (0, 0)),    # W2  (resident)
                pl.BlockSpec((1, H2), lambda k: (0, 0)),     # b2  (resident)
                pl.BlockSpec((H2, OUT), lambda k: (0, 0)),   # W3  (resident)
                pl.BlockSpec((1, OUT), lambda k: (0, 0)),    # b3  (resident)
            ],
            out_specs=pl.BlockSpec((M, OUT), lambda k: (0, 0)),
            scratch_shapes=[pltpu.VMEM((M, H1), jnp.float32)],
        ),
        compiler_params=pltpu.CompilerParams(
            dimension_semantics=("arbitrary",),
            # Double-buffered bf16 W1 tiles (~13.5 MiB x 2 at tk=3456) plus the
            # resident layer-2/3 weights exceed the default scoped VMEM on
            # v5e (16 MiB); raise it (safe on v7x's 64 MiB physical VMEM too).
            vmem_limit_bytes=40 * 1024 * 1024,
        ),
        cost_estimate=cost,
    )(x_lp, params["w1_t"], b1, params["w2_t"], b2, params["w3_t"], b3)


def vgg_forward(x1, params):
    """Forward pass of VGG (double_vgg=False, input_T1=True, input_DeepC=False).

    x1: (B, 128, 6, 6, 6) feature map (feature_extractor modeled as identity).
    Returns logits of shape (B, 2).
    """
    B = x1.shape[0]
    # torch: x = x1.view(x1.size(0), -1)   (row-major flatten of NCDHW)
    x = x1.reshape(B, -1)
    return vgg_head(x, params)


def _reference_forward(x1, params):
    """Pure-jnp reference with identical bf16 weight usage (f32 accumulation)."""
    x = x1.reshape(x1.shape[0], -1).astype(params["w1_t"].dtype)
    h = jnp.maximum(
        jnp.dot(x, params["w1_t"], preferred_element_type=jnp.float32)
        + params["b1"], 0.0)
    h = jax.nn.sigmoid(
        jnp.dot(h, params["w2_t"], preferred_element_type=jnp.float32)
        + params["b2"])
    return (jnp.dot(h, params["w3_t"], preferred_element_type=jnp.float32)
            + params["b3"])


def init_params(key):
    feature_dim = 1 * 128 * 6 * 6 * 6  # == 27648, as in the PyTorch __init__
    k1, k2, k3, k4, k5, k6 = jax.random.split(key, 6)
    # Weights generated directly in (in, out) layout == torch Linear weight .T.
    # W1 is kept in bfloat16: the kernel is HBM-bound on streaming it.
    params = {
        "w1_t": (jax.random.normal(k1, (feature_dim, 1024), jnp.float32)
                 * (1.0 / np.sqrt(feature_dim))).astype(jnp.bfloat16),
        "b1": jax.random.normal(k2, (1024,), jnp.float32) * 0.01,
        "w2_t": jax.random.normal(k3, (1024, 128), jnp.float32)
        * (1.0 / np.sqrt(1024.0)),
        "b2": jax.random.normal(k4, (128,), jnp.float32) * 0.01,
        "w3_t": jax.random.normal(k5, (128, 2), jnp.float32)
        * (1.0 / np.sqrt(128.0)),
        "b3": jax.random.normal(k6, (2,), jnp.float32) * 0.01,
    }
    return params


if __name__ == "__main__":
    key = jax.random.PRNGKey(0)
    pkey, xkey = jax.random.split(key)

    params = init_params(pkey)

    # Small batch; feature-map spatial shape implied by the module:
    # feature_extractor output is (B, 128, 6, 6, 6)  (NCDHW).
    B = 2
    x1 = jax.random.normal(xkey, (B, 128, 6, 6, 6), jnp.float32)

    logits = jax.block_until_ready(vgg_forward(x1, params))
    ref = jax.block_until_ready(_reference_forward(x1, params))

    assert logits.shape == (B, 2), logits.shape
    np.testing.assert_allclose(np.asarray(logits), np.asarray(ref),
                               rtol=5e-3, atol=5e-3)
    print("KERNEL_OK")
</pallas_src>

<mosaic_0001>
module attributes {stable_mosaic.version = 11 : i64} {
  func.func @_vgg_head_kernel(%arg0: i32, %arg1: memref<2x3456xbf16, #tpu.memory_space<vmem>>, %arg2: memref<3456x1024xbf16, #tpu.memory_space<vmem>>, %arg3: memref<1x1024xf32, #tpu.memory_space<vmem>>, %arg4: memref<1024x128xf32, #tpu.memory_space<vmem>>, %arg5: memref<1x128xf32, #tpu.memory_space<vmem>>, %arg6: memref<128x2xf32, #tpu.memory_space<vmem>>, %arg7: memref<1x2xf32, #tpu.memory_space<vmem>>, %arg8: memref<2x2xf32, #tpu.memory_space<vmem>>, %arg9: memref<2x1024xf32, #tpu.memory_space<vmem>>) attributes {dimension_semantics = [#tpu.dimension_semantics<arbitrary>], iteration_bounds = array<i64: 8>, scalar_prefetch = 0 : i64, scratch_operands = 1 : i64, tpu.core_type = #tpu.core_type<tc>, window_params = [{transform_indices = @transform_0, window_bounds = array<i64: 2, 3456>}, {transform_indices = @transform_1, window_bounds = array<i64: 3456, 1024>}, {pipeline_mode = #tpu.pipeline_mode<synchronous>, transform_indices = @transform_2, window_bounds = array<i64: 1, 1024>}, {pipeline_mode = #tpu.pipeline_mode<synchronous>, transform_indices = @transform_3, window_bounds = array<i64: 1024, 128>}, {pipeline_mode = #tpu.pipeline_mode<synchronous>, transform_indices = @transform_4, window_bounds = array<i64: 1, 128>}, {pipeline_mode = #tpu.pipeline_mode<synchronous>, transform_indices = @transform_5, window_bounds = array<i64: 128, 2>}, {pipeline_mode = #tpu.pipeline_mode<synchronous>, transform_indices = @transform_6, window_bounds = array<i64: 1, 2>}, {pipeline_mode = #tpu.pipeline_mode<synchronous>, transform_indices = @transform_7, window_bounds = array<i64: 2, 2>}]} {
    %c0_i32 = arith.constant 0 : i32
    %0 = arith.cmpi eq, %arg0, %c0_i32 : i32
    %1 = arith.extui %0 : i1 to i32
    %c0_i32_0 = arith.constant 0 : i32
    %2 = arith.cmpi ne, %1, %c0_i32_0 : i32
    scf.if %2 {
      %cst_9 = arith.constant 0.000000e+00 : f32
      %12 = vector.broadcast %cst_9 : f32 to vector<2x1024xf32>
      %c0_10 = arith.constant 0 : index
      %c0_11 = arith.constant 0 : index
      %13 = vector.load %arg9[%c0_10, %c0_11] : memref<2x1024xf32, #tpu.memory_space<vmem>>, vector<2x1024xf32>
      tpu.vector_store %arg9[%c0_10, %c0_11], %12 {strides = array<i32>} : memref<2x1024xf32, #tpu.memory_space<vmem>>, vector<2x1024xf32>,
    } else {
    }
    %c0 = arith.constant 0 : index
    %c0_1 = arith.constant 0 : index
    %3 = vector.load %arg9[%c0, %c0_1] : memref<2x1024xf32, #tpu.memory_space<vmem>>, vector<2x1024xf32>
    %c0_2 = arith.constant 0 : index
    %c0_3 = arith.constant 0 : index
    %4 = vector.load %arg1[%c0_2, %c0_3] : memref<2x3456xbf16, #tpu.memory_space<vmem>>, vector<2x3456xbf16>
    %c0_4 = arith.constant 0 : index
    %c0_5 = arith.constant 0 : index
    %5 = vector.load %arg2[%c0_4, %c0_5] : memref<3456x1024xbf16, #tpu.memory_space<vmem>>, vector<3456x1024xbf16>
    %cst = arith.constant dense<0.000000e+00> : vector<2x1024xf32>
    %6 = tpu.matmul %4, %5, %cst {dimension_numbers = #tpu.dot_dimension_numbers<[1], [0], [0], [1], [0, 0, 1, 1], [], []>} : vector<2x3456xbf16>, vector<3456x1024xbf16>, vector<2x1024xf32> -> vector<2x1024xf32>
    %7 = arith.addf %3, %6 : vector<2x1024xf32>
    %c0_6 = arith.constant 0 : index
    %c0_7 = arith.constant 0 : index
    %8 = vector.load %arg9[%c0_6, %c0_7] : memref<2x1024xf32, #tpu.memory_space<vmem>>, vector<2x1024xf32>
    tpu.vector_store %arg9[%c0_6, %c0_7], %7 {strides = array<i32>} : memref<2x1024xf32, #tpu.memory_space<vmem>>, vector<2x1024xf32>,
    %c7_i32 = arith.constant 7 : i32
    %9 = arith.cmpi eq, %arg0, %c7_i32 : i32
    %10 = arith.extui %9 : i1 to i32
    %c0_i32_8 = arith.constant 0 : i32
    %11 = arith.cmpi ne, %10, %c0_i32_8 : i32
    scf.if %11 {
      %c0_9 = arith.constant 0 : index
      %c0_10 = arith.constant 0 : index
      %12 = vector.load %arg9[%c0_9, %c0_10] : memref<2x1024xf32, #tpu.memory_space<vmem>>, vector<2x1024xf32>
      %c0_11 = arith.constant 0 : index
      %c0_12 = arith.constant 0 : index
      %13 = vector.load %arg3[%c0_11, %c0_12] : memref<1x1024xf32, #tpu.memory_space<vmem>>, vector<1x1024xf32>
      %14 = vector.broadcast %13 : vector<1x1024xf32> to vector<2x1024xf32>
      %15 = arith.addf %12, %14 : vector<2x1024xf32>
      %cst_13 = arith.constant 0.000000e+00 : f32
      %16 = vector.broadcast %cst_13 : f32 to vector<2x1024xf32>
      %17 = arith.maximumf %15, %16 : vector<2x1024xf32>
      %c0_14 = arith.constant 0 : index
      %c0_15 = arith.constant 0 : index
      %18 = vector.load %arg4[%c0_14, %c0_15] : memref<1024x128xf32, #tpu.memory_space<vmem>>, vector<1024x128xf32>
      %cst_16 = arith.constant dense<0.000000e+00> : vector<2x128xf32>
      %19 = tpu.matmul %17, %18, %cst_16 {dimension_numbers = #tpu.dot_dimension_numbers<[1], [0], [0], [1], [0, 0, 1, 1], [], []>} : vector<2x1024xf32>, vector<1024x128xf32>, vector<2x128xf32> -> vector<2x128xf32>
      %c0_17 = arith.constant 0 : index
      %c0_18 = arith.constant 0 : index
      %20 = vector.load %arg5[%c0_17, %c0_18] : memref<1x128xf32, #tpu.memory_space<vmem>>, vector<1x128xf32>
      %21 = vector.broadcast %20 : vector<1x128xf32> to vector<2x128xf32>
      %22 = arith.addf %19, %21 : vector<2x128xf32>
      %23 = arith.negf %22 : vector<2x128xf32>
      %24 = math.exp %23 : vector<2x128xf32>
      %cst_19 = arith.constant 1.000000e+00 : f32
      %25 = vector.broadcast %cst_19 : f32 to vector<2x128xf32>
      %26 = arith.addf %25, %24 : vector<2x128xf32>
      %27 = arith.divf %25, %26 : vector<2x128xf32>
      %c0_20 = arith.constant 0 : index
      %c0_21 = arith.constant 0 : index
      %28 = vector.load %arg6[%c0_20, %c0_21] : memref<128x2xf32, #tpu.memory_space<vmem>>, vector<128x2xf32>
      %cst_22 = arith.constant dense<0.000000e+00> : vector<2x2xf32>
      %29 = tpu.matmul %27, %28, %cst_22 {dimension_numbers = #tpu.dot_dimension_numbers<[1], [0], [0], [1], [0, 0, 1, 1], [], []>} : vector<2x128xf32>, vector<128x2xf32>, vector<2x2xf32> -> vector<2x2xf32>
      %c0_23 = arith.constant 0 : index
      %c0_24 = arith.constant 0 : index
      %30 = vector.load %arg7[%c0_23, %c0_24] : memref<1x2xf32, #tpu.memory_space<vmem>>, vector<1x2xf32>
      %31 = vector.broadcast %30 : vector<1x2xf32> to vector<2x2xf32>
      %32 = arith.addf %29, %31 : vector<2x2xf32>
      %c0_25 = arith.constant 0 : index
      %c0_26 = arith.constant 0 : index
      %33 = vector.load %arg8[%c0_25, %c0_26] : memref<2x2xf32, #tpu.memory_space<vmem>>, vector<2x2xf32>
      tpu.vector_store %arg8[%c0_25, %c0_26], %32 {strides = array<i32>} : memref<2x2xf32, #tpu.memory_space<vmem>>, vector<2x2xf32>,
    } else {
    }
    return
  }
  func.func @transform_0(%arg0: i32) -> (i32, i32) {
    %c0_i32 = arith.constant 0 : i32
    %c0_i32_0 = arith.constant 0 : i32
    return %c0_i32, %arg0 : i32, i32
  }
  func.func @transform_1(%arg0: i32) -> (i32, i32) {
    %c0_i32 = arith.constant 0 : i32
    %c0_i32_0 = arith.constant 0 : i32
    return %arg0, %c0_i32 : i32, i32
  }
  func.func @transform_2(%arg0: i32) -> (i32, i32) {
    %c0_i32 = arith.constant 0 : i32
    %c0_i32_0 = arith.constant 0 : i32
    %c0_i32_1 = arith.constant 0 : i32
    return %c0_i32, %c0_i32_0 : i32, i32
  }
  func.func @transform_3(%arg0: i32) -> (i32, i32) {
    %c0_i32 = arith.constant 0 : i32
    %c0_i32_0 = arith.constant 0 : i32
    %c0_i32_1 = arith.constant 0 : i32
    return %c0_i32, %c0_i32_0 : i32, i32
  }
  func.func @transform_4(%arg0: i32) -> (i32, i32) {
    %c0_i32 = arith.constant 0 : i32
    %c0_i32_0 = arith.constant 0 : i32
    %c0_i32_1 = arith.constant 0 : i32
    return %c0_i32, %c0_i32_0 : i32, i32
  }
  func.func @transform_5(%arg0: i32) -> (i32, i32) {
    %c0_i32 = arith.constant 0 : i32
    %c0_i32_0 = arith.constant 0 : i32
    %c0_i32_1 = arith.constant 0 : i32
    return %c0_i32, %c0_i32_0 : i32, i32
  }
  func.func @transform_6(%arg0: i32) -> (i32, i32) {
    %c0_i32 = arith.constant 0 : i32
    %c0_i32_0 = arith.constant 0 : i32
    %c0_i32_1 = arith.constant 0 : i32
    return %c0_i32, %c0_i32_0 : i32, i32
  }
  func.func @transform_7(%arg0: i32) -> (i32, i32) {
    %c0_i32 = arith.constant 0 : i32
    %c0_i32_0 = arith.constant 0 : i32
    %c0_i32_1 = arith.constant 0 : i32
    return %c0_i32, %c0_i32_0 : i32, i32
  }
}

</mosaic_0001>

<llo_original>
// kernel: tpu_custom_call.1
$region0: #{tpu_custom_call.1}
  #allocation0 [shape = 'u32[]', space=smem, size = 0x4, offset = 0x4, fixed_abs, tag = 'smem constant byte address 0x4 - core index']
  #allocation1 [shape = 'u32[144,128]{1,0:T(1,128)}', space=vmem, size = 0x12000, scoped, tag = 'internal scratch']
  #allocation2 [shape = 'f32[2,1024]{1,0:T(2,128)}', space=vmem, size = 0x2000, scoped, tag = 'scratch operand']
  %s0 = inlined_call_operand.hbm [shape: bf16[2,27648], index: 0, kind: input, shape index: {}]
  %s1 = inlined_call_operand.hbm [shape: bf16[27648,1024], index: 1, kind: input, shape index: {}]
  %s2 = inlined_call_operand.hbm [shape: f32[1,1024], index: 2, kind: input, shape index: {}]
  %s3 = inlined_call_operand.hbm [shape: f32[1024,128], index: 3, kind: input, shape index: {}]
  %s4 = inlined_call_operand.hbm [shape: f32[1,128], index: 4, kind: input, shape index: {}]
  %s5 = inlined_call_operand.vmem [shape: f32[128,2], index: 5, kind: input, shape index: {}]
  %s6 = inlined_call_operand.hbm [shape: f32[1,2], index: 6, kind: input, shape index: {}]
  %s7 = inlined_call_operand.hbm [shape: f32[2,2], index: 7, kind: output, shape index: {}]
  %s8 = sld [smem:[#allocation0]]
  $region93: #{tpu_custom_call.1} parent=0
    _
  %s10 = ssub.s32 1, %s8
  %s11 = scalar_select 0, %s10, %s8
  $region1: #{tpu_custom_call.1} parent=0
    #allocation3 [shape = 'u8[27648]{0}', space=vmem, size = 0x6c00, scoped, tag = 'input window, operand 0']
    #allocation4 [shape = 's32[2]{0}', space=sflag, size = 0x8, scoped, tag = 'scoped memory for tpu_custom_call.1']
    #allocation5 [shape = 's32[2]{0}', space=sflag, size = 0x8, scoped, tag = 'scoped memory for tpu_custom_call.1']
    #allocation6 [shape = 'u8[14155776]{0}', space=vmem, size = 0xd80000, scoped, tag = 'input window, operand 1']
    #allocation7 [shape = 's32[2]{0}', space=sflag, size = 0x8, scoped, tag = 'scoped memory for tpu_custom_call.1']
    #allocation8 [shape = 'u8[4096]{0}', space=vmem, size = 0x1000, scoped, tag = 'input window, operand 2, single buffered']
    #allocation9 [shape = 'u8[524288]{0}', space=vmem, size = 0x80000, scoped, tag = 'input window, operand 3, single buffered']
    #allocation10 [shape = 's32[1]{0}', space=sflag, size = 0x4, scoped, tag = 'scoped memory for tpu_custom_call.1']
    #allocation11 [shape = 'u8[512]{0}', space=vmem, size = 0x400, scoped, tag = 'input window, operand 4, single buffered']
    #allocation12 [shape = 'u8[512]{0}', space=vmem, size = 0x400, scoped, tag = 'input window, operand 6, single buffered']
    #allocation13 [shape = 's32[1]{0}', space=sflag, size = 0x4, scoped, tag = 'scoped memory for tpu_custom_call.1']
    #allocation14 [shape = 'u8[1024]{0}', space=vmem, size = 0x400, scoped, tag = 'output window, operand 0, single buffered']
    %12 = vsyncpa [#allocation4], 0
    %s13 = scalar_lea.sflag [#allocation4], 1
    %14 = vsyncpa %s13, 0
    %15 = vsyncpa [#allocation7], 0
    %s16 = scalar_lea.sflag [#allocation7], 1
    %17 = vsyncpa %s16, 0
    %18 = vsyncpa [#allocation10], 0
    %19 = vsyncpa [#allocation13], 0
    %20 = vsyncpa [#allocation5], 0
    loop: start=0, step=1, limit=10
    $region2: #{tpu_custom_call.1} parent=1 // loop_pre_header
      _
    $region3: #{tpu_custom_call.1} parent=1 // loop_header
      %s22 = sphi 0, %s26
      %p23 = scmp.ge.s32.totalorder %s22, 10
      %s32 = sphi 0, %s34
      %s35 = sphi 0, %s32
      %s36 = sphi 0, %s35
      %s52 = sphi 0, %s36
      %s58 = sphi 0, %s60
      %s61 = sphi 0, %s58
      %s62 = sphi 0, %s61
      %s78 = sphi 0, %s62
      %s82 = sphi 0, %s82
      %s84 = sphi 0, %s82
      %s85 = sphi 0, %s84
      %s99 = sphi 0, %s85
      %s103 = sphi 0, %s103
      %s105 = sphi 0, %s103
      %s106 = sphi 0, %s105
      %s120 = sphi 0, %s106
      %s124 = sphi 0, %s124
      %s126 = sphi 0, %s124
      %s127 = sphi 0, %s126
      %s141 = sphi 0, %s127
      %s145 = sphi 0, %s145
      %s147 = sphi 0, %s145
      %s148 = sphi 0, %s147
      %s162 = sphi 0, %s148
      %s166 = sphi 0, %s166
      %s168 = sphi 0, %s166
      %s169 = sphi 0, %s168
      %s183 = sphi 0, %s169
      %s187 = sphi 0, %s187
      %s189 = sphi 0, %s187
      %s190 = sphi 0, %s189
      %s204 = sphi 0, %s190
    $region4: #{tpu_custom_call.1} parent=1 // loop_header_branch
      %25 = sbr.rel (%p23) target = $region8
    $region5: #{tpu_custom_call.1} parent=1 // loop_body
      %s27 = ssub.s32 %s22, 1
      %s28 = ssub.s32 %s22, 2
      %s29 = sadd.s32 %s22, 1
      %s30 = ssub.s32 %s22, %s29
      %p31 = scmp.eq.s32.totalorder %s30, 0
      %s33 = sadd.s32 %s32, 1
      %s34 = scalar_select %p31, %s32, %s33
      %p37 = pneg %p31
      %p38 = scmp.eq.s32.totalorder %s22, 7
      %p39 = por %p37, %p38
      %p40 = scmp.ne.s32.totalorder %s32, %s35
      %p41 = scmp.eq.s32.totalorder %s22, 0
      %p42 = por %p40, %p41
      %p43 = scmp.ne.s32.totalorder %s32, %s35
      %p44 = scmp.eq.s32.totalorder %s27, 7
      %p45 = por %p43, %p44
      %p46 = scmp.ne.s32.totalorder %s35, %s36
      %p47 = scmp.eq.s32.totalorder %s27, 0
      %p48 = por %p46, %p47
      %p49 = scmp.ne.s32.totalorder %s35, %s36
      %p50 = scmp.eq.s32.totalorder %s28, 7
      %p51 = por %p49, %p50
      %p53 = scmp.ne.s32.totalorder %s36, %s52
      %p54 = scmp.eq.s32.totalorder %s28, 0
      %p55 = por %p53, %p54
      %s56 = ssub.s32 %s22, %s29
      %p57 = scmp.eq.s32.totalorder %s56, 0
      %s59 = sadd.s32 %s58, 1
      %s60 = scalar_select %p57, %s58, %s59
      %p63 = pneg %p57
      %p64 = scmp.eq.s32.totalorder %s22, 7
      %p65 = por %p63, %p64
      %p66 = scmp.ne.s32.totalorder %s58, %s61
      %p67 = scmp.eq.s32.totalorder %s22, 0
      %p68 = por %p66, %p67
      %p69 = scmp.ne.s32.totalorder %s58, %s61
      %p70 = scmp.eq.s32.totalorder %s27, 7
      %p71 = por %p69, %p70
      %p72 = scmp.ne.s32.totalorder %s61, %s62
      %p73 = scmp.eq.s32.totalorder %s27, 0
      %p74 = por %p72, %p73
      %p75 = scmp.ne.s32.totalorder %s61, %s62
      %p76 = scmp.eq.s32.totalorder %s28, 7
      %p77 = por %p75, %p76
      %p79 = scmp.ne.s32.totalorder %s62, %s78
      %p80 = scmp.eq.s32.totalorder %s28, 0
      %p81 = por %p79, %p80
      %s83 = sadd.s32 %s82, 1
      %p86 = scmp.eq.s32.totalorder %s22, 7
      %p87 = scmp.ne.s32.totalorder %s82, %s84
      %p88 = scmp.eq.s32.totalorder %s22, 0
      %p89 = por %p87, %p88
      %p90 = scmp.ne.s32.totalorder %s82, %s84
      %p91 = scmp.eq.s32.totalorder %s27, 7
      %p92 = por %p90, %p91
      %p93 = scmp.ne.s32.totalorder %s84, %s85
      %p94 = scmp.eq.s32.totalorder %s27, 0
      %p95 = por %p93, %p94
      %p96 = scmp.ne.s32.totalorder %s84, %s85
      %p97 = scmp.eq.s32.totalorder %s28, 7
      %p98 = por %p96, %p97
      %p100 = scmp.ne.s32.totalorder %s85, %s99
      %p101 = scmp.eq.s32.totalorder %s28, 0
      %p102 = por %p100, %p101
      %s104 = sadd.s32 %s103, 1
      %p107 = scmp.eq.s32.totalorder %s22, 7
      %p108 = scmp.ne.s32.totalorder %s103, %s105
      %p109 = scmp.eq.s32.totalorder %s22, 0
      %p110 = por %p108, %p109
      %p111 = scmp.ne.s32.totalorder %s103, %s105
      %p112 = scmp.eq.s32.totalorder %s27, 7
      %p113 = por %p111, %p112
      %p114 = scmp.ne.s32.totalorder %s105, %s106
      %p115 = scmp.eq.s32.totalorder %s27, 0
      %p116 = por %p114, %p115
      %p117 = scmp.ne.s32.totalorder %s105, %s106
      %p118 = scmp.eq.s32.totalorder %s28, 7
      %p119 = por %p117, %p118
      %p121 = scmp.ne.s32.totalorder %s106, %s120
      %p122 = scmp.eq.s32.totalorder %s28, 0
      %p123 = por %p121, %p122
      %s125 = sadd.s32 %s124, 1
      %p128 = scmp.eq.s32.totalorder %s22, 7
      %p129 = scmp.ne.s32.totalorder %s124, %s126
      %p130 = scmp.eq.s32.totalorder %s22, 0
      %p131 = por %p129, %p130
      %p132 = scmp.ne.s32.totalorder %s124, %s126
      %p133 = scmp.eq.s32.totalorder %s27, 7
      %p134 = por %p132, %p133
      %p135 = scmp.ne.s32.totalorder %s126, %s127
      %p136 = scmp.eq.s32.totalorder %s27, 0
      %p137 = por %p135, %p136
      %p138 = scmp.ne.s32.totalorder %s126, %s127
      %p139 = scmp.eq.s32.totalorder %s28, 7
      %p140 = por %p138, %p139
      %p142 = scmp.ne.s32.totalorder %s127, %s141
      %p143 = scmp.eq.s32.totalorder %s28, 0
      %p144 = por %p142, %p143
      %s146 = sadd.s32 %s145, 1
      %p149 = scmp.eq.s32.totalorder %s22, 7
      %p150 = scmp.ne.s32.totalorder %s145, %s147
      %p151 = scmp.eq.s32.totalorder %s22, 0
      %p152 = por %p150, %p151
      %p153 = scmp.ne.s32.totalorder %s145, %s147
      %p154 = scmp.eq.s32.totalorder %s27, 7
      %p155 = por %p153, %p154
      %p156 = scmp.ne.s32.totalorder %s147, %s148
      %p157 = scmp.eq.s32.totalorder %s27, 0
      %p158 = por %p156, %p157
      %p159 = scmp.ne.s32.totalorder %s147, %s148
      %p160 = scmp.eq.s32.totalorder %s28, 7
      %p161 = por %p159, %p160
      %p163 = scmp.ne.s32.totalorder %s148, %s162
      %p164 = scmp.eq.s32.totalorder %s28, 0
      %p165 = por %p163, %p164
      %s167 = sadd.s32 %s166, 1
      %p170 = scmp.eq.s32.totalorder %s22, 7
      %p171 = scmp.ne.s32.totalorder %s166, %s168
      %p172 = scmp.eq.s32.totalorder %s22, 0
      %p173 = por %p171, %p172
      %p174 = scmp.ne.s32.totalorder %s166, %s168
      %p175 = scmp.eq.s32.totalorder %s27, 7
      %p176 = por %p174, %p175
      %p177 = scmp.ne.s32.totalorder %s168, %s169
      %p178 = scmp.eq.s32.totalorder %s27, 0
      %p179 = por %p177, %p178
      %p180 = scmp.ne.s32.totalorder %s168, %s169
      %p181 = scmp.eq.s32.totalorder %s28, 7
      %p182 = por %p180, %p181
      %p184 = scmp.ne.s32.totalorder %s169, %s183
      %p185 = scmp.eq.s32.totalorder %s28, 0
      %p186 = por %p184, %p185
      %s188 = sadd.s32 %s187, 1
      %p191 = scmp.eq.s32.totalorder %s22, 7
      %p192 = scmp.ne.s32.totalorder %s187, %s189
      %p193 = scmp.eq.s32.totalorder %s22, 0
      %p194 = por %p192, %p193
      %p195 = scmp.ne.s32.totalorder %s187, %s189
      %p196 = scmp.eq.s32.totalorder %s27, 7
      %p197 = por %p195, %p196
      %p198 = scmp.ne.s32.totalorder %s189, %s190
      %p199 = scmp.eq.s32.totalorder %s27, 0
      %p200 = por %p198, %p199
      %p201 = scmp.ne.s32.totalorder %s189, %s190
      %p202 = scmp.eq.s32.totalorder %s28, 7
      %p203 = por %p201, %p202
      %p205 = scmp.ne.s32.totalorder %s190, %s204
      %p206 = scmp.eq.s32.totalorder %s28, 0
      %p207 = por %p205, %p206
      %p208 = scmp.le.s32.totalorder 1, %s22
      %p209 = scmp.lt.s32.totalorder %s22, 9
      %p210 = pnand %p208, %p209
      %p211 = pneg %p210
      // Predicated region
      $region9: #{tpu_custom_call.1} parent=5 // pred_check
        _
      $region10: #{tpu_custom_call.1} parent=5 // pred_check_branch
        %213 = sbr.rel (%p210) target = $region12
      $region11: #{tpu_custom_call.1} parent=5 // pred_region
        %s214 = ssub.s32 %s22, 1
        // Predicated region
        $region13: #{tpu_custom_call.1} parent=11 // pred_check
          %p215 = pneg %p95
        $region14: #{tpu_custom_call.1} parent=11 // pred_check_branch
          %217 = sbr.rel (%p215) target = $region16
        $region15: #{tpu_custom_call.1} parent=11 // pred_region
          %s219 = ssub.s32 128, 128
          %220 = vsyncadd [#allocation7], %s219
          %s222 = sshll.u32 [#allocation8], 4
          %s223 = int_to_ptr.vmem [resolvable:$true] %s222
          %225 = dma.hbm_to_vmem [thread:$0]  %s2, 128, %s223, [#allocation7]
        $region16: #{tpu_custom_call.1} parent=11 // pred_fallthru
          _
        // Predicated region
        $region17: #{tpu_custom_call.1} parent=11 // pred_check
          %p226 = pneg %p116
        $region18: #{tpu_custom_call.1} parent=11 // pred_check_branch
          %228 = sbr.rel (%p226) target = $region20
        $region19: #{tpu_custom_call.1} parent=11 // pred_region
          %s230 = ssub.s32 16384, 16384
          %231 = vsyncadd [#allocation10], %s230
          %s232 = sshll.u32 [#allocation9], 4
          %s233 = int_to_ptr.vmem [resolvable:$true] %s232
          %238 = dma.hbm_to_vmem [thread:$0]  %s3, 16384, %s233, [#allocation10], 128, 128, 8
        $region20: #{tpu_custom_call.1} parent=11 // pred_fallthru
          _
        // Predicated region
        $region21: #{tpu_custom_call.1} parent=11 // pred_check
          %p239 = pneg %p137
        $region22: #{tpu_custom_call.1} parent=11 // pred_check_branch
          %241 = sbr.rel (%p239) target = $region24
        $region23: #{tpu_custom_call.1} parent=11 // pred_region
          %s243 = ssub.s32 16, 16
          %244 = vsyncadd [#allocation10], %s243
          %s246 = sshll.u32 [#allocation11], 4
          %s247 = int_to_ptr.vmem [resolvable:$true] %s246
          %249 = dma.hbm_to_vmem [thread:$0]  %s4, 16, %s247, [#allocation10]
        $region24: #{tpu_custom_call.1} parent=11 // pred_fallthru
          _
        // Predicated region
        $region25: #{tpu_custom_call.1} parent=11 // pred_check
          %p250 = pneg %p158
        $region26: #{tpu_custom_call.1} parent=11 // pred_check_branch
          %252 = sbr.rel (%p250) target = $region28
        $region27: #{tpu_custom_call.1} parent=11 // pred_region
          _
        $region28: #{tpu_custom_call.1} parent=11 // pred_fallthru
          _
        // Predicated region
        $region29: #{tpu_custom_call.1} parent=11 // pred_check
          %p253 = pneg %p179
        $region30: #{tpu_custom_call.1} parent=11 // pred_check_branch
          %255 = sbr.rel (%p253) target = $region32
        $region31: #{tpu_custom_call.1} parent=11 // pred_region
          %s257 = ssub.s32 16, 16
          %258 = vsyncadd [#allocation13], %s257
          %s260 = sshll.u32 [#allocation12], 4
          %s261 = int_to_ptr.vmem [resolvable:$true] %s260
          %263 = dma.hbm_to_vmem [thread:$0]  %s6, 16, %s261, [#allocation13]
        $region32: #{tpu_custom_call.1} parent=11 // pred_fallthru
          _
      $region12: #{tpu_custom_call.1} parent=5 // pred_fallthru
        _
      %p264 = scmp.lt.s32.totalorder %s22, 8
      // Predicated region
      $region33: #{tpu_custom_call.1} parent=5 // pred_check
        %p265 = pneg %p264
      $region34: #{tpu_custom_call.1} parent=5 // pred_check_branch
        %267 = sbr.rel (%p265) target = $region36
      $region35: #{tpu_custom_call.1} parent=5 // pred_region
        // Predicated region
        $region37: #{tpu_custom_call.1} parent=35 // pred_check
          %p268 = pneg %p42
        $region38: #{tpu_custom_call.1} parent=35 // pred_check_branch
          %270 = sbr.rel (%p268) target = $region40
        $region39: #{tpu_custom_call.1} parent=35 // pred_region
          %s271 = sand.u32 %s32, 1
          %s272 = scalar_lea.sflag [#allocation4], %s271
          %s273 = sand.u32 %s32, 1
          %s274 = smul.addr %s273, 27
          %s275 = scalar_lea.vmem [#allocation3], %s274
          %s276 = smul.u32 27, %s22
          %s278 = ssub.s32 432, 432
          %279 = vsyncadd %s272, %s278
          %s280 = smul.addr %s276, 16
          %s281 = scalar_lea.hbm %s0, %s280
          %s283 = sshll.u32 %s275, 4
          %s284 = int_to_ptr.vmem [resolvable:$true] %s283
          %286 = dma.hbm_to_vmem [thread:$0]  %s281, 432, %s284, %s272
        $region40: #{tpu_custom_call.1} parent=35 // pred_fallthru
          _
        // Predicated region
        $region41: #{tpu_custom_call.1} parent=35 // pred_check
          %p287 = pneg %p68
        $region42: #{tpu_custom_call.1} parent=35 // pred_check_branch
          %289 = sbr.rel (%p287) target = $region44
        $region43: #{tpu_custom_call.1} parent=35 // pred_region
          %s290 = sand.u32 %s22, 1
          %s291 = scalar_lea.sflag [#allocation7], %s290
          %s292 = sand.u32 %s58, 1
          %s293 = smul.addr %s292, 13824
          %s294 = scalar_lea.vmem [#allocation6], %s293
          %s295 = smul.u32 432, %s22
          %s297 = ssub.s32 221184, 221184
          %298 = vsyncadd %s291, %s297
          %s299 = smul.addr %s295, 8
          %s300 = smul.addr %s299, 64
          %s301 = scalar_lea.hbm %s1, %s300
          %s302 = sshll.u32 %s294, 4
          %s303 = int_to_ptr.vmem [resolvable:$true] %s302
          %308 = dma.hbm_to_vmem [thread:$0]  %s301, 221184, %s303, %s291, 512, 512, 32
        $region44: #{tpu_custom_call.1} parent=35 // pred_fallthru
          _
      $region36: #{tpu_custom_call.1} parent=5 // pred_fallthru
        _
      %p309 = scmp.le.s32.totalorder 1, %s22
      %p310 = scmp.lt.s32.totalorder %s22, 9
      %p311 = pnand %p309, %p310
      %p312 = pneg %p311
      // Predicated region
      $region45: #{tpu_custom_call.1} parent=5 // pred_check
        _
      $region46: #{tpu_custom_call.1} parent=5 // pred_check_branch
        %314 = sbr.rel (%p311) target = $region48
      $region47: #{tpu_custom_call.1} parent=5 // pred_region
        %s315 = ssub.s32 %s22, 1
        %s316 = sand.u32 %s35, 1
        %s317 = scalar_lea.sflag [#allocation4], %s316
        %s318 = sand.u32 %s35, 1
        %s319 = smul.addr %s318, 27
        %s320 = scalar_lea.vmem [#allocation3], %s319
        // Predicated region
        $region49: #{tpu_custom_call.1} parent=47 // pred_check
          %p321 = pneg %p48
        $region50: #{tpu_custom_call.1} parent=47 // pred_check_branch
          %323 = sbr.rel (%p321) target = $region52
        $region51: #{tpu_custom_call.1} parent=47 // pred_region
          %324 = dma.done %s317, 432
        $region52: #{tpu_custom_call.1} parent=47 // pred_fallthru
          _
        %s325 = sand.u32 %s27, 1
        %s326 = scalar_lea.sflag [#allocation7], %s325
        %s327 = sand.u32 %s61, 1
        %s328 = smul.addr %s327, 13824
        %s329 = scalar_lea.vmem [#allocation6], %s328
        // Predicated region
        $region53: #{tpu_custom_call.1} parent=47 // pred_check
          %p330 = pneg %p74
        $region54: #{tpu_custom_call.1} parent=47 // pred_check_branch
          %332 = sbr.rel (%p330) target = $region56
        $region55: #{tpu_custom_call.1} parent=47 // pred_region
          %333 = dma.done %s326, 221184
        $region56: #{tpu_custom_call.1} parent=47 // pred_fallthru
          _
        // Predicated region
        $region57: #{tpu_custom_call.1} parent=47 // pred_check
          %p334 = pneg %p95
        $region58: #{tpu_custom_call.1} parent=47 // pred_check_branch
          %336 = sbr.rel (%p334) target = $region60
        $region59: #{tpu_custom_call.1} parent=47 // pred_region
          %337 = dma.done [#allocation7], 128
        $region60: #{tpu_custom_call.1} parent=47 // pred_fallthru
          _
        // Predicated region
        $region61: #{tpu_custom_call.1} parent=47 // pred_check
          %p338 = pneg %p116
        $region62: #{tpu_custom_call.1} parent=47 // pred_check_branch
          %340 = sbr.rel (%p338) target = $region64
        $region63: #{tpu_custom_call.1} parent=47 // pred_region
          %341 = dma.done [#allocation10], 16384
        $region64: #{tpu_custom_call.1} parent=47 // pred_fallthru
          _
        // Predicated region
        $region65: #{tpu_custom_call.1} parent=47 // pred_check
          %p342 = pneg %p137
        $region66: #{tpu_custom_call.1} parent=47 // pred_check_branch
          %344 = sbr.rel (%p342) target = $region68
        $region67: #{tpu_custom_call.1} parent=47 // pred_region
          %345 = dma.done [#allocation10], 16
        $region68: #{tpu_custom_call.1} parent=47 // pred_fallthru
          _
        // Predicated region
        $region69: #{tpu_custom_call.1} parent=47 // pred_check
          %p346 = pneg %p179
        $region70: #{tpu_custom_call.1} parent=47 // pred_check_branch
          %348 = sbr.rel (%p346) target = $region72
        $region71: #{tpu_custom_call.1} parent=47 // pred_region
          %349 = dma.done [#allocation13], 16
        $region72: #{tpu_custom_call.1} parent=47 // pred_fallthru
          _
        %s350 = sand.u32 %s35, 1
        %s351 = scalar_lea.sflag [#allocation4], %s350
        %s352 = sand.u32 %s35, 1
        %s353 = smul.addr %s352, 27
        %s354 = scalar_lea.vmem [#allocation3], %s353
        %p355 = pneg %p48
        %p356 = pneg %p45
        %s357 = sand.u32 %s27, 1
        %s358 = scalar_lea.sflag [#allocation7], %s357
        %s359 = sand.u32 %s61, 1
        %s360 = smul.addr %s359, 13824
        %s361 = scalar_lea.vmem [#allocation6], %s360
        %p362 = pneg %p74
        %p363 = pneg %p71
        %p364 = pneg %p95
        %p365 = pneg %p92
        %p366 = pneg %p116
        %p367 = pneg %p113
        %p368 = pneg %p137
        %p369 = pneg %p134
        %p370 = pneg %p158
        %p371 = pneg %p155
        %p372 = pneg %p179
        %p373 = pneg %p176
        %p374 = pneg %p200
        %p375 = pneg %p197
        %s376 = smul.u32 27, %s27
        %s377 = smul.u32 432, %s27
        %p379 = scmp.eq.s32.totalorder %s27, 0
        // Predicated region
        $region73: #{tpu_custom_call.1} parent=47 // pred_check
          %p380 = pneg %p379
        $region74: #{tpu_custom_call.1} parent=47 // pred_check_branch
          %382 = sbr.rel (%p380) target = $region76
        $region75: #{tpu_custom_call.1} parent=47 // pred_region
          %383 = vst [vmem:[#allocation2] sm:$0xff] 0.0
          %384 = vst [vmem:[#allocation2 + $0x8] sm:$0xff] 0.0
        $region76: #{tpu_custom_call.1} parent=47 // pred_fallthru
          _
        %v385 = vld [vmem:[#allocation2] sm:$0xff]
        %v386 = vld [vmem:[#allocation2 + $0x8] sm:$0xff]
        %v387 = vld [vmem:[%s320] sm:$0xff]
        %v388 = vld [vmem:[%s320 + $0x8] sm:$0xff]
        %v389 = vld [vmem:[%s320 + $0x10] sm:$0xff]
        %v390 = vld [vmem:[%s320 + $0x18] sm:$0x7]
        %v391 = vld [vmem:[%s329] sm:$0xff]
        %v392 = vld [vmem:[%s329 + $0x8] sm:$0xff]
        %v393 = vld [vmem:[%s329 + $0x10] sm:$0xff]
        %v394 = vld [vmem:[%s329 + $0x18] sm:$0xff]
        %v395 = vld [vmem:[%s329 + $0x20] sm:$0xff]
        %v396 = vld [vmem:[%s329 + $0x28] sm:$0xff]
        %v397 = vld [vmem:[%s329 + $0x30] sm:$0xff]
        %v398 = vld [vmem:[%s329 + $0x38] sm:$0xff]
        %v399 = vld [vmem:[%s329 + $0x40] sm:$0xff]
        %v400 = vld [vmem:[%s329 + $0x48] sm:$0xff]
        %v401 = vld [vmem:[%s329 + $0x50] sm:$0xff]
        %v402 = vld [vmem:[%s329 + $0x58] sm:$0xff]
        %v403 = vld [vmem:[%s329 + $0x60] sm:$0xff]
        %v404 = vld [vmem:[%s329 + $0x68] sm:$0xff]
        %v405 = vld [vmem:[%s329 + $0x70] sm:$0xff]
        %v406 = vld [vmem:[%s329 + $0x78] sm:$0xff]
        %v407 = vld [vmem:[%s329 + $0x80] sm:$0xff]
        %v408 = vld [vmem:[%s329 + $0x88] sm:$0xff]
        %v409 = vld [vmem:[%s329 + $0x90] sm:$0xff]
        %v410 = vld [vmem:[%s329 + $0x98] sm:$0xff]
        %v411 = vld [vmem:[%s329 + $0xa0] sm:$0xff]
        %v412 = vld [vmem:[%s329 + $0xa8] sm:$0xff]
        %v413 = vld [vmem:[%s329 + $0xb0] sm:$0xff]
        %v414 = vld [vmem:[%s329 + $0xb8] sm:$0xff]
        %v415 = vld [vmem:[%s329 + $0xc0] sm:$0xff]
        %v416 = vld [vmem:[%s329 + $0xc8] sm:$0xff]
        %v417 = vld [vmem:[%s329 + $0xd0] sm:$0xff]
        %v418 = vld [vmem:[%s329 + $0xd8] sm:$0xff]
        %v419 = vld [vmem:[%s329 + $0xe0] sm:$0xff]
        %v420 = vld [vmem:[%s329 + $0xe8] sm:$0xff]
        %v421 = vld [vmem:[%s329 + $0xf0] sm:$0xff]
        %v422 = vld [vmem:[%s329 + $0xf8] sm:$0xff]
        %v423 = vld [vmem:[%s329 + $0x100] sm:$0xff]
        %v424 = vld [vmem:[%s329 + $0x108] sm:$0xff]
        %v425 = vld [vmem:[%s329 + $0x110] sm:$0xff]
        %v426 = vld [vmem:[%s329 + $0x118] sm:$0xff]
        %v427 = vld [vmem:[%s329 + $0x120] sm:$0xff]
        %v428 = vld [vmem:[%s329 + $0x128] sm:$0xff]
        %v429 = vld [vmem:[%s329 + $0x130] sm:$0xff]
        %v430 = vld [vmem:[%s329 + $0x138] sm:$0xff]
        %v431 = vld [vmem:[%s329 + $0x140] sm:$0xff]
        %v432 = vld [vmem:[%s329 + $0x148] sm:$0xff]
        %v433 = vld [vmem:[%s329 + $0x150] sm:$0xff]
        %v434 = vld [vmem:[%s329 + $0x158] sm:$0xff]
        %v435 = vld [vmem:[%s329 + $0x160] sm:$0xff]
        %v436 = vld [vmem:[%s329 + $0x168] sm:$0xff]
        %v437 = vld [vmem:[%s329 + $0x170] sm:$0xff]
        %v438 = vld [vmem:[%s329 + $0x178] sm:$0xff]
        %v439 = vld [vmem:[%s329 + $0x180] sm:$0xff]
        %v440 = vld [vmem:[%s329 + $0x188] sm:$0xff]
        %v441 = vld [vmem:[%s329 + $0x190] sm:$0xff]
        %v442 = vld [vmem:[%s329 + $0x198] sm:$0xff]
        %v443 = vld [vmem:[%s329 + $0x1a0] sm:$0xff]
        %v444 = vld [vmem:[%s329 + $0x1a8] sm:$0xff]
        %v445 = vld [vmem:[%s329 + $0x1b0] sm:$0xff]
        %v446 = vld [vmem:[%s329 + $0x1b8] sm:$0xff]
        %v447 = vld [vmem:[%s329 + $0x1c0] sm:$0xff]
        %v448 = vld [vmem:[%s329 + $0x1c8] sm:$0xff]
        %v449 = vld [vmem:[%s329 + $0x1d0] sm:$0xff]
        %v450 = vld [vmem:[%s329 + $0x1d8] sm:$0xff]
        %v451 = vld [vmem:[%s329 + $0x1e0] sm:$0xff]
        %v452 = vld [vmem:[%s329 + $0x1e8] sm:$0xff]
        %v453 = vld [vmem:[%s329 + $0x1f0] sm:$0xff]
        %v454 = vld [vmem:[%s329 + $0x1f8] sm:$0xff]
        %v455 = vld [vmem:[%s329 + $0x200] sm:$0xff]
        %v456 = vld [vmem:[%s329 + $0x208] sm:$0xff]
        %v457 = vld [vmem:[%s329 + $0x210] sm:$0xff]
        %v458 = vld [vmem:[%s329 + $0x218] sm:$0xff]
        %v459 = vld [vmem:[%s329 + $0x220] sm:$0xff]
        %v460 = vld [vmem:[%s329 + $0x228] sm:$0xff]
        %v461 = vld [vmem:[%s329 + $0x230] sm:$0xff]
        %v462 = vld [vmem:[%s329 + $0x238] sm:$0xff]
        %v463 = vld [vmem:[%s329 + $0x240] sm:$0xff]
        %v464 = vld [vmem:[%s329 + $0x248] sm:$0xff]
        %v465 = vld [vmem:[%s329 + $0x250] sm:$0xff]
        %v466 = vld [vmem:[%s329 + $0x258] sm:$0xff]
        %v467 = vld [vmem:[%s329 + $0x260] sm:$0xff]
        %v468 = vld [vmem:[%s329 + $0x268] sm:$0xff]
        %v469 = vld [vmem:[%s329 + $0x270] sm:$0xff]
        %v470 = vld [vmem:[%s329 + $0x278] sm:$0xff]
        %v471 = vld [vmem:[%s329 + $0x280] sm:$0xff]
        %v472 = vld [vmem:[%s329 + $0x288] sm:$0xff]
        %v473 = vld [vmem:[%s329 + $0x290] sm:$0xff]
        %v474 = vld [vmem:[%s329 + $0x298] sm:$0xff]
        %v475 = vld [vmem:[%s329 + $0x2a0] sm:$0xff]
        %v476 = vld [vmem:[%s329 + $0x2a8] sm:$0xff]
        %v477 = vld [vmem:[%s329 + $0x2b0] sm:$0xff]
        %v478 = vld [vmem:[%s329 + $0x2b8] sm:$0xff]
        %v479 = vld [vmem:[%s329 + $0x2c0] sm:$0xff]
        %v480 = vld [vmem:[%s329 + $0x2c8] sm:$0xff]
        %v481 = vld [vmem:[%s329 + $0x2d0] sm:$0xff]
        %v482 = vld [vmem:[%s329 + $0x2d8] sm:$0xff]
        %v483 = vld [vmem:[%s329 + $0x2e0] sm:$0xff]
        %v484 = vld [vmem:[%s329 + $0x2e8] sm:$0xff]
        %v485 = vld [vmem:[%s329 + $0x2f0] sm:$0xff]
        %v486 = vld [vmem:[%s329 + $0x2f8] sm:$0xff]
        %v487 = vld [vmem:[%s329 + $0x300] sm:$0xff]
        %v488 = vld [vmem:[%s329 + $0x308] sm:$0xff]
        %v489 = vld [vmem:[%s329 + $0x310] sm:$0xff]
        %v490 = vld [vmem:[%s329 + $0x318] sm:$0xff]
        %v491 = vld [vmem:[%s329 + $0x320] sm:$0xff]
        %v492 = vld [vmem:[%s329 + $0x328] sm:$0xff]
        %v493 = vld [vmem:[%s329 + $0x330] sm:$0xff]
        %v494 = vld [vmem:[%s329 + $0x338] sm:$0xff]
        %v495 = vld [vmem:[%s329 + $0x340] sm:$0xff]
        %v496 = vld [vmem:[%s329 + $0x348] sm:$0xff]
        %v497 = vld [vmem:[%s329 + $0x350] sm:$0xff]
        %v498 = vld [vmem:[%s329 + $0x358] sm:$0xff]
        %v499 = vld [vmem:[%s329 + $0x360] sm:$0xff]
        %v500 = vld [vmem:[%s329 + $0x368] sm:$0xff]
        %v501 = vld [vmem:[%s329 + $0x370] sm:$0xff]
        %v502 = vld [vmem:[%s329 + $0x378] sm:$0xff]
        %v503 = vld [vmem:[%s329 + $0x380] sm:$0xff]
        %v504 = vld [vmem:[%s329 + $0x388] sm:$0xff]
        %v505 = vld [vmem:[%s329 + $0x390] sm:$0xff]
        %v506 = vld [vmem:[%s329 + $0x398] sm:$0xff]
        %v507 = vld [vmem:[%s329 + $0x3a0] sm:$0xff]
        %v508 = vld [vmem:[%s329 + $0x3a8] sm:$0xff]
        %v509 = vld [vmem:[%s329 + $0x3b0] sm:$0xff]
        %v510 = vld [vmem:[%s329 + $0x3b8] sm:$0xff]
        %v511 = vld [vmem:[%s329 + $0x3c0] sm:$0xff]
        %v512 = vld [vmem:[%s329 + $0x3c8] sm:$0xff]
        %v513 = vld [vmem:[%s329 + $0x3d0] sm:$0xff]
        %v514 = vld [vmem:[%s329 + $0x3d8] sm:$0xff]
        %v515 = vld [vmem:[%s329 + $0x3e0] sm:$0xff]
        %v516 = vld [vmem:[%s329 + $0x3e8] sm:$0xff]
        %v517 = vld [vmem:[%s329 + $0x3f0] sm:$0xff]
        %v518 = vld [vmem:[%s329 + $0x3f8] sm:$0xff]
        %v519 = vld [vmem:[%s329 + $0x400] sm:$0xff]
        %v520 = vld [vmem:[%s329 + $0x408] sm:$0xff]
        %v521 = vld [vmem:[%s329 + $0x410] sm:$0xff]
        %v522 = vld [vmem:[%s329 + $0x418] sm:$0xff]
        %v523 = vld [vmem:[%s329 + $0x420] sm:$0xff]
        %v524 = vld [vmem:[%s329 + $0x428] sm:$0xff]
        %v525 = vld [vmem:[%s329 + $0x430] sm:$0xff]
        %v526 = vld [vmem:[%s329 + $0x438] sm:$0xff]
        %v527 = vld [vmem:[%s329 + $0x440] sm:$0xff]
        %v528 = vld [vmem:[%s329 + $0x448] sm:$0xff]
        %v529 = vld [vmem:[%s329 + $0x450] sm:$0xff]
        %v530 = vld [vmem:[%s329 + $0x458] sm:$0xff]
        %v531 = vld [vmem:[%s329 + $0x460] sm:$0xff]
        %v532 = vld [vmem:[%s329 + $0x468] sm:$0xff]
        %v533 = vld [vmem:[%s329 + $0x470] sm:$0xff]
        %v534 = vld [vmem:[%s329 + $0x478] sm:$0xff]
        %v535 = vld [vmem:[%s329 + $0x480] sm:$0xff]
        %v536 = vld [vmem:[%s329 + $0x488] sm:$0xff]
        %v537 = vld [vmem:[%s329 + $0x490] sm:$0xff]
        %v538 = vld [vmem:[%s329 + $0x498] sm:$0xff]
        %v539 = vld [vmem:[%s329 + $0x4a0] sm:$0xff]
        %v540 = vld [vmem:[%s329 + $0x4a8] sm:$0xff]
        %v541 = vld [vmem:[%s329 + $0x4b0] sm:$0xff]
        %v542 = vld [vmem:[%s329 + $0x4b8] sm:$0xff]
        %v543 = vld [vmem:[%s329 + $0x4c0] sm:$0xff]
        %v544 = vld [vmem:[%s329 + $0x4c8] sm:$0xff]
        %v545 = vld [vmem:[%s329 + $0x4d0] sm:$0xff]
        %v546 = vld [vmem:[%s329 + $0x4d8] sm:$0xff]
        %v547 = vld [vmem:[%s329 + $0x4e0] sm:$0xff]
        %v548 = vld [vmem:[%s329 + $0x4e8] sm:$0xff]
        %v549 = vld [vmem:[%s329 + $0x4f0] sm:$0xff]
        %v550 = vld [vmem:[%s329 + $0x4f8] sm:$0xff]
        %v551 = vld [vmem:[%s329 + $0x500] sm:$0xff]
        %v552 = vld [vmem:[%s329 + $0x508] sm:$0xff]
        %v553 = vld [vmem:[%s329 + $0x510] sm:$0xff]
        %v554 = vld [vmem:[%s329 + $0x518] sm:$0xff]
        %v555 = vld [vmem:[%s329 + $0x520] sm:$0xff]
        %v556 = vld [vmem:[%s329 + $0x528] sm:$0xff]
        %v557 = vld [vmem:[%s329 + $0x530] sm:$0xff]
        %v558 = vld [vmem:[%s329 + $0x538] sm:$0xff]
        %v559 = vld [vmem:[%s329 + $0x540] sm:$0xff]
        %v560 = vld [vmem:[%s329 + $0x548] sm:$0xff]
        %v561 = vld [vmem:[%s329 + $0x550] sm:$0xff]
        %v562 = vld [vmem:[%s329 + $0x558] sm:$0xff]
        %v563 = vld [vmem:[%s329 + $0x560] sm:$0xff]
        %v564 = vld [vmem:[%s329 + $0x568] sm:$0xff]
        %v565 = vld [vmem:[%s329 + $0x570] sm:$0xff]
        %v566 = vld [vmem:[%s329 + $0x578] sm:$0xff]
        %v567 = vld [vmem:[%s329 + $0x580] sm:$0xff]
        %v568 = vld [vmem:[%s329 + $0x588] sm:$0xff]
        %v569 = vld [vmem:[%s329 + $0x590] sm:$0xff]
        %v570 = vld [vmem:[%s329 + $0x598] sm:$0xff]
        %v571 = vld [vmem:[%s329 + $0x5a0] sm:$0xff]
        %v572 = vld [vmem:[%s329 + $0x5a8] sm:$0xff]
        %v573 = vld [vmem:[%s329 + $0x5b0] sm:$0xff]
        %v574 = vld [vmem:[%s329 + $0x5b8] sm:$0xff]
        %v575 = vld [vmem:[%s329 + $0x5c0] sm:$0xff]
        %v576 = vld [vmem:[%s329 + $0x5c8] sm:$0xff]
        %v577 = vld [vmem:[%s329 + $0x5d0] sm:$0xff]
        %v578 = vld [vmem:[%s329 + $0x5d8] sm:$0xff]
        %v579 = vld [vmem:[%s329 + $0x5e0] sm:$0xff]
        %v580 = vld [vmem:[%s329 + $0x5e8] sm:$0xff]
        %v581 = vld [vmem:[%s329 + $0x5f0] sm:$0xff]
        %v582 = vld [vmem:[%s329 + $0x5f8] sm:$0xff]
        %v583 = vld [vmem:[%s329 + $0x600] sm:$0xff]
        %v584 = vld [vmem:[%s329 + $0x608] sm:$0xff]
        %v585 = vld [vmem:[%s329 + $0x610] sm:$0xff]
        %v586 = vld [vmem:[%s329 + $0x618] sm:$0xff]
        %v587 = vld [vmem:[%s329 + $0x620] sm:$0xff]
        %v588 = vld [vmem:[%s329 + $0x628] sm:$0xff]
        %v589 = vld [vmem:[%s329 + $0x630] sm:$0xff]
        %v590 = vld [vmem:[%s329 + $0x638] sm:$0xff]
        %v591 = vld [vmem:[%s329 + $0x640] sm:$0xff]
        %v592 = vld [vmem:[%s329 + $0x648] sm:$0xff]
        %v593 = vld [vmem:[%s329 + $0x650] sm:$0xff]
        %v594 = vld [vmem:[%s329 + $0x658] sm:$0xff]
        %v595 = vld [vmem:[%s329 + $0x660] sm:$0xff]
        %v596 = vld [vmem:[%s329 + $0x668] sm:$0xff]
        %v597 = vld [vmem:[%s329 + $0x670] sm:$0xff]
        %v598 = vld [vmem:[%s329 + $0x678] sm:$0xff]
        %v599 = vld [vmem:[%s329 + $0x680] sm:$0xff]
        %v600 = vld [vmem:[%s329 + $0x688] sm:$0xff]
        %v601 = vld [vmem:[%s329 + $0x690] sm:$0xff]
        %v602 = vld [vmem:[%s329 + $0x698] sm:$0xff]
        %v603 = vld [vmem:[%s329 + $0x6a0] sm:$0xff]
        %v604 = vld [vmem:[%s329 + $0x6a8] sm:$0xff]
        %v605 = vld [vmem:[%s329 + $0x6b0] sm:$0xff]
        %v606 = vld [vmem:[%s329 + $0x6b8] sm:$0xff]
        %v607 = vld [vmem:[%s329 + $0x6c0] sm:$0xff]
        %v608 = vld [vmem:[%s329 + $0x6c8] sm:$0xff]
        %v609 = vld [vmem:[%s329 + $0x6d0] sm:$0xff]
        %v610 = vld [vmem:[%s329 + $0x6d8] sm:$0xff]
        %v611 = vld [vmem:[%s329 + $0x6e0] sm:$0xff]
        %v612 = vld [vmem:[%s329 + $0x6e8] sm:$0xff]
        %v613 = vld [vmem:[%s329 + $0x6f0] sm:$0xff]
        %v614 = vld [vmem:[%s329 + $0x6f8] sm:$0xff]
        %v615 = vld [vmem:[%s329 + $0x700] sm:$0xff]
        %v616 = vld [vmem:[%s329 + $0x708] sm:$0xff]
        %v617 = vld [vmem:[%s329 + $0x710] sm:$0xff]
        %v618 = vld [vmem:[%s329 + $0x718] sm:$0xff]
        %v619 = vld [vmem:[%s329 + $0x720] sm:$0xff]
        %v620 = vld [vmem:[%s329 + $0x728] sm:$0xff]
        %v621 = vld [vmem:[%s329 + $0x730] sm:$0xff]
        %v622 = vld [vmem:[%s329 + $0x738] sm:$0xff]
        %v623 = vld [vmem:[%s329 + $0x740] sm:$0xff]
        %v624 = vld [vmem:[%s329 + $0x748] sm:$0xff]
        %v625 = vld [vmem:[%s329 + $0x750] sm:$0xff]
        %v626 = vld [vmem:[%s329 + $0x758] sm:$0xff]
        %v627 = vld [vmem:[%s329 + $0x760] sm:$0xff]
        %v628 = vld [vmem:[%s329 + $0x768] sm:$0xff]
        %v629 = vld [vmem:[%s329 + $0x770] sm:$0xff]
        %v630 = vld [vmem:[%s329 + $0x778] sm:$0xff]
        %v631 = vld [vmem:[%s329 + $0x780] sm:$0xff]
        %v632 = vld [vmem:[%s329 + $0x788] sm:$0xff]
        %v633 = vld [vmem:[%s329 + $0x790] sm:$0xff]
        %v634 = vld [vmem:[%s329 + $0x798] sm:$0xff]
        %v635 = vld [vmem:[%s329 + $0x7a0] sm:$0xff]
        %v636 = vld [vmem:[%s329 + $0x7a8] sm:$0xff]
        %v637 = vld [vmem:[%s329 + $0x7b0] sm:$0xff]
        %v638 = vld [vmem:[%s329 + $0x7b8] sm:$0xff]
        %v639 = vld [vmem:[%s329 + $0x7c0] sm:$0xff]
        %v640 = vld [vmem:[%s329 + $0x7c8] sm:$0xff]
        %v641 = vld [vmem:[%s329 + $0x7d0] sm:$0xff]
        %v642 = vld [vmem:[%s329 + $0x7d8] sm:$0xff]
        %v643 = vld [vmem:[%s329 + $0x7e0] sm:$0xff]
        %v644 = vld [vmem:[%s329 + $0x7e8] sm:$0xff]
        %v645 = vld [vmem:[%s329 + $0x7f0] sm:$0xff]
        %v646 = vld [vmem:[%s329 + $0x7f8] sm:$0xff]
        %v647 = vld [vmem:[%s329 + $0x800] sm:$0xff]
        %v648 = vld [vmem:[%s329 + $0x808] sm:$0xff]
        %v649 = vld [vmem:[%s329 + $0x810] sm:$0xff]
        %v650 = vld [vmem:[%s329 + $0x818] sm:$0xff]
        %v651 = vld [vmem:[%s329 + $0x820] sm:$0xff]
        %v652 = vld [vmem:[%s329 + $0x828] sm:$0xff]
        %v653 = vld [vmem:[%s329 + $0x830] sm:$0xff]
        %v654 = vld [vmem:[%s329 + $0x838] sm:$0xff]
        %v655 = vld [vmem:[%s329 + $0x840] sm:$0xff]
        %v656 = vld [vmem:[%s329 + $0x848] sm:$0xff]
        %v657 = vld [vmem:[%s329 + $0x850] sm:$0xff]
        %v658 = vld [vmem:[%s329 + $0x858] sm:$0xff]
        %v659 = vld [vmem:[%s329 + $0x860] sm:$0xff]
        %v660 = vld [vmem:[%s329 + $0x868] sm:$0xff]
        %v661 = vld [vmem:[%s329 + $0x870] sm:$0xff]
        %v662 = vld [vmem:[%s329 + $0x878] sm:$0xff]
        %v663 = vld [vmem:[%s329 + $0x880] sm:$0xff]
        %v664 = vld [vmem:[%s329 + $0x888] sm:$0xff]
        %v665 = vld [vmem:[%s329 + $0x890] sm:$0xff]
        %v666 = vld [vmem:[%s329 + $0x898] sm:$0xff]
        %v667 = vld [vmem:[%s329 + $0x8a0] sm:$0xff]
        %v668 = vld [vmem:[%s329 + $0x8a8] sm:$0xff]
        %v669 = vld [vmem:[%s329 + $0x8b0] sm:$0xff]
        %v670 = vld [vmem:[%s329 + $0x8b8] sm:$0xff]
        %v671 = vld [vmem:[%s329 + $0x8c0] sm:$0xff]
        %v672 = vld [vmem:[%s329 + $0x8c8] sm:$0xff]
        %v673 = vld [vmem:[%s329 + $0x8d0] sm:$0xff]
        %v674 = vld [vmem:[%s329 + $0x8d8] sm:$0xff]
        %v675 = vld [vmem:[%s329 + $0x8e0] sm:$0xff]
        %v676 = vld [vmem:[%s329 + $0x8e8] sm:$0xff]
        %v677 = vld [vmem:[%s329 + $0x8f0] sm:$0xff]
        %v678 = vld [vmem:[%s329 + $0x8f8] sm:$0xff]
        %v679 = vld [vmem:[%s329 + $0x900] sm:$0xff]
        %v680 = vld [vmem:[%s329 + $0x908] sm:$0xff]
        %v681 = vld [vmem:[%s329 + $0x910] sm:$0xff]
        %v682 = vld [vmem:[%s329 + $0x918] sm:$0xff]
        %v683 = vld [vmem:[%s329 + $0x920] sm:$0xff]
        %v684 = vld [vmem:[%s329 + $0x928] sm:$0xff]
        %v685 = vld [vmem:[%s329 + $0x930] sm:$0xff]
        %v686 = vld [vmem:[%s329 + $0x938] sm:$0xff]
        %v687 = vld [vmem:[%s329 + $0x940] sm:$0xff]
        %v688 = vld [vmem:[%s329 + $0x948] sm:$0xff]
        %v689 = vld [vmem:[%s329 + $0x950] sm:$0xff]
        %v690 = vld [vmem:[%s329 + $0x958] sm:$0xff]
        %v691 = vld [vmem:[%s329 + $0x960] sm:$0xff]
        %v692 = vld [vmem:[%s329 + $0x968] sm:$0xff]
        %v693 = vld [vmem:[%s329 + $0x970] sm:$0xff]
        %v694 = vld [vmem:[%s329 + $0x978] sm:$0xff]
        %v695 = vld [vmem:[%s329 + $0x980] sm:$0xff]
        %v696 = vld [vmem:[%s329 + $0x988] sm:$0xff]
        %v697 = vld [vmem:[%s329 + $0x990] sm:$0xff]
        %v698 = vld [vmem:[%s329 + $0x998] sm:$0xff]
        %v699 = vld [vmem:[%s329 + $0x9a0] sm:$0xff]
        %v700 = vld [vmem:[%s329 + $0x9a8] sm:$0xff]
        %v701 = vld [vmem:[%s329 + $0x9b0] sm:$0xff]
        %v702 = vld [vmem:[%s329 + $0x9b8] sm:$0xff]
        %v703 = vld [vmem:[%s329 + $0x9c0] sm:$0xff]
        %v704 = vld [vmem:[%s329 + $0x9c8] sm:$0xff]
        %v705 = vld [vmem:[%s329 + $0x9d0] sm:$0xff]
        %v706 = vld [vmem:[%s329 + $0x9d8] sm:$0xff]
        %v707 = vld [vmem:[%s329 + $0x9e0] sm:$0xff]
        %v708 = vld [vmem:[%s329 + $0x9e8] sm:$0xff]
        %v709 = vld [vmem:[%s329 + $0x9f0] sm:$0xff]
        %v710 = vld [vmem:[%s329 + $0x9f8] sm:$0xff]
        %v711 = vld [vmem:[%s329 + $0xa00] sm:$0xff]
        %v712 = vld [vmem:[%s329 + $0xa08] sm:$0xff]
        %v713 = vld [vmem:[%s329 + $0xa10] sm:$0xff]
        %v714 = vld [vmem:[%s329 + $0xa18] sm:$0xff]
        %v715 = vld [vmem:[%s329 + $0xa20] sm:$0xff]
        %v716 = vld [vmem:[%s329 + $0xa28] sm:$0xff]
        %v717 = vld [vmem:[%s329 + $0xa30] sm:$0xff]
        %v718 = vld [vmem:[%s329 + $0xa38] sm:$0xff]
        %v719 = vld [vmem:[%s329 + $0xa40] sm:$0xff]
        %v720 = vld [vmem:[%s329 + $0xa48] sm:$0xff]
        %v721 = vld [vmem:[%s329 + $0xa50] sm:$0xff]
        %v722 = vld [vmem:[%s329 + $0xa58] sm:$0xff]
        %v723 = vld [vmem:[%s329 + $0xa60] sm:$0xff]
        %v724 = vld [vmem:[%s329 + $0xa68] sm:$0xff]
        %v725 = vld [vmem:[%s329 + $0xa70] sm:$0xff]
        %v726 = vld [vmem:[%s329 + $0xa78] sm:$0xff]
        %v727 = vld [vmem:[%s329 + $0xa80] sm:$0xff]
        %v728 = vld [vmem:[%s329 + $0xa88] sm:$0xff]
        %v729 = vld [vmem:[%s329 + $0xa90] sm:$0xff]
        %v730 = vld [vmem:[%s329 + $0xa98] sm:$0xff]
        %v731 = vld [vmem:[%s329 + $0xaa0] sm:$0xff]
        %v732 = vld [vmem:[%s329 + $0xaa8] sm:$0xff]
        %v733 = vld [vmem:[%s329 + $0xab0] sm:$0xff]
        %v734 = vld [vmem:[%s329 + $0xab8] sm:$0xff]
        %v735 = vld [vmem:[%s329 + $0xac0] sm:$0xff]
        %v736 = vld [vmem:[%s329 + $0xac8] sm:$0xff]
        %v737 = vld [vmem:[%s329 + $0xad0] sm:$0xff]
        %v738 = vld [vmem:[%s329 + $0xad8] sm:$0xff]
        %v739 = vld [vmem:[%s329 + $0xae0] sm:$0xff]
        %v740 = vld [vmem:[%s329 + $0xae8] sm:$0xff]
        %v741 = vld [vmem:[%s329 + $0xaf0] sm:$0xff]
        %v742 = vld [vmem:[%s329 + $0xaf8] sm:$0xff]
        %v743 = vld [vmem:[%s329 + $0xb00] sm:$0xff]
        %v744 = vld [vmem:[%s329 + $0xb08] sm:$0xff]
        %v745 = vld [vmem:[%s329 + $0xb10] sm:$0xff]
        %v746 = vld [vmem:[%s329 + $0xb18] sm:$0xff]
        %v747 = vld [vmem:[%s329 + $0xb20] sm:$0xff]
        %v748 = vld [vmem:[%s329 + $0xb28] sm:$0xff]
        %v749 = vld [vmem:[%s329 + $0xb30] sm:$0xff]
        %v750 = vld [vmem:[%s329 + $0xb38] sm:$0xff]
        %v751 = vld [vmem:[%s329 + $0xb40] sm:$0xff]
        %v752 = vld [vmem:[%s329 + $0xb48] sm:$0xff]
        %v753 = vld [vmem:[%s329 + $0xb50] sm:$0xff]
        %v754 = vld [vmem:[%s329 + $0xb58] sm:$0xff]
        %v755 = vld [vmem:[%s329 + $0xb60] sm:$0xff]
        %v756 = vld [vmem:[%s329 + $0xb68] sm:$0xff]
        %v757 = vld [vmem:[%s329 + $0xb70] sm:$0xff]
        %v758 = vld [vmem:[%s329 + $0xb78] sm:$0xff]
        %v759 = vld [vmem:[%s329 + $0xb80] sm:$0xff]
        %v760 = vld [vmem:[%s329 + $0xb88] sm:$0xff]
        %v761 = vld [vmem:[%s329 + $0xb90] sm:$0xff]
        %v762 = vld [vmem:[%s329 + $0xb98] sm:$0xff]
        %v763 = vld [vmem:[%s329 + $0xba0] sm:$0xff]
        %v764 = vld [vmem:[%s329 + $0xba8] sm:$0xff]
        %v765 = vld [vmem:[%s329 + $0xbb0] sm:$0xff]
        %v766 = vld [vmem:[%s329 + $0xbb8] sm:$0xff]
        %v767 = vld [vmem:[%s329 + $0xbc0] sm:$0xff]
        %v768 = vld [vmem:[%s329 + $0xbc8] sm:$0xff]
        %v769 = vld [vmem:[%s329 + $0xbd0] sm:$0xff]
        %v770 = vld [vmem:[%s329 + $0xbd8] sm:$0xff]
        %v771 = vld [vmem:[%s329 + $0xbe0] sm:$0xff]
        %v772 = vld [vmem:[%s329 + $0xbe8] sm:$0xff]
        %v773 = vld [vmem:[%s329 + $0xbf0] sm:$0xff]
        %v774 = vld [vmem:[%s329 + $0xbf8] sm:$0xff]
        %v775 = vld [vmem:[%s329 + $0xc00] sm:$0xff]
        %v776 = vld [vmem:[%s329 + $0xc08] sm:$0xff]
        %v777 = vld [vmem:[%s329 + $0xc10] sm:$0xff]
        %v778 = vld [vmem:[%s329 + $0xc18] sm:$0xff]
        %v779 = vld [vmem:[%s329 + $0xc20] sm:$0xff]
        %v780 = vld [vmem:[%s329 + $0xc28] sm:$0xff]
        %v781 = vld [vmem:[%s329 + $0xc30] sm:$0xff]
        %v782 = vld [vmem:[%s329 + $0xc38] sm:$0xff]
        %v783 = vld [vmem:[%s329 + $0xc40] sm:$0xff]
        %v784 = vld [vmem:[%s329 + $0xc48] sm:$0xff]
        %v785 = vld [vmem:[%s329 + $0xc50] sm:$0xff]
        %v786 = vld [vmem:[%s329 + $0xc58] sm:$0xff]
        %v787 = vld [vmem:[%s329 + $0xc60] sm:$0xff]
        %v788 = vld [vmem:[%s329 + $0xc68] sm:$0xff]
        %v789 = vld [vmem:[%s329 + $0xc70] sm:$0xff]
        %v790 = vld [vmem:[%s329 + $0xc78] sm:$0xff]
        %v791 = vld [vmem:[%s329 + $0xc80] sm:$0xff]
        %v792 = vld [vmem:[%s329 + $0xc88] sm:$0xff]
        %v793 = vld [vmem:[%s329 + $0xc90] sm:$0xff]
        %v794 = vld [vmem:[%s329 + $0xc98] sm:$0xff]
        %v795 = vld [vmem:[%s329 + $0xca0] sm:$0xff]
        %v796 = vld [vmem:[%s329 + $0xca8] sm:$0xff]
        %v797 = vld [vmem:[%s329 + $0xcb0] sm:$0xff]
        %v798 = vld [vmem:[%s329 + $0xcb8] sm:$0xff]
        %v799 = vld [vmem:[%s329 + $0xcc0] sm:$0xff]
        %v800 = vld [vmem:[%s329 + $0xcc8] sm:$0xff]
        %v801 = vld [vmem:[%s329 + $0xcd0] sm:$0xff]
        %v802 = vld [vmem:[%s329 + $0xcd8] sm:$0xff]
        %v803 = vld [vmem:[%s329 + $0xce0] sm:$0xff]
        %v804 = vld [vmem:[%s329 + $0xce8] sm:$0xff]
        %v805 = vld [vmem:[%s329 + $0xcf0] sm:$0xff]
        %v806 = vld [vmem:[%s329 + $0xcf8] sm:$0xff]
        %v807 = vld [vmem:[%s329 + $0xd00] sm:$0xff]
        %v808 = vld [vmem:[%s329 + $0xd08] sm:$0xff]
        %v809 = vld [vmem:[%s329 + $0xd10] sm:$0xff]
        %v810 = vld [vmem:[%s329 + $0xd18] sm:$0xff]
        %v811 = vld [vmem:[%s329 + $0xd20] sm:$0xff]
        %v812 = vld [vmem:[%s329 + $0xd28] sm:$0xff]
        %v813 = vld [vmem:[%s329 + $0xd30] sm:$0xff]
        %v814 = vld [vmem:[%s329 + $0xd38] sm:$0xff]
        %v815 = vld [vmem:[%s329 + $0xd40] sm:$0xff]
        %v816 = vld [vmem:[%s329 + $0xd48] sm:$0xff]
        %v817 = vld [vmem:[%s329 + $0xd50] sm:$0xff]
        %v818 = vld [vmem:[%s329 + $0xd58] sm:$0xff]
        %v819 = vld [vmem:[%s329 + $0xd60] sm:$0xff]
        %v820 = vld [vmem:[%s329 + $0xd68] sm:$0xff]
        %v821 = vld [vmem:[%s329 + $0xd70] sm:$0xff]
        %v822 = vld [vmem:[%s329 + $0xd78] sm:$0xff]
        %v823 = vld [vmem:[%s329 + $0xd80] sm:$0xff]
        %v824 = vld [vmem:[%s329 + $0xd88] sm:$0xff]
        %v825 = vld [vmem:[%s329 + $0xd90] sm:$0xff]
        %v826 = vld [vmem:[%s329 + $0xd98] sm:$0xff]
        %v827 = vld [vmem:[%s329 + $0xda0] sm:$0xff]
        %v828 = vld [vmem:[%s329 + $0xda8] sm:$0xff]
        %v829 = vld [vmem:[%s329 + $0xdb0] sm:$0xff]
        %v830 = vld [vmem:[%s329 + $0xdb8] sm:$0xff]
        %v831 = vld [vmem:[%s329 + $0xdc0] sm:$0xff]
        %v832 = vld [vmem:[%s329 + $0xdc8] sm:$0xff]
        %v833 = vld [vmem:[%s329 + $0xdd0] sm:$0xff]
        %v834 = vld [vmem:[%s329 + $0xdd8] sm:$0xff]
        %v835 = vld [vmem:[%s329 + $0xde0] sm:$0xff]
        %v836 = vld [vmem:[%s329 + $0xde8] sm:$0xff]
        %v837 = vld [vmem:[%s329 + $0xdf0] sm:$0xff]
        %v838 = vld [vmem:[%s329 + $0xdf8] sm:$0xff]
        %v839 = vld [vmem:[%s329 + $0xe00] sm:$0xff]
        %v840 = vld [vmem:[%s329 + $0xe08] sm:$0xff]
        %v841 = vld [vmem:[%s329 + $0xe10] sm:$0xff]
        %v842 = vld [vmem:[%s329 + $0xe18] sm:$0xff]
        %v843 = vld [vmem:[%s329 + $0xe20] sm:$0xff]
        %v844 = vld [vmem:[%s329 + $0xe28] sm:$0xff]
        %v845 = vld [vmem:[%s329 + $0xe30] sm:$0xff]
        %v846 = vld [vmem:[%s329 + $0xe38] sm:$0xff]
        %v847 = vld [vmem:[%s329 + $0xe40] sm:$0xff]
        %v848 = vld [vmem:[%s329 + $0xe48] sm:$0xff]
        %v849 = vld [vmem:[%s329 + $0xe50] sm:$0xff]
        %v850 = vld [vmem:[%s329 + $0xe58] sm:$0xff]
        %v851 = vld [vmem:[%s329 + $0xe60] sm:$0xff]
        %v852 = vld [vmem:[%s329 + $0xe68] sm:$0xff]
        %v853 = vld [vmem:[%s329 + $0xe70] sm:$0xff]
        %v854 = vld [vmem:[%s329 + $0xe78] sm:$0xff]
        %v855 = vld [vmem:[%s329 + $0xe80] sm:$0xff]
        %v856 = vld [vmem:[%s329 + $0xe88] sm:$0xff]
        %v857 = vld [vmem:[%s329 + $0xe90] sm:$0xff]
        %v858 = vld [vmem:[%s329 + $0xe98] sm:$0xff]
        %v859 = vld [vmem:[%s329 + $0xea0] sm:$0xff]
        %v860 = vld [vmem:[%s329 + $0xea8] sm:$0xff]
        %v861 = vld [vmem:[%s329 + $0xeb0] sm:$0xff]
        %v862 = vld [vmem:[%s329 + $0xeb8] sm:$0xff]
        %v863 = vld [vmem:[%s329 + $0xec0] sm:$0xff]
        %v864 = vld [vmem:[%s329 + $0xec8] sm:$0xff]
        %v865 = vld [vmem:[%s329 + $0xed0] sm:$0xff]
        %v866 = vld [vmem:[%s329 + $0xed8] sm:$0xff]
        %v867 = vld [vmem:[%s329 + $0xee0] sm:$0xff]
        %v868 = vld [vmem:[%s329 + $0xee8] sm:$0xff]
        %v869 = vld [vmem:[%s329 + $0xef0] sm:$0xff]
        %v870 = vld [vmem:[%s329 + $0xef8] sm:$0xff]
        %v871 = vld [vmem:[%s329 + $0xf00] sm:$0xff]
        %v872 = vld [vmem:[%s329 + $0xf08] sm:$0xff]
        %v873 = vld [vmem:[%s329 + $0xf10] sm:$0xff]
        %v874 = vld [vmem:[%s329 + $0xf18] sm:$0xff]
        %v875 = vld [vmem:[%s329 + $0xf20] sm:$0xff]
        %v876 = vld [vmem:[%s329 + $0xf28] sm:$0xff]
        %v877 = vld [vmem:[%s329 + $0xf30] sm:$0xff]
        %v878 = vld [vmem:[%s329 + $0xf38] sm:$0xff]
        %v879 = vld [vmem:[%s329 + $0xf40] sm:$0xff]
        %v880 = vld [vmem:[%s329 + $0xf48] sm:$0xff]
        %v881 = vld [vmem:[%s329 + $0xf50] sm:$0xff]
        %v882 = vld [vmem:[%s329 + $0xf58] sm:$0xff]
        %v883 = vld [vmem:[%s329 + $0xf60] sm:$0xff]
        %v884 = vld [vmem:[%s329 + $0xf68] sm:$0xff]
        %v885 = vld [vmem:[%s329 + $0xf70] sm:$0xff]
        %v886 = vld [vmem:[%s329 + $0xf78] sm:$0xff]
        %v887 = vld [vmem:[%s329 + $0xf80] sm:$0xff]
        %v888 = vld [vmem:[%s329 + $0xf88] sm:$0xff]
        %v889 = vld [vmem:[%s329 + $0xf90] sm:$0xff]
        %v890 = vld [vmem:[%s329 + $0xf98] sm:$0xff]
        %v891 = vld [vmem:[%s329 + $0xfa0] sm:$0xff]
        %v892 = vld [vmem:[%s329 + $0xfa8] sm:$0xff]
        %v893 = vld [vmem:[%s329 + $0xfb0] sm:$0xff]
        %v894 = vld [vmem:[%s329 + $0xfb8] sm:$0xff]
        %v895 = vld [vmem:[%s329 + $0xfc0] sm:$0xff]
        %v896 = vld [vmem:[%s329 + $0xfc8] sm:$0xff]
        %v897 = vld [vmem:[%s329 + $0xfd0] sm:$0xff]
        %v898 = vld [vmem:[%s329 + $0xfd8] sm:$0xff]
        %v899 = vld [vmem:[%s329 + $0xfe0] sm:$0xff]
        %v900 = vld [vmem:[%s329 + $0xfe8] sm:$0xff]
        %v901 = vld [vmem:[%s329 + $0xff0] sm:$0xff]
        %v902 = vld [vmem:[%s329 + $0xff8] sm:$0xff]
        %v903 = vld [vmem:[%s329 + $0x1000] sm:$0xff]
        %v904 = vld [vmem:[%s329 + $0x1008] sm:$0xff]
        %v905 = vld [vmem:[%s329 + $0x1010] sm:$0xff]
        %v906 = vld [vmem:[%s329 + $0x1018] sm:$0xff]
        %v907 = vld [vmem:[%s329 + $0x1020] sm:$0xff]
        %v908 = vld [vmem:[%s329 + $0x1028] sm:$0xff]
        %v909 = vld [vmem:[%s329 + $0x1030] sm:$0xff]
        %v910 = vld [vmem:[%s329 + $0x1038] sm:$0xff]
        %v911 = vld [vmem:[%s329 + $0x1040] sm:$0xff]
        %v912 = vld [vmem:[%s329 + $0x1048] sm:$0xff]
        %v913 = vld [vmem:[%s329 + $0x1050] sm:$0xff]
        %v914 = vld [vmem:[%s329 + $0x1058] sm:$0xff]
        %v915 = vld [vmem:[%s329 + $0x1060] sm:$0xff]
        %v916 = vld [vmem:[%s329 + $0x1068] sm:$0xff]
        %v917 = vld [vmem:[%s329 + $0x1070] sm:$0xff]
        %v918 = vld [vmem:[%s329 + $0x1078] sm:$0xff]
        %v919 = vld [vmem:[%s329 + $0x1080] sm:$0xff]
        %v920 = vld [vmem:[%s329 + $0x1088] sm:$0xff]
        %v921 = vld [vmem:[%s329 + $0x1090] sm:$0xff]
        %v922 = vld [vmem:[%s329 + $0x1098] sm:$0xff]
        %v923 = vld [vmem:[%s329 + $0x10a0] sm:$0xff]
        %v924 = vld [vmem:[%s329 + $0x10a8] sm:$0xff]
        %v925 = vld [vmem:[%s329 + $0x10b0] sm:$0xff]
        %v926 = vld [vmem:[%s329 + $0x10b8] sm:$0xff]
        %v927 = vld [vmem:[%s329 + $0x10c0] sm:$0xff]
        %v928 = vld [vmem:[%s329 + $0x10c8] sm:$0xff]
        %v929 = vld [vmem:[%s329 + $0x10d0] sm:$0xff]
        %v930 = vld [vmem:[%s329 + $0x10d8] sm:$0xff]
        %v931 = vld [vmem:[%s329 + $0x10e0] sm:$0xff]
        %v932 = vld [vmem:[%s329 + $0x10e8] sm:$0xff]
        %v933 = vld [vmem:[%s329 + $0x10f0] sm:$0xff]
        %v934 = vld [vmem:[%s329 + $0x10f8] sm:$0xff]
        %v935 = vld [vmem:[%s329 + $0x1100] sm:$0xff]
        %v936 = vld [vmem:[%s329 + $0x1108] sm:$0xff]
        %v937 = vld [vmem:[%s329 + $0x1110] sm:$0xff]
        %v938 = vld [vmem:[%s329 + $0x1118] sm:$0xff]
        %v939 = vld [vmem:[%s329 + $0x1120] sm:$0xff]
        %v940 = vld [vmem:[%s329 + $0x1128] sm:$0xff]
        %v941 = vld [vmem:[%s329 + $0x1130] sm:$0xff]
        %v942 = vld [vmem:[%s329 + $0x1138] sm:$0xff]
        %v943 = vld [vmem:[%s329 + $0x1140] sm:$0xff]
        %v944 = vld [vmem:[%s329 + $0x1148] sm:$0xff]
        %v945 = vld [vmem:[%s329 + $0x1150] sm:$0xff]
        %v946 = vld [vmem:[%s329 + $0x1158] sm:$0xff]
        %v947 = vld [vmem:[%s329 + $0x1160] sm:$0xff]
        %v948 = vld [vmem:[%s329 + $0x1168] sm:$0xff]
        %v949 = vld [vmem:[%s329 + $0x1170] sm:$0xff]
        %v950 = vld [vmem:[%s329 + $0x1178] sm:$0xff]
        %v951 = vld [vmem:[%s329 + $0x1180] sm:$0xff]
        %v952 = vld [vmem:[%s329 + $0x1188] sm:$0xff]
        %v953 = vld [vmem:[%s329 + $0x1190] sm:$0xff]
        %v954 = vld [vmem:[%s329 + $0x1198] sm:$0xff]
        %v955 = vld [vmem:[%s329 + $0x11a0] sm:$0xff]
        %v956 = vld [vmem:[%s329 + $0x11a8] sm:$0xff]
        %v957 = vld [vmem:[%s329 + $0x11b0] sm:$0xff]
        %v958 = vld [vmem:[%s329 + $0x11b8] sm:$0xff]
        %v959 = vld [vmem:[%s329 + $0x11c0] sm:$0xff]
        %v960 = vld [vmem:[%s329 + $0x11c8] sm:$0xff]
        %v961 = vld [vmem:[%s329 + $0x11d0] sm:$0xff]
        %v962 = vld [vmem:[%s329 + $0x11d8] sm:$0xff]
        %v963 = vld [vmem:[%s329 + $0x11e0] sm:$0xff]
        %v964 = vld [vmem:[%s329 + $0x11e8] sm:$0xff]
        %v965 = vld [vmem:[%s329 + $0x11f0] sm:$0xff]
        %v966 = vld [vmem:[%s329 + $0x11f8] sm:$0xff]
        %v967 = vld [vmem:[%s329 + $0x1200] sm:$0xff]
        %v968 = vld [vmem:[%s329 + $0x1208] sm:$0xff]
        %v969 = vld [vmem:[%s329 + $0x1210] sm:$0xff]
        %v970 = vld [vmem:[%s329 + $0x1218] sm:$0xff]
        %v971 = vld [vmem:[%s329 + $0x1220] sm:$0xff]
        %v972 = vld [vmem:[%s329 + $0x1228] sm:$0xff]
        %v973 = vld [vmem:[%s329 + $0x1230] sm:$0xff]
        %v974 = vld [vmem:[%s329 + $0x1238] sm:$0xff]
        %v975 = vld [vmem:[%s329 + $0x1240] sm:$0xff]
        %v976 = vld [vmem:[%s329 + $0x1248] sm:$0xff]
        %v977 = vld [vmem:[%s329 + $0x1250] sm:$0xff]
        %v978 = vld [vmem:[%s329 + $0x1258] sm:$0xff]
        %v979 = vld [vmem:[%s329 + $0x1260] sm:$0xff]
        %v980 = vld [vmem:[%s329 + $0x1268] sm:$0xff]
        %v981 = vld [vmem:[%s329 + $0x1270] sm:$0xff]
        %v982 = vld [vmem:[%s329 + $0x1278] sm:$0xff]
        %v983 = vld [vmem:[%s329 + $0x1280] sm:$0xff]
        %v984 = vld [vmem:[%s329 + $0x1288] sm:$0xff]
        %v985 = vld [vmem:[%s329 + $0x1290] sm:$0xff]
        %v986 = vld [vmem:[%s329 + $0x1298] sm:$0xff]
        %v987 = vld [vmem:[%s329 + $0x12a0] sm:$0xff]
        %v988 = vld [vmem:[%s329 + $0x12a8] sm:$0xff]
        %v989 = vld [vmem:[%s329 + $0x12b0] sm:$0xff]
        %v990 = vld [vmem:[%s329 + $0x12b8] sm:$0xff]
        %v991 = vld [vmem:[%s329 + $0x12c0] sm:$0xff]
        %v992 = vld [vmem:[%s329 + $0x12c8] sm:$0xff]
        %v993 = vld [vmem:[%s329 + $0x12d0] sm:$0xff]
        %v994 = vld [vmem:[%s329 + $0x12d8] sm:$0xff]
        %v995 = vld [vmem:[%s329 + $0x12e0] sm:$0xff]
        %v996 = vld [vmem:[%s329 + $0x12e8] sm:$0xff]
        %v997 = vld [vmem:[%s329 + $0x12f0] sm:$0xff]
        %v998 = vld [vmem:[%s329 + $0x12f8] sm:$0xff]
        %v999 = vld [vmem:[%s329 + $0x1300] sm:$0xff]
        %v1000 = vld [vmem:[%s329 + $0x1308] sm:$0xff]
        %v1001 = vld [vmem:[%s329 + $0x1310] sm:$0xff]
        %v1002 = vld [vmem:[%s329 + $0x1318] sm:$0xff]
        %v1003 = vld [vmem:[%s329 + $0x1320] sm:$0xff]
        %v1004 = vld [vmem:[%s329 + $0x1328] sm:$0xff]
        %v1005 = vld [vmem:[%s329 + $0x1330] sm:$0xff]
        %v1006 = vld [vmem:[%s329 + $0x1338] sm:$0xff]
        %v1007 = vld [vmem:[%s329 + $0x1340] sm:$0xff]
        %v1008 = vld [vmem:[%s329 + $0x1348] sm:$0xff]
        %v1009 = vld [vmem:[%s329 + $0x1350] sm:$0xff]
        %v1010 = vld [vmem:[%s329 + $0x1358] sm:$0xff]
        %v1011 = vld [vmem:[%s329 + $0x1360] sm:$0xff]
        %v1012 = vld [vmem:[%s329 + $0x1368] sm:$0xff]
        %v1013 = vld [vmem:[%s329 + $0x1370] sm:$0xff]
        %v1014 = vld [vmem:[%s329 + $0x1378] sm:$0xff]
        %v1015 = vld [vmem:[%s329 + $0x1380] sm:$0xff]
        %v1016 = vld [vmem:[%s329 + $0x1388] sm:$0xff]
        %v1017 = vld [vmem:[%s329 + $0x1390] sm:$0xff]
        %v1018 = vld [vmem:[%s329 + $0x1398] sm:$0xff]
        %v1019 = vld [vmem:[%s329 + $0x13a0] sm:$0xff]
        %v1020 = vld [vmem:[%s329 + $0x13a8] sm:$0xff]
        %v1021 = vld [vmem:[%s329 + $0x13b0] sm:$0xff]
        %v1022 = vld [vmem:[%s329 + $0x13b8] sm:$0xff]
        %v1023 = vld [vmem:[%s329 + $0x13c0] sm:$0xff]
        %v1024 = vld [vmem:[%s329 + $0x13c8] sm:$0xff]
        %v1025 = vld [vmem:[%s329 + $0x13d0] sm:$0xff]
        %v1026 = vld [vmem:[%s329 + $0x13d8] sm:$0xff]
        %v1027 = vld [vmem:[%s329 + $0x13e0] sm:$0xff]
        %v1028 = vld [vmem:[%s329 + $0x13e8] sm:$0xff]
        %v1029 = vld [vmem:[%s329 + $0x13f0] sm:$0xff]
        %v1030 = vld [vmem:[%s329 + $0x13f8] sm:$0xff]
        %v1031 = vld [vmem:[%s329 + $0x1400] sm:$0xff]
        %v1032 = vld [vmem:[%s329 + $0x1408] sm:$0xff]
        %v1033 = vld [vmem:[%s329 + $0x1410] sm:$0xff]
        %v1034 = vld [vmem:[%s329 + $0x1418] sm:$0xff]
        %v1035 = vld [vmem:[%s329 + $0x1420] sm:$0xff]
        %v1036 = vld [vmem:[%s329 + $0x1428] sm:$0xff]
        %v1037 = vld [vmem:[%s329 + $0x1430] sm:$0xff]
        %v1038 = vld [vmem:[%s329 + $0x1438] sm:$0xff]
        %v1039 = vld [vmem:[%s329 + $0x1440] sm:$0xff]
        %v1040 = vld [vmem:[%s329 + $0x1448] sm:$0xff]
        %v1041 = vld [vmem:[%s329 + $0x1450] sm:$0xff]
        %v1042 = vld [vmem:[%s329 + $0x1458] sm:$0xff]
        %v1043 = vld [vmem:[%s329 + $0x1460] sm:$0xff]
        %v1044 = vld [vmem:[%s329 + $0x1468] sm:$0xff]
        %v1045 = vld [vmem:[%s329 + $0x1470] sm:$0xff]
        %v1046 = vld [vmem:[%s329 + $0x1478] sm:$0xff]
        %v1047 = vld [vmem:[%s329 + $0x1480] sm:$0xff]
        %v1048 = vld [vmem:[%s329 + $0x1488] sm:$0xff]
        %v1049 = vld [vmem:[%s329 + $0x1490] sm:$0xff]
        %v1050 = vld [vmem:[%s329 + $0x1498] sm:$0xff]
        %v1051 = vld [vmem:[%s329 + $0x14a0] sm:$0xff]
        %v1052 = vld [vmem:[%s329 + $0x14a8] sm:$0xff]
        %v1053 = vld [vmem:[%s329 + $0x14b0] sm:$0xff]
        %v1054 = vld [vmem:[%s329 + $0x14b8] sm:$0xff]
        %v1055 = vld [vmem:[%s329 + $0x14c0] sm:$0xff]
        %v1056 = vld [vmem:[%s329 + $0x14c8] sm:$0xff]
        %v1057 = vld [vmem:[%s329 + $0x14d0] sm:$0xff]
        %v1058 = vld [vmem:[%s329 + $0x14d8] sm:$0xff]
        %v1059 = vld [vmem:[%s329 + $0x14e0] sm:$0xff]
        %v1060 = vld [vmem:[%s329 + $0x14e8] sm:$0xff]
        %v1061 = vld [vmem:[%s329 + $0x14f0] sm:$0xff]
        %v1062 = vld [vmem:[%s329 + $0x14f8] sm:$0xff]
        %v1063 = vld [vmem:[%s329 + $0x1500] sm:$0xff]
        %v1064 = vld [vmem:[%s329 + $0x1508] sm:$0xff]
        %v1065 = vld [vmem:[%s329 + $0x1510] sm:$0xff]
        %v1066 = vld [vmem:[%s329 + $0x1518] sm:$0xff]
        %v1067 = vld [vmem:[%s329 + $0x1520] sm:$0xff]
        %v1068 = vld [vmem:[%s329 + $0x1528] sm:$0xff]
        %v1069 = vld [vmem:[%s329 + $0x1530] sm:$0xff]
        %v1070 = vld [vmem:[%s329 + $0x1538] sm:$0xff]
        %v1071 = vld [vmem:[%s329 + $0x1540] sm:$0xff]
        %v1072 = vld [vmem:[%s329 + $0x1548] sm:$0xff]
        %v1073 = vld [vmem:[%s329 + $0x1550] sm:$0xff]
        %v1074 = vld [vmem:[%s329 + $0x1558] sm:$0xff]
        %v1075 = vld [vmem:[%s329 + $0x1560] sm:$0xff]
        %v1076 = vld [vmem:[%s329 + $0x1568] sm:$0xff]
        %v1077 = vld [vmem:[%s329 + $0x1570] sm:$0xff]
        %v1078 = vld [vmem:[%s329 + $0x1578] sm:$0xff]
        %v1079 = vld [vmem:[%s329 + $0x1580] sm:$0xff]
        %v1080 = vld [vmem:[%s329 + $0x1588] sm:$0xff]
        %v1081 = vld [vmem:[%s329 + $0x1590] sm:$0xff]
        %v1082 = vld [vmem:[%s329 + $0x1598] sm:$0xff]
        %v1083 = vld [vmem:[%s329 + $0x15a0] sm:$0xff]
        %v1084 = vld [vmem:[%s329 + $0x15a8] sm:$0xff]
        %v1085 = vld [vmem:[%s329 + $0x15b0] sm:$0xff]
        %v1086 = vld [vmem:[%s329 + $0x15b8] sm:$0xff]
        %v1087 = vld [vmem:[%s329 + $0x15c0] sm:$0xff]
        %v1088 = vld [vmem:[%s329 + $0x15c8] sm:$0xff]
        %v1089 = vld [vmem:[%s329 + $0x15d0] sm:$0xff]
        %v1090 = vld [vmem:[%s329 + $0x15d8] sm:$0xff]
        %v1091 = vld [vmem:[%s329 + $0x15e0] sm:$0xff]
        %v1092 = vld [vmem:[%s329 + $0x15e8] sm:$0xff]
        %v1093 = vld [vmem:[%s329 + $0x15f0] sm:$0xff]
        %v1094 = vld [vmem:[%s329 + $0x15f8] sm:$0xff]
        %v1095 = vld [vmem:[%s329 + $0x1600] sm:$0xff]
        %v1096 = vld [vmem:[%s329 + $0x1608] sm:$0xff]
        %v1097 = vld [vmem:[%s329 + $0x1610] sm:$0xff]
        %v1098 = vld [vmem:[%s329 + $0x1618] sm:$0xff]
        %v1099 = vld [vmem:[%s329 + $0x1620] sm:$0xff]
        %v1100 = vld [vmem:[%s329 + $0x1628] sm:$0xff]
        %v1101 = vld [vmem:[%s329 + $0x1630] sm:$0xff]
        %v1102 = vld [vmem:[%s329 + $0x1638] sm:$0xff]
        %v1103 = vld [vmem:[%s329 + $0x1640] sm:$0xff]
        %v1104 = vld [vmem:[%s329 + $0x1648] sm:$0xff]
        %v1105 = vld [vmem:[%s329 + $0x1650] sm:$0xff]
        %v1106 = vld [vmem:[%s329 + $0x1658] sm:$0xff]
        %v1107 = vld [vmem:[%s329 + $0x1660] sm:$0xff]
        %v1108 = vld [vmem:[%s329 + $0x1668] sm:$0xff]
        %v1109 = vld [vmem:[%s329 + $0x1670] sm:$0xff]
        %v1110 = vld [vmem:[%s329 + $0x1678] sm:$0xff]
        %v1111 = vld [vmem:[%s329 + $0x1680] sm:$0xff]
        %v1112 = vld [vmem:[%s329 + $0x1688] sm:$0xff]
        %v1113 = vld [vmem:[%s329 + $0x1690] sm:$0xff]
        %v1114 = vld [vmem:[%s329 + $0x1698] sm:$0xff]
        %v1115 = vld [vmem:[%s329 + $0x16a0] sm:$0xff]
        %v1116 = vld [vmem:[%s329 + $0x16a8] sm:$0xff]
        %v1117 = vld [vmem:[%s329 + $0x16b0] sm:$0xff]
        %v1118 = vld [vmem:[%s329 + $0x16b8] sm:$0xff]
        %v1119 = vld [vmem:[%s329 + $0x16c0] sm:$0xff]
        %v1120 = vld [vmem:[%s329 + $0x16c8] sm:$0xff]
        %v1121 = vld [vmem:[%s329 + $0x16d0] sm:$0xff]
        %v1122 = vld [vmem:[%s329 + $0x16d8] sm:$0xff]
        %v1123 = vld [vmem:[%s329 + $0x16e0] sm:$0xff]
        %v1124 = vld [vmem:[%s329 + $0x16e8] sm:$0xff]
        %v1125 = vld [vmem:[%s329 + $0x16f0] sm:$0xff]
        %v1126 = vld [vmem:[%s329 + $0x16f8] sm:$0xff]
        %v1127 = vld [vmem:[%s329 + $0x1700] sm:$0xff]
        %v1128 = vld [vmem:[%s329 + $0x1708] sm:$0xff]
        %v1129 = vld [vmem:[%s329 + $0x1710] sm:$0xff]
        %v1130 = vld [vmem:[%s329 + $0x1718] sm:$0xff]
        %v1131 = vld [vmem:[%s329 + $0x1720] sm:$0xff]
        %v1132 = vld [vmem:[%s329 + $0x1728] sm:$0xff]
        %v1133 = vld [vmem:[%s329 + $0x1730] sm:$0xff]
        %v1134 = vld [vmem:[%s329 + $0x1738] sm:$0xff]
        %v1135 = vld [vmem:[%s329 + $0x1740] sm:$0xff]
        %v1136 = vld [vmem:[%s329 + $0x1748] sm:$0xff]
        %v1137 = vld [vmem:[%s329 + $0x1750] sm:$0xff]
        %v1138 = vld [vmem:[%s329 + $0x1758] sm:$0xff]
        %v1139 = vld [vmem:[%s329 + $0x1760] sm:$0xff]
        %v1140 = vld [vmem:[%s329 + $0x1768] sm:$0xff]
        %v1141 = vld [vmem:[%s329 + $0x1770] sm:$0xff]
        %v1142 = vld [vmem:[%s329 + $0x1778] sm:$0xff]
        %v1143 = vld [vmem:[%s329 + $0x1780] sm:$0xff]
        %v1144 = vld [vmem:[%s329 + $0x1788] sm:$0xff]
        %v1145 = vld [vmem:[%s329 + $0x1790] sm:$0xff]
        %v1146 = vld [vmem:[%s329 + $0x1798] sm:$0xff]
        %v1147 = vld [vmem:[%s329 + $0x17a0] sm:$0xff]
        %v1148 = vld [vmem:[%s329 + $0x17a8] sm:$0xff]
        %v1149 = vld [vmem:[%s329 + $0x17b0] sm:$0xff]
        %v1150 = vld [vmem:[%s329 + $0x17b8] sm:$0xff]
        %v1151 = vld [vmem:[%s329 + $0x17c0] sm:$0xff]
        %v1152 = vld [vmem:[%s329 + $0x17c8] sm:$0xff]
        %v1153 = vld [vmem:[%s329 + $0x17d0] sm:$0xff]
        %v1154 = vld [vmem:[%s329 + $0x17d8] sm:$0xff]
        %v1155 = vld [vmem:[%s329 + $0x17e0] sm:$0xff]
        %v1156 = vld [vmem:[%s329 + $0x17e8] sm:$0xff]
        %v1157 = vld [vmem:[%s329 + $0x17f0] sm:$0xff]
        %v1158 = vld [vmem:[%s329 + $0x17f8] sm:$0xff]
        %v1159 = vld [vmem:[%s329 + $0x1800] sm:$0xff]
        %v1160 = vld [vmem:[%s329 + $0x1808] sm:$0xff]
        %v1161 = vld [vmem:[%s329 + $0x1810] sm:$0xff]
        %v1162 = vld [vmem:[%s329 + $0x1818] sm:$0xff]
        %v1163 = vld [vmem:[%s329 + $0x1820] sm:$0xff]
        %v1164 = vld [vmem:[%s329 + $0x1828] sm:$0xff]
        %v1165 = vld [vmem:[%s329 + $0x1830] sm:$0xff]
        %v1166 = vld [vmem:[%s329 + $0x1838] sm:$0xff]
        %v1167 = vld [vmem:[%s329 + $0x1840] sm:$0xff]
        %v1168 = vld [vmem:[%s329 + $0x1848] sm:$0xff]
        %v1169 = vld [vmem:[%s329 + $0x1850] sm:$0xff]
        %v1170 = vld [vmem:[%s329 + $0x1858] sm:$0xff]
        %v1171 = vld [vmem:[%s329 + $0x1860] sm:$0xff]
        %v1172 = vld [vmem:[%s329 + $0x1868] sm:$0xff]
        %v1173 = vld [vmem:[%s329 + $0x1870] sm:$0xff]
        %v1174 = vld [vmem:[%s329 + $0x1878] sm:$0xff]
        %v1175 = vld [vmem:[%s329 + $0x1880] sm:$0xff]
        %v1176 = vld [vmem:[%s329 + $0x1888] sm:$0xff]
        %v1177 = vld [vmem:[%s329 + $0x1890] sm:$0xff]
        %v1178 = vld [vmem:[%s329 + $0x1898] sm:$0xff]
        %v1179 = vld [vmem:[%s329 + $0x18a0] sm:$0xff]
        %v1180 = vld [vmem:[%s329 + $0x18a8] sm:$0xff]
        %v1181 = vld [vmem:[%s329 + $0x18b0] sm:$0xff]
        %v1182 = vld [vmem:[%s329 + $0x18b8] sm:$0xff]
        %v1183 = vld [vmem:[%s329 + $0x18c0] sm:$0xff]
        %v1184 = vld [vmem:[%s329 + $0x18c8] sm:$0xff]
        %v1185 = vld [vmem:[%s329 + $0x18d0] sm:$0xff]
        %v1186 = vld [vmem:[%s329 + $0x18d8] sm:$0xff]
        %v1187 = vld [vmem:[%s329 + $0x18e0] sm:$0xff]
        %v1188 = vld [vmem:[%s329 + $0x18e8] sm:$0xff]
        %v1189 = vld [vmem:[%s329 + $0x18f0] sm:$0xff]
        %v1190 = vld [vmem:[%s329 + $0x18f8] sm:$0xff]
        %v1191 = vld [vmem:[%s329 + $0x1900] sm:$0xff]
        %v1192 = vld [vmem:[%s329 + $0x1908] sm:$0xff]
        %v1193 = vld [vmem:[%s329 + $0x1910] sm:$0xff]
        %v1194 = vld [vmem:[%s329 + $0x1918] sm:$0xff]
        %v1195 = vld [vmem:[%s329 + $0x1920] sm:$0xff]
        %v1196 = vld [vmem:[%s329 + $0x1928] sm:$0xff]
        %v1197 = vld [vmem:[%s329 + $0x1930] sm:$0xff]
        %v1198 = vld [vmem:[%s329 + $0x1938] sm:$0xff]
        %v1199 = vld [vmem:[%s329 + $0x1940] sm:$0xff]
        %v1200 = vld [vmem:[%s329 + $0x1948] sm:$0xff]
        %v1201 = vld [vmem:[%s329 + $0x1950] sm:$0xff]
        %v1202 = vld [vmem:[%s329 + $0x1958] sm:$0xff]
        %v1203 = vld [vmem:[%s329 + $0x1960] sm:$0xff]
        %v1204 = vld [vmem:[%s329 + $0x1968] sm:$0xff]
        %v1205 = vld [vmem:[%s329 + $0x1970] sm:$0xff]
        %v1206 = vld [vmem:[%s329 + $0x1978] sm:$0xff]
        %v1207 = vld [vmem:[%s329 + $0x1980] sm:$0xff]
        %v1208 = vld [vmem:[%s329 + $0x1988] sm:$0xff]
        %v1209 = vld [vmem:[%s329 + $0x1990] sm:$0xff]
        %v1210 = vld [vmem:[%s329 + $0x1998] sm:$0xff]
        %v1211 = vld [vmem:[%s329 + $0x19a0] sm:$0xff]
        %v1212 = vld [vmem:[%s329 + $0x19a8] sm:$0xff]
        %v1213 = vld [vmem:[%s329 + $0x19b0] sm:$0xff]
        %v1214 = vld [vmem:[%s329 + $0x19b8] sm:$0xff]
        %v1215 = vld [vmem:[%s329 + $0x19c0] sm:$0xff]
        %v1216 = vld [vmem:[%s329 + $0x19c8] sm:$0xff]
        %v1217 = vld [vmem:[%s329 + $0x19d0] sm:$0xff]
        %v1218 = vld [vmem:[%s329 + $0x19d8] sm:$0xff]
        %v1219 = vld [vmem:[%s329 + $0x19e0] sm:$0xff]
        %v1220 = vld [vmem:[%s329 + $0x19e8] sm:$0xff]
        %v1221 = vld [vmem:[%s329 + $0x19f0] sm:$0xff]
        %v1222 = vld [vmem:[%s329 + $0x19f8] sm:$0xff]
        %v1223 = vld [vmem:[%s329 + $0x1a00] sm:$0xff]
        %v1224 = vld [vmem:[%s329 + $0x1a08] sm:$0xff]
        %v1225 = vld [vmem:[%s329 + $0x1a10] sm:$0xff]
        %v1226 = vld [vmem:[%s329 + $0x1a18] sm:$0xff]
        %v1227 = vld [vmem:[%s329 + $0x1a20] sm:$0xff]
        %v1228 = vld [vmem:[%s329 + $0x1a28] sm:$0xff]
        %v1229 = vld [vmem:[%s329 + $0x1a30] sm:$0xff]
        %v1230 = vld [vmem:[%s329 + $0x1a38] sm:$0xff]
        %v1231 = vld [vmem:[%s329 + $0x1a40] sm:$0xff]
        %v1232 = vld [vmem:[%s329 + $0x1a48] sm:$0xff]
        %v1233 = vld [vmem:[%s329 + $0x1a50] sm:$0xff]
        %v1234 = vld [vmem:[%s329 + $0x1a58] sm:$0xff]
        %v1235 = vld [vmem:[%s329 + $0x1a60] sm:$0xff]
        %v1236 = vld [vmem:[%s329 + $0x1a68] sm:$0xff]
        %v1237 = vld [vmem:[%s329 + $0x1a70] sm:$0xff]
        %v1238 = vld [vmem:[%s329 + $0x1a78] sm:$0xff]
        %v1239 = vld [vmem:[%s329 + $0x1a80] sm:$0xff]
        %v1240 = vld [vmem:[%s329 + $0x1a88] sm:$0xff]
        %v1241 = vld [vmem:[%s329 + $0x1a90] sm:$0xff]
        %v1242 = vld [vmem:[%s329 + $0x1a98] sm:$0xff]
        %v1243 = vld [vmem:[%s329 + $0x1aa0] sm:$0xff]
        %v1244 = vld [vmem:[%s329 + $0x1aa8] sm:$0xff]
        %v1245 = vld [vmem:[%s329 + $0x1ab0] sm:$0xff]
        %v1246 = vld [vmem:[%s329 + $0x1ab8] sm:$0xff]
        %v1247 = vld [vmem:[%s329 + $0x1ac0] sm:$0xff]
        %v1248 = vld [vmem:[%s329 + $0x1ac8] sm:$0xff]
        %v1249 = vld [vmem:[%s329 + $0x1ad0] sm:$0xff]
        %v1250 = vld [vmem:[%s329 + $0x1ad8] sm:$0xff]
        %v1251 = vld [vmem:[%s329 + $0x1ae0] sm:$0xff]
        %v1252 = vld [vmem:[%s329 + $0x1ae8] sm:$0xff]
        %v1253 = vld [vmem:[%s329 + $0x1af0] sm:$0xff]
        %v1254 = vld [vmem:[%s329 + $0x1af8] sm:$0xff]
        %v1255 = vld [vmem:[%s329 + $0x1b00] sm:$0xff]
        %v1256 = vld [vmem:[%s329 + $0x1b08] sm:$0xff]
        %v1257 = vld [vmem:[%s329 + $0x1b10] sm:$0xff]
        %v1258 = vld [vmem:[%s329 + $0x1b18] sm:$0xff]
        %v1259 = vld [vmem:[%s329 + $0x1b20] sm:$0xff]
        %v1260 = vld [vmem:[%s329 + $0x1b28] sm:$0xff]
        %v1261 = vld [vmem:[%s329 + $0x1b30] sm:$0xff]
        %v1262 = vld [vmem:[%s329 + $0x1b38] sm:$0xff]
        %v1263 = vld [vmem:[%s329 + $0x1b40] sm:$0xff]
        %v1264 = vld [vmem:[%s329 + $0x1b48] sm:$0xff]
        %v1265 = vld [vmem:[%s329 + $0x1b50] sm:$0xff]
        %v1266 = vld [vmem:[%s329 + $0x1b58] sm:$0xff]
        %v1267 = vld [vmem:[%s329 + $0x1b60] sm:$0xff]
        %v1268 = vld [vmem:[%s329 + $0x1b68] sm:$0xff]
        %v1269 = vld [vmem:[%s329 + $0x1b70] sm:$0xff]
        %v1270 = vld [vmem:[%s329 + $0x1b78] sm:$0xff]
        %v1271 = vld [vmem:[%s329 + $0x1b80] sm:$0xff]
        %v1272 = vld [vmem:[%s329 + $0x1b88] sm:$0xff]
        %v1273 = vld [vmem:[%s329 + $0x1b90] sm:$0xff]
        %v1274 = vld [vmem:[%s329 + $0x1b98] sm:$0xff]
        %v1275 = vld [vmem:[%s329 + $0x1ba0] sm:$0xff]
        %v1276 = vld [vmem:[%s329 + $0x1ba8] sm:$0xff]
        %v1277 = vld [vmem:[%s329 + $0x1bb0] sm:$0xff]
        %v1278 = vld [vmem:[%s329 + $0x1bb8] sm:$0xff]
        %v1279 = vld [vmem:[%s329 + $0x1bc0] sm:$0xff]
        %v1280 = vld [vmem:[%s329 + $0x1bc8] sm:$0xff]
        %v1281 = vld [vmem:[%s329 + $0x1bd0] sm:$0xff]
        %v1282 = vld [vmem:[%s329 + $0x1bd8] sm:$0xff]
        %v1283 = vld [vmem:[%s329 + $0x1be0] sm:$0xff]
        %v1284 = vld [vmem:[%s329 + $0x1be8] sm:$0xff]
        %v1285 = vld [vmem:[%s329 + $0x1bf0] sm:$0xff]
        %v1286 = vld [vmem:[%s329 + $0x1bf8] sm:$0xff]
        %v1287 = vld [vmem:[%s329 + $0x1c00] sm:$0xff]
        %v1288 = vld [vmem:[%s329 + $0x1c08] sm:$0xff]
        %v1289 = vld [vmem:[%s329 + $0x1c10] sm:$0xff]
        %v1290 = vld [vmem:[%s329 + $0x1c18] sm:$0xff]
        %v1291 = vld [vmem:[%s329 + $0x1c20] sm:$0xff]
        %v1292 = vld [vmem:[%s329 + $0x1c28] sm:$0xff]
        %v1293 = vld [vmem:[%s329 + $0x1c30] sm:$0xff]
        %v1294 = vld [vmem:[%s329 + $0x1c38] sm:$0xff]
        %v1295 = vld [vmem:[%s329 + $0x1c40] sm:$0xff]
        %v1296 = vld [vmem:[%s329 + $0x1c48] sm:$0xff]
        %v1297 = vld [vmem:[%s329 + $0x1c50] sm:$0xff]
        %v1298 = vld [vmem:[%s329 + $0x1c58] sm:$0xff]
        %v1299 = vld [vmem:[%s329 + $0x1c60] sm:$0xff]
        %v1300 = vld [vmem:[%s329 + $0x1c68] sm:$0xff]
        %v1301 = vld [vmem:[%s329 + $0x1c70] sm:$0xff]
        %v1302 = vld [vmem:[%s329 + $0x1c78] sm:$0xff]
        %v1303 = vld [vmem:[%s329 + $0x1c80] sm:$0xff]
        %v1304 = vld [vmem:[%s329 + $0x1c88] sm:$0xff]
        %v1305 = vld [vmem:[%s329 + $0x1c90] sm:$0xff]
        %v1306 = vld [vmem:[%s329 + $0x1c98] sm:$0xff]
        %v1307 = vld [vmem:[%s329 + $0x1ca0] sm:$0xff]
        %v1308 = vld [vmem:[%s329 + $0x1ca8] sm:$0xff]
        %v1309 = vld [vmem:[%s329 + $0x1cb0] sm:$0xff]
        %v1310 = vld [vmem:[%s329 + $0x1cb8] sm:$0xff]
        %v1311 = vld [vmem:[%s329 + $0x1cc0] sm:$0xff]
        %v1312 = vld [vmem:[%s329 + $0x1cc8] sm:$0xff]
        %v1313 = vld [vmem:[%s329 + $0x1cd0] sm:$0xff]
        %v1314 = vld [vmem:[%s329 + $0x1cd8] sm:$0xff]
        %v1315 = vld [vmem:[%s329 + $0x1ce0] sm:$0xff]
        %v1316 = vld [vmem:[%s329 + $0x1ce8] sm:$0xff]
        %v1317 = vld [vmem:[%s329 + $0x1cf0] sm:$0xff]
        %v1318 = vld [vmem:[%s329 + $0x1cf8] sm:$0xff]
        %v1319 = vld [vmem:[%s329 + $0x1d00] sm:$0xff]
        %v1320 = vld [vmem:[%s329 + $0x1d08] sm:$0xff]
        %v1321 = vld [vmem:[%s329 + $0x1d10] sm:$0xff]
        %v1322 = vld [vmem:[%s329 + $0x1d18] sm:$0xff]
        %v1323 = vld [vmem:[%s329 + $0x1d20] sm:$0xff]
        %v1324 = vld [vmem:[%s329 + $0x1d28] sm:$0xff]
        %v1325 = vld [vmem:[%s329 + $0x1d30] sm:$0xff]
        %v1326 = vld [vmem:[%s329 + $0x1d38] sm:$0xff]
        %v1327 = vld [vmem:[%s329 + $0x1d40] sm:$0xff]
        %v1328 = vld [vmem:[%s329 + $0x1d48] sm:$0xff]
        %v1329 = vld [vmem:[%s329 + $0x1d50] sm:$0xff]
        %v1330 = vld [vmem:[%s329 + $0x1d58] sm:$0xff]
        %v1331 = vld [vmem:[%s329 + $0x1d60] sm:$0xff]
        %v1332 = vld [vmem:[%s329 + $0x1d68] sm:$0xff]
        %v1333 = vld [vmem:[%s329 + $0x1d70] sm:$0xff]
        %v1334 = vld [vmem:[%s329 + $0x1d78] sm:$0xff]
        %v1335 = vld [vmem:[%s329 + $0x1d80] sm:$0xff]
        %v1336 = vld [vmem:[%s329 + $0x1d88] sm:$0xff]
        %v1337 = vld [vmem:[%s329 + $0x1d90] sm:$0xff]
        %v1338 = vld [vmem:[%s329 + $0x1d98] sm:$0xff]
        %v1339 = vld [vmem:[%s329 + $0x1da0] sm:$0xff]
        %v1340 = vld [vmem:[%s329 + $0x1da8] sm:$0xff]
        %v1341 = vld [vmem:[%s329 + $0x1db0] sm:$0xff]
        %v1342 = vld [vmem:[%s329 + $0x1db8] sm:$0xff]
        %v1343 = vld [vmem:[%s329 + $0x1dc0] sm:$0xff]
        %v1344 = vld [vmem:[%s329 + $0x1dc8] sm:$0xff]
        %v1345 = vld [vmem:[%s329 + $0x1dd0] sm:$0xff]
        %v1346 = vld [vmem:[%s329 + $0x1dd8] sm:$0xff]
        %v1347 = vld [vmem:[%s329 + $0x1de0] sm:$0xff]
        %v1348 = vld [vmem:[%s329 + $0x1de8] sm:$0xff]
        %v1349 = vld [vmem:[%s329 + $0x1df0] sm:$0xff]
        %v1350 = vld [vmem:[%s329 + $0x1df8] sm:$0xff]
        %v1351 = vld [vmem:[%s329 + $0x1e00] sm:$0xff]
        %v1352 = vld [vmem:[%s329 + $0x1e08] sm:$0xff]
        %v1353 = vld [vmem:[%s329 + $0x1e10] sm:$0xff]
        %v1354 = vld [vmem:[%s329 + $0x1e18] sm:$0xff]
        %v1355 = vld [vmem:[%s329 + $0x1e20] sm:$0xff]
        %v1356 = vld [vmem:[%s329 + $0x1e28] sm:$0xff]
        %v1357 = vld [vmem:[%s329 + $0x1e30] sm:$0xff]
        %v1358 = vld [vmem:[%s329 + $0x1e38] sm:$0xff]
        %v1359 = vld [vmem:[%s329 + $0x1e40] sm:$0xff]
        %v1360 = vld [vmem:[%s329 + $0x1e48] sm:$0xff]
        %v1361 = vld [vmem:[%s329 + $0x1e50] sm:$0xff]
        %v1362 = vld [vmem:[%s329 + $0x1e58] sm:$0xff]
        %v1363 = vld [vmem:[%s329 + $0x1e60] sm:$0xff]
        %v1364 = vld [vmem:[%s329 + $0x1e68] sm:$0xff]
        %v1365 = vld [vmem:[%s329 + $0x1e70] sm:$0xff]
        %v1366 = vld [vmem:[%s329 + $0x1e78] sm:$0xff]
        %v1367 = vld [vmem:[%s329 + $0x1e80] sm:$0xff]
        %v1368 = vld [vmem:[%s329 + $0x1e88] sm:$0xff]
        %v1369 = vld [vmem:[%s329 + $0x1e90] sm:$0xff]
        %v1370 = vld [vmem:[%s329 + $0x1e98] sm:$0xff]
        %v1371 = vld [vmem:[%s329 + $0x1ea0] sm:$0xff]
        %v1372 = vld [vmem:[%s329 + $0x1ea8] sm:$0xff]
        %v1373 = vld [vmem:[%s329 + $0x1eb0] sm:$0xff]
        %v1374 = vld [vmem:[%s329 + $0x1eb8] sm:$0xff]
        %v1375 = vld [vmem:[%s329 + $0x1ec0] sm:$0xff]
        %v1376 = vld [vmem:[%s329 + $0x1ec8] sm:$0xff]
        %v1377 = vld [vmem:[%s329 + $0x1ed0] sm:$0xff]
        %v1378 = vld [vmem:[%s329 + $0x1ed8] sm:$0xff]
        %v1379 = vld [vmem:[%s329 + $0x1ee0] sm:$0xff]
        %v1380 = vld [vmem:[%s329 + $0x1ee8] sm:$0xff]
        %v1381 = vld [vmem:[%s329 + $0x1ef0] sm:$0xff]
        %v1382 = vld [vmem:[%s329 + $0x1ef8] sm:$0xff]
        %v1383 = vld [vmem:[%s329 + $0x1f00] sm:$0xff]
        %v1384 = vld [vmem:[%s329 + $0x1f08] sm:$0xff]
        %v1385 = vld [vmem:[%s329 + $0x1f10] sm:$0xff]
        %v1386 = vld [vmem:[%s329 + $0x1f18] sm:$0xff]
        %v1387 = vld [vmem:[%s329 + $0x1f20] sm:$0xff]
        %v1388 = vld [vmem:[%s329 + $0x1f28] sm:$0xff]
        %v1389 = vld [vmem:[%s329 + $0x1f30] sm:$0xff]
        %v1390 = vld [vmem:[%s329 + $0x1f38] sm:$0xff]
        %v1391 = vld [vmem:[%s329 + $0x1f40] sm:$0xff]
        %v1392 = vld [vmem:[%s329 + $0x1f48] sm:$0xff]
        %v1393 = vld [vmem:[%s329 + $0x1f50] sm:$0xff]
        %v1394 = vld [vmem:[%s329 + $0x1f58] sm:$0xff]
        %v1395 = vld [vmem:[%s329 + $0x1f60] sm:$0xff]
        %v1396 = vld [vmem:[%s329 + $0x1f68] sm:$0xff]
        %v1397 = vld [vmem:[%s329 + $0x1f70] sm:$0xff]
        %v1398 = vld [vmem:[%s329 + $0x1f78] sm:$0xff]
        %v1399 = vld [vmem:[%s329 + $0x1f80] sm:$0xff]
        %v1400 = vld [vmem:[%s329 + $0x1f88] sm:$0xff]
        %v1401 = vld [vmem:[%s329 + $0x1f90] sm:$0xff]
        %v1402 = vld [vmem:[%s329 + $0x1f98] sm:$0xff]
        %v1403 = vld [vmem:[%s329 + $0x1fa0] sm:$0xff]
        %v1404 = vld [vmem:[%s329 + $0x1fa8] sm:$0xff]
        %v1405 = vld [vmem:[%s329 + $0x1fb0] sm:$0xff]
        %v1406 = vld [vmem:[%s329 + $0x1fb8] sm:$0xff]
        %v1407 = vld [vmem:[%s329 + $0x1fc0] sm:$0xff]
        %v1408 = vld [vmem:[%s329 + $0x1fc8] sm:$0xff]
        %v1409 = vld [vmem:[%s329 + $0x1fd0] sm:$0xff]
        %v1410 = vld [vmem:[%s329 + $0x1fd8] sm:$0xff]
        %v1411 = vld [vmem:[%s329 + $0x1fe0] sm:$0xff]
        %v1412 = vld [vmem:[%s329 + $0x1fe8] sm:$0xff]
        %v1413 = vld [vmem:[%s329 + $0x1ff0] sm:$0xff]
        %v1414 = vld [vmem:[%s329 + $0x1ff8] sm:$0xff]
        %v1415 = vld [vmem:[%s329 + $0x2000] sm:$0xff]
        %v1416 = vld [vmem:[%s329 + $0x2008] sm:$0xff]
        %v1417 = vld [vmem:[%s329 + $0x2010] sm:$0xff]
        %v1418 = vld [vmem:[%s329 + $0x2018] sm:$0xff]
        %v1419 = vld [vmem:[%s329 + $0x2020] sm:$0xff]
        %v1420 = vld [vmem:[%s329 + $0x2028] sm:$0xff]
        %v1421 = vld [vmem:[%s329 + $0x2030] sm:$0xff]
        %v1422 = vld [vmem:[%s329 + $0x2038] sm:$0xff]
        %v1423 = vld [vmem:[%s329 + $0x2040] sm:$0xff]
        %v1424 = vld [vmem:[%s329 + $0x2048] sm:$0xff]
        %v1425 = vld [vmem:[%s329 + $0x2050] sm:$0xff]
        %v1426 = vld [vmem:[%s329 + $0x2058] sm:$0xff]
        %v1427 = vld [vmem:[%s329 + $0x2060] sm:$0xff]
        %v1428 = vld [vmem:[%s329 + $0x2068] sm:$0xff]
        %v1429 = vld [vmem:[%s329 + $0x2070] sm:$0xff]
        %v1430 = vld [vmem:[%s329 + $0x2078] sm:$0xff]
        %v1431 = vld [vmem:[%s329 + $0x2080] sm:$0xff]
        %v1432 = vld [vmem:[%s329 + $0x2088] sm:$0xff]
        %v1433 = vld [vmem:[%s329 + $0x2090] sm:$0xff]
        %v1434 = vld [vmem:[%s329 + $0x2098] sm:$0xff]
        %v1435 = vld [vmem:[%s329 + $0x20a0] sm:$0xff]
        %v1436 = vld [vmem:[%s329 + $0x20a8] sm:$0xff]
        %v1437 = vld [vmem:[%s329 + $0x20b0] sm:$0xff]
        %v1438 = vld [vmem:[%s329 + $0x20b8] sm:$0xff]
        %v1439 = vld [vmem:[%s329 + $0x20c0] sm:$0xff]
        %v1440 = vld [vmem:[%s329 + $0x20c8] sm:$0xff]
        %v1441 = vld [vmem:[%s329 + $0x20d0] sm:$0xff]
        %v1442 = vld [vmem:[%s329 + $0x20d8] sm:$0xff]
        %v1443 = vld [vmem:[%s329 + $0x20e0] sm:$0xff]
        %v1444 = vld [vmem:[%s329 + $0x20e8] sm:$0xff]
        %v1445 = vld [vmem:[%s329 + $0x20f0] sm:$0xff]
        %v1446 = vld [vmem:[%s329 + $0x20f8] sm:$0xff]
        %v1447 = vld [vmem:[%s329 + $0x2100] sm:$0xff]
        %v1448 = vld [vmem:[%s329 + $0x2108] sm:$0xff]
        %v1449 = vld [vmem:[%s329 + $0x2110] sm:$0xff]
        %v1450 = vld [vmem:[%s329 + $0x2118] sm:$0xff]
        %v1451 = vld [vmem:[%s329 + $0x2120] sm:$0xff]
        %v1452 = vld [vmem:[%s329 + $0x2128] sm:$0xff]
        %v1453 = vld [vmem:[%s329 + $0x2130] sm:$0xff]
        %v1454 = vld [vmem:[%s329 + $0x2138] sm:$0xff]
        %v1455 = vld [vmem:[%s329 + $0x2140] sm:$0xff]
        %v1456 = vld [vmem:[%s329 + $0x2148] sm:$0xff]
        %v1457 = vld [vmem:[%s329 + $0x2150] sm:$0xff]
        %v1458 = vld [vmem:[%s329 + $0x2158] sm:$0xff]
        %v1459 = vld [vmem:[%s329 + $0x2160] sm:$0xff]
        %v1460 = vld [vmem:[%s329 + $0x2168] sm:$0xff]
        %v1461 = vld [vmem:[%s329 + $0x2170] sm:$0xff]
        %v1462 = vld [vmem:[%s329 + $0x2178] sm:$0xff]
        %v1463 = vld [vmem:[%s329 + $0x2180] sm:$0xff]
        %v1464 = vld [vmem:[%s329 + $0x2188] sm:$0xff]
        %v1465 = vld [vmem:[%s329 + $0x2190] sm:$0xff]
        %v1466 = vld [vmem:[%s329 + $0x2198] sm:$0xff]
        %v1467 = vld [vmem:[%s329 + $0x21a0] sm:$0xff]
        %v1468 = vld [vmem:[%s329 + $0x21a8] sm:$0xff]
        %v1469 = vld [vmem:[%s329 + $0x21b0] sm:$0xff]
        %v1470 = vld [vmem:[%s329 + $0x21b8] sm:$0xff]
        %v1471 = vld [vmem:[%s329 + $0x21c0] sm:$0xff]
        %v1472 = vld [vmem:[%s329 + $0x21c8] sm:$0xff]
        %v1473 = vld [vmem:[%s329 + $0x21d0] sm:$0xff]
        %v1474 = vld [vmem:[%s329 + $0x21d8] sm:$0xff]
        %v1475 = vld [vmem:[%s329 + $0x21e0] sm:$0xff]
        %v1476 = vld [vmem:[%s329 + $0x21e8] sm:$0xff]
        %v1477 = vld [vmem:[%s329 + $0x21f0] sm:$0xff]
        %v1478 = vld [vmem:[%s329 + $0x21f8] sm:$0xff]
        %v1479 = vld [vmem:[%s329 + $0x2200] sm:$0xff]
        %v1480 = vld [vmem:[%s329 + $0x2208] sm:$0xff]
        %v1481 = vld [vmem:[%s329 + $0x2210] sm:$0xff]
        %v1482 = vld [vmem:[%s329 + $0x2218] sm:$0xff]
        %v1483 = vld [vmem:[%s329 + $0x2220] sm:$0xff]
        %v1484 = vld [vmem:[%s329 + $0x2228] sm:$0xff]
        %v1485 = vld [vmem:[%s329 + $0x2230] sm:$0xff]
        %v1486 = vld [vmem:[%s329 + $0x2238] sm:$0xff]
        %v1487 = vld [vmem:[%s329 + $0x2240] sm:$0xff]
        %v1488 = vld [vmem:[%s329 + $0x2248] sm:$0xff]
        %v1489 = vld [vmem:[%s329 + $0x2250] sm:$0xff]
        %v1490 = vld [vmem:[%s329 + $0x2258] sm:$0xff]
        %v1491 = vld [vmem:[%s329 + $0x2260] sm:$0xff]
        %v1492 = vld [vmem:[%s329 + $0x2268] sm:$0xff]
        %v1493 = vld [vmem:[%s329 + $0x2270] sm:$0xff]
        %v1494 = vld [vmem:[%s329 + $0x2278] sm:$0xff]
        %v1495 = vld [vmem:[%s329 + $0x2280] sm:$0xff]
        %v1496 = vld [vmem:[%s329 + $0x2288] sm:$0xff]
        %v1497 = vld [vmem:[%s329 + $0x2290] sm:$0xff]
        %v1498 = vld [vmem:[%s329 + $0x2298] sm:$0xff]
        %v1499 = vld [vmem:[%s329 + $0x22a0] sm:$0xff]
        %v1500 = vld [vmem:[%s329 + $0x22a8] sm:$0xff]
        %v1501 = vld [vmem:[%s329 + $0x22b0] sm:$0xff]
        %v1502 = vld [vmem:[%s329 + $0x22b8] sm:$0xff]
        %v1503 = vld [vmem:[%s329 + $0x22c0] sm:$0xff]
        %v1504 = vld [vmem:[%s329 + $0x22c8] sm:$0xff]
        %v1505 = vld [vmem:[%s329 + $0x22d0] sm:$0xff]
        %v1506 = vld [vmem:[%s329 + $0x22d8] sm:$0xff]
        %v1507 = vld [vmem:[%s329 + $0x22e0] sm:$0xff]
        %v1508 = vld [vmem:[%s329 + $0x22e8] sm:$0xff]
        %v1509 = vld [vmem:[%s329 + $0x22f0] sm:$0xff]
        %v1510 = vld [vmem:[%s329 + $0x22f8] sm:$0xff]
        %v1511 = vld [vmem:[%s329 + $0x2300] sm:$0xff]
        %v1512 = vld [vmem:[%s329 + $0x2308] sm:$0xff]
        %v1513 = vld [vmem:[%s329 + $0x2310] sm:$0xff]
        %v1514 = vld [vmem:[%s329 + $0x2318] sm:$0xff]
        %v1515 = vld [vmem:[%s329 + $0x2320] sm:$0xff]
        %v1516 = vld [vmem:[%s329 + $0x2328] sm:$0xff]
        %v1517 = vld [vmem:[%s329 + $0x2330] sm:$0xff]
        %v1518 = vld [vmem:[%s329 + $0x2338] sm:$0xff]
        %v1519 = vld [vmem:[%s329 + $0x2340] sm:$0xff]
        %v1520 = vld [vmem:[%s329 + $0x2348] sm:$0xff]
        %v1521 = vld [vmem:[%s329 + $0x2350] sm:$0xff]
        %v1522 = vld [vmem:[%s329 + $0x2358] sm:$0xff]
        %v1523 = vld [vmem:[%s329 + $0x2360] sm:$0xff]
        %v1524 = vld [vmem:[%s329 + $0x2368] sm:$0xff]
        %v1525 = vld [vmem:[%s329 + $0x2370] sm:$0xff]
        %v1526 = vld [vmem:[%s329 + $0x2378] sm:$0xff]
        %v1527 = vld [vmem:[%s329 + $0x2380] sm:$0xff]
        %v1528 = vld [vmem:[%s329 + $0x2388] sm:$0xff]
        %v1529 = vld [vmem:[%s329 + $0x2390] sm:$0xff]
        %v1530 = vld [vmem:[%s329 + $0x2398] sm:$0xff]
        %v1531 = vld [vmem:[%s329 + $0x23a0] sm:$0xff]
        %v1532 = vld [vmem:[%s329 + $0x23a8] sm:$0xff]
        %v1533 = vld [vmem:[%s329 + $0x23b0] sm:$0xff]
        %v1534 = vld [vmem:[%s329 + $0x23b8] sm:$0xff]
        %v1535 = vld [vmem:[%s329 + $0x23c0] sm:$0xff]
        %v1536 = vld [vmem:[%s329 + $0x23c8] sm:$0xff]
        %v1537 = vld [vmem:[%s329 + $0x23d0] sm:$0xff]
        %v1538 = vld [vmem:[%s329 + $0x23d8] sm:$0xff]
        %v1539 = vld [vmem:[%s329 + $0x23e0] sm:$0xff]
        %v1540 = vld [vmem:[%s329 + $0x23e8] sm:$0xff]
        %v1541 = vld [vmem:[%s329 + $0x23f0] sm:$0xff]
        %v1542 = vld [vmem:[%s329 + $0x23f8] sm:$0xff]
        %v1543 = vld [vmem:[%s329 + $0x2400] sm:$0xff]
        %v1544 = vld [vmem:[%s329 + $0x2408] sm:$0xff]
        %v1545 = vld [vmem:[%s329 + $0x2410] sm:$0xff]
        %v1546 = vld [vmem:[%s329 + $0x2418] sm:$0xff]
        %v1547 = vld [vmem:[%s329 + $0x2420] sm:$0xff]
        %v1548 = vld [vmem:[%s329 + $0x2428] sm:$0xff]
        %v1549 = vld [vmem:[%s329 + $0x2430] sm:$0xff]
        %v1550 = vld [vmem:[%s329 + $0x2438] sm:$0xff]
        %v1551 = vld [vmem:[%s329 + $0x2440] sm:$0xff]
        %v1552 = vld [vmem:[%s329 + $0x2448] sm:$0xff]
        %v1553 = vld [vmem:[%s329 + $0x2450] sm:$0xff]
        %v1554 = vld [vmem:[%s329 + $0x2458] sm:$0xff]
        %v1555 = vld [vmem:[%s329 + $0x2460] sm:$0xff]
        %v1556 = vld [vmem:[%s329 + $0x2468] sm:$0xff]
        %v1557 = vld [vmem:[%s329 + $0x2470] sm:$0xff]
        %v1558 = vld [vmem:[%s329 + $0x2478] sm:$0xff]
        %v1559 = vld [vmem:[%s329 + $0x2480] sm:$0xff]
        %v1560 = vld [vmem:[%s329 + $0x2488] sm:$0xff]
        %v1561 = vld [vmem:[%s329 + $0x2490] sm:$0xff]
        %v1562 = vld [vmem:[%s329 + $0x2498] sm:$0xff]
        %v1563 = vld [vmem:[%s329 + $0x24a0] sm:$0xff]
        %v1564 = vld [vmem:[%s329 + $0x24a8] sm:$0xff]
        %v1565 = vld [vmem:[%s329 + $0x24b0] sm:$0xff]
        %v1566 = vld [vmem:[%s329 + $0x24b8] sm:$0xff]
        %v1567 = vld [vmem:[%s329 + $0x24c0] sm:$0xff]
        %v1568 = vld [vmem:[%s329 + $0x24c8] sm:$0xff]
        %v1569 = vld [vmem:[%s329 + $0x24d0] sm:$0xff]
        %v1570 = vld [vmem:[%s329 + $0x24d8] sm:$0xff]
        %v1571 = vld [vmem:[%s329 + $0x24e0] sm:$0xff]
        %v1572 = vld [vmem:[%s329 + $0x24e8] sm:$0xff]
        %v1573 = vld [vmem:[%s329 + $0x24f0] sm:$0xff]
        %v1574 = vld [vmem:[%s329 + $0x24f8] sm:$0xff]
        %v1575 = vld [vmem:[%s329 + $0x2500] sm:$0xff]
        %v1576 = vld [vmem:[%s329 + $0x2508] sm:$0xff]
        %v1577 = vld [vmem:[%s329 + $0x2510] sm:$0xff]
        %v1578 = vld [vmem:[%s329 + $0x2518] sm:$0xff]
        %v1579 = vld [vmem:[%s329 + $0x2520] sm:$0xff]
        %v1580 = vld [vmem:[%s329 + $0x2528] sm:$0xff]
        %v1581 = vld [vmem:[%s329 + $0x2530] sm:$0xff]
        %v1582 = vld [vmem:[%s329 + $0x2538] sm:$0xff]
        %v1583 = vld [vmem:[%s329 + $0x2540] sm:$0xff]
        %v1584 = vld [vmem:[%s329 + $0x2548] sm:$0xff]
        %v1585 = vld [vmem:[%s329 + $0x2550] sm:$0xff]
        %v1586 = vld [vmem:[%s329 + $0x2558] sm:$0xff]
        %v1587 = vld [vmem:[%s329 + $0x2560] sm:$0xff]
        %v1588 = vld [vmem:[%s329 + $0x2568] sm:$0xff]
        %v1589 = vld [vmem:[%s329 + $0x2570] sm:$0xff]
        %v1590 = vld [vmem:[%s329 + $0x2578] sm:$0xff]
        %v1591 = vld [vmem:[%s329 + $0x2580] sm:$0xff]
        %v1592 = vld [vmem:[%s329 + $0x2588] sm:$0xff]
        %v1593 = vld [vmem:[%s329 + $0x2590] sm:$0xff]
        %v1594 = vld [vmem:[%s329 + $0x2598] sm:$0xff]
        %v1595 = vld [vmem:[%s329 + $0x25a0] sm:$0xff]
        %v1596 = vld [vmem:[%s329 + $0x25a8] sm:$0xff]
        %v1597 = vld [vmem:[%s329 + $0x25b0] sm:$0xff]
        %v1598 = vld [vmem:[%s329 + $0x25b8] sm:$0xff]
        %v1599 = vld [vmem:[%s329 + $0x25c0] sm:$0xff]
        %v1600 = vld [vmem:[%s329 + $0x25c8] sm:$0xff]
        %v1601 = vld [vmem:[%s329 + $0x25d0] sm:$0xff]
        %v1602 = vld [vmem:[%s329 + $0x25d8] sm:$0xff]
        %v1603 = vld [vmem:[%s329 + $0x25e0] sm:$0xff]
        %v1604 = vld [vmem:[%s329 + $0x25e8] sm:$0xff]
        %v1605 = vld [vmem:[%s329 + $0x25f0] sm:$0xff]
        %v1606 = vld [vmem:[%s329 + $0x25f8] sm:$0xff]
        %v1607 = vld [vmem:[%s329 + $0x2600] sm:$0xff]
        %v1608 = vld [vmem:[%s329 + $0x2608] sm:$0xff]
        %v1609 = vld [vmem:[%s329 + $0x2610] sm:$0xff]
        %v1610 = vld [vmem:[%s329 + $0x2618] sm:$0xff]
        %v1611 = vld [vmem:[%s329 + $0x2620] sm:$0xff]
        %v1612 = vld [vmem:[%s329 + $0x2628] sm:$0xff]
        %v1613 = vld [vmem:[%s329 + $0x2630] sm:$0xff]
        %v1614 = vld [vmem:[%s329 + $0x2638] sm:$0xff]
        %v1615 = vld [vmem:[%s329 + $0x2640] sm:$0xff]
        %v1616 = vld [vmem:[%s329 + $0x2648] sm:$0xff]
        %v1617 = vld [vmem:[%s329 + $0x2650] sm:$0xff]
        %v1618 = vld [vmem:[%s329 + $0x2658] sm:$0xff]
        %v1619 = vld [vmem:[%s329 + $0x2660] sm:$0xff]
        %v1620 = vld [vmem:[%s329 + $0x2668] sm:$0xff]
        %v1621 = vld [vmem:[%s329 + $0x2670] sm:$0xff]
        %v1622 = vld [vmem:[%s329 + $0x2678] sm:$0xff]
        %v1623 = vld [vmem:[%s329 + $0x2680] sm:$0xff]
        %v1624 = vld [vmem:[%s329 + $0x2688] sm:$0xff]
        %v1625 = vld [vmem:[%s329 + $0x2690] sm:$0xff]
        %v1626 = vld [vmem:[%s329 + $0x2698] sm:$0xff]
        %v1627 = vld [vmem:[%s329 + $0x26a0] sm:$0xff]
        %v1628 = vld [vmem:[%s329 + $0x26a8] sm:$0xff]
        %v1629 = vld [vmem:[%s329 + $0x26b0] sm:$0xff]
        %v1630 = vld [vmem:[%s329 + $0x26b8] sm:$0xff]
        %v1631 = vld [vmem:[%s329 + $0x26c0] sm:$0xff]
        %v1632 = vld [vmem:[%s329 + $0x26c8] sm:$0xff]
        %v1633 = vld [vmem:[%s329 + $0x26d0] sm:$0xff]
        %v1634 = vld [vmem:[%s329 + $0x26d8] sm:$0xff]
        %v1635 = vld [vmem:[%s329 + $0x26e0] sm:$0xff]
        %v1636 = vld [vmem:[%s329 + $0x26e8] sm:$0xff]
        %v1637 = vld [vmem:[%s329 + $0x26f0] sm:$0xff]
        %v1638 = vld [vmem:[%s329 + $0x26f8] sm:$0xff]
        %v1639 = vld [vmem:[%s329 + $0x2700] sm:$0xff]
        %v1640 = vld [vmem:[%s329 + $0x2708] sm:$0xff]
        %v1641 = vld [vmem:[%s329 + $0x2710] sm:$0xff]
        %v1642 = vld [vmem:[%s329 + $0x2718] sm:$0xff]
        %v1643 = vld [vmem:[%s329 + $0x2720] sm:$0xff]
        %v1644 = vld [vmem:[%s329 + $0x2728] sm:$0xff]
        %v1645 = vld [vmem:[%s329 + $0x2730] sm:$0xff]
        %v1646 = vld [vmem:[%s329 + $0x2738] sm:$0xff]
        %v1647 = vld [vmem:[%s329 + $0x2740] sm:$0xff]
        %v1648 = vld [vmem:[%s329 + $0x2748] sm:$0xff]
        %v1649 = vld [vmem:[%s329 + $0x2750] sm:$0xff]
        %v1650 = vld [vmem:[%s329 + $0x2758] sm:$0xff]
        %v1651 = vld [vmem:[%s329 + $0x2760] sm:$0xff]
        %v1652 = vld [vmem:[%s329 + $0x2768] sm:$0xff]
        %v1653 = vld [vmem:[%s329 + $0x2770] sm:$0xff]
        %v1654 = vld [vmem:[%s329 + $0x2778] sm:$0xff]
        %v1655 = vld [vmem:[%s329 + $0x2780] sm:$0xff]
        %v1656 = vld [vmem:[%s329 + $0x2788] sm:$0xff]
        %v1657 = vld [vmem:[%s329 + $0x2790] sm:$0xff]
        %v1658 = vld [vmem:[%s329 + $0x2798] sm:$0xff]
        %v1659 = vld [vmem:[%s329 + $0x27a0] sm:$0xff]
        %v1660 = vld [vmem:[%s329 + $0x27a8] sm:$0xff]
        %v1661 = vld [vmem:[%s329 + $0x27b0] sm:$0xff]
        %v1662 = vld [vmem:[%s329 + $0x27b8] sm:$0xff]
        %v1663 = vld [vmem:[%s329 + $0x27c0] sm:$0xff]
        %v1664 = vld [vmem:[%s329 + $0x27c8] sm:$0xff]
        %v1665 = vld [vmem:[%s329 + $0x27d0] sm:$0xff]
        %v1666 = vld [vmem:[%s329 + $0x27d8] sm:$0xff]
        %v1667 = vld [vmem:[%s329 + $0x27e0] sm:$0xff]
        %v1668 = vld [vmem:[%s329 + $0x27e8] sm:$0xff]
        %v1669 = vld [vmem:[%s329 + $0x27f0] sm:$0xff]
        %v1670 = vld [vmem:[%s329 + $0x27f8] sm:$0xff]
        %v1671 = vld [vmem:[%s329 + $0x2800] sm:$0xff]
        %v1672 = vld [vmem:[%s329 + $0x2808] sm:$0xff]
        %v1673 = vld [vmem:[%s329 + $0x2810] sm:$0xff]
        %v1674 = vld [vmem:[%s329 + $0x2818] sm:$0xff]
        %v1675 = vld [vmem:[%s329 + $0x2820] sm:$0xff]
        %v1676 = vld [vmem:[%s329 + $0x2828] sm:$0xff]
        %v1677 = vld [vmem:[%s329 + $0x2830] sm:$0xff]
        %v1678 = vld [vmem:[%s329 + $0x2838] sm:$0xff]
        %v1679 = vld [vmem:[%s329 + $0x2840] sm:$0xff]
        %v1680 = vld [vmem:[%s329 + $0x2848] sm:$0xff]
        %v1681 = vld [vmem:[%s329 + $0x2850] sm:$0xff]
        %v1682 = vld [vmem:[%s329 + $0x2858] sm:$0xff]
        %v1683 = vld [vmem:[%s329 + $0x2860] sm:$0xff]
        %v1684 = vld [vmem:[%s329 + $0x2868] sm:$0xff]
        %v1685 = vld [vmem:[%s329 + $0x2870] sm:$0xff]
        %v1686 = vld [vmem:[%s329 + $0x2878] sm:$0xff]
        %v1687 = vld [vmem:[%s329 + $0x2880] sm:$0xff]
        %v1688 = vld [vmem:[%s329 + $0x2888] sm:$0xff]
        %v1689 = vld [vmem:[%s329 + $0x2890] sm:$0xff]
        %v1690 = vld [vmem:[%s329 + $0x2898] sm:$0xff]
        %v1691 = vld [vmem:[%s329 + $0x28a0] sm:$0xff]
        %v1692 = vld [vmem:[%s329 + $0x28a8] sm:$0xff]
        %v1693 = vld [vmem:[%s329 + $0x28b0] sm:$0xff]
        %v1694 = vld [vmem:[%s329 + $0x28b8] sm:$0xff]
        %v1695 = vld [vmem:[%s329 + $0x28c0] sm:$0xff]
        %v1696 = vld [vmem:[%s329 + $0x28c8] sm:$0xff]
        %v1697 = vld [vmem:[%s329 + $0x28d0] sm:$0xff]
        %v1698 = vld [vmem:[%s329 + $0x28d8] sm:$0xff]
        %v1699 = vld [vmem:[%s329 + $0x28e0] sm:$0xff]
        %v1700 = vld [vmem:[%s329 + $0x28e8] sm:$0xff]
        %v1701 = vld [vmem:[%s329 + $0x28f0] sm:$0xff]
        %v1702 = vld [vmem:[%s329 + $0x28f8] sm:$0xff]
        %v1703 = vld [vmem:[%s329 + $0x2900] sm:$0xff]
        %v1704 = vld [vmem:[%s329 + $0x2908] sm:$0xff]
        %v1705 = vld [vmem:[%s329 + $0x2910] sm:$0xff]
        %v1706 = vld [vmem:[%s329 + $0x2918] sm:$0xff]
        %v1707 = vld [vmem:[%s329 + $0x2920] sm:$0xff]
        %v1708 = vld [vmem:[%s329 + $0x2928] sm:$0xff]
        %v1709 = vld [vmem:[%s329 + $0x2930] sm:$0xff]
        %v1710 = vld [vmem:[%s329 + $0x2938] sm:$0xff]
        %v1711 = vld [vmem:[%s329 + $0x2940] sm:$0xff]
        %v1712 = vld [vmem:[%s329 + $0x2948] sm:$0xff]
        %v1713 = vld [vmem:[%s329 + $0x2950] sm:$0xff]
        %v1714 = vld [vmem:[%s329 + $0x2958] sm:$0xff]
        %v1715 = vld [vmem:[%s329 + $0x2960] sm:$0xff]
        %v1716 = vld [vmem:[%s329 + $0x2968] sm:$0xff]
        %v1717 = vld [vmem:[%s329 + $0x2970] sm:$0xff]
        %v1718 = vld [vmem:[%s329 + $0x2978] sm:$0xff]
        %v1719 = vld [vmem:[%s329 + $0x2980] sm:$0xff]
        %v1720 = vld [vmem:[%s329 + $0x2988] sm:$0xff]
        %v1721 = vld [vmem:[%s329 + $0x2990] sm:$0xff]
        %v1722 = vld [vmem:[%s329 + $0x2998] sm:$0xff]
        %v1723 = vld [vmem:[%s329 + $0x29a0] sm:$0xff]
        %v1724 = vld [vmem:[%s329 + $0x29a8] sm:$0xff]
        %v1725 = vld [vmem:[%s329 + $0x29b0] sm:$0xff]
        %v1726 = vld [vmem:[%s329 + $0x29b8] sm:$0xff]
        %v1727 = vld [vmem:[%s329 + $0x29c0] sm:$0xff]
        %v1728 = vld [vmem:[%s329 + $0x29c8] sm:$0xff]
        %v1729 = vld [vmem:[%s329 + $0x29d0] sm:$0xff]
        %v1730 = vld [vmem:[%s329 + $0x29d8] sm:$0xff]
        %v1731 = vld [vmem:[%s329 + $0x29e0] sm:$0xff]
        %v1732 = vld [vmem:[%s329 + $0x29e8] sm:$0xff]
        %v1733 = vld [vmem:[%s329 + $0x29f0] sm:$0xff]
        %v1734 = vld [vmem:[%s329 + $0x29f8] sm:$0xff]
        %v1735 = vld [vmem:[%s329 + $0x2a00] sm:$0xff]
        %v1736 = vld [vmem:[%s329 + $0x2a08] sm:$0xff]
        %v1737 = vld [vmem:[%s329 + $0x2a10] sm:$0xff]
        %v1738 = vld [vmem:[%s329 + $0x2a18] sm:$0xff]
        %v1739 = vld [vmem:[%s329 + $0x2a20] sm:$0xff]
        %v1740 = vld [vmem:[%s329 + $0x2a28] sm:$0xff]
        %v1741 = vld [vmem:[%s329 + $0x2a30] sm:$0xff]
        %v1742 = vld [vmem:[%s329 + $0x2a38] sm:$0xff]
        %v1743 = vld [vmem:[%s329 + $0x2a40] sm:$0xff]
        %v1744 = vld [vmem:[%s329 + $0x2a48] sm:$0xff]
        %v1745 = vld [vmem:[%s329 + $0x2a50] sm:$0xff]
        %v1746 = vld [vmem:[%s329 + $0x2a58] sm:$0xff]
        %v1747 = vld [vmem:[%s329 + $0x2a60] sm:$0xff]
        %v1748 = vld [vmem:[%s329 + $0x2a68] sm:$0xff]
        %v1749 = vld [vmem:[%s329 + $0x2a70] sm:$0xff]
        %v1750 = vld [vmem:[%s329 + $0x2a78] sm:$0xff]
        %v1751 = vld [vmem:[%s329 + $0x2a80] sm:$0xff]
        %v1752 = vld [vmem:[%s329 + $0x2a88] sm:$0xff]
        %v1753 = vld [vmem:[%s329 + $0x2a90] sm:$0xff]
        %v1754 = vld [vmem:[%s329 + $0x2a98] sm:$0xff]
        %v1755 = vld [vmem:[%s329 + $0x2aa0] sm:$0xff]
        %v1756 = vld [vmem:[%s329 + $0x2aa8] sm:$0xff]
        %v1757 = vld [vmem:[%s329 + $0x2ab0] sm:$0xff]
        %v1758 = vld [vmem:[%s329 + $0x2ab8] sm:$0xff]
        %v1759 = vld [vmem:[%s329 + $0x2ac0] sm:$0xff]
        %v1760 = vld [vmem:[%s329 + $0x2ac8] sm:$0xff]
        %v1761 = vld [vmem:[%s329 + $0x2ad0] sm:$0xff]
        %v1762 = vld [vmem:[%s329 + $0x2ad8] sm:$0xff]
        %v1763 = vld [vmem:[%s329 + $0x2ae0] sm:$0xff]
        %v1764 = vld [vmem:[%s329 + $0x2ae8] sm:$0xff]
        %v1765 = vld [vmem:[%s329 + $0x2af0] sm:$0xff]
        %v1766 = vld [vmem:[%s329 + $0x2af8] sm:$0xff]
        %v1767 = vld [vmem:[%s329 + $0x2b00] sm:$0xff]
        %v1768 = vld [vmem:[%s329 + $0x2b08] sm:$0xff]
        %v1769 = vld [vmem:[%s329 + $0x2b10] sm:$0xff]
        %v1770 = vld [vmem:[%s329 + $0x2b18] sm:$0xff]
        %v1771 = vld [vmem:[%s329 + $0x2b20] sm:$0xff]
        %v1772 = vld [vmem:[%s329 + $0x2b28] sm:$0xff]
        %v1773 = vld [vmem:[%s329 + $0x2b30] sm:$0xff]
        %v1774 = vld [vmem:[%s329 + $0x2b38] sm:$0xff]
        %v1775 = vld [vmem:[%s329 + $0x2b40] sm:$0xff]
        %v1776 = vld [vmem:[%s329 + $0x2b48] sm:$0xff]
        %v1777 = vld [vmem:[%s329 + $0x2b50] sm:$0xff]
        %v1778 = vld [vmem:[%s329 + $0x2b58] sm:$0xff]
        %v1779 = vld [vmem:[%s329 + $0x2b60] sm:$0xff]
        %v1780 = vld [vmem:[%s329 + $0x2b68] sm:$0xff]
        %v1781 = vld [vmem:[%s329 + $0x2b70] sm:$0xff]
        %v1782 = vld [vmem:[%s329 + $0x2b78] sm:$0xff]
        %v1783 = vld [vmem:[%s329 + $0x2b80] sm:$0xff]
        %v1784 = vld [vmem:[%s329 + $0x2b88] sm:$0xff]
        %v1785 = vld [vmem:[%s329 + $0x2b90] sm:$0xff]
        %v1786 = vld [vmem:[%s329 + $0x2b98] sm:$0xff]
        %v1787 = vld [vmem:[%s329 + $0x2ba0] sm:$0xff]
        %v1788 = vld [vmem:[%s329 + $0x2ba8] sm:$0xff]
        %v1789 = vld [vmem:[%s329 + $0x2bb0] sm:$0xff]
        %v1790 = vld [vmem:[%s329 + $0x2bb8] sm:$0xff]
        %v1791 = vld [vmem:[%s329 + $0x2bc0] sm:$0xff]
        %v1792 = vld [vmem:[%s329 + $0x2bc8] sm:$0xff]
        %v1793 = vld [vmem:[%s329 + $0x2bd0] sm:$0xff]
        %v1794 = vld [vmem:[%s329 + $0x2bd8] sm:$0xff]
        %v1795 = vld [vmem:[%s329 + $0x2be0] sm:$0xff]
        %v1796 = vld [vmem:[%s329 + $0x2be8] sm:$0xff]
        %v1797 = vld [vmem:[%s329 + $0x2bf0] sm:$0xff]
        %v1798 = vld [vmem:[%s329 + $0x2bf8] sm:$0xff]
        %v1799 = vld [vmem:[%s329 + $0x2c00] sm:$0xff]
        %v1800 = vld [vmem:[%s329 + $0x2c08] sm:$0xff]
        %v1801 = vld [vmem:[%s329 + $0x2c10] sm:$0xff]
        %v1802 = vld [vmem:[%s329 + $0x2c18] sm:$0xff]
        %v1803 = vld [vmem:[%s329 + $0x2c20] sm:$0xff]
        %v1804 = vld [vmem:[%s329 + $0x2c28] sm:$0xff]
        %v1805 = vld [vmem:[%s329 + $0x2c30] sm:$0xff]
        %v1806 = vld [vmem:[%s329 + $0x2c38] sm:$0xff]
        %v1807 = vld [vmem:[%s329 + $0x2c40] sm:$0xff]
        %v1808 = vld [vmem:[%s329 + $0x2c48] sm:$0xff]
        %v1809 = vld [vmem:[%s329 + $0x2c50] sm:$0xff]
        %v1810 = vld [vmem:[%s329 + $0x2c58] sm:$0xff]
        %v1811 = vld [vmem:[%s329 + $0x2c60] sm:$0xff]
        %v1812 = vld [vmem:[%s329 + $0x2c68] sm:$0xff]
        %v1813 = vld [vmem:[%s329 + $0x2c70] sm:$0xff]
        %v1814 = vld [vmem:[%s329 + $0x2c78] sm:$0xff]
        %v1815 = vld [vmem:[%s329 + $0x2c80] sm:$0xff]
        %v1816 = vld [vmem:[%s329 + $0x2c88] sm:$0xff]
        %v1817 = vld [vmem:[%s329 + $0x2c90] sm:$0xff]
        %v1818 = vld [vmem:[%s329 + $0x2c98] sm:$0xff]
        %v1819 = vld [vmem:[%s329 + $0x2ca0] sm:$0xff]
        %v1820 = vld [vmem:[%s329 + $0x2ca8] sm:$0xff]
        %v1821 = vld [vmem:[%s329 + $0x2cb0] sm:$0xff]
        %v1822 = vld [vmem:[%s329 + $0x2cb8] sm:$0xff]
        %v1823 = vld [vmem:[%s329 + $0x2cc0] sm:$0xff]
        %v1824 = vld [vmem:[%s329 + $0x2cc8] sm:$0xff]
        %v1825 = vld [vmem:[%s329 + $0x2cd0] sm:$0xff]
        %v1826 = vld [vmem:[%s329 + $0x2cd8] sm:$0xff]
        %v1827 = vld [vmem:[%s329 + $0x2ce0] sm:$0xff]
        %v1828 = vld [vmem:[%s329 + $0x2ce8] sm:$0xff]
        %v1829 = vld [vmem:[%s329 + $0x2cf0] sm:$0xff]
        %v1830 = vld [vmem:[%s329 + $0x2cf8] sm:$0xff]
        %v1831 = vld [vmem:[%s329 + $0x2d00] sm:$0xff]
        %v1832 = vld [vmem:[%s329 + $0x2d08] sm:$0xff]
        %v1833 = vld [vmem:[%s329 + $0x2d10] sm:$0xff]
        %v1834 = vld [vmem:[%s329 + $0x2d18] sm:$0xff]
        %v1835 = vld [vmem:[%s329 + $0x2d20] sm:$0xff]
        %v1836 = vld [vmem:[%s329 + $0x2d28] sm:$0xff]
        %v1837 = vld [vmem:[%s329 + $0x2d30] sm:$0xff]
        %v1838 = vld [vmem:[%s329 + $0x2d38] sm:$0xff]
        %v1839 = vld [vmem:[%s329 + $0x2d40] sm:$0xff]
        %v1840 = vld [vmem:[%s329 + $0x2d48] sm:$0xff]
        %v1841 = vld [vmem:[%s329 + $0x2d50] sm:$0xff]
        %v1842 = vld [vmem:[%s329 + $0x2d58] sm:$0xff]
        %v1843 = vld [vmem:[%s329 + $0x2d60] sm:$0xff]
        %v1844 = vld [vmem:[%s329 + $0x2d68] sm:$0xff]
        %v1845 = vld [vmem:[%s329 + $0x2d70] sm:$0xff]
        %v1846 = vld [vmem:[%s329 + $0x2d78] sm:$0xff]
        %v1847 = vld [vmem:[%s329 + $0x2d80] sm:$0xff]
        %v1848 = vld [vmem:[%s329 + $0x2d88] sm:$0xff]
        %v1849 = vld [vmem:[%s329 + $0x2d90] sm:$0xff]
        %v1850 = vld [vmem:[%s329 + $0x2d98] sm:$0xff]
        %v1851 = vld [vmem:[%s329 + $0x2da0] sm:$0xff]
        %v1852 = vld [vmem:[%s329 + $0x2da8] sm:$0xff]
        %v1853 = vld [vmem:[%s329 + $0x2db0] sm:$0xff]
        %v1854 = vld [vmem:[%s329 + $0x2db8] sm:$0xff]
        %v1855 = vld [vmem:[%s329 + $0x2dc0] sm:$0xff]
        %v1856 = vld [vmem:[%s329 + $0x2dc8] sm:$0xff]
        %v1857 = vld [vmem:[%s329 + $0x2dd0] sm:$0xff]
        %v1858 = vld [vmem:[%s329 + $0x2dd8] sm:$0xff]
        %v1859 = vld [vmem:[%s329 + $0x2de0] sm:$0xff]
        %v1860 = vld [vmem:[%s329 + $0x2de8] sm:$0xff]
        %v1861 = vld [vmem:[%s329 + $0x2df0] sm:$0xff]
        %v1862 = vld [vmem:[%s329 + $0x2df8] sm:$0xff]
        %v1863 = vld [vmem:[%s329 + $0x2e00] sm:$0xff]
        %v1864 = vld [vmem:[%s329 + $0x2e08] sm:$0xff]
        %v1865 = vld [vmem:[%s329 + $0x2e10] sm:$0xff]
        %v1866 = vld [vmem:[%s329 + $0x2e18] sm:$0xff]
        %v1867 = vld [vmem:[%s329 + $0x2e20] sm:$0xff]
        %v1868 = vld [vmem:[%s329 + $0x2e28] sm:$0xff]
        %v1869 = vld [vmem:[%s329 + $0x2e30] sm:$0xff]
        %v1870 = vld [vmem:[%s329 + $0x2e38] sm:$0xff]
        %v1871 = vld [vmem:[%s329 + $0x2e40] sm:$0xff]
        %v1872 = vld [vmem:[%s329 + $0x2e48] sm:$0xff]
        %v1873 = vld [vmem:[%s329 + $0x2e50] sm:$0xff]
        %v1874 = vld [vmem:[%s329 + $0x2e58] sm:$0xff]
        %v1875 = vld [vmem:[%s329 + $0x2e60] sm:$0xff]
        %v1876 = vld [vmem:[%s329 + $0x2e68] sm:$0xff]
        %v1877 = vld [vmem:[%s329 + $0x2e70] sm:$0xff]
        %v1878 = vld [vmem:[%s329 + $0x2e78] sm:$0xff]
        %v1879 = vld [vmem:[%s329 + $0x2e80] sm:$0xff]
        %v1880 = vld [vmem:[%s329 + $0x2e88] sm:$0xff]
        %v1881 = vld [vmem:[%s329 + $0x2e90] sm:$0xff]
        %v1882 = vld [vmem:[%s329 + $0x2e98] sm:$0xff]
        %v1883 = vld [vmem:[%s329 + $0x2ea0] sm:$0xff]
        %v1884 = vld [vmem:[%s329 + $0x2ea8] sm:$0xff]
        %v1885 = vld [vmem:[%s329 + $0x2eb0] sm:$0xff]
        %v1886 = vld [vmem:[%s329 + $0x2eb8] sm:$0xff]
        %v1887 = vld [vmem:[%s329 + $0x2ec0] sm:$0xff]
        %v1888 = vld [vmem:[%s329 + $0x2ec8] sm:$0xff]
        %v1889 = vld [vmem:[%s329 + $0x2ed0] sm:$0xff]
        %v1890 = vld [vmem:[%s329 + $0x2ed8] sm:$0xff]
        %v1891 = vld [vmem:[%s329 + $0x2ee0] sm:$0xff]
        %v1892 = vld [vmem:[%s329 + $0x2ee8] sm:$0xff]
        %v1893 = vld [vmem:[%s329 + $0x2ef0] sm:$0xff]
        %v1894 = vld [vmem:[%s329 + $0x2ef8] sm:$0xff]
        %v1895 = vld [vmem:[%s329 + $0x2f00] sm:$0xff]
        %v1896 = vld [vmem:[%s329 + $0x2f08] sm:$0xff]
        %v1897 = vld [vmem:[%s329 + $0x2f10] sm:$0xff]
        %v1898 = vld [vmem:[%s329 + $0x2f18] sm:$0xff]
        %v1899 = vld [vmem:[%s329 + $0x2f20] sm:$0xff]
        %v1900 = vld [vmem:[%s329 + $0x2f28] sm:$0xff]
        %v1901 = vld [vmem:[%s329 + $0x2f30] sm:$0xff]
        %v1902 = vld [vmem:[%s329 + $0x2f38] sm:$0xff]
        %v1903 = vld [vmem:[%s329 + $0x2f40] sm:$0xff]
        %v1904 = vld [vmem:[%s329 + $0x2f48] sm:$0xff]
        %v1905 = vld [vmem:[%s329 + $0x2f50] sm:$0xff]
        %v1906 = vld [vmem:[%s329 + $0x2f58] sm:$0xff]
        %v1907 = vld [vmem:[%s329 + $0x2f60] sm:$0xff]
        %v1908 = vld [vmem:[%s329 + $0x2f68] sm:$0xff]
        %v1909 = vld [vmem:[%s329 + $0x2f70] sm:$0xff]
        %v1910 = vld [vmem:[%s329 + $0x2f78] sm:$0xff]
        %v1911 = vld [vmem:[%s329 + $0x2f80] sm:$0xff]
        %v1912 = vld [vmem:[%s329 + $0x2f88] sm:$0xff]
        %v1913 = vld [vmem:[%s329 + $0x2f90] sm:$0xff]
        %v1914 = vld [vmem:[%s329 + $0x2f98] sm:$0xff]
        %v1915 = vld [vmem:[%s329 + $0x2fa0] sm:$0xff]
        %v1916 = vld [vmem:[%s329 + $0x2fa8] sm:$0xff]
        %v1917 = vld [vmem:[%s329 + $0x2fb0] sm:$0xff]
        %v1918 = vld [vmem:[%s329 + $0x2fb8] sm:$0xff]
        %v1919 = vld [vmem:[%s329 + $0x2fc0] sm:$0xff]
        %v1920 = vld [vmem:[%s329 + $0x2fc8] sm:$0xff]
        %v1921 = vld [vmem:[%s329 + $0x2fd0] sm:$0xff]
        %v1922 = vld [vmem:[%s329 + $0x2fd8] sm:$0xff]
        %v1923 = vld [vmem:[%s329 + $0x2fe0] sm:$0xff]
        %v1924 = vld [vmem:[%s329 + $0x2fe8] sm:$0xff]
        %v1925 = vld [vmem:[%s329 + $0x2ff0] sm:$0xff]
        %v1926 = vld [vmem:[%s329 + $0x2ff8] sm:$0xff]
        %v1927 = vld [vmem:[%s329 + $0x3000] sm:$0xff]
        %v1928 = vld [vmem:[%s329 + $0x3008] sm:$0xff]
        %v1929 = vld [vmem:[%s329 + $0x3010] sm:$0xff]
        %v1930 = vld [vmem:[%s329 + $0x3018] sm:$0xff]
        %v1931 = vld [vmem:[%s329 + $0x3020] sm:$0xff]
        %v1932 = vld [vmem:[%s329 + $0x3028] sm:$0xff]
        %v1933 = vld [vmem:[%s329 + $0x3030] sm:$0xff]
        %v1934 = vld [vmem:[%s329 + $0x3038] sm:$0xff]
        %v1935 = vld [vmem:[%s329 + $0x3040] sm:$0xff]
        %v1936 = vld [vmem:[%s329 + $0x3048] sm:$0xff]
        %v1937 = vld [vmem:[%s329 + $0x3050] sm:$0xff]
        %v1938 = vld [vmem:[%s329 + $0x3058] sm:$0xff]
        %v1939 = vld [vmem:[%s329 + $0x3060] sm:$0xff]
        %v1940 = vld [vmem:[%s329 + $0x3068] sm:$0xff]
        %v1941 = vld [vmem:[%s329 + $0x3070] sm:$0xff]
        %v1942 = vld [vmem:[%s329 + $0x3078] sm:$0xff]
        %v1943 = vld [vmem:[%s329 + $0x3080] sm:$0xff]
        %v1944 = vld [vmem:[%s329 + $0x3088] sm:$0xff]
        %v1945 = vld [vmem:[%s329 + $0x3090] sm:$0xff]
        %v1946 = vld [vmem:[%s329 + $0x3098] sm:$0xff]
        %v1947 = vld [vmem:[%s329 + $0x30a0] sm:$0xff]
        %v1948 = vld [vmem:[%s329 + $0x30a8] sm:$0xff]
        %v1949 = vld [vmem:[%s329 + $0x30b0] sm:$0xff]
        %v1950 = vld [vmem:[%s329 + $0x30b8] sm:$0xff]
        %v1951 = vld [vmem:[%s329 + $0x30c0] sm:$0xff]
        %v1952 = vld [vmem:[%s329 + $0x30c8] sm:$0xff]
        %v1953 = vld [vmem:[%s329 + $0x30d0] sm:$0xff]
        %v1954 = vld [vmem:[%s329 + $0x30d8] sm:$0xff]
        %v1955 = vld [vmem:[%s329 + $0x30e0] sm:$0xff]
        %v1956 = vld [vmem:[%s329 + $0x30e8] sm:$0xff]
        %v1957 = vld [vmem:[%s329 + $0x30f0] sm:$0xff]
        %v1958 = vld [vmem:[%s329 + $0x30f8] sm:$0xff]
        %v1959 = vld [vmem:[%s329 + $0x3100] sm:$0xff]
        %v1960 = vld [vmem:[%s329 + $0x3108] sm:$0xff]
        %v1961 = vld [vmem:[%s329 + $0x3110] sm:$0xff]
        %v1962 = vld [vmem:[%s329 + $0x3118] sm:$0xff]
        %v1963 = vld [vmem:[%s329 + $0x3120] sm:$0xff]
        %v1964 = vld [vmem:[%s329 + $0x3128] sm:$0xff]
        %v1965 = vld [vmem:[%s329 + $0x3130] sm:$0xff]
        %v1966 = vld [vmem:[%s329 + $0x3138] sm:$0xff]
        %v1967 = vld [vmem:[%s329 + $0x3140] sm:$0xff]
        %v1968 = vld [vmem:[%s329 + $0x3148] sm:$0xff]
        %v1969 = vld [vmem:[%s329 + $0x3150] sm:$0xff]
        %v1970 = vld [vmem:[%s329 + $0x3158] sm:$0xff]
        %v1971 = vld [vmem:[%s329 + $0x3160] sm:$0xff]
        %v1972 = vld [vmem:[%s329 + $0x3168] sm:$0xff]
        %v1973 = vld [vmem:[%s329 + $0x3170] sm:$0xff]
        %v1974 = vld [vmem:[%s329 + $0x3178] sm:$0xff]
        %v1975 = vld [vmem:[%s329 + $0x3180] sm:$0xff]
        %v1976 = vld [vmem:[%s329 + $0x3188] sm:$0xff]
        %v1977 = vld [vmem:[%s329 + $0x3190] sm:$0xff]
        %v1978 = vld [vmem:[%s329 + $0x3198] sm:$0xff]
        %v1979 = vld [vmem:[%s329 + $0x31a0] sm:$0xff]
        %v1980 = vld [vmem:[%s329 + $0x31a8] sm:$0xff]
        %v1981 = vld [vmem:[%s329 + $0x31b0] sm:$0xff]
        %v1982 = vld [vmem:[%s329 + $0x31b8] sm:$0xff]
        %v1983 = vld [vmem:[%s329 + $0x31c0] sm:$0xff]
        %v1984 = vld [vmem:[%s329 + $0x31c8] sm:$0xff]
        %v1985 = vld [vmem:[%s329 + $0x31d0] sm:$0xff]
        %v1986 = vld [vmem:[%s329 + $0x31d8] sm:$0xff]
        %v1987 = vld [vmem:[%s329 + $0x31e0] sm:$0xff]
        %v1988 = vld [vmem:[%s329 + $0x31e8] sm:$0xff]
        %v1989 = vld [vmem:[%s329 + $0x31f0] sm:$0xff]
        %v1990 = vld [vmem:[%s329 + $0x31f8] sm:$0xff]
        %v1991 = vld [vmem:[%s329 + $0x3200] sm:$0xff]
        %v1992 = vld [vmem:[%s329 + $0x3208] sm:$0xff]
        %v1993 = vld [vmem:[%s329 + $0x3210] sm:$0xff]
        %v1994 = vld [vmem:[%s329 + $0x3218] sm:$0xff]
        %v1995 = vld [vmem:[%s329 + $0x3220] sm:$0xff]
        %v1996 = vld [vmem:[%s329 + $0x3228] sm:$0xff]
        %v1997 = vld [vmem:[%s329 + $0x3230] sm:$0xff]
        %v1998 = vld [vmem:[%s329 + $0x3238] sm:$0xff]
        %v1999 = vld [vmem:[%s329 + $0x3240] sm:$0xff]
        %v2000 = vld [vmem:[%s329 + $0x3248] sm:$0xff]
        %v2001 = vld [vmem:[%s329 + $0x3250] sm:$0xff]
        %v2002 = vld [vmem:[%s329 + $0x3258] sm:$0xff]
        %v2003 = vld [vmem:[%s329 + $0x3260] sm:$0xff]
        %v2004 = vld [vmem:[%s329 + $0x3268] sm:$0xff]
        %v2005 = vld [vmem:[%s329 + $0x3270] sm:$0xff]
        %v2006 = vld [vmem:[%s329 + $0x3278] sm:$0xff]
        %v2007 = vld [vmem:[%s329 + $0x3280] sm:$0xff]
        %v2008 = vld [vmem:[%s329 + $0x3288] sm:$0xff]
        %v2009 = vld [vmem:[%s329 + $0x3290] sm:$0xff]
        %v2010 = vld [vmem:[%s329 + $0x3298] sm:$0xff]
        %v2011 = vld [vmem:[%s329 + $0x32a0] sm:$0xff]
        %v2012 = vld [vmem:[%s329 + $0x32a8] sm:$0xff]
        %v2013 = vld [vmem:[%s329 + $0x32b0] sm:$0xff]
        %v2014 = vld [vmem:[%s329 + $0x32b8] sm:$0xff]
        %v2015 = vld [vmem:[%s329 + $0x32c0] sm:$0xff]
        %v2016 = vld [vmem:[%s329 + $0x32c8] sm:$0xff]
        %v2017 = vld [vmem:[%s329 + $0x32d0] sm:$0xff]
        %v2018 = vld [vmem:[%s329 + $0x32d8] sm:$0xff]
        %v2019 = vld [vmem:[%s329 + $0x32e0] sm:$0xff]
        %v2020 = vld [vmem:[%s329 + $0x32e8] sm:$0xff]
        %v2021 = vld [vmem:[%s329 + $0x32f0] sm:$0xff]
        %v2022 = vld [vmem:[%s329 + $0x32f8] sm:$0xff]
        %v2023 = vld [vmem:[%s329 + $0x3300] sm:$0xff]
        %v2024 = vld [vmem:[%s329 + $0x3308] sm:$0xff]
        %v2025 = vld [vmem:[%s329 + $0x3310] sm:$0xff]
        %v2026 = vld [vmem:[%s329 + $0x3318] sm:$0xff]
        %v2027 = vld [vmem:[%s329 + $0x3320] sm:$0xff]
        %v2028 = vld [vmem:[%s329 + $0x3328] sm:$0xff]
        %v2029 = vld [vmem:[%s329 + $0x3330] sm:$0xff]
        %v2030 = vld [vmem:[%s329 + $0x3338] sm:$0xff]
        %v2031 = vld [vmem:[%s329 + $0x3340] sm:$0xff]
        %v2032 = vld [vmem:[%s329 + $0x3348] sm:$0xff]
        %v2033 = vld [vmem:[%s329 + $0x3350] sm:$0xff]
        %v2034 = vld [vmem:[%s329 + $0x3358] sm:$0xff]
        %v2035 = vld [vmem:[%s329 + $0x3360] sm:$0xff]
        %v2036 = vld [vmem:[%s329 + $0x3368] sm:$0xff]
        %v2037 = vld [vmem:[%s329 + $0x3370] sm:$0xff]
        %v2038 = vld [vmem:[%s329 + $0x3378] sm:$0xff]
        %v2039 = vld [vmem:[%s329 + $0x3380] sm:$0xff]
        %v2040 = vld [vmem:[%s329 + $0x3388] sm:$0xff]
        %v2041 = vld [vmem:[%s329 + $0x3390] sm:$0xff]
        %v2042 = vld [vmem:[%s329 + $0x3398] sm:$0xff]
        %v2043 = vld [vmem:[%s329 + $0x33a0] sm:$0xff]
        %v2044 = vld [vmem:[%s329 + $0x33a8] sm:$0xff]
        %v2045 = vld [vmem:[%s329 + $0x33b0] sm:$0xff]
        %v2046 = vld [vmem:[%s329 + $0x33b8] sm:$0xff]
        %v2047 = vld [vmem:[%s329 + $0x33c0] sm:$0xff]
        %v2048 = vld [vmem:[%s329 + $0x33c8] sm:$0xff]
        %v2049 = vld [vmem:[%s329 + $0x33d0] sm:$0xff]
        %v2050 = vld [vmem:[%s329 + $0x33d8] sm:$0xff]
        %v2051 = vld [vmem:[%s329 + $0x33e0] sm:$0xff]
        %v2052 = vld [vmem:[%s329 + $0x33e8] sm:$0xff]
        %v2053 = vld [vmem:[%s329 + $0x33f0] sm:$0xff]
        %v2054 = vld [vmem:[%s329 + $0x33f8] sm:$0xff]
        %v2055 = vld [vmem:[%s329 + $0x3400] sm:$0xff]
        %v2056 = vld [vmem:[%s329 + $0x3408] sm:$0xff]
        %v2057 = vld [vmem:[%s329 + $0x3410] sm:$0xff]
        %v2058 = vld [vmem:[%s329 + $0x3418] sm:$0xff]
        %v2059 = vld [vmem:[%s329 + $0x3420] sm:$0xff]
        %v2060 = vld [vmem:[%s329 + $0x3428] sm:$0xff]
        %v2061 = vld [vmem:[%s329 + $0x3430] sm:$0xff]
        %v2062 = vld [vmem:[%s329 + $0x3438] sm:$0xff]
        %v2063 = vld [vmem:[%s329 + $0x3440] sm:$0xff]
        %v2064 = vld [vmem:[%s329 + $0x3448] sm:$0xff]
        %v2065 = vld [vmem:[%s329 + $0x3450] sm:$0xff]
        %v2066 = vld [vmem:[%s329 + $0x3458] sm:$0xff]
        %v2067 = vld [vmem:[%s329 + $0x3460] sm:$0xff]
        %v2068 = vld [vmem:[%s329 + $0x3468] sm:$0xff]
        %v2069 = vld [vmem:[%s329 + $0x3470] sm:$0xff]
        %v2070 = vld [vmem:[%s329 + $0x3478] sm:$0xff]
        %v2071 = vld [vmem:[%s329 + $0x3480] sm:$0xff]
        %v2072 = vld [vmem:[%s329 + $0x3488] sm:$0xff]
        %v2073 = vld [vmem:[%s329 + $0x3490] sm:$0xff]
        %v2074 = vld [vmem:[%s329 + $0x3498] sm:$0xff]
        %v2075 = vld [vmem:[%s329 + $0x34a0] sm:$0xff]
        %v2076 = vld [vmem:[%s329 + $0x34a8] sm:$0xff]
        %v2077 = vld [vmem:[%s329 + $0x34b0] sm:$0xff]
        %v2078 = vld [vmem:[%s329 + $0x34b8] sm:$0xff]
        %v2079 = vld [vmem:[%s329 + $0x34c0] sm:$0xff]
        %v2080 = vld [vmem:[%s329 + $0x34c8] sm:$0xff]
        %v2081 = vld [vmem:[%s329 + $0x34d0] sm:$0xff]
        %v2082 = vld [vmem:[%s329 + $0x34d8] sm:$0xff]
        %v2083 = vld [vmem:[%s329 + $0x34e0] sm:$0xff]
        %v2084 = vld [vmem:[%s329 + $0x34e8] sm:$0xff]
        %v2085 = vld [vmem:[%s329 + $0x34f0] sm:$0xff]
        %v2086 = vld [vmem:[%s329 + $0x34f8] sm:$0xff]
        %v2087 = vld [vmem:[%s329 + $0x3500] sm:$0xff]
        %v2088 = vld [vmem:[%s329 + $0x3508] sm:$0xff]
        %v2089 = vld [vmem:[%s329 + $0x3510] sm:$0xff]
        %v2090 = vld [vmem:[%s329 + $0x3518] sm:$0xff]
        %v2091 = vld [vmem:[%s329 + $0x3520] sm:$0xff]
        %v2092 = vld [vmem:[%s329 + $0x3528] sm:$0xff]
        %v2093 = vld [vmem:[%s329 + $0x3530] sm:$0xff]
        %v2094 = vld [vmem:[%s329 + $0x3538] sm:$0xff]
        %v2095 = vld [vmem:[%s329 + $0x3540] sm:$0xff]
        %v2096 = vld [vmem:[%s329 + $0x3548] sm:$0xff]
        %v2097 = vld [vmem:[%s329 + $0x3550] sm:$0xff]
        %v2098 = vld [vmem:[%s329 + $0x3558] sm:$0xff]
        %v2099 = vld [vmem:[%s329 + $0x3560] sm:$0xff]
        %v2100 = vld [vmem:[%s329 + $0x3568] sm:$0xff]
        %v2101 = vld [vmem:[%s329 + $0x3570] sm:$0xff]
        %v2102 = vld [vmem:[%s329 + $0x3578] sm:$0xff]
        %v2103 = vld [vmem:[%s329 + $0x3580] sm:$0xff]
        %v2104 = vld [vmem:[%s329 + $0x3588] sm:$0xff]
        %v2105 = vld [vmem:[%s329 + $0x3590] sm:$0xff]
        %v2106 = vld [vmem:[%s329 + $0x3598] sm:$0xff]
        %v2107 = vld [vmem:[%s329 + $0x35a0] sm:$0xff]
        %v2108 = vld [vmem:[%s329 + $0x35a8] sm:$0xff]
        %v2109 = vld [vmem:[%s329 + $0x35b0] sm:$0xff]
        %v2110 = vld [vmem:[%s329 + $0x35b8] sm:$0xff]
        %v2111 = vld [vmem:[%s329 + $0x35c0] sm:$0xff]
        %v2112 = vld [vmem:[%s329 + $0x35c8] sm:$0xff]
        %v2113 = vld [vmem:[%s329 + $0x35d0] sm:$0xff]
        %v2114 = vld [vmem:[%s329 + $0x35d8] sm:$0xff]
        %v2115 = vld [vmem:[%s329 + $0x35e0] sm:$0xff]
        %v2116 = vld [vmem:[%s329 + $0x35e8] sm:$0xff]
        %v2117 = vld [vmem:[%s329 + $0x35f0] sm:$0xff]
        %v2118 = vld [vmem:[%s329 + $0x35f8] sm:$0xff]
        %v2123 = vcombine.high %v387, %v387
        %v2125 = vunpack.c.l.s4 1966171168
        %v2126 = vunpack.c.0.s8 %v2125
        %v2127 = vlaneseq
        %v2128 = vshrl.u32 %v2127, 7
        %v2129 = vsub.s32 %v2126, %v2128
        %v2130 = vrot.slane %v387, %v2129
        %v2132 = vunpack.c.l.s4 1966171168
        %v2133 = vunpack.c.0.s8 %v2132
        %v2134 = vlaneseq
        %v2135 = vshrl.u32 %v2134, 7
        %v2136 = vsub.s32 %v2133, %v2135
        %v2137 = vrot.slane %v2123, %v2136
        %v2138 = vcombine.high %v2130, %v2130
        %v2139 = vcombine.high %v2137, %v2137
        %v2141 = vunpack.c.l.s4 1966171168
        %v2142 = vunpack.c.0.s8 %v2141
        %v2143 = vlaneseq
        %v2144 = vshrl.u32 %v2143, 7
        %v2145 = vsub.s32 %v2142, %v2144
        %v2146 = vrot.slane %v2130, %v2145
        %v2148 = vunpack.c.l.s4 1966171168
        %v2149 = vunpack.c.0.s8 %v2148
        %v2150 = vlaneseq
        %v2151 = vshrl.u32 %v2150, 7
        %v2152 = vsub.s32 %v2149, %v2151
        %v2153 = vrot.slane %v2137, %v2152
        %v2155 = vunpack.c.l.s4 1966171168
        %v2156 = vunpack.c.0.s8 %v2155
        %v2157 = vlaneseq
        %v2158 = vshrl.u32 %v2157, 7
        %v2159 = vsub.s32 %v2156, %v2158
        %v2160 = vrot.slane %v2138, %v2159
        %v2162 = vunpack.c.l.s4 1966171168
        %v2163 = vunpack.c.0.s8 %v2162
        %v2164 = vlaneseq
        %v2165 = vshrl.u32 %v2164, 7
        %v2166 = vsub.s32 %v2163, %v2165
        %v2167 = vrot.slane %v2139, %v2166
        %v2168 = vcombine.high %v2146, %v2146
        %v2169 = vcombine.high %v2153, %v2153
        %v2170 = vcombine.high %v2160, %v2160
        %v2171 = vcombine.high %v2167, %v2167
        %v2172 = vcombine.high %v388, %v388
        %v2174 = vunpack.c.l.s4 1966171168
        %v2175 = vunpack.c.0.s8 %v2174
        %v2176 = vlaneseq
        %v2177 = vshrl.u32 %v2176, 7
        %v2178 = vsub.s32 %v2175, %v2177
        %v2179 = vrot.slane %v388, %v2178
        %v2181 = vunpack.c.l.s4 1966171168
        %v2182 = vunpack.c.0.s8 %v2181
        %v2183 = vlaneseq
        %v2184 = vshrl.u32 %v2183, 7
        %v2185 = vsub.s32 %v2182, %v2184
        %v2186 = vrot.slane %v2172, %v2185
        %v2187 = vcombine.high %v2179, %v2179
        %v2188 = vcombine.high %v2186, %v2186
        %v2190 = vunpack.c.l.s4 1966171168
        %v2191 = vunpack.c.0.s8 %v2190
        %v2192 = vlaneseq
        %v2193 = vshrl.u32 %v2192, 7
        %v2194 = vsub.s32 %v2191, %v2193
        %v2195 = vrot.slane %v2179, %v2194
        %v2197 = vunpack.c.l.s4 1966171168
        %v2198 = vunpack.c.0.s8 %v2197
        %v2199 = vlaneseq
        %v2200 = vshrl.u32 %v2199, 7
        %v2201 = vsub.s32 %v2198, %v2200
        %v2202 = vrot.slane %v2186, %v2201
        %v2204 = vunpack.c.l.s4 1966171168
        %v2205 = vunpack.c.0.s8 %v2204
        %v2206 = vlaneseq
        %v2207 = vshrl.u32 %v2206, 7
        %v2208 = vsub.s32 %v2205, %v2207
        %v2209 = vrot.slane %v2187, %v2208
        %v2211 = vunpack.c.l.s4 1966171168
        %v2212 = vunpack.c.0.s8 %v2211
        %v2213 = vlaneseq
        %v2214 = vshrl.u32 %v2213, 7
        %v2215 = vsub.s32 %v2212, %v2214
        %v2216 = vrot.slane %v2188, %v2215
        %v2217 = vcombine.high %v2195, %v2195
        %v2218 = vcombine.high %v2202, %v2202
        %v2219 = vcombine.high %v2209, %v2209
        %v2220 = vcombine.high %v2216, %v2216
        %v2221 = vcombine.high %v389, %v389
        %v2223 = vunpack.c.l.s4 1966171168
        %v2224 = vunpack.c.0.s8 %v2223
        %v2225 = vlaneseq
        %v2226 = vshrl.u32 %v2225, 7
        %v2227 = vsub.s32 %v2224, %v2226
        %v2228 = vrot.slane %v389, %v2227
        %v2230 = vunpack.c.l.s4 1966171168
        %v2231 = vunpack.c.0.s8 %v2230
        %v2232 = vlaneseq
        %v2233 = vshrl.u32 %v2232, 7
        %v2234 = vsub.s32 %v2231, %v2233
        %v2235 = vrot.slane %v2221, %v2234
        %v2236 = vcombine.high %v2228, %v2228
        %v2237 = vcombine.high %v2235, %v2235
        %v2239 = vunpack.c.l.s4 1966171168
        %v2240 = vunpack.c.0.s8 %v2239
        %v2241 = vlaneseq
        %v2242 = vshrl.u32 %v2241, 7
        %v2243 = vsub.s32 %v2240, %v2242
        %v2244 = vrot.slane %v2228, %v2243
        %v2246 = vunpack.c.l.s4 1966171168
        %v2247 = vunpack.c.0.s8 %v2246
        %v2248 = vlaneseq
        %v2249 = vshrl.u32 %v2248, 7
        %v2250 = vsub.s32 %v2247, %v2249
        %v2251 = vrot.slane %v2235, %v2250
        %v2253 = vunpack.c.l.s4 1966171168
        %v2254 = vunpack.c.0.s8 %v2253
        %v2255 = vlaneseq
        %v2256 = vshrl.u32 %v2255, 7
        %v2257 = vsub.s32 %v2254, %v2256
        %v2258 = vrot.slane %v2236, %v2257
        %v2260 = vunpack.c.l.s4 1966171168
        %v2261 = vunpack.c.0.s8 %v2260
        %v2262 = vlaneseq
        %v2263 = vshrl.u32 %v2262, 7
        %v2264 = vsub.s32 %v2261, %v2263
        %v2265 = vrot.slane %v2237, %v2264
        %v2266 = vcombine.high %v2244, %v2244
        %v2267 = vcombine.high %v2251, %v2251
        %v2268 = vcombine.high %v2258, %v2258
        %v2269 = vcombine.high %v2265, %v2265
        %v2271 = vunpack.c.l.s4 1966171168
        %v2272 = vunpack.c.0.s8 %v2271
        %v2273 = vlaneseq
        %v2274 = vshrl.u32 %v2273, 7
        %v2275 = vsub.s32 %v2272, %v2274
        %v2276 = vrot.slane %v390, %v2275
        %v2277 = vcombine.high %v2276, %v2276
        %v2279 = vunpack.c.l.s4 1966171168
        %v2280 = vunpack.c.0.s8 %v2279
        %v2281 = vlaneseq
        %v2282 = vshrl.u32 %v2281, 7
        %v2283 = vsub.s32 %v2280, %v2282
        %v2284 = vrot.slane %v2276, %v2283
        %v2286 = vunpack.c.l.s4 1966171168
        %v2287 = vunpack.c.0.s8 %v2286
        %v2288 = vlaneseq
        %v2289 = vshrl.u32 %v2288, 7
        %v2290 = vsub.s32 %v2287, %v2289
        %v2291 = vrot.slane %v2277, %v2290
        %v2292 = vcombine.high %v2284, %v2284
        %v4048 = vunpack.c.l.b16 %v391
        %v4049 = vunpack.c.h.b16 %v391
        %v4050 = vunpack.c.l.b16 %v392
        %v4051 = vunpack.c.h.b16 %v392
        %v4052 = vunpack.c.l.b16 %v393
        %v4053 = vunpack.c.h.b16 %v393
        %v4054 = vunpack.c.l.b16 %v394
        %v4055 = vunpack.c.h.b16 %v394
        %v4056 = vunpack.c.l.b16 %v395
        %v4057 = vunpack.c.h.b16 %v395
        %v4058 = vunpack.c.l.b16 %v396
        %v4059 = vunpack.c.h.b16 %v396
        %v4060 = vunpack.c.l.b16 %v397
        %v4061 = vunpack.c.h.b16 %v397
        %v4062 = vunpack.c.l.b16 %v398
        %v4063 = vunpack.c.h.b16 %v398
        %v4064 = vunpack.c.l.b16 %v399
        %v4065 = vunpack.c.h.b16 %v399
        %v4066 = vunpack.c.l.b16 %v400
        %v4067 = vunpack.c.h.b16 %v400
        %v4068 = vunpack.c.l.b16 %v401
        %v4069 = vunpack.c.h.b16 %v401
        %v4070 = vunpack.c.l.b16 %v402
        %v4071 = vunpack.c.h.b16 %v402
        %v4072 = vunpack.c.l.b16 %v403
        %v4073 = vunpack.c.h.b16 %v403
        %v4074 = vunpack.c.l.b16 %v404
        %v4075 = vunpack.c.h.b16 %v404
        %v4076 = vunpack.c.l.b16 %v405
        %v4077 = vunpack.c.h.b16 %v405
        %v4078 = vunpack.c.l.b16 %v406
        %v4079 = vunpack.c.h.b16 %v406
        %v4080 = vunpack.c.l.b16 %v407
        %v4081 = vunpack.c.h.b16 %v407
        %v4082 = vunpack.c.l.b16 %v408
        %v4083 = vunpack.c.h.b16 %v408
        %v4084 = vunpack.c.l.b16 %v409
        %v4085 = vunpack.c.h.b16 %v409
        %v4086 = vunpack.c.l.b16 %v410
        %v4087 = vunpack.c.h.b16 %v410
        %v4088 = vunpack.c.l.b16 %v411
        %v4089 = vunpack.c.h.b16 %v411
        %v4090 = vunpack.c.l.b16 %v412
        %v4091 = vunpack.c.h.b16 %v412
        %v4092 = vunpack.c.l.b16 %v413
        %v4093 = vunpack.c.h.b16 %v413
        %v4094 = vunpack.c.l.b16 %v414
        %v4095 = vunpack.c.h.b16 %v414
        %v4096 = vunpack.c.l.b16 %v415
        %v4097 = vunpack.c.h.b16 %v415
        %v4098 = vunpack.c.l.b16 %v416
        %v4099 = vunpack.c.h.b16 %v416
        %v4100 = vunpack.c.l.b16 %v417
        %v4101 = vunpack.c.h.b16 %v417
        %v4102 = vunpack.c.l.b16 %v418
        %v4103 = vunpack.c.h.b16 %v418
        %v4104 = vunpack.c.l.b16 %v419
        %v4105 = vunpack.c.h.b16 %v419
        %v4106 = vunpack.c.l.b16 %v420
        %v4107 = vunpack.c.h.b16 %v420
        %v4108 = vunpack.c.l.b16 %v421
        %v4109 = vunpack.c.h.b16 %v421
        %v4110 = vunpack.c.l.b16 %v422
        %v4111 = vunpack.c.h.b16 %v422
        %v4112 = vunpack.c.l.b16 %v423
        %v4113 = vunpack.c.h.b16 %v423
        %v4114 = vunpack.c.l.b16 %v424
        %v4115 = vunpack.c.h.b16 %v424
        %v4116 = vunpack.c.l.b16 %v425
        %v4117 = vunpack.c.h.b16 %v425
        %v4118 = vunpack.c.l.b16 %v426
        %v4119 = vunpack.c.h.b16 %v426
        %v4120 = vunpack.c.l.b16 %v427
        %v4121 = vunpack.c.h.b16 %v427
        %v4122 = vunpack.c.l.b16 %v428
        %v4123 = vunpack.c.h.b16 %v428
        %v4124 = vunpack.c.l.b16 %v429
        %v4125 = vunpack.c.h.b16 %v429
        %v4126 = vunpack.c.l.b16 %v430
        %v4127 = vunpack.c.h.b16 %v430
        %v4128 = vunpack.c.l.b16 %v431
        %v4129 = vunpack.c.h.b16 %v431
        %v4130 = vunpack.c.l.b16 %v432
        %v4131 = vunpack.c.h.b16 %v432
        %v4132 = vunpack.c.l.b16 %v433
        %v4133 = vunpack.c.h.b16 %v433
        %v4134 = vunpack.c.l.b16 %v434
        %v4135 = vunpack.c.h.b16 %v434
        %v4136 = vunpack.c.l.b16 %v435
        %v4137 = vunpack.c.h.b16 %v435
        %v4138 = vunpack.c.l.b16 %v436
        %v4139 = vunpack.c.h.b16 %v436
        %v4140 = vunpack.c.l.b16 %v437
        %v4141 = vunpack.c.h.b16 %v437
        %v4142 = vunpack.c.l.b16 %v438
        %v4143 = vunpack.c.h.b16 %v438
        %v4144 = vunpack.c.l.b16 %v439
        %v4145 = vunpack.c.h.b16 %v439
        %v4146 = vunpack.c.l.b16 %v440
        %v4147 = vunpack.c.h.b16 %v440
        %v4148 = vunpack.c.l.b16 %v441
        %v4149 = vunpack.c.h.b16 %v441
        %v4150 = vunpack.c.l.b16 %v442
        %v4151 = vunpack.c.h.b16 %v442
        %v4152 = vunpack.c.l.b16 %v443
        %v4153 = vunpack.c.h.b16 %v443
        %v4154 = vunpack.c.l.b16 %v444
        %v4155 = vunpack.c.h.b16 %v444
        %v4156 = vunpack.c.l.b16 %v445
        %v4157 = vunpack.c.h.b16 %v445
        %v4158 = vunpack.c.l.b16 %v446
        %v4159 = vunpack.c.h.b16 %v446
        %v4160 = vunpack.c.l.b16 %v447
        %v4161 = vunpack.c.h.b16 %v447
        %v4162 = vunpack.c.l.b16 %v448
        %v4163 = vunpack.c.h.b16 %v448
        %v4164 = vunpack.c.l.b16 %v449
        %v4165 = vunpack.c.h.b16 %v449
        %v4166 = vunpack.c.l.b16 %v450
        %v4167 = vunpack.c.h.b16 %v450
        %v4168 = vunpack.c.l.b16 %v451
        %v4169 = vunpack.c.h.b16 %v451
        %v4170 = vunpack.c.l.b16 %v452
        %v4171 = vunpack.c.h.b16 %v452
        %v4172 = vunpack.c.l.b16 %v453
        %v4173 = vunpack.c.h.b16 %v453
        %v4174 = vunpack.c.l.b16 %v454
        %v4175 = vunpack.c.h.b16 %v454
        %v4176 = vunpack.c.l.b16 %v455
        %v4177 = vunpack.c.h.b16 %v455
        %v4178 = vunpack.c.l.b16 %v456
        %v4179 = vunpack.c.h.b16 %v456
        %v4180 = vunpack.c.l.b16 %v457
        %v4181 = vunpack.c.h.b16 %v457
        %v4182 = vunpack.c.l.b16 %v458
        %v4183 = vunpack.c.h.b16 %v458
        %v4184 = vunpack.c.l.b16 %v459
        %v4185 = vunpack.c.h.b16 %v459
        %v4186 = vunpack.c.l.b16 %v460
        %v4187 = vunpack.c.h.b16 %v460
        %v4188 = vunpack.c.l.b16 %v461
        %v4189 = vunpack.c.h.b16 %v461
        %v4190 = vunpack.c.l.b16 %v462
        %v4191 = vunpack.c.h.b16 %v462
        %v4192 = vunpack.c.l.b16 %v463
        %v4193 = vunpack.c.h.b16 %v463
        %v4194 = vunpack.c.l.b16 %v464
        %v4195 = vunpack.c.h.b16 %v464
        %v4196 = vunpack.c.l.b16 %v465
        %v4197 = vunpack.c.h.b16 %v465
        %v4198 = vunpack.c.l.b16 %v466
        %v4199 = vunpack.c.h.b16 %v466
        %v4200 = vunpack.c.l.b16 %v467
        %v4201 = vunpack.c.h.b16 %v467
        %v4202 = vunpack.c.l.b16 %v468
        %v4203 = vunpack.c.h.b16 %v468
        %v4204 = vunpack.c.l.b16 %v469
        %v4205 = vunpack.c.h.b16 %v469
        %v4206 = vunpack.c.l.b16 %v470
        %v4207 = vunpack.c.h.b16 %v470
        %v4208 = vunpack.c.l.b16 %v471
        %v4209 = vunpack.c.h.b16 %v471
        %v4210 = vunpack.c.l.b16 %v472
        %v4211 = vunpack.c.h.b16 %v472
        %v4212 = vunpack.c.l.b16 %v473
        %v4213 = vunpack.c.h.b16 %v473
        %v4214 = vunpack.c.l.b16 %v474
        %v4215 = vunpack.c.h.b16 %v474
        %v4216 = vunpack.c.l.b16 %v475
        %v4217 = vunpack.c.h.b16 %v475
        %v4218 = vunpack.c.l.b16 %v476
        %v4219 = vunpack.c.h.b16 %v476
        %v4220 = vunpack.c.l.b16 %v477
        %v4221 = vunpack.c.h.b16 %v477
        %v4222 = vunpack.c.l.b16 %v478
        %v4223 = vunpack.c.h.b16 %v478
        %v4224 = vunpack.c.l.b16 %v479
        %v4225 = vunpack.c.h.b16 %v479
        %v4226 = vunpack.c.l.b16 %v480
        %v4227 = vunpack.c.h.b16 %v480
        %v4228 = vunpack.c.l.b16 %v481
        %v4229 = vunpack.c.h.b16 %v481
        %v4230 = vunpack.c.l.b16 %v482
        %v4231 = vunpack.c.h.b16 %v482
        %v4232 = vunpack.c.l.b16 %v483
        %v4233 = vunpack.c.h.b16 %v483
        %v4234 = vunpack.c.l.b16 %v484
        %v4235 = vunpack.c.h.b16 %v484
        %v4236 = vunpack.c.l.b16 %v485
        %v4237 = vunpack.c.h.b16 %v485
        %v4238 = vunpack.c.l.b16 %v486
        %v4239 = vunpack.c.h.b16 %v486
        %v4240 = vunpack.c.l.b16 %v487
        %v4241 = vunpack.c.h.b16 %v487
        %v4242 = vunpack.c.l.b16 %v488
        %v4243 = vunpack.c.h.b16 %v488
        %v4244 = vunpack.c.l.b16 %v489
        %v4245 = vunpack.c.h.b16 %v489
        %v4246 = vunpack.c.l.b16 %v490
        %v4247 = vunpack.c.h.b16 %v490
        %v4248 = vunpack.c.l.b16 %v491
        %v4249 = vunpack.c.h.b16 %v491
        %v4250 = vunpack.c.l.b16 %v492
        %v4251 = vunpack.c.h.b16 %v492
        %v4252 = vunpack.c.l.b16 %v493
        %v4253 = vunpack.c.h.b16 %v493
        %v4254 = vunpack.c.l.b16 %v494
        %v4255 = vunpack.c.h.b16 %v494
        %v4256 = vunpack.c.l.b16 %v495
        %v4257 = vunpack.c.h.b16 %v495
        %v4258 = vunpack.c.l.b16 %v496
        %v4259 = vunpack.c.h.b16 %v496
        %v4260 = vunpack.c.l.b16 %v497
        %v4261 = vunpack.c.h.b16 %v497
        %v4262 = vunpack.c.l.b16 %v498
        %v4263 = vunpack.c.h.b16 %v498
        %v4264 = vunpack.c.l.b16 %v499
        %v4265 = vunpack.c.h.b16 %v499
        %v4266 = vunpack.c.l.b16 %v500
        %v4267 = vunpack.c.h.b16 %v500
        %v4268 = vunpack.c.l.b16 %v501
        %v4269 = vunpack.c.h.b16 %v501
        %v4270 = vunpack.c.l.b16 %v502
        %v4271 = vunpack.c.h.b16 %v502
        %v4272 = vunpack.c.l.b16 %v503
        %v4273 = vunpack.c.h.b16 %v503
        %v4274 = vunpack.c.l.b16 %v504
        %v4275 = vunpack.c.h.b16 %v504
        %v4276 = vunpack.c.l.b16 %v505
        %v4277 = vunpack.c.h.b16 %v505
        %v4278 = vunpack.c.l.b16 %v506
        %v4279 = vunpack.c.h.b16 %v506
        %v4280 = vunpack.c.l.b16 %v507
        %v4281 = vunpack.c.h.b16 %v507
        %v4282 = vunpack.c.l.b16 %v508
        %v4283 = vunpack.c.h.b16 %v508
        %v4284 = vunpack.c.l.b16 %v509
        %v4285 = vunpack.c.h.b16 %v509
        %v4286 = vunpack.c.l.b16 %v510
        %v4287 = vunpack.c.h.b16 %v510
        %v4288 = vunpack.c.l.b16 %v511
        %v4289 = vunpack.c.h.b16 %v511
        %v4290 = vunpack.c.l.b16 %v512
        %v4291 = vunpack.c.h.b16 %v512
        %v4292 = vunpack.c.l.b16 %v513
        %v4293 = vunpack.c.h.b16 %v513
        %v4294 = vunpack.c.l.b16 %v514
        %v4295 = vunpack.c.h.b16 %v514
        %v4296 = vunpack.c.l.b16 %v515
        %v4297 = vunpack.c.h.b16 %v515
        %v4298 = vunpack.c.l.b16 %v516
        %v4299 = vunpack.c.h.b16 %v516
        %v4300 = vunpack.c.l.b16 %v517
        %v4301 = vunpack.c.h.b16 %v517
        %v4302 = vunpack.c.l.b16 %v518
        %v4303 = vunpack.c.h.b16 %v518
        %v4304 = vunpack.c.l.b16 %v519
        %v4305 = vunpack.c.h.b16 %v519
        %v4306 = vunpack.c.l.b16 %v520
        %v4307 = vunpack.c.h.b16 %v520
        %v4308 = vunpack.c.l.b16 %v521
        %v4309 = vunpack.c.h.b16 %v521
        %v4310 = vunpack.c.l.b16 %v522
        %v4311 = vunpack.c.h.b16 %v522
        %v4312 = vunpack.c.l.b16 %v523
        %v4313 = vunpack.c.h.b16 %v523
        %v4314 = vunpack.c.l.b16 %v524
        %v4315 = vunpack.c.h.b16 %v524
        %v4316 = vunpack.c.l.b16 %v525
        %v4317 = vunpack.c.h.b16 %v525
        %v4318 = vunpack.c.l.b16 %v526
        %v4319 = vunpack.c.h.b16 %v526
        %v4320 = vunpack.c.l.b16 %v527
        %v4321 = vunpack.c.h.b16 %v527
        %v4322 = vunpack.c.l.b16 %v528
        %v4323 = vunpack.c.h.b16 %v528
        %v4324 = vunpack.c.l.b16 %v529
        %v4325 = vunpack.c.h.b16 %v529
        %v4326 = vunpack.c.l.b16 %v530
        %v4327 = vunpack.c.h.b16 %v530
        %v4328 = vunpack.c.l.b16 %v531
        %v4329 = vunpack.c.h.b16 %v531
        %v4330 = vunpack.c.l.b16 %v532
        %v4331 = vunpack.c.h.b16 %v532
        %v4332 = vunpack.c.l.b16 %v533
        %v4333 = vunpack.c.h.b16 %v533
        %v4334 = vunpack.c.l.b16 %v534
        %v4335 = vunpack.c.h.b16 %v534
        %v4336 = vunpack.c.l.b16 %v535
        %v4337 = vunpack.c.h.b16 %v535
        %v4338 = vunpack.c.l.b16 %v536
        %v4339 = vunpack.c.h.b16 %v536
        %v4340 = vunpack.c.l.b16 %v537
        %v4341 = vunpack.c.h.b16 %v537
        %v4342 = vunpack.c.l.b16 %v538
        %v4343 = vunpack.c.h.b16 %v538
        %v4344 = vunpack.c.l.b16 %v539
        %v4345 = vunpack.c.h.b16 %v539
        %v4346 = vunpack.c.l.b16 %v540
        %v4347 = vunpack.c.h.b16 %v540
        %v4348 = vunpack.c.l.b16 %v541
        %v4349 = vunpack.c.h.b16 %v541
        %v4350 = vunpack.c.l.b16 %v542
        %v4351 = vunpack.c.h.b16 %v542
        %v4352 = vunpack.c.l.b16 %v543
        %v4353 = vunpack.c.h.b16 %v543
        %v4354 = vunpack.c.l.b16 %v544
        %v4355 = vunpack.c.h.b16 %v544
        %v4356 = vunpack.c.l.b16 %v545
        %v4357 = vunpack.c.h.b16 %v545
        %v4358 = vunpack.c.l.b16 %v546
        %v4359 = vunpack.c.h.b16 %v546
        %v4360 = vunpack.c.l.b16 %v547
        %v4361 = vunpack.c.h.b16 %v547
        %v4362 = vunpack.c.l.b16 %v548
        %v4363 = vunpack.c.h.b16 %v548
        %v4364 = vunpack.c.l.b16 %v549
        %v4365 = vunpack.c.h.b16 %v549
        %v4366 = vunpack.c.l.b16 %v550
        %v4367 = vunpack.c.h.b16 %v550
        %v4368 = vunpack.c.l.b16 %v551
        %v4369 = vunpack.c.h.b16 %v551
        %v4370 = vunpack.c.l.b16 %v552
        %v4371 = vunpack.c.h.b16 %v552
        %v4372 = vunpack.c.l.b16 %v553
        %v4373 = vunpack.c.h.b16 %v553
        %v4374 = vunpack.c.l.b16 %v554
        %v4375 = vunpack.c.h.b16 %v554
        %v4376 = vunpack.c.l.b16 %v555
        %v4377 = vunpack.c.h.b16 %v555
        %v4378 = vunpack.c.l.b16 %v556
        %v4379 = vunpack.c.h.b16 %v556
        %v4380 = vunpack.c.l.b16 %v557
        %v4381 = vunpack.c.h.b16 %v557
        %v4382 = vunpack.c.l.b16 %v558
        %v4383 = vunpack.c.h.b16 %v558
        %v4384 = vunpack.c.l.b16 %v559
        %v4385 = vunpack.c.h.b16 %v559
        %v4386 = vunpack.c.l.b16 %v560
        %v4387 = vunpack.c.h.b16 %v560
        %v4388 = vunpack.c.l.b16 %v561
        %v4389 = vunpack.c.h.b16 %v561
        %v4390 = vunpack.c.l.b16 %v562
        %v4391 = vunpack.c.h.b16 %v562
        %v4392 = vunpack.c.l.b16 %v563
        %v4393 = vunpack.c.h.b16 %v563
        %v4394 = vunpack.c.l.b16 %v564
        %v4395 = vunpack.c.h.b16 %v564
        %v4396 = vunpack.c.l.b16 %v565
        %v4397 = vunpack.c.h.b16 %v565
        %v4398 = vunpack.c.l.b16 %v566
        %v4399 = vunpack.c.h.b16 %v566
        %v4400 = vunpack.c.l.b16 %v567
        %v4401 = vunpack.c.h.b16 %v567
        %v4402 = vunpack.c.l.b16 %v568
        %v4403 = vunpack.c.h.b16 %v568
        %v4404 = vunpack.c.l.b16 %v569
        %v4405 = vunpack.c.h.b16 %v569
        %v4406 = vunpack.c.l.b16 %v570
        %v4407 = vunpack.c.h.b16 %v570
        %v4408 = vunpack.c.l.b16 %v571
        %v4409 = vunpack.c.h.b16 %v571
        %v4410 = vunpack.c.l.b16 %v572
        %v4411 = vunpack.c.h.b16 %v572
        %v4412 = vunpack.c.l.b16 %v573
        %v4413 = vunpack.c.h.b16 %v573
        %v4414 = vunpack.c.l.b16 %v574
        %v4415 = vunpack.c.h.b16 %v574
        %v4416 = vunpack.c.l.b16 %v575
        %v4417 = vunpack.c.h.b16 %v575
        %v4418 = vunpack.c.l.b16 %v576
        %v4419 = vunpack.c.h.b16 %v576
        %v4420 = vunpack.c.l.b16 %v577
        %v4421 = vunpack.c.h.b16 %v577
        %v4422 = vunpack.c.l.b16 %v578
        %v4423 = vunpack.c.h.b16 %v578
        %v4424 = vunpack.c.l.b16 %v579
        %v4425 = vunpack.c.h.b16 %v579
        %v4426 = vunpack.c.l.b16 %v580
        %v4427 = vunpack.c.h.b16 %v580
        %v4428 = vunpack.c.l.b16 %v581
        %v4429 = vunpack.c.h.b16 %v581
        %v4430 = vunpack.c.l.b16 %v582
        %v4431 = vunpack.c.h.b16 %v582
        %v4432 = vunpack.c.l.b16 %v583
        %v4433 = vunpack.c.h.b16 %v583
        %v4434 = vunpack.c.l.b16 %v584
        %v4435 = vunpack.c.h.b16 %v584
        %v4436 = vunpack.c.l.b16 %v585
        %v4437 = vunpack.c.h.b16 %v585
        %v4438 = vunpack.c.l.b16 %v586
        %v4439 = vunpack.c.h.b16 %v586
        %v4440 = vunpack.c.l.b16 %v587
        %v4441 = vunpack.c.h.b16 %v587
        %v4442 = vunpack.c.l.b16 %v588
        %v4443 = vunpack.c.h.b16 %v588
        %v4444 = vunpack.c.l.b16 %v589
        %v4445 = vunpack.c.h.b16 %v589
        %v4446 = vunpack.c.l.b16 %v590
        %v4447 = vunpack.c.h.b16 %v590
        %v4448 = vunpack.c.l.b16 %v591
        %v4449 = vunpack.c.h.b16 %v591
        %v4450 = vunpack.c.l.b16 %v592
        %v4451 = vunpack.c.h.b16 %v592
        %v4452 = vunpack.c.l.b16 %v593
        %v4453 = vunpack.c.h.b16 %v593
        %v4454 = vunpack.c.l.b16 %v594
        %v4455 = vunpack.c.h.b16 %v594
        %v4456 = vunpack.c.l.b16 %v595
        %v4457 = vunpack.c.h.b16 %v595
        %v4458 = vunpack.c.l.b16 %v596
        %v4459 = vunpack.c.h.b16 %v596
        %v4460 = vunpack.c.l.b16 %v597
        %v4461 = vunpack.c.h.b16 %v597
        %v4462 = vunpack.c.l.b16 %v598
        %v4463 = vunpack.c.h.b16 %v598
        %v4464 = vunpack.c.l.b16 %v599
        %v4465 = vunpack.c.h.b16 %v599
        %v4466 = vunpack.c.l.b16 %v600
        %v4467 = vunpack.c.h.b16 %v600
        %v4468 = vunpack.c.l.b16 %v601
        %v4469 = vunpack.c.h.b16 %v601
        %v4470 = vunpack.c.l.b16 %v602
        %v4471 = vunpack.c.h.b16 %v602
        %v4472 = vunpack.c.l.b16 %v603
        %v4473 = vunpack.c.h.b16 %v603
        %v4474 = vunpack.c.l.b16 %v604
        %v4475 = vunpack.c.h.b16 %v604
        %v4476 = vunpack.c.l.b16 %v605
        %v4477 = vunpack.c.h.b16 %v605
        %v4478 = vunpack.c.l.b16 %v606
        %v4479 = vunpack.c.h.b16 %v606
        %v4480 = vunpack.c.l.b16 %v607
        %v4481 = vunpack.c.h.b16 %v607
        %v4482 = vunpack.c.l.b16 %v608
        %v4483 = vunpack.c.h.b16 %v608
        %v4484 = vunpack.c.l.b16 %v609
        %v4485 = vunpack.c.h.b16 %v609
        %v4486 = vunpack.c.l.b16 %v610
        %v4487 = vunpack.c.h.b16 %v610
        %v4488 = vunpack.c.l.b16 %v611
        %v4489 = vunpack.c.h.b16 %v611
        %v4490 = vunpack.c.l.b16 %v612
        %v4491 = vunpack.c.h.b16 %v612
        %v4492 = vunpack.c.l.b16 %v613
        %v4493 = vunpack.c.h.b16 %v613
        %v4494 = vunpack.c.l.b16 %v614
        %v4495 = vunpack.c.h.b16 %v614
        %v4496 = vunpack.c.l.b16 %v615
        %v4497 = vunpack.c.h.b16 %v615
        %v4498 = vunpack.c.l.b16 %v616
        %v4499 = vunpack.c.h.b16 %v616
        %v4500 = vunpack.c.l.b16 %v617
        %v4501 = vunpack.c.h.b16 %v617
        %v4502 = vunpack.c.l.b16 %v618
        %v4503 = vunpack.c.h.b16 %v618
        %v4504 = vunpack.c.l.b16 %v619
        %v4505 = vunpack.c.h.b16 %v619
        %v4506 = vunpack.c.l.b16 %v620
        %v4507 = vunpack.c.h.b16 %v620
        %v4508 = vunpack.c.l.b16 %v621
        %v4509 = vunpack.c.h.b16 %v621
        %v4510 = vunpack.c.l.b16 %v622
        %v4511 = vunpack.c.h.b16 %v622
        %v4512 = vunpack.c.l.b16 %v623
        %v4513 = vunpack.c.h.b16 %v623
        %v4514 = vunpack.c.l.b16 %v624
        %v4515 = vunpack.c.h.b16 %v624
        %v4516 = vunpack.c.l.b16 %v625
        %v4517 = vunpack.c.h.b16 %v625
        %v4518 = vunpack.c.l.b16 %v626
        %v4519 = vunpack.c.h.b16 %v626
        %v4520 = vunpack.c.l.b16 %v627
        %v4521 = vunpack.c.h.b16 %v627
        %v4522 = vunpack.c.l.b16 %v628
        %v4523 = vunpack.c.h.b16 %v628
        %v4524 = vunpack.c.l.b16 %v629
        %v4525 = vunpack.c.h.b16 %v629
        %v4526 = vunpack.c.l.b16 %v630
        %v4527 = vunpack.c.h.b16 %v630
        %v4528 = vunpack.c.l.b16 %v631
        %v4529 = vunpack.c.h.b16 %v631
        %v4530 = vunpack.c.l.b16 %v632
        %v4531 = vunpack.c.h.b16 %v632
        %v4532 = vunpack.c.l.b16 %v633
        %v4533 = vunpack.c.h.b16 %v633
        %v4534 = vunpack.c.l.b16 %v634
        %v4535 = vunpack.c.h.b16 %v634
        %v4536 = vunpack.c.l.b16 %v635
        %v4537 = vunpack.c.h.b16 %v635
        %v4538 = vunpack.c.l.b16 %v636
        %v4539 = vunpack.c.h.b16 %v636
        %v4540 = vunpack.c.l.b16 %v637
        %v4541 = vunpack.c.h.b16 %v637
        %v4542 = vunpack.c.l.b16 %v638
        %v4543 = vunpack.c.h.b16 %v638
        %v4544 = vunpack.c.l.b16 %v639
        %v4545 = vunpack.c.h.b16 %v639
        %v4546 = vunpack.c.l.b16 %v640
        %v4547 = vunpack.c.h.b16 %v640
        %v4548 = vunpack.c.l.b16 %v641
        %v4549 = vunpack.c.h.b16 %v641
        %v4550 = vunpack.c.l.b16 %v642
        %v4551 = vunpack.c.h.b16 %v642
        %v4552 = vunpack.c.l.b16 %v643
        %v4553 = vunpack.c.h.b16 %v643
        %v4554 = vunpack.c.l.b16 %v644
        %v4555 = vunpack.c.h.b16 %v644
        %v4556 = vunpack.c.l.b16 %v645
        %v4557 = vunpack.c.h.b16 %v645
        %v4558 = vunpack.c.l.b16 %v646
        %v4559 = vunpack.c.h.b16 %v646
        %v4560 = vunpack.c.l.b16 %v647
        %v4561 = vunpack.c.h.b16 %v647
        %v4562 = vunpack.c.l.b16 %v648
        %v4563 = vunpack.c.h.b16 %v648
        %v4564 = vunpack.c.l.b16 %v649
        %v4565 = vunpack.c.h.b16 %v649
        %v4566 = vunpack.c.l.b16 %v650
        %v4567 = vunpack.c.h.b16 %v650
        %v4568 = vunpack.c.l.b16 %v651
        %v4569 = vunpack.c.h.b16 %v651
        %v4570 = vunpack.c.l.b16 %v652
        %v4571 = vunpack.c.h.b16 %v652
        %v4572 = vunpack.c.l.b16 %v653
        %v4573 = vunpack.c.h.b16 %v653
        %v4574 = vunpack.c.l.b16 %v654
        %v4575 = vunpack.c.h.b16 %v654
        %v4576 = vunpack.c.l.b16 %v655
        %v4577 = vunpack.c.h.b16 %v655
        %v4578 = vunpack.c.l.b16 %v656
        %v4579 = vunpack.c.h.b16 %v656
        %v4580 = vunpack.c.l.b16 %v657
        %v4581 = vunpack.c.h.b16 %v657
        %v4582 = vunpack.c.l.b16 %v658
        %v4583 = vunpack.c.h.b16 %v658
        %v4584 = vunpack.c.l.b16 %v659
        %v4585 = vunpack.c.h.b16 %v659
        %v4586 = vunpack.c.l.b16 %v660
        %v4587 = vunpack.c.h.b16 %v660
        %v4588 = vunpack.c.l.b16 %v661
        %v4589 = vunpack.c.h.b16 %v661
        %v4590 = vunpack.c.l.b16 %v662
        %v4591 = vunpack.c.h.b16 %v662
        %v4592 = vunpack.c.l.b16 %v663
        %v4593 = vunpack.c.h.b16 %v663
        %v4594 = vunpack.c.l.b16 %v664
        %v4595 = vunpack.c.h.b16 %v664
        %v4596 = vunpack.c.l.b16 %v665
        %v4597 = vunpack.c.h.b16 %v665
        %v4598 = vunpack.c.l.b16 %v666
        %v4599 = vunpack.c.h.b16 %v666
        %v4600 = vunpack.c.l.b16 %v667
        %v4601 = vunpack.c.h.b16 %v667
        %v4602 = vunpack.c.l.b16 %v668
        %v4603 = vunpack.c.h.b16 %v668
        %v4604 = vunpack.c.l.b16 %v669
        %v4605 = vunpack.c.h.b16 %v669
        %v4606 = vunpack.c.l.b16 %v670
        %v4607 = vunpack.c.h.b16 %v670
        %v4608 = vunpack.c.l.b16 %v671
        %v4609 = vunpack.c.h.b16 %v671
        %v4610 = vunpack.c.l.b16 %v672
        %v4611 = vunpack.c.h.b16 %v672
        %v4612 = vunpack.c.l.b16 %v673
        %v4613 = vunpack.c.h.b16 %v673
        %v4614 = vunpack.c.l.b16 %v674
        %v4615 = vunpack.c.h.b16 %v674
        %v4616 = vunpack.c.l.b16 %v675
        %v4617 = vunpack.c.h.b16 %v675
        %v4618 = vunpack.c.l.b16 %v676
        %v4619 = vunpack.c.h.b16 %v676
        %v4620 = vunpack.c.l.b16 %v677
        %v4621 = vunpack.c.h.b16 %v677
        %v4622 = vunpack.c.l.b16 %v678
        %v4623 = vunpack.c.h.b16 %v678
        %v4624 = vunpack.c.l.b16 %v679
        %v4625 = vunpack.c.h.b16 %v679
        %v4626 = vunpack.c.l.b16 %v680
        %v4627 = vunpack.c.h.b16 %v680
        %v4628 = vunpack.c.l.b16 %v681
        %v4629 = vunpack.c.h.b16 %v681
        %v4630 = vunpack.c.l.b16 %v682
        %v4631 = vunpack.c.h.b16 %v682
        %v4632 = vunpack.c.l.b16 %v683
        %v4633 = vunpack.c.h.b16 %v683
        %v4634 = vunpack.c.l.b16 %v684
        %v4635 = vunpack.c.h.b16 %v684
        %v4636 = vunpack.c.l.b16 %v685
        %v4637 = vunpack.c.h.b16 %v685
        %v4638 = vunpack.c.l.b16 %v686
        %v4639 = vunpack.c.h.b16 %v686
        %v4640 = vunpack.c.l.b16 %v687
        %v4641 = vunpack.c.h.b16 %v687
        %v4642 = vunpack.c.l.b16 %v688
        %v4643 = vunpack.c.h.b16 %v688
        %v4644 = vunpack.c.l.b16 %v689
        %v4645 = vunpack.c.h.b16 %v689
        %v4646 = vunpack.c.l.b16 %v690
        %v4647 = vunpack.c.h.b16 %v690
        %v4648 = vunpack.c.l.b16 %v691
        %v4649 = vunpack.c.h.b16 %v691
        %v4650 = vunpack.c.l.b16 %v692
        %v4651 = vunpack.c.h.b16 %v692
        %v4652 = vunpack.c.l.b16 %v693
        %v4653 = vunpack.c.h.b16 %v693
        %v4654 = vunpack.c.l.b16 %v694
        %v4655 = vunpack.c.h.b16 %v694
        %v4656 = vunpack.c.l.b16 %v695
        %v4657 = vunpack.c.h.b16 %v695
        %v4658 = vunpack.c.l.b16 %v696
        %v4659 = vunpack.c.h.b16 %v696
        %v4660 = vunpack.c.l.b16 %v697
        %v4661 = vunpack.c.h.b16 %v697
        %v4662 = vunpack.c.l.b16 %v698
        %v4663 = vunpack.c.h.b16 %v698
        %v4664 = vunpack.c.l.b16 %v699
        %v4665 = vunpack.c.h.b16 %v699
        %v4666 = vunpack.c.l.b16 %v700
        %v4667 = vunpack.c.h.b16 %v700
        %v4668 = vunpack.c.l.b16 %v701
        %v4669 = vunpack.c.h.b16 %v701
        %v4670 = vunpack.c.l.b16 %v702
        %v4671 = vunpack.c.h.b16 %v702
        %v4672 = vunpack.c.l.b16 %v703
        %v4673 = vunpack.c.h.b16 %v703
        %v4674 = vunpack.c.l.b16 %v704
        %v4675 = vunpack.c.h.b16 %v704
        %v4676 = vunpack.c.l.b16 %v705
        %v4677 = vunpack.c.h.b16 %v705
        %v4678 = vunpack.c.l.b16 %v706
        %v4679 = vunpack.c.h.b16 %v706
        %v4680 = vunpack.c.l.b16 %v707
        %v4681 = vunpack.c.h.b16 %v707
        %v4682 = vunpack.c.l.b16 %v708
        %v4683 = vunpack.c.h.b16 %v708
        %v4684 = vunpack.c.l.b16 %v709
        %v4685 = vunpack.c.h.b16 %v709
        %v4686 = vunpack.c.l.b16 %v710
        %v4687 = vunpack.c.h.b16 %v710
        %v4688 = vunpack.c.l.b16 %v711
        %v4689 = vunpack.c.h.b16 %v711
        %v4690 = vunpack.c.l.b16 %v712
        %v4691 = vunpack.c.h.b16 %v712
        %v4692 = vunpack.c.l.b16 %v713
        %v4693 = vunpack.c.h.b16 %v713
        %v4694 = vunpack.c.l.b16 %v714
        %v4695 = vunpack.c.h.b16 %v714
        %v4696 = vunpack.c.l.b16 %v715
        %v4697 = vunpack.c.h.b16 %v715
        %v4698 = vunpack.c.l.b16 %v716
        %v4699 = vunpack.c.h.b16 %v716
        %v4700 = vunpack.c.l.b16 %v717
        %v4701 = vunpack.c.h.b16 %v717
        %v4702 = vunpack.c.l.b16 %v718
        %v4703 = vunpack.c.h.b16 %v718
        %v4704 = vunpack.c.l.b16 %v719
        %v4705 = vunpack.c.h.b16 %v719
        %v4706 = vunpack.c.l.b16 %v720
        %v4707 = vunpack.c.h.b16 %v720
        %v4708 = vunpack.c.l.b16 %v721
        %v4709 = vunpack.c.h.b16 %v721
        %v4710 = vunpack.c.l.b16 %v722
        %v4711 = vunpack.c.h.b16 %v722
        %v4712 = vunpack.c.l.b16 %v723
        %v4713 = vunpack.c.h.b16 %v723
        %v4714 = vunpack.c.l.b16 %v724
        %v4715 = vunpack.c.h.b16 %v724
        %v4716 = vunpack.c.l.b16 %v725
        %v4717 = vunpack.c.h.b16 %v725
        %v4718 = vunpack.c.l.b16 %v726
        %v4719 = vunpack.c.h.b16 %v726
        %v4720 = vunpack.c.l.b16 %v727
        %v4721 = vunpack.c.h.b16 %v727
        %v4722 = vunpack.c.l.b16 %v728
        %v4723 = vunpack.c.h.b16 %v728
        %v4724 = vunpack.c.l.b16 %v729
        %v4725 = vunpack.c.h.b16 %v729
        %v4726 = vunpack.c.l.b16 %v730
        %v4727 = vunpack.c.h.b16 %v730
        %v4728 = vunpack.c.l.b16 %v731
        %v4729 = vunpack.c.h.b16 %v731
        %v4730 = vunpack.c.l.b16 %v732
        %v4731 = vunpack.c.h.b16 %v732
        %v4732 = vunpack.c.l.b16 %v733
        %v4733 = vunpack.c.h.b16 %v733
        %v4734 = vunpack.c.l.b16 %v734
        %v4735 = vunpack.c.h.b16 %v734
        %v4736 = vunpack.c.l.b16 %v735
        %v4737 = vunpack.c.h.b16 %v735
        %v4738 = vunpack.c.l.b16 %v736
        %v4739 = vunpack.c.h.b16 %v736
        %v4740 = vunpack.c.l.b16 %v737
        %v4741 = vunpack.c.h.b16 %v737
        %v4742 = vunpack.c.l.b16 %v738
        %v4743 = vunpack.c.h.b16 %v738
        %v4744 = vunpack.c.l.b16 %v739
        %v4745 = vunpack.c.h.b16 %v739
        %v4746 = vunpack.c.l.b16 %v740
        %v4747 = vunpack.c.h.b16 %v740
        %v4748 = vunpack.c.l.b16 %v741
        %v4749 = vunpack.c.h.b16 %v741
        %v4750 = vunpack.c.l.b16 %v742
        %v4751 = vunpack.c.h.b16 %v742
        %v4752 = vunpack.c.l.b16 %v743
        %v4753 = vunpack.c.h.b16 %v743
        %v4754 = vunpack.c.l.b16 %v744
        %v4755 = vunpack.c.h.b16 %v744
        %v4756 = vunpack.c.l.b16 %v745
        %v4757 = vunpack.c.h.b16 %v745
        %v4758 = vunpack.c.l.b16 %v746
        %v4759 = vunpack.c.h.b16 %v746
        %v4760 = vunpack.c.l.b16 %v747
        %v4761 = vunpack.c.h.b16 %v747
        %v4762 = vunpack.c.l.b16 %v748
        %v4763 = vunpack.c.h.b16 %v748
        %v4764 = vunpack.c.l.b16 %v749
        %v4765 = vunpack.c.h.b16 %v749
        %v4766 = vunpack.c.l.b16 %v750
        %v4767 = vunpack.c.h.b16 %v750
        %v4768 = vunpack.c.l.b16 %v751
        %v4769 = vunpack.c.h.b16 %v751
        %v4770 = vunpack.c.l.b16 %v752
        %v4771 = vunpack.c.h.b16 %v752
        %v4772 = vunpack.c.l.b16 %v753
        %v4773 = vunpack.c.h.b16 %v753
        %v4774 = vunpack.c.l.b16 %v754
        %v4775 = vunpack.c.h.b16 %v754
        %v4776 = vunpack.c.l.b16 %v755
        %v4777 = vunpack.c.h.b16 %v755
        %v4778 = vunpack.c.l.b16 %v756
        %v4779 = vunpack.c.h.b16 %v756
        %v4780 = vunpack.c.l.b16 %v757
        %v4781 = vunpack.c.h.b16 %v757
        %v4782 = vunpack.c.l.b16 %v758
        %v4783 = vunpack.c.h.b16 %v758
        %v4784 = vunpack.c.l.b16 %v759
        %v4785 = vunpack.c.h.b16 %v759
        %v4786 = vunpack.c.l.b16 %v760
        %v4787 = vunpack.c.h.b16 %v760
        %v4788 = vunpack.c.l.b16 %v761
        %v4789 = vunpack.c.h.b16 %v761
        %v4790 = vunpack.c.l.b16 %v762
        %v4791 = vunpack.c.h.b16 %v762
        %v4792 = vunpack.c.l.b16 %v763
        %v4793 = vunpack.c.h.b16 %v763
        %v4794 = vunpack.c.l.b16 %v764
        %v4795 = vunpack.c.h.b16 %v764
        %v4796 = vunpack.c.l.b16 %v765
        %v4797 = vunpack.c.h.b16 %v765
        %v4798 = vunpack.c.l.b16 %v766
        %v4799 = vunpack.c.h.b16 %v766
        %v4800 = vunpack.c.l.b16 %v767
        %v4801 = vunpack.c.h.b16 %v767
        %v4802 = vunpack.c.l.b16 %v768
        %v4803 = vunpack.c.h.b16 %v768
        %v4804 = vunpack.c.l.b16 %v769
        %v4805 = vunpack.c.h.b16 %v769
        %v4806 = vunpack.c.l.b16 %v770
        %v4807 = vunpack.c.h.b16 %v770
        %v4808 = vunpack.c.l.b16 %v771
        %v4809 = vunpack.c.h.b16 %v771
        %v4810 = vunpack.c.l.b16 %v772
        %v4811 = vunpack.c.h.b16 %v772
        %v4812 = vunpack.c.l.b16 %v773
        %v4813 = vunpack.c.h.b16 %v773
        %v4814 = vunpack.c.l.b16 %v774
        %v4815 = vunpack.c.h.b16 %v774
        %v4816 = vunpack.c.l.b16 %v775
        %v4817 = vunpack.c.h.b16 %v775
        %v4818 = vunpack.c.l.b16 %v776
        %v4819 = vunpack.c.h.b16 %v776
        %v4820 = vunpack.c.l.b16 %v777
        %v4821 = vunpack.c.h.b16 %v777
        %v4822 = vunpack.c.l.b16 %v778
        %v4823 = vunpack.c.h.b16 %v778
        %v4824 = vunpack.c.l.b16 %v779
        %v4825 = vunpack.c.h.b16 %v779
        %v4826 = vunpack.c.l.b16 %v780
        %v4827 = vunpack.c.h.b16 %v780
        %v4828 = vunpack.c.l.b16 %v781
        %v4829 = vunpack.c.h.b16 %v781
        %v4830 = vunpack.c.l.b16 %v782
        %v4831 = vunpack.c.h.b16 %v782
        %v4832 = vunpack.c.l.b16 %v783
        %v4833 = vunpack.c.h.b16 %v783
        %v4834 = vunpack.c.l.b16 %v784
        %v4835 = vunpack.c.h.b16 %v784
        %v4836 = vunpack.c.l.b16 %v785
        %v4837 = vunpack.c.h.b16 %v785
        %v4838 = vunpack.c.l.b16 %v786
        %v4839 = vunpack.c.h.b16 %v786
        %v4840 = vunpack.c.l.b16 %v787
        %v4841 = vunpack.c.h.b16 %v787
        %v4842 = vunpack.c.l.b16 %v788
        %v4843 = vunpack.c.h.b16 %v788
        %v4844 = vunpack.c.l.b16 %v789
        %v4845 = vunpack.c.h.b16 %v789
        %v4846 = vunpack.c.l.b16 %v790
        %v4847 = vunpack.c.h.b16 %v790
        %v4848 = vunpack.c.l.b16 %v791
        %v4849 = vunpack.c.h.b16 %v791
        %v4850 = vunpack.c.l.b16 %v792
        %v4851 = vunpack.c.h.b16 %v792
        %v4852 = vunpack.c.l.b16 %v793
        %v4853 = vunpack.c.h.b16 %v793
        %v4854 = vunpack.c.l.b16 %v794
        %v4855 = vunpack.c.h.b16 %v794
        %v4856 = vunpack.c.l.b16 %v795
        %v4857 = vunpack.c.h.b16 %v795
        %v4858 = vunpack.c.l.b16 %v796
        %v4859 = vunpack.c.h.b16 %v796
        %v4860 = vunpack.c.l.b16 %v797
        %v4861 = vunpack.c.h.b16 %v797
        %v4862 = vunpack.c.l.b16 %v798
        %v4863 = vunpack.c.h.b16 %v798
        %v4864 = vunpack.c.l.b16 %v799
        %v4865 = vunpack.c.h.b16 %v799
        %v4866 = vunpack.c.l.b16 %v800
        %v4867 = vunpack.c.h.b16 %v800
        %v4868 = vunpack.c.l.b16 %v801
        %v4869 = vunpack.c.h.b16 %v801
        %v4870 = vunpack.c.l.b16 %v802
        %v4871 = vunpack.c.h.b16 %v802
        %v4872 = vunpack.c.l.b16 %v803
        %v4873 = vunpack.c.h.b16 %v803
        %v4874 = vunpack.c.l.b16 %v804
        %v4875 = vunpack.c.h.b16 %v804
        %v4876 = vunpack.c.l.b16 %v805
        %v4877 = vunpack.c.h.b16 %v805
        %v4878 = vunpack.c.l.b16 %v806
        %v4879 = vunpack.c.h.b16 %v806
        %v4880 = vunpack.c.l.b16 %v807
        %v4881 = vunpack.c.h.b16 %v807
        %v4882 = vunpack.c.l.b16 %v808
        %v4883 = vunpack.c.h.b16 %v808
        %v4884 = vunpack.c.l.b16 %v809
        %v4885 = vunpack.c.h.b16 %v809
        %v4886 = vunpack.c.l.b16 %v810
        %v4887 = vunpack.c.h.b16 %v810
        %v4888 = vunpack.c.l.b16 %v811
        %v4889 = vunpack.c.h.b16 %v811
        %v4890 = vunpack.c.l.b16 %v812
        %v4891 = vunpack.c.h.b16 %v812
        %v4892 = vunpack.c.l.b16 %v813
        %v4893 = vunpack.c.h.b16 %v813
        %v4894 = vunpack.c.l.b16 %v814
        %v4895 = vunpack.c.h.b16 %v814
        %v4896 = vunpack.c.l.b16 %v815
        %v4897 = vunpack.c.h.b16 %v815
        %v4898 = vunpack.c.l.b16 %v816
        %v4899 = vunpack.c.h.b16 %v816
        %v4900 = vunpack.c.l.b16 %v817
        %v4901 = vunpack.c.h.b16 %v817
        %v4902 = vunpack.c.l.b16 %v818
        %v4903 = vunpack.c.h.b16 %v818
        %v4904 = vunpack.c.l.b16 %v819
        %v4905 = vunpack.c.h.b16 %v819
        %v4906 = vunpack.c.l.b16 %v820
        %v4907 = vunpack.c.h.b16 %v820
        %v4908 = vunpack.c.l.b16 %v821
        %v4909 = vunpack.c.h.b16 %v821
        %v4910 = vunpack.c.l.b16 %v822
        %v4911 = vunpack.c.h.b16 %v822
        %v4912 = vunpack.c.l.b16 %v823
        %v4913 = vunpack.c.h.b16 %v823
        %v4914 = vunpack.c.l.b16 %v824
        %v4915 = vunpack.c.h.b16 %v824
        %v4916 = vunpack.c.l.b16 %v825
        %v4917 = vunpack.c.h.b16 %v825
        %v4918 = vunpack.c.l.b16 %v826
        %v4919 = vunpack.c.h.b16 %v826
        %v4920 = vunpack.c.l.b16 %v827
        %v4921 = vunpack.c.h.b16 %v827
        %v4922 = vunpack.c.l.b16 %v828
        %v4923 = vunpack.c.h.b16 %v828
        %v4924 = vunpack.c.l.b16 %v829
        %v4925 = vunpack.c.h.b16 %v829
        %v4926 = vunpack.c.l.b16 %v830
        %v4927 = vunpack.c.h.b16 %v830
        %v4928 = vunpack.c.l.b16 %v831
        %v4929 = vunpack.c.h.b16 %v831
        %v4930 = vunpack.c.l.b16 %v832
        %v4931 = vunpack.c.h.b16 %v832
        %v4932 = vunpack.c.l.b16 %v833
        %v4933 = vunpack.c.h.b16 %v833
        %v4934 = vunpack.c.l.b16 %v834
        %v4935 = vunpack.c.h.b16 %v834
        %v4936 = vunpack.c.l.b16 %v835
        %v4937 = vunpack.c.h.b16 %v835
        %v4938 = vunpack.c.l.b16 %v836
        %v4939 = vunpack.c.h.b16 %v836
        %v4940 = vunpack.c.l.b16 %v837
        %v4941 = vunpack.c.h.b16 %v837
        %v4942 = vunpack.c.l.b16 %v838
        %v4943 = vunpack.c.h.b16 %v838
        %v4944 = vunpack.c.l.b16 %v839
        %v4945 = vunpack.c.h.b16 %v839
        %v4946 = vunpack.c.l.b16 %v840
        %v4947 = vunpack.c.h.b16 %v840
        %v4948 = vunpack.c.l.b16 %v841
        %v4949 = vunpack.c.h.b16 %v841
        %v4950 = vunpack.c.l.b16 %v842
        %v4951 = vunpack.c.h.b16 %v842
        %v4952 = vunpack.c.l.b16 %v843
        %v4953 = vunpack.c.h.b16 %v843
        %v4954 = vunpack.c.l.b16 %v844
        %v4955 = vunpack.c.h.b16 %v844
        %v4956 = vunpack.c.l.b16 %v845
        %v4957 = vunpack.c.h.b16 %v845
        %v4958 = vunpack.c.l.b16 %v846
        %v4959 = vunpack.c.h.b16 %v846
        %v4960 = vunpack.c.l.b16 %v847
        %v4961 = vunpack.c.h.b16 %v847
        %v4962 = vunpack.c.l.b16 %v848
        %v4963 = vunpack.c.h.b16 %v848
        %v4964 = vunpack.c.l.b16 %v849
        %v4965 = vunpack.c.h.b16 %v849
        %v4966 = vunpack.c.l.b16 %v850
        %v4967 = vunpack.c.h.b16 %v850
        %v4968 = vunpack.c.l.b16 %v851
        %v4969 = vunpack.c.h.b16 %v851
        %v4970 = vunpack.c.l.b16 %v852
        %v4971 = vunpack.c.h.b16 %v852
        %v4972 = vunpack.c.l.b16 %v853
        %v4973 = vunpack.c.h.b16 %v853
        %v4974 = vunpack.c.l.b16 %v854
        %v4975 = vunpack.c.h.b16 %v854
        %v4976 = vunpack.c.l.b16 %v855
        %v4977 = vunpack.c.h.b16 %v855
        %v4978 = vunpack.c.l.b16 %v856
        %v4979 = vunpack.c.h.b16 %v856
        %v4980 = vunpack.c.l.b16 %v857
        %v4981 = vunpack.c.h.b16 %v857
        %v4982 = vunpack.c.l.b16 %v858
        %v4983 = vunpack.c.h.b16 %v858
        %v4984 = vunpack.c.l.b16 %v859
        %v4985 = vunpack.c.h.b16 %v859
        %v4986 = vunpack.c.l.b16 %v860
        %v4987 = vunpack.c.h.b16 %v860
        %v4988 = vunpack.c.l.b16 %v861
        %v4989 = vunpack.c.h.b16 %v861
        %v4990 = vunpack.c.l.b16 %v862
        %v4991 = vunpack.c.h.b16 %v862
        %v4992 = vunpack.c.l.b16 %v863
        %v4993 = vunpack.c.h.b16 %v863
        %v4994 = vunpack.c.l.b16 %v864
        %v4995 = vunpack.c.h.b16 %v864
        %v4996 = vunpack.c.l.b16 %v865
        %v4997 = vunpack.c.h.b16 %v865
        %v4998 = vunpack.c.l.b16 %v866
        %v4999 = vunpack.c.h.b16 %v866
        %v5000 = vunpack.c.l.b16 %v867
        %v5001 = vunpack.c.h.b16 %v867
        %v5002 = vunpack.c.l.b16 %v868
        %v5003 = vunpack.c.h.b16 %v868
        %v5004 = vunpack.c.l.b16 %v869
        %v5005 = vunpack.c.h.b16 %v869
        %v5006 = vunpack.c.l.b16 %v870
        %v5007 = vunpack.c.h.b16 %v870
        %v5008 = vunpack.c.l.b16 %v871
        %v5009 = vunpack.c.h.b16 %v871
        %v5010 = vunpack.c.l.b16 %v872
        %v5011 = vunpack.c.h.b16 %v872
        %v5012 = vunpack.c.l.b16 %v873
        %v5013 = vunpack.c.h.b16 %v873
        %v5014 = vunpack.c.l.b16 %v874
        %v5015 = vunpack.c.h.b16 %v874
        %v5016 = vunpack.c.l.b16 %v875
        %v5017 = vunpack.c.h.b16 %v875
        %v5018 = vunpack.c.l.b16 %v876
        %v5019 = vunpack.c.h.b16 %v876
        %v5020 = vunpack.c.l.b16 %v877
        %v5021 = vunpack.c.h.b16 %v877
        %v5022 = vunpack.c.l.b16 %v878
        %v5023 = vunpack.c.h.b16 %v878
        %v5024 = vunpack.c.l.b16 %v879
        %v5025 = vunpack.c.h.b16 %v879
        %v5026 = vunpack.c.l.b16 %v880
        %v5027 = vunpack.c.h.b16 %v880
        %v5028 = vunpack.c.l.b16 %v881
        %v5029 = vunpack.c.h.b16 %v881
        %v5030 = vunpack.c.l.b16 %v882
        %v5031 = vunpack.c.h.b16 %v882
        %v5032 = vunpack.c.l.b16 %v883
        %v5033 = vunpack.c.h.b16 %v883
        %v5034 = vunpack.c.l.b16 %v884
        %v5035 = vunpack.c.h.b16 %v884
        %v5036 = vunpack.c.l.b16 %v885
        %v5037 = vunpack.c.h.b16 %v885
        %v5038 = vunpack.c.l.b16 %v886
        %v5039 = vunpack.c.h.b16 %v886
        %v5040 = vunpack.c.l.b16 %v887
        %v5041 = vunpack.c.h.b16 %v887
        %v5042 = vunpack.c.l.b16 %v888
        %v5043 = vunpack.c.h.b16 %v888
        %v5044 = vunpack.c.l.b16 %v889
        %v5045 = vunpack.c.h.b16 %v889
        %v5046 = vunpack.c.l.b16 %v890
        %v5047 = vunpack.c.h.b16 %v890
        %v5048 = vunpack.c.l.b16 %v891
        %v5049 = vunpack.c.h.b16 %v891
        %v5050 = vunpack.c.l.b16 %v892
        %v5051 = vunpack.c.h.b16 %v892
        %v5052 = vunpack.c.l.b16 %v893
        %v5053 = vunpack.c.h.b16 %v893
        %v5054 = vunpack.c.l.b16 %v894
        %v5055 = vunpack.c.h.b16 %v894
        %v5056 = vunpack.c.l.b16 %v895
        %v5057 = vunpack.c.h.b16 %v895
        %v5058 = vunpack.c.l.b16 %v896
        %v5059 = vunpack.c.h.b16 %v896
        %v5060 = vunpack.c.l.b16 %v897
        %v5061 = vunpack.c.h.b16 %v897
        %v5062 = vunpack.c.l.b16 %v898
        %v5063 = vunpack.c.h.b16 %v898
        %v5064 = vunpack.c.l.b16 %v899
        %v5065 = vunpack.c.h.b16 %v899
        %v5066 = vunpack.c.l.b16 %v900
        %v5067 = vunpack.c.h.b16 %v900
        %v5068 = vunpack.c.l.b16 %v901
        %v5069 = vunpack.c.h.b16 %v901
        %v5070 = vunpack.c.l.b16 %v902
        %v5071 = vunpack.c.h.b16 %v902
        %v5072 = vunpack.c.l.b16 %v903
        %v5073 = vunpack.c.h.b16 %v903
        %v5074 = vunpack.c.l.b16 %v904
        %v5075 = vunpack.c.h.b16 %v904
        %v5076 = vunpack.c.l.b16 %v905
        %v5077 = vunpack.c.h.b16 %v905
        %v5078 = vunpack.c.l.b16 %v906
        %v5079 = vunpack.c.h.b16 %v906
        %v5080 = vunpack.c.l.b16 %v907
        %v5081 = vunpack.c.h.b16 %v907
        %v5082 = vunpack.c.l.b16 %v908
        %v5083 = vunpack.c.h.b16 %v908
        %v5084 = vunpack.c.l.b16 %v909
        %v5085 = vunpack.c.h.b16 %v909
        %v5086 = vunpack.c.l.b16 %v910
        %v5087 = vunpack.c.h.b16 %v910
        %v5088 = vunpack.c.l.b16 %v911
        %v5089 = vunpack.c.h.b16 %v911
        %v5090 = vunpack.c.l.b16 %v912
        %v5091 = vunpack.c.h.b16 %v912
        %v5092 = vunpack.c.l.b16 %v913
        %v5093 = vunpack.c.h.b16 %v913
        %v5094 = vunpack.c.l.b16 %v914
        %v5095 = vunpack.c.h.b16 %v914
        %v5096 = vunpack.c.l.b16 %v915
        %v5097 = vunpack.c.h.b16 %v915
        %v5098 = vunpack.c.l.b16 %v916
        %v5099 = vunpack.c.h.b16 %v916
        %v5100 = vunpack.c.l.b16 %v917
        %v5101 = vunpack.c.h.b16 %v917
        %v5102 = vunpack.c.l.b16 %v918
        %v5103 = vunpack.c.h.b16 %v918
        %v5104 = vunpack.c.l.b16 %v919
        %v5105 = vunpack.c.h.b16 %v919
        %v5106 = vunpack.c.l.b16 %v920
        %v5107 = vunpack.c.h.b16 %v920
        %v5108 = vunpack.c.l.b16 %v921
        %v5109 = vunpack.c.h.b16 %v921
        %v5110 = vunpack.c.l.b16 %v922
        %v5111 = vunpack.c.h.b16 %v922
        %v5112 = vunpack.c.l.b16 %v923
        %v5113 = vunpack.c.h.b16 %v923
        %v5114 = vunpack.c.l.b16 %v924
        %v5115 = vunpack.c.h.b16 %v924
        %v5116 = vunpack.c.l.b16 %v925
        %v5117 = vunpack.c.h.b16 %v925
        %v5118 = vunpack.c.l.b16 %v926
        %v5119 = vunpack.c.h.b16 %v926
        %v5120 = vunpack.c.l.b16 %v927
        %v5121 = vunpack.c.h.b16 %v927
        %v5122 = vunpack.c.l.b16 %v928
        %v5123 = vunpack.c.h.b16 %v928
        %v5124 = vunpack.c.l.b16 %v929
        %v5125 = vunpack.c.h.b16 %v929
        %v5126 = vunpack.c.l.b16 %v930
        %v5127 = vunpack.c.h.b16 %v930
        %v5128 = vunpack.c.l.b16 %v931
        %v5129 = vunpack.c.h.b16 %v931
        %v5130 = vunpack.c.l.b16 %v932
        %v5131 = vunpack.c.h.b16 %v932
        %v5132 = vunpack.c.l.b16 %v933
        %v5133 = vunpack.c.h.b16 %v933
        %v5134 = vunpack.c.l.b16 %v934
        %v5135 = vunpack.c.h.b16 %v934
        %v5136 = vunpack.c.l.b16 %v935
        %v5137 = vunpack.c.h.b16 %v935
        %v5138 = vunpack.c.l.b16 %v936
        %v5139 = vunpack.c.h.b16 %v936
        %v5140 = vunpack.c.l.b16 %v937
        %v5141 = vunpack.c.h.b16 %v937
        %v5142 = vunpack.c.l.b16 %v938
        %v5143 = vunpack.c.h.b16 %v938
        %v5144 = vunpack.c.l.b16 %v939
        %v5145 = vunpack.c.h.b16 %v939
        %v5146 = vunpack.c.l.b16 %v940
        %v5147 = vunpack.c.h.b16 %v940
        %v5148 = vunpack.c.l.b16 %v941
        %v5149 = vunpack.c.h.b16 %v941
        %v5150 = vunpack.c.l.b16 %v942
        %v5151 = vunpack.c.h.b16 %v942
        %v5152 = vunpack.c.l.b16 %v943
        %v5153 = vunpack.c.h.b16 %v943
        %v5154 = vunpack.c.l.b16 %v944
        %v5155 = vunpack.c.h.b16 %v944
        %v5156 = vunpack.c.l.b16 %v945
        %v5157 = vunpack.c.h.b16 %v945
        %v5158 = vunpack.c.l.b16 %v946
        %v5159 = vunpack.c.h.b16 %v946
        %v5160 = vunpack.c.l.b16 %v947
        %v5161 = vunpack.c.h.b16 %v947
        %v5162 = vunpack.c.l.b16 %v948
        %v5163 = vunpack.c.h.b16 %v948
        %v5164 = vunpack.c.l.b16 %v949
        %v5165 = vunpack.c.h.b16 %v949
        %v5166 = vunpack.c.l.b16 %v950
        %v5167 = vunpack.c.h.b16 %v950
        %v5168 = vunpack.c.l.b16 %v951
        %v5169 = vunpack.c.h.b16 %v951
        %v5170 = vunpack.c.l.b16 %v952
        %v5171 = vunpack.c.h.b16 %v952
        %v5172 = vunpack.c.l.b16 %v953
        %v5173 = vunpack.c.h.b16 %v953
        %v5174 = vunpack.c.l.b16 %v954
        %v5175 = vunpack.c.h.b16 %v954
        %v5176 = vunpack.c.l.b16 %v955
        %v5177 = vunpack.c.h.b16 %v955
        %v5178 = vunpack.c.l.b16 %v956
        %v5179 = vunpack.c.h.b16 %v956
        %v5180 = vunpack.c.l.b16 %v957
        %v5181 = vunpack.c.h.b16 %v957
        %v5182 = vunpack.c.l.b16 %v958
        %v5183 = vunpack.c.h.b16 %v958
        %v5184 = vunpack.c.l.b16 %v959
        %v5185 = vunpack.c.h.b16 %v959
        %v5186 = vunpack.c.l.b16 %v960
        %v5187 = vunpack.c.h.b16 %v960
        %v5188 = vunpack.c.l.b16 %v961
        %v5189 = vunpack.c.h.b16 %v961
        %v5190 = vunpack.c.l.b16 %v962
        %v5191 = vunpack.c.h.b16 %v962
        %v5192 = vunpack.c.l.b16 %v963
        %v5193 = vunpack.c.h.b16 %v963
        %v5194 = vunpack.c.l.b16 %v964
        %v5195 = vunpack.c.h.b16 %v964
        %v5196 = vunpack.c.l.b16 %v965
        %v5197 = vunpack.c.h.b16 %v965
        %v5198 = vunpack.c.l.b16 %v966
        %v5199 = vunpack.c.h.b16 %v966
        %v5200 = vunpack.c.l.b16 %v967
        %v5201 = vunpack.c.h.b16 %v967
        %v5202 = vunpack.c.l.b16 %v968
        %v5203 = vunpack.c.h.b16 %v968
        %v5204 = vunpack.c.l.b16 %v969
        %v5205 = vunpack.c.h.b16 %v969
        %v5206 = vunpack.c.l.b16 %v970
        %v5207 = vunpack.c.h.b16 %v970
        %v5208 = vunpack.c.l.b16 %v971
        %v5209 = vunpack.c.h.b16 %v971
        %v5210 = vunpack.c.l.b16 %v972
        %v5211 = vunpack.c.h.b16 %v972
        %v5212 = vunpack.c.l.b16 %v973
        %v5213 = vunpack.c.h.b16 %v973
        %v5214 = vunpack.c.l.b16 %v974
        %v5215 = vunpack.c.h.b16 %v974
        %v5216 = vunpack.c.l.b16 %v975
        %v5217 = vunpack.c.h.b16 %v975
        %v5218 = vunpack.c.l.b16 %v976
        %v5219 = vunpack.c.h.b16 %v976
        %v5220 = vunpack.c.l.b16 %v977
        %v5221 = vunpack.c.h.b16 %v977
        %v5222 = vunpack.c.l.b16 %v978
        %v5223 = vunpack.c.h.b16 %v978
        %v5224 = vunpack.c.l.b16 %v979
        %v5225 = vunpack.c.h.b16 %v979
        %v5226 = vunpack.c.l.b16 %v980
        %v5227 = vunpack.c.h.b16 %v980
        %v5228 = vunpack.c.l.b16 %v981
        %v5229 = vunpack.c.h.b16 %v981
        %v5230 = vunpack.c.l.b16 %v982
        %v5231 = vunpack.c.h.b16 %v982
        %v5232 = vunpack.c.l.b16 %v983
        %v5233 = vunpack.c.h.b16 %v983
        %v5234 = vunpack.c.l.b16 %v984
        %v5235 = vunpack.c.h.b16 %v984
        %v5236 = vunpack.c.l.b16 %v985
        %v5237 = vunpack.c.h.b16 %v985
        %v5238 = vunpack.c.l.b16 %v986
        %v5239 = vunpack.c.h.b16 %v986
        %v5240 = vunpack.c.l.b16 %v987
        %v5241 = vunpack.c.h.b16 %v987
        %v5242 = vunpack.c.l.b16 %v988
        %v5243 = vunpack.c.h.b16 %v988
        %v5244 = vunpack.c.l.b16 %v989
        %v5245 = vunpack.c.h.b16 %v989
        %v5246 = vunpack.c.l.b16 %v990
        %v5247 = vunpack.c.h.b16 %v990
        %v5248 = vunpack.c.l.b16 %v991
        %v5249 = vunpack.c.h.b16 %v991
        %v5250 = vunpack.c.l.b16 %v992
        %v5251 = vunpack.c.h.b16 %v992
        %v5252 = vunpack.c.l.b16 %v993
        %v5253 = vunpack.c.h.b16 %v993
        %v5254 = vunpack.c.l.b16 %v994
        %v5255 = vunpack.c.h.b16 %v994
        %v5256 = vunpack.c.l.b16 %v995
        %v5257 = vunpack.c.h.b16 %v995
        %v5258 = vunpack.c.l.b16 %v996
        %v5259 = vunpack.c.h.b16 %v996
        %v5260 = vunpack.c.l.b16 %v997
        %v5261 = vunpack.c.h.b16 %v997
        %v5262 = vunpack.c.l.b16 %v998
        %v5263 = vunpack.c.h.b16 %v998
        %v5264 = vunpack.c.l.b16 %v999
        %v5265 = vunpack.c.h.b16 %v999
        %v5266 = vunpack.c.l.b16 %v1000
        %v5267 = vunpack.c.h.b16 %v1000
        %v5268 = vunpack.c.l.b16 %v1001
        %v5269 = vunpack.c.h.b16 %v1001
        %v5270 = vunpack.c.l.b16 %v1002
        %v5271 = vunpack.c.h.b16 %v1002
        %v5272 = vunpack.c.l.b16 %v1003
        %v5273 = vunpack.c.h.b16 %v1003
        %v5274 = vunpack.c.l.b16 %v1004
        %v5275 = vunpack.c.h.b16 %v1004
        %v5276 = vunpack.c.l.b16 %v1005
        %v5277 = vunpack.c.h.b16 %v1005
        %v5278 = vunpack.c.l.b16 %v1006
        %v5279 = vunpack.c.h.b16 %v1006
        %v5280 = vunpack.c.l.b16 %v1007
        %v5281 = vunpack.c.h.b16 %v1007
        %v5282 = vunpack.c.l.b16 %v1008
        %v5283 = vunpack.c.h.b16 %v1008
        %v5284 = vunpack.c.l.b16 %v1009
        %v5285 = vunpack.c.h.b16 %v1009
        %v5286 = vunpack.c.l.b16 %v1010
        %v5287 = vunpack.c.h.b16 %v1010
        %v5288 = vunpack.c.l.b16 %v1011
        %v5289 = vunpack.c.h.b16 %v1011
        %v5290 = vunpack.c.l.b16 %v1012
        %v5291 = vunpack.c.h.b16 %v1012
        %v5292 = vunpack.c.l.b16 %v1013
        %v5293 = vunpack.c.h.b16 %v1013
        %v5294 = vunpack.c.l.b16 %v1014
        %v5295 = vunpack.c.h.b16 %v1014
        %v5296 = vunpack.c.l.b16 %v1015
        %v5297 = vunpack.c.h.b16 %v1015
        %v5298 = vunpack.c.l.b16 %v1016
        %v5299 = vunpack.c.h.b16 %v1016
        %v5300 = vunpack.c.l.b16 %v1017
        %v5301 = vunpack.c.h.b16 %v1017
        %v5302 = vunpack.c.l.b16 %v1018
        %v5303 = vunpack.c.h.b16 %v1018
        %v5304 = vunpack.c.l.b16 %v1019
        %v5305 = vunpack.c.h.b16 %v1019
        %v5306 = vunpack.c.l.b16 %v1020
        %v5307 = vunpack.c.h.b16 %v1020
        %v5308 = vunpack.c.l.b16 %v1021
        %v5309 = vunpack.c.h.b16 %v1021
        %v5310 = vunpack.c.l.b16 %v1022
        %v5311 = vunpack.c.h.b16 %v1022
        %v5312 = vunpack.c.l.b16 %v1023
        %v5313 = vunpack.c.h.b16 %v1023
        %v5314 = vunpack.c.l.b16 %v1024
        %v5315 = vunpack.c.h.b16 %v1024
        %v5316 = vunpack.c.l.b16 %v1025
        %v5317 = vunpack.c.h.b16 %v1025
        %v5318 = vunpack.c.l.b16 %v1026
        %v5319 = vunpack.c.h.b16 %v1026
        %v5320 = vunpack.c.l.b16 %v1027
        %v5321 = vunpack.c.h.b16 %v1027
        %v5322 = vunpack.c.l.b16 %v1028
        %v5323 = vunpack.c.h.b16 %v1028
        %v5324 = vunpack.c.l.b16 %v1029
        %v5325 = vunpack.c.h.b16 %v1029
        %v5326 = vunpack.c.l.b16 %v1030
        %v5327 = vunpack.c.h.b16 %v1030
        %v5328 = vunpack.c.l.b16 %v1031
        %v5329 = vunpack.c.h.b16 %v1031
        %v5330 = vunpack.c.l.b16 %v1032
        %v5331 = vunpack.c.h.b16 %v1032
        %v5332 = vunpack.c.l.b16 %v1033
        %v5333 = vunpack.c.h.b16 %v1033
        %v5334 = vunpack.c.l.b16 %v1034
        %v5335 = vunpack.c.h.b16 %v1034
        %v5336 = vunpack.c.l.b16 %v1035
        %v5337 = vunpack.c.h.b16 %v1035
        %v5338 = vunpack.c.l.b16 %v1036
        %v5339 = vunpack.c.h.b16 %v1036
        %v5340 = vunpack.c.l.b16 %v1037
        %v5341 = vunpack.c.h.b16 %v1037
        %v5342 = vunpack.c.l.b16 %v1038
        %v5343 = vunpack.c.h.b16 %v1038
        %v5344 = vunpack.c.l.b16 %v1039
        %v5345 = vunpack.c.h.b16 %v1039
        %v5346 = vunpack.c.l.b16 %v1040
        %v5347 = vunpack.c.h.b16 %v1040
        %v5348 = vunpack.c.l.b16 %v1041
        %v5349 = vunpack.c.h.b16 %v1041
        %v5350 = vunpack.c.l.b16 %v1042
        %v5351 = vunpack.c.h.b16 %v1042
        %v5352 = vunpack.c.l.b16 %v1043
        %v5353 = vunpack.c.h.b16 %v1043
        %v5354 = vunpack.c.l.b16 %v1044
        %v5355 = vunpack.c.h.b16 %v1044
        %v5356 = vunpack.c.l.b16 %v1045
        %v5357 = vunpack.c.h.b16 %v1045
        %v5358 = vunpack.c.l.b16 %v1046
        %v5359 = vunpack.c.h.b16 %v1046
        %v5360 = vunpack.c.l.b16 %v1047
        %v5361 = vunpack.c.h.b16 %v1047
        %v5362 = vunpack.c.l.b16 %v1048
        %v5363 = vunpack.c.h.b16 %v1048
        %v5364 = vunpack.c.l.b16 %v1049
        %v5365 = vunpack.c.h.b16 %v1049
        %v5366 = vunpack.c.l.b16 %v1050
        %v5367 = vunpack.c.h.b16 %v1050
        %v5368 = vunpack.c.l.b16 %v1051
        %v5369 = vunpack.c.h.b16 %v1051
        %v5370 = vunpack.c.l.b16 %v1052
        %v5371 = vunpack.c.h.b16 %v1052
        %v5372 = vunpack.c.l.b16 %v1053
        %v5373 = vunpack.c.h.b16 %v1053
        %v5374 = vunpack.c.l.b16 %v1054
        %v5375 = vunpack.c.h.b16 %v1054
        %v5376 = vunpack.c.l.b16 %v1055
        %v5377 = vunpack.c.h.b16 %v1055
        %v5378 = vunpack.c.l.b16 %v1056
        %v5379 = vunpack.c.h.b16 %v1056
        %v5380 = vunpack.c.l.b16 %v1057
        %v5381 = vunpack.c.h.b16 %v1057
        %v5382 = vunpack.c.l.b16 %v1058
        %v5383 = vunpack.c.h.b16 %v1058
        %v5384 = vunpack.c.l.b16 %v1059
        %v5385 = vunpack.c.h.b16 %v1059
        %v5386 = vunpack.c.l.b16 %v1060
        %v5387 = vunpack.c.h.b16 %v1060
        %v5388 = vunpack.c.l.b16 %v1061
        %v5389 = vunpack.c.h.b16 %v1061
        %v5390 = vunpack.c.l.b16 %v1062
        %v5391 = vunpack.c.h.b16 %v1062
        %v5392 = vunpack.c.l.b16 %v1063
        %v5393 = vunpack.c.h.b16 %v1063
        %v5394 = vunpack.c.l.b16 %v1064
        %v5395 = vunpack.c.h.b16 %v1064
        %v5396 = vunpack.c.l.b16 %v1065
        %v5397 = vunpack.c.h.b16 %v1065
        %v5398 = vunpack.c.l.b16 %v1066
        %v5399 = vunpack.c.h.b16 %v1066
        %v5400 = vunpack.c.l.b16 %v1067
        %v5401 = vunpack.c.h.b16 %v1067
        %v5402 = vunpack.c.l.b16 %v1068
        %v5403 = vunpack.c.h.b16 %v1068
        %v5404 = vunpack.c.l.b16 %v1069
        %v5405 = vunpack.c.h.b16 %v1069
        %v5406 = vunpack.c.l.b16 %v1070
        %v5407 = vunpack.c.h.b16 %v1070
        %v5408 = vunpack.c.l.b16 %v1071
        %v5409 = vunpack.c.h.b16 %v1071
        %v5410 = vunpack.c.l.b16 %v1072
        %v5411 = vunpack.c.h.b16 %v1072
        %v5412 = vunpack.c.l.b16 %v1073
        %v5413 = vunpack.c.h.b16 %v1073
        %v5414 = vunpack.c.l.b16 %v1074
        %v5415 = vunpack.c.h.b16 %v1074
        %v5416 = vunpack.c.l.b16 %v1075
        %v5417 = vunpack.c.h.b16 %v1075
        %v5418 = vunpack.c.l.b16 %v1076
        %v5419 = vunpack.c.h.b16 %v1076
        %v5420 = vunpack.c.l.b16 %v1077
        %v5421 = vunpack.c.h.b16 %v1077
        %v5422 = vunpack.c.l.b16 %v1078
        %v5423 = vunpack.c.h.b16 %v1078
        %v5424 = vunpack.c.l.b16 %v1079
        %v5425 = vunpack.c.h.b16 %v1079
        %v5426 = vunpack.c.l.b16 %v1080
        %v5427 = vunpack.c.h.b16 %v1080
        %v5428 = vunpack.c.l.b16 %v1081
        %v5429 = vunpack.c.h.b16 %v1081
        %v5430 = vunpack.c.l.b16 %v1082
        %v5431 = vunpack.c.h.b16 %v1082
        %v5432 = vunpack.c.l.b16 %v1083
        %v5433 = vunpack.c.h.b16 %v1083
        %v5434 = vunpack.c.l.b16 %v1084
        %v5435 = vunpack.c.h.b16 %v1084
        %v5436 = vunpack.c.l.b16 %v1085
        %v5437 = vunpack.c.h.b16 %v1085
        %v5438 = vunpack.c.l.b16 %v1086
        %v5439 = vunpack.c.h.b16 %v1086
        %v5440 = vunpack.c.l.b16 %v1087
        %v5441 = vunpack.c.h.b16 %v1087
        %v5442 = vunpack.c.l.b16 %v1088
        %v5443 = vunpack.c.h.b16 %v1088
        %v5444 = vunpack.c.l.b16 %v1089
        %v5445 = vunpack.c.h.b16 %v1089
        %v5446 = vunpack.c.l.b16 %v1090
        %v5447 = vunpack.c.h.b16 %v1090
        %v5448 = vunpack.c.l.b16 %v1091
        %v5449 = vunpack.c.h.b16 %v1091
        %v5450 = vunpack.c.l.b16 %v1092
        %v5451 = vunpack.c.h.b16 %v1092
        %v5452 = vunpack.c.l.b16 %v1093
        %v5453 = vunpack.c.h.b16 %v1093
        %v5454 = vunpack.c.l.b16 %v1094
        %v5455 = vunpack.c.h.b16 %v1094
        %v5456 = vunpack.c.l.b16 %v1095
        %v5457 = vunpack.c.h.b16 %v1095
        %v5458 = vunpack.c.l.b16 %v1096
        %v5459 = vunpack.c.h.b16 %v1096
        %v5460 = vunpack.c.l.b16 %v1097
        %v5461 = vunpack.c.h.b16 %v1097
        %v5462 = vunpack.c.l.b16 %v1098
        %v5463 = vunpack.c.h.b16 %v1098
        %v5464 = vunpack.c.l.b16 %v1099
        %v5465 = vunpack.c.h.b16 %v1099
        %v5466 = vunpack.c.l.b16 %v1100
        %v5467 = vunpack.c.h.b16 %v1100
        %v5468 = vunpack.c.l.b16 %v1101
        %v5469 = vunpack.c.h.b16 %v1101
        %v5470 = vunpack.c.l.b16 %v1102
        %v5471 = vunpack.c.h.b16 %v1102
        %v5472 = vunpack.c.l.b16 %v1103
        %v5473 = vunpack.c.h.b16 %v1103
        %v5474 = vunpack.c.l.b16 %v1104
        %v5475 = vunpack.c.h.b16 %v1104
        %v5476 = vunpack.c.l.b16 %v1105
        %v5477 = vunpack.c.h.b16 %v1105
        %v5478 = vunpack.c.l.b16 %v1106
        %v5479 = vunpack.c.h.b16 %v1106
        %v5480 = vunpack.c.l.b16 %v1107
        %v5481 = vunpack.c.h.b16 %v1107
        %v5482 = vunpack.c.l.b16 %v1108
        %v5483 = vunpack.c.h.b16 %v1108
        %v5484 = vunpack.c.l.b16 %v1109
        %v5485 = vunpack.c.h.b16 %v1109
        %v5486 = vunpack.c.l.b16 %v1110
        %v5487 = vunpack.c.h.b16 %v1110
        %v5488 = vunpack.c.l.b16 %v1111
        %v5489 = vunpack.c.h.b16 %v1111
        %v5490 = vunpack.c.l.b16 %v1112
        %v5491 = vunpack.c.h.b16 %v1112
        %v5492 = vunpack.c.l.b16 %v1113
        %v5493 = vunpack.c.h.b16 %v1113
        %v5494 = vunpack.c.l.b16 %v1114
        %v5495 = vunpack.c.h.b16 %v1114
        %v5496 = vunpack.c.l.b16 %v1115
        %v5497 = vunpack.c.h.b16 %v1115
        %v5498 = vunpack.c.l.b16 %v1116
        %v5499 = vunpack.c.h.b16 %v1116
        %v5500 = vunpack.c.l.b16 %v1117
        %v5501 = vunpack.c.h.b16 %v1117
        %v5502 = vunpack.c.l.b16 %v1118
        %v5503 = vunpack.c.h.b16 %v1118
        %v5504 = vunpack.c.l.b16 %v1119
        %v5505 = vunpack.c.h.b16 %v1119
        %v5506 = vunpack.c.l.b16 %v1120
        %v5507 = vunpack.c.h.b16 %v1120
        %v5508 = vunpack.c.l.b16 %v1121
        %v5509 = vunpack.c.h.b16 %v1121
        %v5510 = vunpack.c.l.b16 %v1122
        %v5511 = vunpack.c.h.b16 %v1122
        %v5512 = vunpack.c.l.b16 %v1123
        %v5513 = vunpack.c.h.b16 %v1123
        %v5514 = vunpack.c.l.b16 %v1124
        %v5515 = vunpack.c.h.b16 %v1124
        %v5516 = vunpack.c.l.b16 %v1125
        %v5517 = vunpack.c.h.b16 %v1125
        %v5518 = vunpack.c.l.b16 %v1126
        %v5519 = vunpack.c.h.b16 %v1126
        %v5520 = vunpack.c.l.b16 %v1127
        %v5521 = vunpack.c.h.b16 %v1127
        %v5522 = vunpack.c.l.b16 %v1128
        %v5523 = vunpack.c.h.b16 %v1128
        %v5524 = vunpack.c.l.b16 %v1129
        %v5525 = vunpack.c.h.b16 %v1129
        %v5526 = vunpack.c.l.b16 %v1130
        %v5527 = vunpack.c.h.b16 %v1130
        %v5528 = vunpack.c.l.b16 %v1131
        %v5529 = vunpack.c.h.b16 %v1131
        %v5530 = vunpack.c.l.b16 %v1132
        %v5531 = vunpack.c.h.b16 %v1132
        %v5532 = vunpack.c.l.b16 %v1133
        %v5533 = vunpack.c.h.b16 %v1133
        %v5534 = vunpack.c.l.b16 %v1134
        %v5535 = vunpack.c.h.b16 %v1134
        %v5536 = vunpack.c.l.b16 %v1135
        %v5537 = vunpack.c.h.b16 %v1135
        %v5538 = vunpack.c.l.b16 %v1136
        %v5539 = vunpack.c.h.b16 %v1136
        %v5540 = vunpack.c.l.b16 %v1137
        %v5541 = vunpack.c.h.b16 %v1137
        %v5542 = vunpack.c.l.b16 %v1138
        %v5543 = vunpack.c.h.b16 %v1138
        %v5544 = vunpack.c.l.b16 %v1139
        %v5545 = vunpack.c.h.b16 %v1139
        %v5546 = vunpack.c.l.b16 %v1140
        %v5547 = vunpack.c.h.b16 %v1140
        %v5548 = vunpack.c.l.b16 %v1141
        %v5549 = vunpack.c.h.b16 %v1141
        %v5550 = vunpack.c.l.b16 %v1142
        %v5551 = vunpack.c.h.b16 %v1142
        %v5552 = vunpack.c.l.b16 %v1143
        %v5553 = vunpack.c.h.b16 %v1143
        %v5554 = vunpack.c.l.b16 %v1144
        %v5555 = vunpack.c.h.b16 %v1144
        %v5556 = vunpack.c.l.b16 %v1145
        %v5557 = vunpack.c.h.b16 %v1145
        %v5558 = vunpack.c.l.b16 %v1146
        %v5559 = vunpack.c.h.b16 %v1146
        %v5560 = vunpack.c.l.b16 %v1147
        %v5561 = vunpack.c.h.b16 %v1147
        %v5562 = vunpack.c.l.b16 %v1148
        %v5563 = vunpack.c.h.b16 %v1148
        %v5564 = vunpack.c.l.b16 %v1149
        %v5565 = vunpack.c.h.b16 %v1149
        %v5566 = vunpack.c.l.b16 %v1150
        %v5567 = vunpack.c.h.b16 %v1150
        %v5568 = vunpack.c.l.b16 %v1151
        %v5569 = vunpack.c.h.b16 %v1151
        %v5570 = vunpack.c.l.b16 %v1152
        %v5571 = vunpack.c.h.b16 %v1152
        %v5572 = vunpack.c.l.b16 %v1153
        %v5573 = vunpack.c.h.b16 %v1153
        %v5574 = vunpack.c.l.b16 %v1154
        %v5575 = vunpack.c.h.b16 %v1154
        %v5576 = vunpack.c.l.b16 %v1155
        %v5577 = vunpack.c.h.b16 %v1155
        %v5578 = vunpack.c.l.b16 %v1156
        %v5579 = vunpack.c.h.b16 %v1156
        %v5580 = vunpack.c.l.b16 %v1157
        %v5581 = vunpack.c.h.b16 %v1157
        %v5582 = vunpack.c.l.b16 %v1158
        %v5583 = vunpack.c.h.b16 %v1158
        %v5584 = vunpack.c.l.b16 %v1159
        %v5585 = vunpack.c.h.b16 %v1159
        %v5586 = vunpack.c.l.b16 %v1160
        %v5587 = vunpack.c.h.b16 %v1160
        %v5588 = vunpack.c.l.b16 %v1161
        %v5589 = vunpack.c.h.b16 %v1161
        %v5590 = vunpack.c.l.b16 %v1162
        %v5591 = vunpack.c.h.b16 %v1162
        %v5592 = vunpack.c.l.b16 %v1163
        %v5593 = vunpack.c.h.b16 %v1163
        %v5594 = vunpack.c.l.b16 %v1164
        %v5595 = vunpack.c.h.b16 %v1164
        %v5596 = vunpack.c.l.b16 %v1165
        %v5597 = vunpack.c.h.b16 %v1165
        %v5598 = vunpack.c.l.b16 %v1166
        %v5599 = vunpack.c.h.b16 %v1166
        %v5600 = vunpack.c.l.b16 %v1167
        %v5601 = vunpack.c.h.b16 %v1167
        %v5602 = vunpack.c.l.b16 %v1168
        %v5603 = vunpack.c.h.b16 %v1168
        %v5604 = vunpack.c.l.b16 %v1169
        %v5605 = vunpack.c.h.b16 %v1169
        %v5606 = vunpack.c.l.b16 %v1170
        %v5607 = vunpack.c.h.b16 %v1170
        %v5608 = vunpack.c.l.b16 %v1171
        %v5609 = vunpack.c.h.b16 %v1171
        %v5610 = vunpack.c.l.b16 %v1172
        %v5611 = vunpack.c.h.b16 %v1172
        %v5612 = vunpack.c.l.b16 %v1173
        %v5613 = vunpack.c.h.b16 %v1173
        %v5614 = vunpack.c.l.b16 %v1174
        %v5615 = vunpack.c.h.b16 %v1174
        %v5616 = vunpack.c.l.b16 %v1175
        %v5617 = vunpack.c.h.b16 %v1175
        %v5618 = vunpack.c.l.b16 %v1176
        %v5619 = vunpack.c.h.b16 %v1176
        %v5620 = vunpack.c.l.b16 %v1177
        %v5621 = vunpack.c.h.b16 %v1177
        %v5622 = vunpack.c.l.b16 %v1178
        %v5623 = vunpack.c.h.b16 %v1178
        %v5624 = vunpack.c.l.b16 %v1179
        %v5625 = vunpack.c.h.b16 %v1179
        %v5626 = vunpack.c.l.b16 %v1180
        %v5627 = vunpack.c.h.b16 %v1180
        %v5628 = vunpack.c.l.b16 %v1181
        %v5629 = vunpack.c.h.b16 %v1181
        %v5630 = vunpack.c.l.b16 %v1182
        %v5631 = vunpack.c.h.b16 %v1182
        %v5632 = vunpack.c.l.b16 %v1183
        %v5633 = vunpack.c.h.b16 %v1183
        %v5634 = vunpack.c.l.b16 %v1184
        %v5635 = vunpack.c.h.b16 %v1184
        %v5636 = vunpack.c.l.b16 %v1185
        %v5637 = vunpack.c.h.b16 %v1185
        %v5638 = vunpack.c.l.b16 %v1186
        %v5639 = vunpack.c.h.b16 %v1186
        %v5640 = vunpack.c.l.b16 %v1187
        %v5641 = vunpack.c.h.b16 %v1187
        %v5642 = vunpack.c.l.b16 %v1188
        %v5643 = vunpack.c.h.b16 %v1188
        %v5644 = vunpack.c.l.b16 %v1189
        %v5645 = vunpack.c.h.b16 %v1189
        %v5646 = vunpack.c.l.b16 %v1190
        %v5647 = vunpack.c.h.b16 %v1190
        %v5648 = vunpack.c.l.b16 %v1191
        %v5649 = vunpack.c.h.b16 %v1191
        %v5650 = vunpack.c.l.b16 %v1192
        %v5651 = vunpack.c.h.b16 %v1192
        %v5652 = vunpack.c.l.b16 %v1193
        %v5653 = vunpack.c.h.b16 %v1193
        %v5654 = vunpack.c.l.b16 %v1194
        %v5655 = vunpack.c.h.b16 %v1194
        %v5656 = vunpack.c.l.b16 %v1195
        %v5657 = vunpack.c.h.b16 %v1195
        %v5658 = vunpack.c.l.b16 %v1196
        %v5659 = vunpack.c.h.b16 %v1196
        %v5660 = vunpack.c.l.b16 %v1197
        %v5661 = vunpack.c.h.b16 %v1197
        %v5662 = vunpack.c.l.b16 %v1198
        %v5663 = vunpack.c.h.b16 %v1198
        %v5664 = vunpack.c.l.b16 %v1199
        %v5665 = vunpack.c.h.b16 %v1199
        %v5666 = vunpack.c.l.b16 %v1200
        %v5667 = vunpack.c.h.b16 %v1200
        %v5668 = vunpack.c.l.b16 %v1201
        %v5669 = vunpack.c.h.b16 %v1201
        %v5670 = vunpack.c.l.b16 %v1202
        %v5671 = vunpack.c.h.b16 %v1202
        %v5672 = vunpack.c.l.b16 %v1203
        %v5673 = vunpack.c.h.b16 %v1203
        %v5674 = vunpack.c.l.b16 %v1204
        %v5675 = vunpack.c.h.b16 %v1204
        %v5676 = vunpack.c.l.b16 %v1205
        %v5677 = vunpack.c.h.b16 %v1205
        %v5678 = vunpack.c.l.b16 %v1206
        %v5679 = vunpack.c.h.b16 %v1206
        %v5680 = vunpack.c.l.b16 %v1207
        %v5681 = vunpack.c.h.b16 %v1207
        %v5682 = vunpack.c.l.b16 %v1208
        %v5683 = vunpack.c.h.b16 %v1208
        %v5684 = vunpack.c.l.b16 %v1209
        %v5685 = vunpack.c.h.b16 %v1209
        %v5686 = vunpack.c.l.b16 %v1210
        %v5687 = vunpack.c.h.b16 %v1210
        %v5688 = vunpack.c.l.b16 %v1211
        %v5689 = vunpack.c.h.b16 %v1211
        %v5690 = vunpack.c.l.b16 %v1212
        %v5691 = vunpack.c.h.b16 %v1212
        %v5692 = vunpack.c.l.b16 %v1213
        %v5693 = vunpack.c.h.b16 %v1213
        %v5694 = vunpack.c.l.b16 %v1214
        %v5695 = vunpack.c.h.b16 %v1214
        %v5696 = vunpack.c.l.b16 %v1215
        %v5697 = vunpack.c.h.b16 %v1215
        %v5698 = vunpack.c.l.b16 %v1216
        %v5699 = vunpack.c.h.b16 %v1216
        %v5700 = vunpack.c.l.b16 %v1217
        %v5701 = vunpack.c.h.b16 %v1217
        %v5702 = vunpack.c.l.b16 %v1218
        %v5703 = vunpack.c.h.b16 %v1218
        %v5704 = vunpack.c.l.b16 %v1219
        %v5705 = vunpack.c.h.b16 %v1219
        %v5706 = vunpack.c.l.b16 %v1220
        %v5707 = vunpack.c.h.b16 %v1220
        %v5708 = vunpack.c.l.b16 %v1221
        %v5709 = vunpack.c.h.b16 %v1221
        %v5710 = vunpack.c.l.b16 %v1222
        %v5711 = vunpack.c.h.b16 %v1222
        %v5712 = vunpack.c.l.b16 %v1223
        %v5713 = vunpack.c.h.b16 %v1223
        %v5714 = vunpack.c.l.b16 %v1224
        %v5715 = vunpack.c.h.b16 %v1224
        %v5716 = vunpack.c.l.b16 %v1225
        %v5717 = vunpack.c.h.b16 %v1225
        %v5718 = vunpack.c.l.b16 %v1226
        %v5719 = vunpack.c.h.b16 %v1226
        %v5720 = vunpack.c.l.b16 %v1227
        %v5721 = vunpack.c.h.b16 %v1227
        %v5722 = vunpack.c.l.b16 %v1228
        %v5723 = vunpack.c.h.b16 %v1228
        %v5724 = vunpack.c.l.b16 %v1229
        %v5725 = vunpack.c.h.b16 %v1229
        %v5726 = vunpack.c.l.b16 %v1230
        %v5727 = vunpack.c.h.b16 %v1230
        %v5728 = vunpack.c.l.b16 %v1231
        %v5729 = vunpack.c.h.b16 %v1231
        %v5730 = vunpack.c.l.b16 %v1232
        %v5731 = vunpack.c.h.b16 %v1232
        %v5732 = vunpack.c.l.b16 %v1233
        %v5733 = vunpack.c.h.b16 %v1233
        %v5734 = vunpack.c.l.b16 %v1234
        %v5735 = vunpack.c.h.b16 %v1234
        %v5736 = vunpack.c.l.b16 %v1235
        %v5737 = vunpack.c.h.b16 %v1235
        %v5738 = vunpack.c.l.b16 %v1236
        %v5739 = vunpack.c.h.b16 %v1236
        %v5740 = vunpack.c.l.b16 %v1237
        %v5741 = vunpack.c.h.b16 %v1237
        %v5742 = vunpack.c.l.b16 %v1238
        %v5743 = vunpack.c.h.b16 %v1238
        %v5744 = vunpack.c.l.b16 %v1239
        %v5745 = vunpack.c.h.b16 %v1239
        %v5746 = vunpack.c.l.b16 %v1240
        %v5747 = vunpack.c.h.b16 %v1240
        %v5748 = vunpack.c.l.b16 %v1241
        %v5749 = vunpack.c.h.b16 %v1241
        %v5750 = vunpack.c.l.b16 %v1242
        %v5751 = vunpack.c.h.b16 %v1242
        %v5752 = vunpack.c.l.b16 %v1243
        %v5753 = vunpack.c.h.b16 %v1243
        %v5754 = vunpack.c.l.b16 %v1244
        %v5755 = vunpack.c.h.b16 %v1244
        %v5756 = vunpack.c.l.b16 %v1245
        %v5757 = vunpack.c.h.b16 %v1245
        %v5758 = vunpack.c.l.b16 %v1246
        %v5759 = vunpack.c.h.b16 %v1246
        %v5760 = vunpack.c.l.b16 %v1247
        %v5761 = vunpack.c.h.b16 %v1247
        %v5762 = vunpack.c.l.b16 %v1248
        %v5763 = vunpack.c.h.b16 %v1248
        %v5764 = vunpack.c.l.b16 %v1249
        %v5765 = vunpack.c.h.b16 %v1249
        %v5766 = vunpack.c.l.b16 %v1250
        %v5767 = vunpack.c.h.b16 %v1250
        %v5768 = vunpack.c.l.b16 %v1251
        %v5769 = vunpack.c.h.b16 %v1251
        %v5770 = vunpack.c.l.b16 %v1252
        %v5771 = vunpack.c.h.b16 %v1252
        %v5772 = vunpack.c.l.b16 %v1253
        %v5773 = vunpack.c.h.b16 %v1253
        %v5774 = vunpack.c.l.b16 %v1254
        %v5775 = vunpack.c.h.b16 %v1254
        %v5776 = vunpack.c.l.b16 %v1255
        %v5777 = vunpack.c.h.b16 %v1255
        %v5778 = vunpack.c.l.b16 %v1256
        %v5779 = vunpack.c.h.b16 %v1256
        %v5780 = vunpack.c.l.b16 %v1257
        %v5781 = vunpack.c.h.b16 %v1257
        %v5782 = vunpack.c.l.b16 %v1258
        %v5783 = vunpack.c.h.b16 %v1258
        %v5784 = vunpack.c.l.b16 %v1259
        %v5785 = vunpack.c.h.b16 %v1259
        %v5786 = vunpack.c.l.b16 %v1260
        %v5787 = vunpack.c.h.b16 %v1260
        %v5788 = vunpack.c.l.b16 %v1261
        %v5789 = vunpack.c.h.b16 %v1261
        %v5790 = vunpack.c.l.b16 %v1262
        %v5791 = vunpack.c.h.b16 %v1262
        %v5792 = vunpack.c.l.b16 %v1263
        %v5793 = vunpack.c.h.b16 %v1263
        %v5794 = vunpack.c.l.b16 %v1264
        %v5795 = vunpack.c.h.b16 %v1264
        %v5796 = vunpack.c.l.b16 %v1265
        %v5797 = vunpack.c.h.b16 %v1265
        %v5798 = vunpack.c.l.b16 %v1266
        %v5799 = vunpack.c.h.b16 %v1266
        %v5800 = vunpack.c.l.b16 %v1267
        %v5801 = vunpack.c.h.b16 %v1267
        %v5802 = vunpack.c.l.b16 %v1268
        %v5803 = vunpack.c.h.b16 %v1268
        %v5804 = vunpack.c.l.b16 %v1269
        %v5805 = vunpack.c.h.b16 %v1269
        %v5806 = vunpack.c.l.b16 %v1270
        %v5807 = vunpack.c.h.b16 %v1270
        %v5808 = vunpack.c.l.b16 %v1271
        %v5809 = vunpack.c.h.b16 %v1271
        %v5810 = vunpack.c.l.b16 %v1272
        %v5811 = vunpack.c.h.b16 %v1272
        %v5812 = vunpack.c.l.b16 %v1273
        %v5813 = vunpack.c.h.b16 %v1273
        %v5814 = vunpack.c.l.b16 %v1274
        %v5815 = vunpack.c.h.b16 %v1274
        %v5816 = vunpack.c.l.b16 %v1275
        %v5817 = vunpack.c.h.b16 %v1275
        %v5818 = vunpack.c.l.b16 %v1276
        %v5819 = vunpack.c.h.b16 %v1276
        %v5820 = vunpack.c.l.b16 %v1277
        %v5821 = vunpack.c.h.b16 %v1277
        %v5822 = vunpack.c.l.b16 %v1278
        %v5823 = vunpack.c.h.b16 %v1278
        %v5824 = vunpack.c.l.b16 %v1279
        %v5825 = vunpack.c.h.b16 %v1279
        %v5826 = vunpack.c.l.b16 %v1280
        %v5827 = vunpack.c.h.b16 %v1280
        %v5828 = vunpack.c.l.b16 %v1281
        %v5829 = vunpack.c.h.b16 %v1281
        %v5830 = vunpack.c.l.b16 %v1282
        %v5831 = vunpack.c.h.b16 %v1282
        %v5832 = vunpack.c.l.b16 %v1283
        %v5833 = vunpack.c.h.b16 %v1283
        %v5834 = vunpack.c.l.b16 %v1284
        %v5835 = vunpack.c.h.b16 %v1284
        %v5836 = vunpack.c.l.b16 %v1285
        %v5837 = vunpack.c.h.b16 %v1285
        %v5838 = vunpack.c.l.b16 %v1286
        %v5839 = vunpack.c.h.b16 %v1286
        %v5840 = vunpack.c.l.b16 %v1287
        %v5841 = vunpack.c.h.b16 %v1287
        %v5842 = vunpack.c.l.b16 %v1288
        %v5843 = vunpack.c.h.b16 %v1288
        %v5844 = vunpack.c.l.b16 %v1289
        %v5845 = vunpack.c.h.b16 %v1289
        %v5846 = vunpack.c.l.b16 %v1290
        %v5847 = vunpack.c.h.b16 %v1290
        %v5848 = vunpack.c.l.b16 %v1291
        %v5849 = vunpack.c.h.b16 %v1291
        %v5850 = vunpack.c.l.b16 %v1292
        %v5851 = vunpack.c.h.b16 %v1292
        %v5852 = vunpack.c.l.b16 %v1293
        %v5853 = vunpack.c.h.b16 %v1293
        %v5854 = vunpack.c.l.b16 %v1294
        %v5855 = vunpack.c.h.b16 %v1294
        %v5856 = vunpack.c.l.b16 %v1295
        %v5857 = vunpack.c.h.b16 %v1295
        %v5858 = vunpack.c.l.b16 %v1296
        %v5859 = vunpack.c.h.b16 %v1296
        %v5860 = vunpack.c.l.b16 %v1297
        %v5861 = vunpack.c.h.b16 %v1297
        %v5862 = vunpack.c.l.b16 %v1298
        %v5863 = vunpack.c.h.b16 %v1298
        %v5864 = vunpack.c.l.b16 %v1299
        %v5865 = vunpack.c.h.b16 %v1299
        %v5866 = vunpack.c.l.b16 %v1300
        %v5867 = vunpack.c.h.b16 %v1300
        %v5868 = vunpack.c.l.b16 %v1301
        %v5869 = vunpack.c.h.b16 %v1301
        %v5870 = vunpack.c.l.b16 %v1302
        %v5871 = vunpack.c.h.b16 %v1302
        %v5872 = vunpack.c.l.b16 %v1303
        %v5873 = vunpack.c.h.b16 %v1303
        %v5874 = vunpack.c.l.b16 %v1304
        %v5875 = vunpack.c.h.b16 %v1304
        %v5876 = vunpack.c.l.b16 %v1305
        %v5877 = vunpack.c.h.b16 %v1305
        %v5878 = vunpack.c.l.b16 %v1306
        %v5879 = vunpack.c.h.b16 %v1306
        %v5880 = vunpack.c.l.b16 %v1307
        %v5881 = vunpack.c.h.b16 %v1307
        %v5882 = vunpack.c.l.b16 %v1308
        %v5883 = vunpack.c.h.b16 %v1308
        %v5884 = vunpack.c.l.b16 %v1309
        %v5885 = vunpack.c.h.b16 %v1309
        %v5886 = vunpack.c.l.b16 %v1310
        %v5887 = vunpack.c.h.b16 %v1310
        %v5888 = vunpack.c.l.b16 %v1311
        %v5889 = vunpack.c.h.b16 %v1311
        %v5890 = vunpack.c.l.b16 %v1312
        %v5891 = vunpack.c.h.b16 %v1312
        %v5892 = vunpack.c.l.b16 %v1313
        %v5893 = vunpack.c.h.b16 %v1313
        %v5894 = vunpack.c.l.b16 %v1314
        %v5895 = vunpack.c.h.b16 %v1314
        %v5896 = vunpack.c.l.b16 %v1315
        %v5897 = vunpack.c.h.b16 %v1315
        %v5898 = vunpack.c.l.b16 %v1316
        %v5899 = vunpack.c.h.b16 %v1316
        %v5900 = vunpack.c.l.b16 %v1317
        %v5901 = vunpack.c.h.b16 %v1317
        %v5902 = vunpack.c.l.b16 %v1318
        %v5903 = vunpack.c.h.b16 %v1318
        %v5904 = vunpack.c.l.b16 %v1319
        %v5905 = vunpack.c.h.b16 %v1319
        %v5906 = vunpack.c.l.b16 %v1320
        %v5907 = vunpack.c.h.b16 %v1320
        %v5908 = vunpack.c.l.b16 %v1321
        %v5909 = vunpack.c.h.b16 %v1321
        %v5910 = vunpack.c.l.b16 %v1322
        %v5911 = vunpack.c.h.b16 %v1322
        %v5912 = vunpack.c.l.b16 %v1323
        %v5913 = vunpack.c.h.b16 %v1323
        %v5914 = vunpack.c.l.b16 %v1324
        %v5915 = vunpack.c.h.b16 %v1324
        %v5916 = vunpack.c.l.b16 %v1325
        %v5917 = vunpack.c.h.b16 %v1325
        %v5918 = vunpack.c.l.b16 %v1326
        %v5919 = vunpack.c.h.b16 %v1326
        %v5920 = vunpack.c.l.b16 %v1327
        %v5921 = vunpack.c.h.b16 %v1327
        %v5922 = vunpack.c.l.b16 %v1328
        %v5923 = vunpack.c.h.b16 %v1328
        %v5924 = vunpack.c.l.b16 %v1329
        %v5925 = vunpack.c.h.b16 %v1329
        %v5926 = vunpack.c.l.b16 %v1330
        %v5927 = vunpack.c.h.b16 %v1330
        %v5928 = vunpack.c.l.b16 %v1331
        %v5929 = vunpack.c.h.b16 %v1331
        %v5930 = vunpack.c.l.b16 %v1332
        %v5931 = vunpack.c.h.b16 %v1332
        %v5932 = vunpack.c.l.b16 %v1333
        %v5933 = vunpack.c.h.b16 %v1333
        %v5934 = vunpack.c.l.b16 %v1334
        %v5935 = vunpack.c.h.b16 %v1334
        %v5936 = vunpack.c.l.b16 %v1335
        %v5937 = vunpack.c.h.b16 %v1335
        %v5938 = vunpack.c.l.b16 %v1336
        %v5939 = vunpack.c.h.b16 %v1336
        %v5940 = vunpack.c.l.b16 %v1337
        %v5941 = vunpack.c.h.b16 %v1337
        %v5942 = vunpack.c.l.b16 %v1338
        %v5943 = vunpack.c.h.b16 %v1338
        %v5944 = vunpack.c.l.b16 %v1339
        %v5945 = vunpack.c.h.b16 %v1339
        %v5946 = vunpack.c.l.b16 %v1340
        %v5947 = vunpack.c.h.b16 %v1340
        %v5948 = vunpack.c.l.b16 %v1341
        %v5949 = vunpack.c.h.b16 %v1341
        %v5950 = vunpack.c.l.b16 %v1342
        %v5951 = vunpack.c.h.b16 %v1342
        %v5952 = vunpack.c.l.b16 %v1343
        %v5953 = vunpack.c.h.b16 %v1343
        %v5954 = vunpack.c.l.b16 %v1344
        %v5955 = vunpack.c.h.b16 %v1344
        %v5956 = vunpack.c.l.b16 %v1345
        %v5957 = vunpack.c.h.b16 %v1345
        %v5958 = vunpack.c.l.b16 %v1346
        %v5959 = vunpack.c.h.b16 %v1346
        %v5960 = vunpack.c.l.b16 %v1347
        %v5961 = vunpack.c.h.b16 %v1347
        %v5962 = vunpack.c.l.b16 %v1348
        %v5963 = vunpack.c.h.b16 %v1348
        %v5964 = vunpack.c.l.b16 %v1349
        %v5965 = vunpack.c.h.b16 %v1349
        %v5966 = vunpack.c.l.b16 %v1350
        %v5967 = vunpack.c.h.b16 %v1350
        %v5968 = vunpack.c.l.b16 %v1351
        %v5969 = vunpack.c.h.b16 %v1351
        %v5970 = vunpack.c.l.b16 %v1352
        %v5971 = vunpack.c.h.b16 %v1352
        %v5972 = vunpack.c.l.b16 %v1353
        %v5973 = vunpack.c.h.b16 %v1353
        %v5974 = vunpack.c.l.b16 %v1354
        %v5975 = vunpack.c.h.b16 %v1354
        %v5976 = vunpack.c.l.b16 %v1355
        %v5977 = vunpack.c.h.b16 %v1355
        %v5978 = vunpack.c.l.b16 %v1356
        %v5979 = vunpack.c.h.b16 %v1356
        %v5980 = vunpack.c.l.b16 %v1357
        %v5981 = vunpack.c.h.b16 %v1357
        %v5982 = vunpack.c.l.b16 %v1358
        %v5983 = vunpack.c.h.b16 %v1358
        %v5984 = vunpack.c.l.b16 %v1359
        %v5985 = vunpack.c.h.b16 %v1359
        %v5986 = vunpack.c.l.b16 %v1360
        %v5987 = vunpack.c.h.b16 %v1360
        %v5988 = vunpack.c.l.b16 %v1361
        %v5989 = vunpack.c.h.b16 %v1361
        %v5990 = vunpack.c.l.b16 %v1362
        %v5991 = vunpack.c.h.b16 %v1362
        %v5992 = vunpack.c.l.b16 %v1363
        %v5993 = vunpack.c.h.b16 %v1363
        %v5994 = vunpack.c.l.b16 %v1364
        %v5995 = vunpack.c.h.b16 %v1364
        %v5996 = vunpack.c.l.b16 %v1365
        %v5997 = vunpack.c.h.b16 %v1365
        %v5998 = vunpack.c.l.b16 %v1366
        %v5999 = vunpack.c.h.b16 %v1366
        %v6000 = vunpack.c.l.b16 %v1367
        %v6001 = vunpack.c.h.b16 %v1367
        %v6002 = vunpack.c.l.b16 %v1368
        %v6003 = vunpack.c.h.b16 %v1368
        %v6004 = vunpack.c.l.b16 %v1369
        %v6005 = vunpack.c.h.b16 %v1369
        %v6006 = vunpack.c.l.b16 %v1370
        %v6007 = vunpack.c.h.b16 %v1370
        %v6008 = vunpack.c.l.b16 %v1371
        %v6009 = vunpack.c.h.b16 %v1371
        %v6010 = vunpack.c.l.b16 %v1372
        %v6011 = vunpack.c.h.b16 %v1372
        %v6012 = vunpack.c.l.b16 %v1373
        %v6013 = vunpack.c.h.b16 %v1373
        %v6014 = vunpack.c.l.b16 %v1374
        %v6015 = vunpack.c.h.b16 %v1374
        %v6016 = vunpack.c.l.b16 %v1375
        %v6017 = vunpack.c.h.b16 %v1375
        %v6018 = vunpack.c.l.b16 %v1376
        %v6019 = vunpack.c.h.b16 %v1376
        %v6020 = vunpack.c.l.b16 %v1377
        %v6021 = vunpack.c.h.b16 %v1377
        %v6022 = vunpack.c.l.b16 %v1378
        %v6023 = vunpack.c.h.b16 %v1378
        %v6024 = vunpack.c.l.b16 %v1379
        %v6025 = vunpack.c.h.b16 %v1379
        %v6026 = vunpack.c.l.b16 %v1380
        %v6027 = vunpack.c.h.b16 %v1380
        %v6028 = vunpack.c.l.b16 %v1381
        %v6029 = vunpack.c.h.b16 %v1381
        %v6030 = vunpack.c.l.b16 %v1382
        %v6031 = vunpack.c.h.b16 %v1382
        %v6032 = vunpack.c.l.b16 %v1383
        %v6033 = vunpack.c.h.b16 %v1383
        %v6034 = vunpack.c.l.b16 %v1384
        %v6035 = vunpack.c.h.b16 %v1384
        %v6036 = vunpack.c.l.b16 %v1385
        %v6037 = vunpack.c.h.b16 %v1385
        %v6038 = vunpack.c.l.b16 %v1386
        %v6039 = vunpack.c.h.b16 %v1386
        %v6040 = vunpack.c.l.b16 %v1387
        %v6041 = vunpack.c.h.b16 %v1387
        %v6042 = vunpack.c.l.b16 %v1388
        %v6043 = vunpack.c.h.b16 %v1388
        %v6044 = vunpack.c.l.b16 %v1389
        %v6045 = vunpack.c.h.b16 %v1389
        %v6046 = vunpack.c.l.b16 %v1390
        %v6047 = vunpack.c.h.b16 %v1390
        %v6048 = vunpack.c.l.b16 %v1391
        %v6049 = vunpack.c.h.b16 %v1391
        %v6050 = vunpack.c.l.b16 %v1392
        %v6051 = vunpack.c.h.b16 %v1392
        %v6052 = vunpack.c.l.b16 %v1393
        %v6053 = vunpack.c.h.b16 %v1393
        %v6054 = vunpack.c.l.b16 %v1394
        %v6055 = vunpack.c.h.b16 %v1394
        %v6056 = vunpack.c.l.b16 %v1395
        %v6057 = vunpack.c.h.b16 %v1395
        %v6058 = vunpack.c.l.b16 %v1396
        %v6059 = vunpack.c.h.b16 %v1396
        %v6060 = vunpack.c.l.b16 %v1397
        %v6061 = vunpack.c.h.b16 %v1397
        %v6062 = vunpack.c.l.b16 %v1398
        %v6063 = vunpack.c.h.b16 %v1398
        %v6064 = vunpack.c.l.b16 %v1399
        %v6065 = vunpack.c.h.b16 %v1399
        %v6066 = vunpack.c.l.b16 %v1400
        %v6067 = vunpack.c.h.b16 %v1400
        %v6068 = vunpack.c.l.b16 %v1401
        %v6069 = vunpack.c.h.b16 %v1401
        %v6070 = vunpack.c.l.b16 %v1402
        %v6071 = vunpack.c.h.b16 %v1402
        %v6072 = vunpack.c.l.b16 %v1403
        %v6073 = vunpack.c.h.b16 %v1403
        %v6074 = vunpack.c.l.b16 %v1404
        %v6075 = vunpack.c.h.b16 %v1404
        %v6076 = vunpack.c.l.b16 %v1405
        %v6077 = vunpack.c.h.b16 %v1405
        %v6078 = vunpack.c.l.b16 %v1406
        %v6079 = vunpack.c.h.b16 %v1406
        %v6080 = vunpack.c.l.b16 %v1407
        %v6081 = vunpack.c.h.b16 %v1407
        %v6082 = vunpack.c.l.b16 %v1408
        %v6083 = vunpack.c.h.b16 %v1408
        %v6084 = vunpack.c.l.b16 %v1409
        %v6085 = vunpack.c.h.b16 %v1409
        %v6086 = vunpack.c.l.b16 %v1410
        %v6087 = vunpack.c.h.b16 %v1410
        %v6088 = vunpack.c.l.b16 %v1411
        %v6089 = vunpack.c.h.b16 %v1411
        %v6090 = vunpack.c.l.b16 %v1412
        %v6091 = vunpack.c.h.b16 %v1412
        %v6092 = vunpack.c.l.b16 %v1413
        %v6093 = vunpack.c.h.b16 %v1413
        %v6094 = vunpack.c.l.b16 %v1414
        %v6095 = vunpack.c.h.b16 %v1414
        %v6096 = vunpack.c.l.b16 %v1415
        %v6097 = vunpack.c.h.b16 %v1415
        %v6098 = vunpack.c.l.b16 %v1416
        %v6099 = vunpack.c.h.b16 %v1416
        %v6100 = vunpack.c.l.b16 %v1417
        %v6101 = vunpack.c.h.b16 %v1417
        %v6102 = vunpack.c.l.b16 %v1418
        %v6103 = vunpack.c.h.b16 %v1418
        %v6104 = vunpack.c.l.b16 %v1419
        %v6105 = vunpack.c.h.b16 %v1419
        %v6106 = vunpack.c.l.b16 %v1420
        %v6107 = vunpack.c.h.b16 %v1420
        %v6108 = vunpack.c.l.b16 %v1421
        %v6109 = vunpack.c.h.b16 %v1421
        %v6110 = vunpack.c.l.b16 %v1422
        %v6111 = vunpack.c.h.b16 %v1422
        %v6112 = vunpack.c.l.b16 %v1423
        %v6113 = vunpack.c.h.b16 %v1423
        %v6114 = vunpack.c.l.b16 %v1424
        %v6115 = vunpack.c.h.b16 %v1424
        %v6116 = vunpack.c.l.b16 %v1425
        %v6117 = vunpack.c.h.b16 %v1425
        %v6118 = vunpack.c.l.b16 %v1426
        %v6119 = vunpack.c.h.b16 %v1426
        %v6120 = vunpack.c.l.b16 %v1427
        %v6121 = vunpack.c.h.b16 %v1427
        %v6122 = vunpack.c.l.b16 %v1428
        %v6123 = vunpack.c.h.b16 %v1428
        %v6124 = vunpack.c.l.b16 %v1429
        %v6125 = vunpack.c.h.b16 %v1429
        %v6126 = vunpack.c.l.b16 %v1430
        %v6127 = vunpack.c.h.b16 %v1430
        %v6128 = vunpack.c.l.b16 %v1431
        %v6129 = vunpack.c.h.b16 %v1431
        %v6130 = vunpack.c.l.b16 %v1432
        %v6131 = vunpack.c.h.b16 %v1432
        %v6132 = vunpack.c.l.b16 %v1433
        %v6133 = vunpack.c.h.b16 %v1433
        %v6134 = vunpack.c.l.b16 %v1434
        %v6135 = vunpack.c.h.b16 %v1434
        %v6136 = vunpack.c.l.b16 %v1435
        %v6137 = vunpack.c.h.b16 %v1435
        %v6138 = vunpack.c.l.b16 %v1436
        %v6139 = vunpack.c.h.b16 %v1436
        %v6140 = vunpack.c.l.b16 %v1437
        %v6141 = vunpack.c.h.b16 %v1437
        %v6142 = vunpack.c.l.b16 %v1438
        %v6143 = vunpack.c.h.b16 %v1438
        %v6144 = vunpack.c.l.b16 %v1439
        %v6145 = vunpack.c.h.b16 %v1439
        %v6146 = vunpack.c.l.b16 %v1440
        %v6147 = vunpack.c.h.b16 %v1440
        %v6148 = vunpack.c.l.b16 %v1441
        %v6149 = vunpack.c.h.b16 %v1441
        %v6150 = vunpack.c.l.b16 %v1442
        %v6151 = vunpack.c.h.b16 %v1442
        %v6152 = vunpack.c.l.b16 %v1443
        %v6153 = vunpack.c.h.b16 %v1443
        %v6154 = vunpack.c.l.b16 %v1444
        %v6155 = vunpack.c.h.b16 %v1444
        %v6156 = vunpack.c.l.b16 %v1445
        %v6157 = vunpack.c.h.b16 %v1445
        %v6158 = vunpack.c.l.b16 %v1446
        %v6159 = vunpack.c.h.b16 %v1446
        %v6160 = vunpack.c.l.b16 %v1447
        %v6161 = vunpack.c.h.b16 %v1447
        %v6162 = vunpack.c.l.b16 %v1448
        %v6163 = vunpack.c.h.b16 %v1448
        %v6164 = vunpack.c.l.b16 %v1449
        %v6165 = vunpack.c.h.b16 %v1449
        %v6166 = vunpack.c.l.b16 %v1450
        %v6167 = vunpack.c.h.b16 %v1450
        %v6168 = vunpack.c.l.b16 %v1451
        %v6169 = vunpack.c.h.b16 %v1451
        %v6170 = vunpack.c.l.b16 %v1452
        %v6171 = vunpack.c.h.b16 %v1452
        %v6172 = vunpack.c.l.b16 %v1453
        %v6173 = vunpack.c.h.b16 %v1453
        %v6174 = vunpack.c.l.b16 %v1454
        %v6175 = vunpack.c.h.b16 %v1454
        %v6176 = vunpack.c.l.b16 %v1455
        %v6177 = vunpack.c.h.b16 %v1455
        %v6178 = vunpack.c.l.b16 %v1456
        %v6179 = vunpack.c.h.b16 %v1456
        %v6180 = vunpack.c.l.b16 %v1457
        %v6181 = vunpack.c.h.b16 %v1457
        %v6182 = vunpack.c.l.b16 %v1458
        %v6183 = vunpack.c.h.b16 %v1458
        %v6184 = vunpack.c.l.b16 %v1459
        %v6185 = vunpack.c.h.b16 %v1459
        %v6186 = vunpack.c.l.b16 %v1460
        %v6187 = vunpack.c.h.b16 %v1460
        %v6188 = vunpack.c.l.b16 %v1461
        %v6189 = vunpack.c.h.b16 %v1461
        %v6190 = vunpack.c.l.b16 %v1462
        %v6191 = vunpack.c.h.b16 %v1462
        %v6192 = vunpack.c.l.b16 %v1463
        %v6193 = vunpack.c.h.b16 %v1463
        %v6194 = vunpack.c.l.b16 %v1464
        %v6195 = vunpack.c.h.b16 %v1464
        %v6196 = vunpack.c.l.b16 %v1465
        %v6197 = vunpack.c.h.b16 %v1465
        %v6198 = vunpack.c.l.b16 %v1466
        %v6199 = vunpack.c.h.b16 %v1466
        %v6200 = vunpack.c.l.b16 %v1467
        %v6201 = vunpack.c.h.b16 %v1467
        %v6202 = vunpack.c.l.b16 %v1468
        %v6203 = vunpack.c.h.b16 %v1468
        %v6204 = vunpack.c.l.b16 %v1469
        %v6205 = vunpack.c.h.b16 %v1469
        %v6206 = vunpack.c.l.b16 %v1470
        %v6207 = vunpack.c.h.b16 %v1470
        %v6208 = vunpack.c.l.b16 %v1471
        %v6209 = vunpack.c.h.b16 %v1471
        %v6210 = vunpack.c.l.b16 %v1472
        %v6211 = vunpack.c.h.b16 %v1472
        %v6212 = vunpack.c.l.b16 %v1473
        %v6213 = vunpack.c.h.b16 %v1473
        %v6214 = vunpack.c.l.b16 %v1474
        %v6215 = vunpack.c.h.b16 %v1474
        %v6216 = vunpack.c.l.b16 %v1475
        %v6217 = vunpack.c.h.b16 %v1475
        %v6218 = vunpack.c.l.b16 %v1476
        %v6219 = vunpack.c.h.b16 %v1476
        %v6220 = vunpack.c.l.b16 %v1477
        %v6221 = vunpack.c.h.b16 %v1477
        %v6222 = vunpack.c.l.b16 %v1478
        %v6223 = vunpack.c.h.b16 %v1478
        %v6224 = vunpack.c.l.b16 %v1479
        %v6225 = vunpack.c.h.b16 %v1479
        %v6226 = vunpack.c.l.b16 %v1480
        %v6227 = vunpack.c.h.b16 %v1480
        %v6228 = vunpack.c.l.b16 %v1481
        %v6229 = vunpack.c.h.b16 %v1481
        %v6230 = vunpack.c.l.b16 %v1482
        %v6231 = vunpack.c.h.b16 %v1482
        %v6232 = vunpack.c.l.b16 %v1483
        %v6233 = vunpack.c.h.b16 %v1483
        %v6234 = vunpack.c.l.b16 %v1484
        %v6235 = vunpack.c.h.b16 %v1484
        %v6236 = vunpack.c.l.b16 %v1485
        %v6237 = vunpack.c.h.b16 %v1485
        %v6238 = vunpack.c.l.b16 %v1486
        %v6239 = vunpack.c.h.b16 %v1486
        %v6240 = vunpack.c.l.b16 %v1487
        %v6241 = vunpack.c.h.b16 %v1487
        %v6242 = vunpack.c.l.b16 %v1488
        %v6243 = vunpack.c.h.b16 %v1488
        %v6244 = vunpack.c.l.b16 %v1489
        %v6245 = vunpack.c.h.b16 %v1489
        %v6246 = vunpack.c.l.b16 %v1490
        %v6247 = vunpack.c.h.b16 %v1490
        %v6248 = vunpack.c.l.b16 %v1491
        %v6249 = vunpack.c.h.b16 %v1491
        %v6250 = vunpack.c.l.b16 %v1492
        %v6251 = vunpack.c.h.b16 %v1492
        %v6252 = vunpack.c.l.b16 %v1493
        %v6253 = vunpack.c.h.b16 %v1493
        %v6254 = vunpack.c.l.b16 %v1494
        %v6255 = vunpack.c.h.b16 %v1494
        %v6256 = vunpack.c.l.b16 %v1495
        %v6257 = vunpack.c.h.b16 %v1495
        %v6258 = vunpack.c.l.b16 %v1496
        %v6259 = vunpack.c.h.b16 %v1496
        %v6260 = vunpack.c.l.b16 %v1497
        %v6261 = vunpack.c.h.b16 %v1497
        %v6262 = vunpack.c.l.b16 %v1498
        %v6263 = vunpack.c.h.b16 %v1498
        %v6264 = vunpack.c.l.b16 %v1499
        %v6265 = vunpack.c.h.b16 %v1499
        %v6266 = vunpack.c.l.b16 %v1500
        %v6267 = vunpack.c.h.b16 %v1500
        %v6268 = vunpack.c.l.b16 %v1501
        %v6269 = vunpack.c.h.b16 %v1501
        %v6270 = vunpack.c.l.b16 %v1502
        %v6271 = vunpack.c.h.b16 %v1502
        %v6272 = vunpack.c.l.b16 %v1503
        %v6273 = vunpack.c.h.b16 %v1503
        %v6274 = vunpack.c.l.b16 %v1504
        %v6275 = vunpack.c.h.b16 %v1504
        %v6276 = vunpack.c.l.b16 %v1505
        %v6277 = vunpack.c.h.b16 %v1505
        %v6278 = vunpack.c.l.b16 %v1506
        %v6279 = vunpack.c.h.b16 %v1506
        %v6280 = vunpack.c.l.b16 %v1507
        %v6281 = vunpack.c.h.b16 %v1507
        %v6282 = vunpack.c.l.b16 %v1508
        %v6283 = vunpack.c.h.b16 %v1508
        %v6284 = vunpack.c.l.b16 %v1509
        %v6285 = vunpack.c.h.b16 %v1509
        %v6286 = vunpack.c.l.b16 %v1510
        %v6287 = vunpack.c.h.b16 %v1510
        %v6288 = vunpack.c.l.b16 %v1511
        %v6289 = vunpack.c.h.b16 %v1511
        %v6290 = vunpack.c.l.b16 %v1512
        %v6291 = vunpack.c.h.b16 %v1512
        %v6292 = vunpack.c.l.b16 %v1513
        %v6293 = vunpack.c.h.b16 %v1513
        %v6294 = vunpack.c.l.b16 %v1514
        %v6295 = vunpack.c.h.b16 %v1514
        %v6296 = vunpack.c.l.b16 %v1515
        %v6297 = vunpack.c.h.b16 %v1515
        %v6298 = vunpack.c.l.b16 %v1516
        %v6299 = vunpack.c.h.b16 %v1516
        %v6300 = vunpack.c.l.b16 %v1517
        %v6301 = vunpack.c.h.b16 %v1517
        %v6302 = vunpack.c.l.b16 %v1518
        %v6303 = vunpack.c.h.b16 %v1518
        %v6304 = vunpack.c.l.b16 %v1519
        %v6305 = vunpack.c.h.b16 %v1519
        %v6306 = vunpack.c.l.b16 %v1520
        %v6307 = vunpack.c.h.b16 %v1520
        %v6308 = vunpack.c.l.b16 %v1521
        %v6309 = vunpack.c.h.b16 %v1521
        %v6310 = vunpack.c.l.b16 %v1522
        %v6311 = vunpack.c.h.b16 %v1522
        %v6312 = vunpack.c.l.b16 %v1523
        %v6313 = vunpack.c.h.b16 %v1523
        %v6314 = vunpack.c.l.b16 %v1524
        %v6315 = vunpack.c.h.b16 %v1524
        %v6316 = vunpack.c.l.b16 %v1525
        %v6317 = vunpack.c.h.b16 %v1525
        %v6318 = vunpack.c.l.b16 %v1526
        %v6319 = vunpack.c.h.b16 %v1526
        %v6320 = vunpack.c.l.b16 %v1527
        %v6321 = vunpack.c.h.b16 %v1527
        %v6322 = vunpack.c.l.b16 %v1528
        %v6323 = vunpack.c.h.b16 %v1528
        %v6324 = vunpack.c.l.b16 %v1529
        %v6325 = vunpack.c.h.b16 %v1529
        %v6326 = vunpack.c.l.b16 %v1530
        %v6327 = vunpack.c.h.b16 %v1530
        %v6328 = vunpack.c.l.b16 %v1531
        %v6329 = vunpack.c.h.b16 %v1531
        %v6330 = vunpack.c.l.b16 %v1532
        %v6331 = vunpack.c.h.b16 %v1532
        %v6332 = vunpack.c.l.b16 %v1533
        %v6333 = vunpack.c.h.b16 %v1533
        %v6334 = vunpack.c.l.b16 %v1534
        %v6335 = vunpack.c.h.b16 %v1534
        %v6336 = vunpack.c.l.b16 %v1535
        %v6337 = vunpack.c.h.b16 %v1535
        %v6338 = vunpack.c.l.b16 %v1536
        %v6339 = vunpack.c.h.b16 %v1536
        %v6340 = vunpack.c.l.b16 %v1537
        %v6341 = vunpack.c.h.b16 %v1537
        %v6342 = vunpack.c.l.b16 %v1538
        %v6343 = vunpack.c.h.b16 %v1538
        %v6344 = vunpack.c.l.b16 %v1539
        %v6345 = vunpack.c.h.b16 %v1539
        %v6346 = vunpack.c.l.b16 %v1540
        %v6347 = vunpack.c.h.b16 %v1540
        %v6348 = vunpack.c.l.b16 %v1541
        %v6349 = vunpack.c.h.b16 %v1541
        %v6350 = vunpack.c.l.b16 %v1542
        %v6351 = vunpack.c.h.b16 %v1542
        %v6352 = vunpack.c.l.b16 %v1543
        %v6353 = vunpack.c.h.b16 %v1543
        %v6354 = vunpack.c.l.b16 %v1544
        %v6355 = vunpack.c.h.b16 %v1544
        %v6356 = vunpack.c.l.b16 %v1545
        %v6357 = vunpack.c.h.b16 %v1545
        %v6358 = vunpack.c.l.b16 %v1546
        %v6359 = vunpack.c.h.b16 %v1546
        %v6360 = vunpack.c.l.b16 %v1547
        %v6361 = vunpack.c.h.b16 %v1547
        %v6362 = vunpack.c.l.b16 %v1548
        %v6363 = vunpack.c.h.b16 %v1548
        %v6364 = vunpack.c.l.b16 %v1549
        %v6365 = vunpack.c.h.b16 %v1549
        %v6366 = vunpack.c.l.b16 %v1550
        %v6367 = vunpack.c.h.b16 %v1550
        %v6368 = vunpack.c.l.b16 %v1551
        %v6369 = vunpack.c.h.b16 %v1551
        %v6370 = vunpack.c.l.b16 %v1552
        %v6371 = vunpack.c.h.b16 %v1552
        %v6372 = vunpack.c.l.b16 %v1553
        %v6373 = vunpack.c.h.b16 %v1553
        %v6374 = vunpack.c.l.b16 %v1554
        %v6375 = vunpack.c.h.b16 %v1554
        %v6376 = vunpack.c.l.b16 %v1555
        %v6377 = vunpack.c.h.b16 %v1555
        %v6378 = vunpack.c.l.b16 %v1556
        %v6379 = vunpack.c.h.b16 %v1556
        %v6380 = vunpack.c.l.b16 %v1557
        %v6381 = vunpack.c.h.b16 %v1557
        %v6382 = vunpack.c.l.b16 %v1558
        %v6383 = vunpack.c.h.b16 %v1558
        %v6384 = vunpack.c.l.b16 %v1559
        %v6385 = vunpack.c.h.b16 %v1559
        %v6386 = vunpack.c.l.b16 %v1560
        %v6387 = vunpack.c.h.b16 %v1560
        %v6388 = vunpack.c.l.b16 %v1561
        %v6389 = vunpack.c.h.b16 %v1561
        %v6390 = vunpack.c.l.b16 %v1562
        %v6391 = vunpack.c.h.b16 %v1562
        %v6392 = vunpack.c.l.b16 %v1563
        %v6393 = vunpack.c.h.b16 %v1563
        %v6394 = vunpack.c.l.b16 %v1564
        %v6395 = vunpack.c.h.b16 %v1564
        %v6396 = vunpack.c.l.b16 %v1565
        %v6397 = vunpack.c.h.b16 %v1565
        %v6398 = vunpack.c.l.b16 %v1566
        %v6399 = vunpack.c.h.b16 %v1566
        %v6400 = vunpack.c.l.b16 %v1567
        %v6401 = vunpack.c.h.b16 %v1567
        %v6402 = vunpack.c.l.b16 %v1568
        %v6403 = vunpack.c.h.b16 %v1568
        %v6404 = vunpack.c.l.b16 %v1569
        %v6405 = vunpack.c.h.b16 %v1569
        %v6406 = vunpack.c.l.b16 %v1570
        %v6407 = vunpack.c.h.b16 %v1570
        %v6408 = vunpack.c.l.b16 %v1571
        %v6409 = vunpack.c.h.b16 %v1571
        %v6410 = vunpack.c.l.b16 %v1572
        %v6411 = vunpack.c.h.b16 %v1572
        %v6412 = vunpack.c.l.b16 %v1573
        %v6413 = vunpack.c.h.b16 %v1573
        %v6414 = vunpack.c.l.b16 %v1574
        %v6415 = vunpack.c.h.b16 %v1574
        %v6416 = vunpack.c.l.b16 %v1575
        %v6417 = vunpack.c.h.b16 %v1575
        %v6418 = vunpack.c.l.b16 %v1576
        %v6419 = vunpack.c.h.b16 %v1576
        %v6420 = vunpack.c.l.b16 %v1577
        %v6421 = vunpack.c.h.b16 %v1577
        %v6422 = vunpack.c.l.b16 %v1578
        %v6423 = vunpack.c.h.b16 %v1578
        %v6424 = vunpack.c.l.b16 %v1579
        %v6425 = vunpack.c.h.b16 %v1579
        %v6426 = vunpack.c.l.b16 %v1580
        %v6427 = vunpack.c.h.b16 %v1580
        %v6428 = vunpack.c.l.b16 %v1581
        %v6429 = vunpack.c.h.b16 %v1581
        %v6430 = vunpack.c.l.b16 %v1582
        %v6431 = vunpack.c.h.b16 %v1582
        %v6432 = vunpack.c.l.b16 %v1583
        %v6433 = vunpack.c.h.b16 %v1583
        %v6434 = vunpack.c.l.b16 %v1584
        %v6435 = vunpack.c.h.b16 %v1584
        %v6436 = vunpack.c.l.b16 %v1585
        %v6437 = vunpack.c.h.b16 %v1585
        %v6438 = vunpack.c.l.b16 %v1586
        %v6439 = vunpack.c.h.b16 %v1586
        %v6440 = vunpack.c.l.b16 %v1587
        %v6441 = vunpack.c.h.b16 %v1587
        %v6442 = vunpack.c.l.b16 %v1588
        %v6443 = vunpack.c.h.b16 %v1588
        %v6444 = vunpack.c.l.b16 %v1589
        %v6445 = vunpack.c.h.b16 %v1589
        %v6446 = vunpack.c.l.b16 %v1590
        %v6447 = vunpack.c.h.b16 %v1590
        %v6448 = vunpack.c.l.b16 %v1591
        %v6449 = vunpack.c.h.b16 %v1591
        %v6450 = vunpack.c.l.b16 %v1592
        %v6451 = vunpack.c.h.b16 %v1592
        %v6452 = vunpack.c.l.b16 %v1593
        %v6453 = vunpack.c.h.b16 %v1593
        %v6454 = vunpack.c.l.b16 %v1594
        %v6455 = vunpack.c.h.b16 %v1594
        %v6456 = vunpack.c.l.b16 %v1595
        %v6457 = vunpack.c.h.b16 %v1595
        %v6458 = vunpack.c.l.b16 %v1596
        %v6459 = vunpack.c.h.b16 %v1596
        %v6460 = vunpack.c.l.b16 %v1597
        %v6461 = vunpack.c.h.b16 %v1597
        %v6462 = vunpack.c.l.b16 %v1598
        %v6463 = vunpack.c.h.b16 %v1598
        %v6464 = vunpack.c.l.b16 %v1599
        %v6465 = vunpack.c.h.b16 %v1599
        %v6466 = vunpack.c.l.b16 %v1600
        %v6467 = vunpack.c.h.b16 %v1600
        %v6468 = vunpack.c.l.b16 %v1601
        %v6469 = vunpack.c.h.b16 %v1601
        %v6470 = vunpack.c.l.b16 %v1602
        %v6471 = vunpack.c.h.b16 %v1602
        %v6472 = vunpack.c.l.b16 %v1603
        %v6473 = vunpack.c.h.b16 %v1603
        %v6474 = vunpack.c.l.b16 %v1604
        %v6475 = vunpack.c.h.b16 %v1604
        %v6476 = vunpack.c.l.b16 %v1605
        %v6477 = vunpack.c.h.b16 %v1605
        %v6478 = vunpack.c.l.b16 %v1606
        %v6479 = vunpack.c.h.b16 %v1606
        %v6480 = vunpack.c.l.b16 %v1607
        %v6481 = vunpack.c.h.b16 %v1607
        %v6482 = vunpack.c.l.b16 %v1608
        %v6483 = vunpack.c.h.b16 %v1608
        %v6484 = vunpack.c.l.b16 %v1609
        %v6485 = vunpack.c.h.b16 %v1609
        %v6486 = vunpack.c.l.b16 %v1610
        %v6487 = vunpack.c.h.b16 %v1610
        %v6488 = vunpack.c.l.b16 %v1611
        %v6489 = vunpack.c.h.b16 %v1611
        %v6490 = vunpack.c.l.b16 %v1612
        %v6491 = vunpack.c.h.b16 %v1612
        %v6492 = vunpack.c.l.b16 %v1613
        %v6493 = vunpack.c.h.b16 %v1613
        %v6494 = vunpack.c.l.b16 %v1614
        %v6495 = vunpack.c.h.b16 %v1614
        %v6496 = vunpack.c.l.b16 %v1615
        %v6497 = vunpack.c.h.b16 %v1615
        %v6498 = vunpack.c.l.b16 %v1616
        %v6499 = vunpack.c.h.b16 %v1616
        %v6500 = vunpack.c.l.b16 %v1617
        %v6501 = vunpack.c.h.b16 %v1617
        %v6502 = vunpack.c.l.b16 %v1618
        %v6503 = vunpack.c.h.b16 %v1618
        %v6504 = vunpack.c.l.b16 %v1619
        %v6505 = vunpack.c.h.b16 %v1619
        %v6506 = vunpack.c.l.b16 %v1620
        %v6507 = vunpack.c.h.b16 %v1620
        %v6508 = vunpack.c.l.b16 %v1621
        %v6509 = vunpack.c.h.b16 %v1621
        %v6510 = vunpack.c.l.b16 %v1622
        %v6511 = vunpack.c.h.b16 %v1622
        %v6512 = vunpack.c.l.b16 %v1623
        %v6513 = vunpack.c.h.b16 %v1623
        %v6514 = vunpack.c.l.b16 %v1624
        %v6515 = vunpack.c.h.b16 %v1624
        %v6516 = vunpack.c.l.b16 %v1625
        %v6517 = vunpack.c.h.b16 %v1625
        %v6518 = vunpack.c.l.b16 %v1626
        %v6519 = vunpack.c.h.b16 %v1626
        %v6520 = vunpack.c.l.b16 %v1627
        %v6521 = vunpack.c.h.b16 %v1627
        %v6522 = vunpack.c.l.b16 %v1628
        %v6523 = vunpack.c.h.b16 %v1628
        %v6524 = vunpack.c.l.b16 %v1629
        %v6525 = vunpack.c.h.b16 %v1629
        %v6526 = vunpack.c.l.b16 %v1630
        %v6527 = vunpack.c.h.b16 %v1630
        %v6528 = vunpack.c.l.b16 %v1631
        %v6529 = vunpack.c.h.b16 %v1631
        %v6530 = vunpack.c.l.b16 %v1632
        %v6531 = vunpack.c.h.b16 %v1632
        %v6532 = vunpack.c.l.b16 %v1633
        %v6533 = vunpack.c.h.b16 %v1633
        %v6534 = vunpack.c.l.b16 %v1634
        %v6535 = vunpack.c.h.b16 %v1634
        %v6536 = vunpack.c.l.b16 %v1635
        %v6537 = vunpack.c.h.b16 %v1635
        %v6538 = vunpack.c.l.b16 %v1636
        %v6539 = vunpack.c.h.b16 %v1636
        %v6540 = vunpack.c.l.b16 %v1637
        %v6541 = vunpack.c.h.b16 %v1637
        %v6542 = vunpack.c.l.b16 %v1638
        %v6543 = vunpack.c.h.b16 %v1638
        %v6544 = vunpack.c.l.b16 %v1639
        %v6545 = vunpack.c.h.b16 %v1639
        %v6546 = vunpack.c.l.b16 %v1640
        %v6547 = vunpack.c.h.b16 %v1640
        %v6548 = vunpack.c.l.b16 %v1641
        %v6549 = vunpack.c.h.b16 %v1641
        %v6550 = vunpack.c.l.b16 %v1642
        %v6551 = vunpack.c.h.b16 %v1642
        %v6552 = vunpack.c.l.b16 %v1643
        %v6553 = vunpack.c.h.b16 %v1643
        %v6554 = vunpack.c.l.b16 %v1644
        %v6555 = vunpack.c.h.b16 %v1644
        %v6556 = vunpack.c.l.b16 %v1645
        %v6557 = vunpack.c.h.b16 %v1645
        %v6558 = vunpack.c.l.b16 %v1646
        %v6559 = vunpack.c.h.b16 %v1646
        %v6560 = vunpack.c.l.b16 %v1647
        %v6561 = vunpack.c.h.b16 %v1647
        %v6562 = vunpack.c.l.b16 %v1648
        %v6563 = vunpack.c.h.b16 %v1648
        %v6564 = vunpack.c.l.b16 %v1649
        %v6565 = vunpack.c.h.b16 %v1649
        %v6566 = vunpack.c.l.b16 %v1650
        %v6567 = vunpack.c.h.b16 %v1650
        %v6568 = vunpack.c.l.b16 %v1651
        %v6569 = vunpack.c.h.b16 %v1651
        %v6570 = vunpack.c.l.b16 %v1652
        %v6571 = vunpack.c.h.b16 %v1652
        %v6572 = vunpack.c.l.b16 %v1653
        %v6573 = vunpack.c.h.b16 %v1653
        %v6574 = vunpack.c.l.b16 %v1654
        %v6575 = vunpack.c.h.b16 %v1654
        %v6576 = vunpack.c.l.b16 %v1655
        %v6577 = vunpack.c.h.b16 %v1655
        %v6578 = vunpack.c.l.b16 %v1656
        %v6579 = vunpack.c.h.b16 %v1656
        %v6580 = vunpack.c.l.b16 %v1657
        %v6581 = vunpack.c.h.b16 %v1657
        %v6582 = vunpack.c.l.b16 %v1658
        %v6583 = vunpack.c.h.b16 %v1658
        %v6584 = vunpack.c.l.b16 %v1659
        %v6585 = vunpack.c.h.b16 %v1659
        %v6586 = vunpack.c.l.b16 %v1660
        %v6587 = vunpack.c.h.b16 %v1660
        %v6588 = vunpack.c.l.b16 %v1661
        %v6589 = vunpack.c.h.b16 %v1661
        %v6590 = vunpack.c.l.b16 %v1662
        %v6591 = vunpack.c.h.b16 %v1662
        %v6592 = vunpack.c.l.b16 %v1663
        %v6593 = vunpack.c.h.b16 %v1663
        %v6594 = vunpack.c.l.b16 %v1664
        %v6595 = vunpack.c.h.b16 %v1664
        %v6596 = vunpack.c.l.b16 %v1665
        %v6597 = vunpack.c.h.b16 %v1665
        %v6598 = vunpack.c.l.b16 %v1666
        %v6599 = vunpack.c.h.b16 %v1666
        %v6600 = vunpack.c.l.b16 %v1667
        %v6601 = vunpack.c.h.b16 %v1667
        %v6602 = vunpack.c.l.b16 %v1668
        %v6603 = vunpack.c.h.b16 %v1668
        %v6604 = vunpack.c.l.b16 %v1669
        %v6605 = vunpack.c.h.b16 %v1669
        %v6606 = vunpack.c.l.b16 %v1670
        %v6607 = vunpack.c.h.b16 %v1670
        %v6608 = vunpack.c.l.b16 %v1671
        %v6609 = vunpack.c.h.b16 %v1671
        %v6610 = vunpack.c.l.b16 %v1672
        %v6611 = vunpack.c.h.b16 %v1672
        %v6612 = vunpack.c.l.b16 %v1673
        %v6613 = vunpack.c.h.b16 %v1673
        %v6614 = vunpack.c.l.b16 %v1674
        %v6615 = vunpack.c.h.b16 %v1674
        %v6616 = vunpack.c.l.b16 %v1675
        %v6617 = vunpack.c.h.b16 %v1675
        %v6618 = vunpack.c.l.b16 %v1676
        %v6619 = vunpack.c.h.b16 %v1676
        %v6620 = vunpack.c.l.b16 %v1677
        %v6621 = vunpack.c.h.b16 %v1677
        %v6622 = vunpack.c.l.b16 %v1678
        %v6623 = vunpack.c.h.b16 %v1678
        %v6624 = vunpack.c.l.b16 %v1679
        %v6625 = vunpack.c.h.b16 %v1679
        %v6626 = vunpack.c.l.b16 %v1680
        %v6627 = vunpack.c.h.b16 %v1680
        %v6628 = vunpack.c.l.b16 %v1681
        %v6629 = vunpack.c.h.b16 %v1681
        %v6630 = vunpack.c.l.b16 %v1682
        %v6631 = vunpack.c.h.b16 %v1682
        %v6632 = vunpack.c.l.b16 %v1683
        %v6633 = vunpack.c.h.b16 %v1683
        %v6634 = vunpack.c.l.b16 %v1684
        %v6635 = vunpack.c.h.b16 %v1684
        %v6636 = vunpack.c.l.b16 %v1685
        %v6637 = vunpack.c.h.b16 %v1685
        %v6638 = vunpack.c.l.b16 %v1686
        %v6639 = vunpack.c.h.b16 %v1686
        %v6640 = vunpack.c.l.b16 %v1687
        %v6641 = vunpack.c.h.b16 %v1687
        %v6642 = vunpack.c.l.b16 %v1688
        %v6643 = vunpack.c.h.b16 %v1688
        %v6644 = vunpack.c.l.b16 %v1689
        %v6645 = vunpack.c.h.b16 %v1689
        %v6646 = vunpack.c.l.b16 %v1690
        %v6647 = vunpack.c.h.b16 %v1690
        %v6648 = vunpack.c.l.b16 %v1691
        %v6649 = vunpack.c.h.b16 %v1691
        %v6650 = vunpack.c.l.b16 %v1692
        %v6651 = vunpack.c.h.b16 %v1692
        %v6652 = vunpack.c.l.b16 %v1693
        %v6653 = vunpack.c.h.b16 %v1693
        %v6654 = vunpack.c.l.b16 %v1694
        %v6655 = vunpack.c.h.b16 %v1694
        %v6656 = vunpack.c.l.b16 %v1695
        %v6657 = vunpack.c.h.b16 %v1695
        %v6658 = vunpack.c.l.b16 %v1696
        %v6659 = vunpack.c.h.b16 %v1696
        %v6660 = vunpack.c.l.b16 %v1697
        %v6661 = vunpack.c.h.b16 %v1697
        %v6662 = vunpack.c.l.b16 %v1698
        %v6663 = vunpack.c.h.b16 %v1698
        %v6664 = vunpack.c.l.b16 %v1699
        %v6665 = vunpack.c.h.b16 %v1699
        %v6666 = vunpack.c.l.b16 %v1700
        %v6667 = vunpack.c.h.b16 %v1700
        %v6668 = vunpack.c.l.b16 %v1701
        %v6669 = vunpack.c.h.b16 %v1701
        %v6670 = vunpack.c.l.b16 %v1702
        %v6671 = vunpack.c.h.b16 %v1702
        %v6672 = vunpack.c.l.b16 %v1703
        %v6673 = vunpack.c.h.b16 %v1703
        %v6674 = vunpack.c.l.b16 %v1704
        %v6675 = vunpack.c.h.b16 %v1704
        %v6676 = vunpack.c.l.b16 %v1705
        %v6677 = vunpack.c.h.b16 %v1705
        %v6678 = vunpack.c.l.b16 %v1706
        %v6679 = vunpack.c.h.b16 %v1706
        %v6680 = vunpack.c.l.b16 %v1707
        %v6681 = vunpack.c.h.b16 %v1707
        %v6682 = vunpack.c.l.b16 %v1708
        %v6683 = vunpack.c.h.b16 %v1708
        %v6684 = vunpack.c.l.b16 %v1709
        %v6685 = vunpack.c.h.b16 %v1709
        %v6686 = vunpack.c.l.b16 %v1710
        %v6687 = vunpack.c.h.b16 %v1710
        %v6688 = vunpack.c.l.b16 %v1711
        %v6689 = vunpack.c.h.b16 %v1711
        %v6690 = vunpack.c.l.b16 %v1712
        %v6691 = vunpack.c.h.b16 %v1712
        %v6692 = vunpack.c.l.b16 %v1713
        %v6693 = vunpack.c.h.b16 %v1713
        %v6694 = vunpack.c.l.b16 %v1714
        %v6695 = vunpack.c.h.b16 %v1714
        %v6696 = vunpack.c.l.b16 %v1715
        %v6697 = vunpack.c.h.b16 %v1715
        %v6698 = vunpack.c.l.b16 %v1716
        %v6699 = vunpack.c.h.b16 %v1716
        %v6700 = vunpack.c.l.b16 %v1717
        %v6701 = vunpack.c.h.b16 %v1717
        %v6702 = vunpack.c.l.b16 %v1718
        %v6703 = vunpack.c.h.b16 %v1718
        %v6704 = vunpack.c.l.b16 %v1719
        %v6705 = vunpack.c.h.b16 %v1719
        %v6706 = vunpack.c.l.b16 %v1720
        %v6707 = vunpack.c.h.b16 %v1720
        %v6708 = vunpack.c.l.b16 %v1721
        %v6709 = vunpack.c.h.b16 %v1721
        %v6710 = vunpack.c.l.b16 %v1722
        %v6711 = vunpack.c.h.b16 %v1722
        %v6712 = vunpack.c.l.b16 %v1723
        %v6713 = vunpack.c.h.b16 %v1723
        %v6714 = vunpack.c.l.b16 %v1724
        %v6715 = vunpack.c.h.b16 %v1724
        %v6716 = vunpack.c.l.b16 %v1725
        %v6717 = vunpack.c.h.b16 %v1725
        %v6718 = vunpack.c.l.b16 %v1726
        %v6719 = vunpack.c.h.b16 %v1726
        %v6720 = vunpack.c.l.b16 %v1727
        %v6721 = vunpack.c.h.b16 %v1727
        %v6722 = vunpack.c.l.b16 %v1728
        %v6723 = vunpack.c.h.b16 %v1728
        %v6724 = vunpack.c.l.b16 %v1729
        %v6725 = vunpack.c.h.b16 %v1729
        %v6726 = vunpack.c.l.b16 %v1730
        %v6727 = vunpack.c.h.b16 %v1730
        %v6728 = vunpack.c.l.b16 %v1731
        %v6729 = vunpack.c.h.b16 %v1731
        %v6730 = vunpack.c.l.b16 %v1732
        %v6731 = vunpack.c.h.b16 %v1732
        %v6732 = vunpack.c.l.b16 %v1733
        %v6733 = vunpack.c.h.b16 %v1733
        %v6734 = vunpack.c.l.b16 %v1734
        %v6735 = vunpack.c.h.b16 %v1734
        %v6736 = vunpack.c.l.b16 %v1735
        %v6737 = vunpack.c.h.b16 %v1735
        %v6738 = vunpack.c.l.b16 %v1736
        %v6739 = vunpack.c.h.b16 %v1736
        %v6740 = vunpack.c.l.b16 %v1737
        %v6741 = vunpack.c.h.b16 %v1737
        %v6742 = vunpack.c.l.b16 %v1738
        %v6743 = vunpack.c.h.b16 %v1738
        %v6744 = vunpack.c.l.b16 %v1739
        %v6745 = vunpack.c.h.b16 %v1739
        %v6746 = vunpack.c.l.b16 %v1740
        %v6747 = vunpack.c.h.b16 %v1740
        %v6748 = vunpack.c.l.b16 %v1741
        %v6749 = vunpack.c.h.b16 %v1741
        %v6750 = vunpack.c.l.b16 %v1742
        %v6751 = vunpack.c.h.b16 %v1742
        %v6752 = vunpack.c.l.b16 %v1743
        %v6753 = vunpack.c.h.b16 %v1743
        %v6754 = vunpack.c.l.b16 %v1744
        %v6755 = vunpack.c.h.b16 %v1744
        %v6756 = vunpack.c.l.b16 %v1745
        %v6757 = vunpack.c.h.b16 %v1745
        %v6758 = vunpack.c.l.b16 %v1746
        %v6759 = vunpack.c.h.b16 %v1746
        %v6760 = vunpack.c.l.b16 %v1747
        %v6761 = vunpack.c.h.b16 %v1747
        %v6762 = vunpack.c.l.b16 %v1748
        %v6763 = vunpack.c.h.b16 %v1748
        %v6764 = vunpack.c.l.b16 %v1749
        %v6765 = vunpack.c.h.b16 %v1749
        %v6766 = vunpack.c.l.b16 %v1750
        %v6767 = vunpack.c.h.b16 %v1750
        %v6768 = vunpack.c.l.b16 %v1751
        %v6769 = vunpack.c.h.b16 %v1751
        %v6770 = vunpack.c.l.b16 %v1752
        %v6771 = vunpack.c.h.b16 %v1752
        %v6772 = vunpack.c.l.b16 %v1753
        %v6773 = vunpack.c.h.b16 %v1753
        %v6774 = vunpack.c.l.b16 %v1754
        %v6775 = vunpack.c.h.b16 %v1754
        %v6776 = vunpack.c.l.b16 %v1755
        %v6777 = vunpack.c.h.b16 %v1755
        %v6778 = vunpack.c.l.b16 %v1756
        %v6779 = vunpack.c.h.b16 %v1756
        %v6780 = vunpack.c.l.b16 %v1757
        %v6781 = vunpack.c.h.b16 %v1757
        %v6782 = vunpack.c.l.b16 %v1758
        %v6783 = vunpack.c.h.b16 %v1758
        %v6784 = vunpack.c.l.b16 %v1759
        %v6785 = vunpack.c.h.b16 %v1759
        %v6786 = vunpack.c.l.b16 %v1760
        %v6787 = vunpack.c.h.b16 %v1760
        %v6788 = vunpack.c.l.b16 %v1761
        %v6789 = vunpack.c.h.b16 %v1761
        %v6790 = vunpack.c.l.b16 %v1762
        %v6791 = vunpack.c.h.b16 %v1762
        %v6792 = vunpack.c.l.b16 %v1763
        %v6793 = vunpack.c.h.b16 %v1763
        %v6794 = vunpack.c.l.b16 %v1764
        %v6795 = vunpack.c.h.b16 %v1764
        %v6796 = vunpack.c.l.b16 %v1765
        %v6797 = vunpack.c.h.b16 %v1765
        %v6798 = vunpack.c.l.b16 %v1766
        %v6799 = vunpack.c.h.b16 %v1766
        %v6800 = vunpack.c.l.b16 %v1767
        %v6801 = vunpack.c.h.b16 %v1767
        %v6802 = vunpack.c.l.b16 %v1768
        %v6803 = vunpack.c.h.b16 %v1768
        %v6804 = vunpack.c.l.b16 %v1769
        %v6805 = vunpack.c.h.b16 %v1769
        %v6806 = vunpack.c.l.b16 %v1770
        %v6807 = vunpack.c.h.b16 %v1770
        %v6808 = vunpack.c.l.b16 %v1771
        %v6809 = vunpack.c.h.b16 %v1771
        %v6810 = vunpack.c.l.b16 %v1772
        %v6811 = vunpack.c.h.b16 %v1772
        %v6812 = vunpack.c.l.b16 %v1773
        %v6813 = vunpack.c.h.b16 %v1773
        %v6814 = vunpack.c.l.b16 %v1774
        %v6815 = vunpack.c.h.b16 %v1774
        %v6816 = vunpack.c.l.b16 %v1775
        %v6817 = vunpack.c.h.b16 %v1775
        %v6818 = vunpack.c.l.b16 %v1776
        %v6819 = vunpack.c.h.b16 %v1776
        %v6820 = vunpack.c.l.b16 %v1777
        %v6821 = vunpack.c.h.b16 %v1777
        %v6822 = vunpack.c.l.b16 %v1778
        %v6823 = vunpack.c.h.b16 %v1778
        %v6824 = vunpack.c.l.b16 %v1779
        %v6825 = vunpack.c.h.b16 %v1779
        %v6826 = vunpack.c.l.b16 %v1780
        %v6827 = vunpack.c.h.b16 %v1780
        %v6828 = vunpack.c.l.b16 %v1781
        %v6829 = vunpack.c.h.b16 %v1781
        %v6830 = vunpack.c.l.b16 %v1782
        %v6831 = vunpack.c.h.b16 %v1782
        %v6832 = vunpack.c.l.b16 %v1783
        %v6833 = vunpack.c.h.b16 %v1783
        %v6834 = vunpack.c.l.b16 %v1784
        %v6835 = vunpack.c.h.b16 %v1784
        %v6836 = vunpack.c.l.b16 %v1785
        %v6837 = vunpack.c.h.b16 %v1785
        %v6838 = vunpack.c.l.b16 %v1786
        %v6839 = vunpack.c.h.b16 %v1786
        %v6840 = vunpack.c.l.b16 %v1787
        %v6841 = vunpack.c.h.b16 %v1787
        %v6842 = vunpack.c.l.b16 %v1788
        %v6843 = vunpack.c.h.b16 %v1788
        %v6844 = vunpack.c.l.b16 %v1789
        %v6845 = vunpack.c.h.b16 %v1789
        %v6846 = vunpack.c.l.b16 %v1790
        %v6847 = vunpack.c.h.b16 %v1790
        %v6848 = vunpack.c.l.b16 %v1791
        %v6849 = vunpack.c.h.b16 %v1791
        %v6850 = vunpack.c.l.b16 %v1792
        %v6851 = vunpack.c.h.b16 %v1792
        %v6852 = vunpack.c.l.b16 %v1793
        %v6853 = vunpack.c.h.b16 %v1793
        %v6854 = vunpack.c.l.b16 %v1794
        %v6855 = vunpack.c.h.b16 %v1794
        %v6856 = vunpack.c.l.b16 %v1795
        %v6857 = vunpack.c.h.b16 %v1795
        %v6858 = vunpack.c.l.b16 %v1796
        %v6859 = vunpack.c.h.b16 %v1796
        %v6860 = vunpack.c.l.b16 %v1797
        %v6861 = vunpack.c.h.b16 %v1797
        %v6862 = vunpack.c.l.b16 %v1798
        %v6863 = vunpack.c.h.b16 %v1798
        %v6864 = vunpack.c.l.b16 %v1799
        %v6865 = vunpack.c.h.b16 %v1799
        %v6866 = vunpack.c.l.b16 %v1800
        %v6867 = vunpack.c.h.b16 %v1800
        %v6868 = vunpack.c.l.b16 %v1801
        %v6869 = vunpack.c.h.b16 %v1801
        %v6870 = vunpack.c.l.b16 %v1802
        %v6871 = vunpack.c.h.b16 %v1802
        %v6872 = vunpack.c.l.b16 %v1803
        %v6873 = vunpack.c.h.b16 %v1803
        %v6874 = vunpack.c.l.b16 %v1804
        %v6875 = vunpack.c.h.b16 %v1804
        %v6876 = vunpack.c.l.b16 %v1805
        %v6877 = vunpack.c.h.b16 %v1805
        %v6878 = vunpack.c.l.b16 %v1806
        %v6879 = vunpack.c.h.b16 %v1806
        %v6880 = vunpack.c.l.b16 %v1807
        %v6881 = vunpack.c.h.b16 %v1807
        %v6882 = vunpack.c.l.b16 %v1808
        %v6883 = vunpack.c.h.b16 %v1808
        %v6884 = vunpack.c.l.b16 %v1809
        %v6885 = vunpack.c.h.b16 %v1809
        %v6886 = vunpack.c.l.b16 %v1810
        %v6887 = vunpack.c.h.b16 %v1810
        %v6888 = vunpack.c.l.b16 %v1811
        %v6889 = vunpack.c.h.b16 %v1811
        %v6890 = vunpack.c.l.b16 %v1812
        %v6891 = vunpack.c.h.b16 %v1812
        %v6892 = vunpack.c.l.b16 %v1813
        %v6893 = vunpack.c.h.b16 %v1813
        %v6894 = vunpack.c.l.b16 %v1814
        %v6895 = vunpack.c.h.b16 %v1814
        %v6896 = vunpack.c.l.b16 %v1815
        %v6897 = vunpack.c.h.b16 %v1815
        %v6898 = vunpack.c.l.b16 %v1816
        %v6899 = vunpack.c.h.b16 %v1816
        %v6900 = vunpack.c.l.b16 %v1817
        %v6901 = vunpack.c.h.b16 %v1817
        %v6902 = vunpack.c.l.b16 %v1818
        %v6903 = vunpack.c.h.b16 %v1818
        %v6904 = vunpack.c.l.b16 %v1819
        %v6905 = vunpack.c.h.b16 %v1819
        %v6906 = vunpack.c.l.b16 %v1820
        %v6907 = vunpack.c.h.b16 %v1820
        %v6908 = vunpack.c.l.b16 %v1821
        %v6909 = vunpack.c.h.b16 %v1821
        %v6910 = vunpack.c.l.b16 %v1822
        %v6911 = vunpack.c.h.b16 %v1822
        %v6912 = vunpack.c.l.b16 %v1823
        %v6913 = vunpack.c.h.b16 %v1823
        %v6914 = vunpack.c.l.b16 %v1824
        %v6915 = vunpack.c.h.b16 %v1824
        %v6916 = vunpack.c.l.b16 %v1825
        %v6917 = vunpack.c.h.b16 %v1825
        %v6918 = vunpack.c.l.b16 %v1826
        %v6919 = vunpack.c.h.b16 %v1826
        %v6920 = vunpack.c.l.b16 %v1827
        %v6921 = vunpack.c.h.b16 %v1827
        %v6922 = vunpack.c.l.b16 %v1828
        %v6923 = vunpack.c.h.b16 %v1828
        %v6924 = vunpack.c.l.b16 %v1829
        %v6925 = vunpack.c.h.b16 %v1829
        %v6926 = vunpack.c.l.b16 %v1830
        %v6927 = vunpack.c.h.b16 %v1830
        %v6928 = vunpack.c.l.b16 %v1831
        %v6929 = vunpack.c.h.b16 %v1831
        %v6930 = vunpack.c.l.b16 %v1832
        %v6931 = vunpack.c.h.b16 %v1832
        %v6932 = vunpack.c.l.b16 %v1833
        %v6933 = vunpack.c.h.b16 %v1833
        %v6934 = vunpack.c.l.b16 %v1834
        %v6935 = vunpack.c.h.b16 %v1834
        %v6936 = vunpack.c.l.b16 %v1835
        %v6937 = vunpack.c.h.b16 %v1835
        %v6938 = vunpack.c.l.b16 %v1836
        %v6939 = vunpack.c.h.b16 %v1836
        %v6940 = vunpack.c.l.b16 %v1837
        %v6941 = vunpack.c.h.b16 %v1837
        %v6942 = vunpack.c.l.b16 %v1838
        %v6943 = vunpack.c.h.b16 %v1838
        %v6944 = vunpack.c.l.b16 %v1839
        %v6945 = vunpack.c.h.b16 %v1839
        %v6946 = vunpack.c.l.b16 %v1840
        %v6947 = vunpack.c.h.b16 %v1840
        %v6948 = vunpack.c.l.b16 %v1841
        %v6949 = vunpack.c.h.b16 %v1841
        %v6950 = vunpack.c.l.b16 %v1842
        %v6951 = vunpack.c.h.b16 %v1842
        %v6952 = vunpack.c.l.b16 %v1843
        %v6953 = vunpack.c.h.b16 %v1843
        %v6954 = vunpack.c.l.b16 %v1844
        %v6955 = vunpack.c.h.b16 %v1844
        %v6956 = vunpack.c.l.b16 %v1845
        %v6957 = vunpack.c.h.b16 %v1845
        %v6958 = vunpack.c.l.b16 %v1846
        %v6959 = vunpack.c.h.b16 %v1846
        %v6960 = vunpack.c.l.b16 %v1847
        %v6961 = vunpack.c.h.b16 %v1847
        %v6962 = vunpack.c.l.b16 %v1848
        %v6963 = vunpack.c.h.b16 %v1848
        %v6964 = vunpack.c.l.b16 %v1849
        %v6965 = vunpack.c.h.b16 %v1849
        %v6966 = vunpack.c.l.b16 %v1850
        %v6967 = vunpack.c.h.b16 %v1850
        %v6968 = vunpack.c.l.b16 %v1851
        %v6969 = vunpack.c.h.b16 %v1851
        %v6970 = vunpack.c.l.b16 %v1852
        %v6971 = vunpack.c.h.b16 %v1852
        %v6972 = vunpack.c.l.b16 %v1853
        %v6973 = vunpack.c.h.b16 %v1853
        %v6974 = vunpack.c.l.b16 %v1854
        %v6975 = vunpack.c.h.b16 %v1854
        %v6976 = vunpack.c.l.b16 %v1855
        %v6977 = vunpack.c.h.b16 %v1855
        %v6978 = vunpack.c.l.b16 %v1856
        %v6979 = vunpack.c.h.b16 %v1856
        %v6980 = vunpack.c.l.b16 %v1857
        %v6981 = vunpack.c.h.b16 %v1857
        %v6982 = vunpack.c.l.b16 %v1858
        %v6983 = vunpack.c.h.b16 %v1858
        %v6984 = vunpack.c.l.b16 %v1859
        %v6985 = vunpack.c.h.b16 %v1859
        %v6986 = vunpack.c.l.b16 %v1860
        %v6987 = vunpack.c.h.b16 %v1860
        %v6988 = vunpack.c.l.b16 %v1861
        %v6989 = vunpack.c.h.b16 %v1861
        %v6990 = vunpack.c.l.b16 %v1862
        %v6991 = vunpack.c.h.b16 %v1862
        %v6992 = vunpack.c.l.b16 %v1863
        %v6993 = vunpack.c.h.b16 %v1863
        %v6994 = vunpack.c.l.b16 %v1864
        %v6995 = vunpack.c.h.b16 %v1864
        %v6996 = vunpack.c.l.b16 %v1865
        %v6997 = vunpack.c.h.b16 %v1865
        %v6998 = vunpack.c.l.b16 %v1866
        %v6999 = vunpack.c.h.b16 %v1866
        %v7000 = vunpack.c.l.b16 %v1867
        %v7001 = vunpack.c.h.b16 %v1867
        %v7002 = vunpack.c.l.b16 %v1868
        %v7003 = vunpack.c.h.b16 %v1868
        %v7004 = vunpack.c.l.b16 %v1869
        %v7005 = vunpack.c.h.b16 %v1869
        %v7006 = vunpack.c.l.b16 %v1870
        %v7007 = vunpack.c.h.b16 %v1870
        %v7008 = vunpack.c.l.b16 %v1871
        %v7009 = vunpack.c.h.b16 %v1871
        %v7010 = vunpack.c.l.b16 %v1872
        %v7011 = vunpack.c.h.b16 %v1872
        %v7012 = vunpack.c.l.b16 %v1873
        %v7013 = vunpack.c.h.b16 %v1873
        %v7014 = vunpack.c.l.b16 %v1874
        %v7015 = vunpack.c.h.b16 %v1874
        %v7016 = vunpack.c.l.b16 %v1875
        %v7017 = vunpack.c.h.b16 %v1875
        %v7018 = vunpack.c.l.b16 %v1876
        %v7019 = vunpack.c.h.b16 %v1876
        %v7020 = vunpack.c.l.b16 %v1877
        %v7021 = vunpack.c.h.b16 %v1877
        %v7022 = vunpack.c.l.b16 %v1878
        %v7023 = vunpack.c.h.b16 %v1878
        %v7024 = vunpack.c.l.b16 %v1879
        %v7025 = vunpack.c.h.b16 %v1879
        %v7026 = vunpack.c.l.b16 %v1880
        %v7027 = vunpack.c.h.b16 %v1880
        %v7028 = vunpack.c.l.b16 %v1881
        %v7029 = vunpack.c.h.b16 %v1881
        %v7030 = vunpack.c.l.b16 %v1882
        %v7031 = vunpack.c.h.b16 %v1882
        %v7032 = vunpack.c.l.b16 %v1883
        %v7033 = vunpack.c.h.b16 %v1883
        %v7034 = vunpack.c.l.b16 %v1884
        %v7035 = vunpack.c.h.b16 %v1884
        %v7036 = vunpack.c.l.b16 %v1885
        %v7037 = vunpack.c.h.b16 %v1885
        %v7038 = vunpack.c.l.b16 %v1886
        %v7039 = vunpack.c.h.b16 %v1886
        %v7040 = vunpack.c.l.b16 %v1887
        %v7041 = vunpack.c.h.b16 %v1887
        %v7042 = vunpack.c.l.b16 %v1888
        %v7043 = vunpack.c.h.b16 %v1888
        %v7044 = vunpack.c.l.b16 %v1889
        %v7045 = vunpack.c.h.b16 %v1889
        %v7046 = vunpack.c.l.b16 %v1890
        %v7047 = vunpack.c.h.b16 %v1890
        %v7048 = vunpack.c.l.b16 %v1891
        %v7049 = vunpack.c.h.b16 %v1891
        %v7050 = vunpack.c.l.b16 %v1892
        %v7051 = vunpack.c.h.b16 %v1892
        %v7052 = vunpack.c.l.b16 %v1893
        %v7053 = vunpack.c.h.b16 %v1893
        %v7054 = vunpack.c.l.b16 %v1894
        %v7055 = vunpack.c.h.b16 %v1894
        %v7056 = vunpack.c.l.b16 %v1895
        %v7057 = vunpack.c.h.b16 %v1895
        %v7058 = vunpack.c.l.b16 %v1896
        %v7059 = vunpack.c.h.b16 %v1896
        %v7060 = vunpack.c.l.b16 %v1897
        %v7061 = vunpack.c.h.b16 %v1897
        %v7062 = vunpack.c.l.b16 %v1898
        %v7063 = vunpack.c.h.b16 %v1898
        %v7064 = vunpack.c.l.b16 %v1899
        %v7065 = vunpack.c.h.b16 %v1899
        %v7066 = vunpack.c.l.b16 %v1900
        %v7067 = vunpack.c.h.b16 %v1900
        %v7068 = vunpack.c.l.b16 %v1901
        %v7069 = vunpack.c.h.b16 %v1901
        %v7070 = vunpack.c.l.b16 %v1902
        %v7071 = vunpack.c.h.b16 %v1902
        %v7072 = vunpack.c.l.b16 %v1903
        %v7073 = vunpack.c.h.b16 %v1903
        %v7074 = vunpack.c.l.b16 %v1904
        %v7075 = vunpack.c.h.b16 %v1904
        %v7076 = vunpack.c.l.b16 %v1905
        %v7077 = vunpack.c.h.b16 %v1905
        %v7078 = vunpack.c.l.b16 %v1906
        %v7079 = vunpack.c.h.b16 %v1906
        %v7080 = vunpack.c.l.b16 %v1907
        %v7081 = vunpack.c.h.b16 %v1907
        %v7082 = vunpack.c.l.b16 %v1908
        %v7083 = vunpack.c.h.b16 %v1908
        %v7084 = vunpack.c.l.b16 %v1909
        %v7085 = vunpack.c.h.b16 %v1909
        %v7086 = vunpack.c.l.b16 %v1910
        %v7087 = vunpack.c.h.b16 %v1910
        %v7088 = vunpack.c.l.b16 %v1911
        %v7089 = vunpack.c.h.b16 %v1911
        %v7090 = vunpack.c.l.b16 %v1912
        %v7091 = vunpack.c.h.b16 %v1912
        %v7092 = vunpack.c.l.b16 %v1913
        %v7093 = vunpack.c.h.b16 %v1913
        %v7094 = vunpack.c.l.b16 %v1914
        %v7095 = vunpack.c.h.b16 %v1914
        %v7096 = vunpack.c.l.b16 %v1915
        %v7097 = vunpack.c.h.b16 %v1915
        %v7098 = vunpack.c.l.b16 %v1916
        %v7099 = vunpack.c.h.b16 %v1916
        %v7100 = vunpack.c.l.b16 %v1917
        %v7101 = vunpack.c.h.b16 %v1917
        %v7102 = vunpack.c.l.b16 %v1918
        %v7103 = vunpack.c.h.b16 %v1918
        %v7104 = vunpack.c.l.b16 %v1919
        %v7105 = vunpack.c.h.b16 %v1919
        %v7106 = vunpack.c.l.b16 %v1920
        %v7107 = vunpack.c.h.b16 %v1920
        %v7108 = vunpack.c.l.b16 %v1921
        %v7109 = vunpack.c.h.b16 %v1921
        %v7110 = vunpack.c.l.b16 %v1922
        %v7111 = vunpack.c.h.b16 %v1922
        %v7112 = vunpack.c.l.b16 %v1923
        %v7113 = vunpack.c.h.b16 %v1923
        %v7114 = vunpack.c.l.b16 %v1924
        %v7115 = vunpack.c.h.b16 %v1924
        %v7116 = vunpack.c.l.b16 %v1925
        %v7117 = vunpack.c.h.b16 %v1925
        %v7118 = vunpack.c.l.b16 %v1926
        %v7119 = vunpack.c.h.b16 %v1926
        %v7120 = vunpack.c.l.b16 %v1927
        %v7121 = vunpack.c.h.b16 %v1927
        %v7122 = vunpack.c.l.b16 %v1928
        %v7123 = vunpack.c.h.b16 %v1928
        %v7124 = vunpack.c.l.b16 %v1929
        %v7125 = vunpack.c.h.b16 %v1929
        %v7126 = vunpack.c.l.b16 %v1930
        %v7127 = vunpack.c.h.b16 %v1930
        %v7128 = vunpack.c.l.b16 %v1931
        %v7129 = vunpack.c.h.b16 %v1931
        %v7130 = vunpack.c.l.b16 %v1932
        %v7131 = vunpack.c.h.b16 %v1932
        %v7132 = vunpack.c.l.b16 %v1933
        %v7133 = vunpack.c.h.b16 %v1933
        %v7134 = vunpack.c.l.b16 %v1934
        %v7135 = vunpack.c.h.b16 %v1934
        %v7136 = vunpack.c.l.b16 %v1935
        %v7137 = vunpack.c.h.b16 %v1935
        %v7138 = vunpack.c.l.b16 %v1936
        %v7139 = vunpack.c.h.b16 %v1936
        %v7140 = vunpack.c.l.b16 %v1937
        %v7141 = vunpack.c.h.b16 %v1937
        %v7142 = vunpack.c.l.b16 %v1938
        %v7143 = vunpack.c.h.b16 %v1938
        %v7144 = vunpack.c.l.b16 %v1939
        %v7145 = vunpack.c.h.b16 %v1939
        %v7146 = vunpack.c.l.b16 %v1940
        %v7147 = vunpack.c.h.b16 %v1940
        %v7148 = vunpack.c.l.b16 %v1941
        %v7149 = vunpack.c.h.b16 %v1941
        %v7150 = vunpack.c.l.b16 %v1942
        %v7151 = vunpack.c.h.b16 %v1942
        %v7152 = vunpack.c.l.b16 %v1943
        %v7153 = vunpack.c.h.b16 %v1943
        %v7154 = vunpack.c.l.b16 %v1944
        %v7155 = vunpack.c.h.b16 %v1944
        %v7156 = vunpack.c.l.b16 %v1945
        %v7157 = vunpack.c.h.b16 %v1945
        %v7158 = vunpack.c.l.b16 %v1946
        %v7159 = vunpack.c.h.b16 %v1946
        %v7160 = vunpack.c.l.b16 %v1947
        %v7161 = vunpack.c.h.b16 %v1947
        %v7162 = vunpack.c.l.b16 %v1948
        %v7163 = vunpack.c.h.b16 %v1948
        %v7164 = vunpack.c.l.b16 %v1949
        %v7165 = vunpack.c.h.b16 %v1949
        %v7166 = vunpack.c.l.b16 %v1950
        %v7167 = vunpack.c.h.b16 %v1950
        %v7168 = vunpack.c.l.b16 %v1951
        %v7169 = vunpack.c.h.b16 %v1951
        %v7170 = vunpack.c.l.b16 %v1952
        %v7171 = vunpack.c.h.b16 %v1952
        %v7172 = vunpack.c.l.b16 %v1953
        %v7173 = vunpack.c.h.b16 %v1953
        %v7174 = vunpack.c.l.b16 %v1954
        %v7175 = vunpack.c.h.b16 %v1954
        %v7176 = vunpack.c.l.b16 %v1955
        %v7177 = vunpack.c.h.b16 %v1955
        %v7178 = vunpack.c.l.b16 %v1956
        %v7179 = vunpack.c.h.b16 %v1956
        %v7180 = vunpack.c.l.b16 %v1957
        %v7181 = vunpack.c.h.b16 %v1957
        %v7182 = vunpack.c.l.b16 %v1958
        %v7183 = vunpack.c.h.b16 %v1958
        %v7184 = vunpack.c.l.b16 %v1959
        %v7185 = vunpack.c.h.b16 %v1959
        %v7186 = vunpack.c.l.b16 %v1960
        %v7187 = vunpack.c.h.b16 %v1960
        %v7188 = vunpack.c.l.b16 %v1961
        %v7189 = vunpack.c.h.b16 %v1961
        %v7190 = vunpack.c.l.b16 %v1962
        %v7191 = vunpack.c.h.b16 %v1962
        %v7192 = vunpack.c.l.b16 %v1963
        %v7193 = vunpack.c.h.b16 %v1963
        %v7194 = vunpack.c.l.b16 %v1964
        %v7195 = vunpack.c.h.b16 %v1964
        %v7196 = vunpack.c.l.b16 %v1965
        %v7197 = vunpack.c.h.b16 %v1965
        %v7198 = vunpack.c.l.b16 %v1966
        %v7199 = vunpack.c.h.b16 %v1966
        %v7200 = vunpack.c.l.b16 %v1967
        %v7201 = vunpack.c.h.b16 %v1967
        %v7202 = vunpack.c.l.b16 %v1968
        %v7203 = vunpack.c.h.b16 %v1968
        %v7204 = vunpack.c.l.b16 %v1969
        %v7205 = vunpack.c.h.b16 %v1969
        %v7206 = vunpack.c.l.b16 %v1970
        %v7207 = vunpack.c.h.b16 %v1970
        %v7208 = vunpack.c.l.b16 %v1971
        %v7209 = vunpack.c.h.b16 %v1971
        %v7210 = vunpack.c.l.b16 %v1972
        %v7211 = vunpack.c.h.b16 %v1972
        %v7212 = vunpack.c.l.b16 %v1973
        %v7213 = vunpack.c.h.b16 %v1973
        %v7214 = vunpack.c.l.b16 %v1974
        %v7215 = vunpack.c.h.b16 %v1974
        %v7216 = vunpack.c.l.b16 %v1975
        %v7217 = vunpack.c.h.b16 %v1975
        %v7218 = vunpack.c.l.b16 %v1976
        %v7219 = vunpack.c.h.b16 %v1976
        %v7220 = vunpack.c.l.b16 %v1977
        %v7221 = vunpack.c.h.b16 %v1977
        %v7222 = vunpack.c.l.b16 %v1978
        %v7223 = vunpack.c.h.b16 %v1978
        %v7224 = vunpack.c.l.b16 %v1979
        %v7225 = vunpack.c.h.b16 %v1979
        %v7226 = vunpack.c.l.b16 %v1980
        %v7227 = vunpack.c.h.b16 %v1980
        %v7228 = vunpack.c.l.b16 %v1981
        %v7229 = vunpack.c.h.b16 %v1981
        %v7230 = vunpack.c.l.b16 %v1982
        %v7231 = vunpack.c.h.b16 %v1982
        %v7232 = vunpack.c.l.b16 %v1983
        %v7233 = vunpack.c.h.b16 %v1983
        %v7234 = vunpack.c.l.b16 %v1984
        %v7235 = vunpack.c.h.b16 %v1984
        %v7236 = vunpack.c.l.b16 %v1985
        %v7237 = vunpack.c.h.b16 %v1985
        %v7238 = vunpack.c.l.b16 %v1986
        %v7239 = vunpack.c.h.b16 %v1986
        %v7240 = vunpack.c.l.b16 %v1987
        %v7241 = vunpack.c.h.b16 %v1987
        %v7242 = vunpack.c.l.b16 %v1988
        %v7243 = vunpack.c.h.b16 %v1988
        %v7244 = vunpack.c.l.b16 %v1989
        %v7245 = vunpack.c.h.b16 %v1989
        %v7246 = vunpack.c.l.b16 %v1990
        %v7247 = vunpack.c.h.b16 %v1990
        %v7248 = vunpack.c.l.b16 %v1991
        %v7249 = vunpack.c.h.b16 %v1991
        %v7250 = vunpack.c.l.b16 %v1992
        %v7251 = vunpack.c.h.b16 %v1992
        %v7252 = vunpack.c.l.b16 %v1993
        %v7253 = vunpack.c.h.b16 %v1993
        %v7254 = vunpack.c.l.b16 %v1994
        %v7255 = vunpack.c.h.b16 %v1994
        %v7256 = vunpack.c.l.b16 %v1995
        %v7257 = vunpack.c.h.b16 %v1995
        %v7258 = vunpack.c.l.b16 %v1996
        %v7259 = vunpack.c.h.b16 %v1996
        %v7260 = vunpack.c.l.b16 %v1997
        %v7261 = vunpack.c.h.b16 %v1997
        %v7262 = vunpack.c.l.b16 %v1998
        %v7263 = vunpack.c.h.b16 %v1998
        %v7264 = vunpack.c.l.b16 %v1999
        %v7265 = vunpack.c.h.b16 %v1999
        %v7266 = vunpack.c.l.b16 %v2000
        %v7267 = vunpack.c.h.b16 %v2000
        %v7268 = vunpack.c.l.b16 %v2001
        %v7269 = vunpack.c.h.b16 %v2001
        %v7270 = vunpack.c.l.b16 %v2002
        %v7271 = vunpack.c.h.b16 %v2002
        %v7272 = vunpack.c.l.b16 %v2003
        %v7273 = vunpack.c.h.b16 %v2003
        %v7274 = vunpack.c.l.b16 %v2004
        %v7275 = vunpack.c.h.b16 %v2004
        %v7276 = vunpack.c.l.b16 %v2005
        %v7277 = vunpack.c.h.b16 %v2005
        %v7278 = vunpack.c.l.b16 %v2006
        %v7279 = vunpack.c.h.b16 %v2006
        %v7280 = vunpack.c.l.b16 %v2007
        %v7281 = vunpack.c.h.b16 %v2007
        %v7282 = vunpack.c.l.b16 %v2008
        %v7283 = vunpack.c.h.b16 %v2008
        %v7284 = vunpack.c.l.b16 %v2009
        %v7285 = vunpack.c.h.b16 %v2009
        %v7286 = vunpack.c.l.b16 %v2010
        %v7287 = vunpack.c.h.b16 %v2010
        %v7288 = vunpack.c.l.b16 %v2011
        %v7289 = vunpack.c.h.b16 %v2011
        %v7290 = vunpack.c.l.b16 %v2012
        %v7291 = vunpack.c.h.b16 %v2012
        %v7292 = vunpack.c.l.b16 %v2013
        %v7293 = vunpack.c.h.b16 %v2013
        %v7294 = vunpack.c.l.b16 %v2014
        %v7295 = vunpack.c.h.b16 %v2014
        %v7296 = vunpack.c.l.b16 %v2015
        %v7297 = vunpack.c.h.b16 %v2015
        %v7298 = vunpack.c.l.b16 %v2016
        %v7299 = vunpack.c.h.b16 %v2016
        %v7300 = vunpack.c.l.b16 %v2017
        %v7301 = vunpack.c.h.b16 %v2017
        %v7302 = vunpack.c.l.b16 %v2018
        %v7303 = vunpack.c.h.b16 %v2018
        %v7304 = vunpack.c.l.b16 %v2019
        %v7305 = vunpack.c.h.b16 %v2019
        %v7306 = vunpack.c.l.b16 %v2020
        %v7307 = vunpack.c.h.b16 %v2020
        %v7308 = vunpack.c.l.b16 %v2021
        %v7309 = vunpack.c.h.b16 %v2021
        %v7310 = vunpack.c.l.b16 %v2022
        %v7311 = vunpack.c.h.b16 %v2022
        %v7312 = vunpack.c.l.b16 %v2023
        %v7313 = vunpack.c.h.b16 %v2023
        %v7314 = vunpack.c.l.b16 %v2024
        %v7315 = vunpack.c.h.b16 %v2024
        %v7316 = vunpack.c.l.b16 %v2025
        %v7317 = vunpack.c.h.b16 %v2025
        %v7318 = vunpack.c.l.b16 %v2026
        %v7319 = vunpack.c.h.b16 %v2026
        %v7320 = vunpack.c.l.b16 %v2027
        %v7321 = vunpack.c.h.b16 %v2027
        %v7322 = vunpack.c.l.b16 %v2028
        %v7323 = vunpack.c.h.b16 %v2028
        %v7324 = vunpack.c.l.b16 %v2029
        %v7325 = vunpack.c.h.b16 %v2029
        %v7326 = vunpack.c.l.b16 %v2030
        %v7327 = vunpack.c.h.b16 %v2030
        %v7328 = vunpack.c.l.b16 %v2031
        %v7329 = vunpack.c.h.b16 %v2031
        %v7330 = vunpack.c.l.b16 %v2032
        %v7331 = vunpack.c.h.b16 %v2032
        %v7332 = vunpack.c.l.b16 %v2033
        %v7333 = vunpack.c.h.b16 %v2033
        %v7334 = vunpack.c.l.b16 %v2034
        %v7335 = vunpack.c.h.b16 %v2034
        %v7336 = vunpack.c.l.b16 %v2035
        %v7337 = vunpack.c.h.b16 %v2035
        %v7338 = vunpack.c.l.b16 %v2036
        %v7339 = vunpack.c.h.b16 %v2036
        %v7340 = vunpack.c.l.b16 %v2037
        %v7341 = vunpack.c.h.b16 %v2037
        %v7342 = vunpack.c.l.b16 %v2038
        %v7343 = vunpack.c.h.b16 %v2038
        %v7344 = vunpack.c.l.b16 %v2039
        %v7345 = vunpack.c.h.b16 %v2039
        %v7346 = vunpack.c.l.b16 %v2040
        %v7347 = vunpack.c.h.b16 %v2040
        %v7348 = vunpack.c.l.b16 %v2041
        %v7349 = vunpack.c.h.b16 %v2041
        %v7350 = vunpack.c.l.b16 %v2042
        %v7351 = vunpack.c.h.b16 %v2042
        %v7352 = vunpack.c.l.b16 %v2043
        %v7353 = vunpack.c.h.b16 %v2043
        %v7354 = vunpack.c.l.b16 %v2044
        %v7355 = vunpack.c.h.b16 %v2044
        %v7356 = vunpack.c.l.b16 %v2045
        %v7357 = vunpack.c.h.b16 %v2045
        %v7358 = vunpack.c.l.b16 %v2046
        %v7359 = vunpack.c.h.b16 %v2046
        %v7360 = vunpack.c.l.b16 %v2047
        %v7361 = vunpack.c.h.b16 %v2047
        %v7362 = vunpack.c.l.b16 %v2048
        %v7363 = vunpack.c.h.b16 %v2048
        %v7364 = vunpack.c.l.b16 %v2049
        %v7365 = vunpack.c.h.b16 %v2049
        %v7366 = vunpack.c.l.b16 %v2050
        %v7367 = vunpack.c.h.b16 %v2050
        %v7368 = vunpack.c.l.b16 %v2051
        %v7369 = vunpack.c.h.b16 %v2051
        %v7370 = vunpack.c.l.b16 %v2052
        %v7371 = vunpack.c.h.b16 %v2052
        %v7372 = vunpack.c.l.b16 %v2053
        %v7373 = vunpack.c.h.b16 %v2053
        %v7374 = vunpack.c.l.b16 %v2054
        %v7375 = vunpack.c.h.b16 %v2054
        %v7376 = vunpack.c.l.b16 %v2055
        %v7377 = vunpack.c.h.b16 %v2055
        %v7378 = vunpack.c.l.b16 %v2056
        %v7379 = vunpack.c.h.b16 %v2056
        %v7380 = vunpack.c.l.b16 %v2057
        %v7381 = vunpack.c.h.b16 %v2057
        %v7382 = vunpack.c.l.b16 %v2058
        %v7383 = vunpack.c.h.b16 %v2058
        %v7384 = vunpack.c.l.b16 %v2059
        %v7385 = vunpack.c.h.b16 %v2059
        %v7386 = vunpack.c.l.b16 %v2060
        %v7387 = vunpack.c.h.b16 %v2060
        %v7388 = vunpack.c.l.b16 %v2061
        %v7389 = vunpack.c.h.b16 %v2061
        %v7390 = vunpack.c.l.b16 %v2062
        %v7391 = vunpack.c.h.b16 %v2062
        %v7392 = vunpack.c.l.b16 %v2063
        %v7393 = vunpack.c.h.b16 %v2063
        %v7394 = vunpack.c.l.b16 %v2064
        %v7395 = vunpack.c.h.b16 %v2064
        %v7396 = vunpack.c.l.b16 %v2065
        %v7397 = vunpack.c.h.b16 %v2065
        %v7398 = vunpack.c.l.b16 %v2066
        %v7399 = vunpack.c.h.b16 %v2066
        %v7400 = vunpack.c.l.b16 %v2067
        %v7401 = vunpack.c.h.b16 %v2067
        %v7402 = vunpack.c.l.b16 %v2068
        %v7403 = vunpack.c.h.b16 %v2068
        %v7404 = vunpack.c.l.b16 %v2069
        %v7405 = vunpack.c.h.b16 %v2069
        %v7406 = vunpack.c.l.b16 %v2070
        %v7407 = vunpack.c.h.b16 %v2070
        %v7408 = vunpack.c.l.b16 %v2071
        %v7409 = vunpack.c.h.b16 %v2071
        %v7410 = vunpack.c.l.b16 %v2072
        %v7411 = vunpack.c.h.b16 %v2072
        %v7412 = vunpack.c.l.b16 %v2073
        %v7413 = vunpack.c.h.b16 %v2073
        %v7414 = vunpack.c.l.b16 %v2074
        %v7415 = vunpack.c.h.b16 %v2074
        %v7416 = vunpack.c.l.b16 %v2075
        %v7417 = vunpack.c.h.b16 %v2075
        %v7418 = vunpack.c.l.b16 %v2076
        %v7419 = vunpack.c.h.b16 %v2076
        %v7420 = vunpack.c.l.b16 %v2077
        %v7421 = vunpack.c.h.b16 %v2077
        %v7422 = vunpack.c.l.b16 %v2078
        %v7423 = vunpack.c.h.b16 %v2078
        %v7424 = vunpack.c.l.b16 %v2079
        %v7425 = vunpack.c.h.b16 %v2079
        %v7426 = vunpack.c.l.b16 %v2080
        %v7427 = vunpack.c.h.b16 %v2080
        %v7428 = vunpack.c.l.b16 %v2081
        %v7429 = vunpack.c.h.b16 %v2081
        %v7430 = vunpack.c.l.b16 %v2082
        %v7431 = vunpack.c.h.b16 %v2082
        %v7432 = vunpack.c.l.b16 %v2083
        %v7433 = vunpack.c.h.b16 %v2083
        %v7434 = vunpack.c.l.b16 %v2084
        %v7435 = vunpack.c.h.b16 %v2084
        %v7436 = vunpack.c.l.b16 %v2085
        %v7437 = vunpack.c.h.b16 %v2085
        %v7438 = vunpack.c.l.b16 %v2086
        %v7439 = vunpack.c.h.b16 %v2086
        %v7440 = vunpack.c.l.b16 %v2087
        %v7441 = vunpack.c.h.b16 %v2087
        %v7442 = vunpack.c.l.b16 %v2088
        %v7443 = vunpack.c.h.b16 %v2088
        %v7444 = vunpack.c.l.b16 %v2089
        %v7445 = vunpack.c.h.b16 %v2089
        %v7446 = vunpack.c.l.b16 %v2090
        %v7447 = vunpack.c.h.b16 %v2090
        %v7448 = vunpack.c.l.b16 %v2091
        %v7449 = vunpack.c.h.b16 %v2091
        %v7450 = vunpack.c.l.b16 %v2092
        %v7451 = vunpack.c.h.b16 %v2092
        %v7452 = vunpack.c.l.b16 %v2093
        %v7453 = vunpack.c.h.b16 %v2093
        %v7454 = vunpack.c.l.b16 %v2094
        %v7455 = vunpack.c.h.b16 %v2094
        %v7456 = vunpack.c.l.b16 %v2095
        %v7457 = vunpack.c.h.b16 %v2095
        %v7458 = vunpack.c.l.b16 %v2096
        %v7459 = vunpack.c.h.b16 %v2096
        %v7460 = vunpack.c.l.b16 %v2097
        %v7461 = vunpack.c.h.b16 %v2097
        %v7462 = vunpack.c.l.b16 %v2098
        %v7463 = vunpack.c.h.b16 %v2098
        %v7464 = vunpack.c.l.b16 %v2099
        %v7465 = vunpack.c.h.b16 %v2099
        %v7466 = vunpack.c.l.b16 %v2100
        %v7467 = vunpack.c.h.b16 %v2100
        %v7468 = vunpack.c.l.b16 %v2101
        %v7469 = vunpack.c.h.b16 %v2101
        %v7470 = vunpack.c.l.b16 %v2102
        %v7471 = vunpack.c.h.b16 %v2102
        %v7472 = vunpack.c.l.b16 %v2103
        %v7473 = vunpack.c.h.b16 %v2103
        %v7474 = vunpack.c.l.b16 %v2104
        %v7475 = vunpack.c.h.b16 %v2104
        %v7476 = vunpack.c.l.b16 %v2105
        %v7477 = vunpack.c.h.b16 %v2105
        %v7478 = vunpack.c.l.b16 %v2106
        %v7479 = vunpack.c.h.b16 %v2106
        %v7480 = vunpack.c.l.b16 %v2107
        %v7481 = vunpack.c.h.b16 %v2107
        %v7482 = vunpack.c.l.b16 %v2108
        %v7483 = vunpack.c.h.b16 %v2108
        %v7484 = vunpack.c.l.b16 %v2109
        %v7485 = vunpack.c.h.b16 %v2109
        %v7486 = vunpack.c.l.b16 %v2110
        %v7487 = vunpack.c.h.b16 %v2110
        %v7488 = vunpack.c.l.b16 %v2111
        %v7489 = vunpack.c.h.b16 %v2111
        %v7490 = vunpack.c.l.b16 %v2112
        %v7491 = vunpack.c.h.b16 %v2112
        %v7492 = vunpack.c.l.b16 %v2113
        %v7493 = vunpack.c.h.b16 %v2113
        %v7494 = vunpack.c.l.b16 %v2114
        %v7495 = vunpack.c.h.b16 %v2114
        %v7496 = vunpack.c.l.b16 %v2115
        %v7497 = vunpack.c.h.b16 %v2115
        %v7498 = vunpack.c.l.b16 %v2116
        %v7499 = vunpack.c.h.b16 %v2116
        %v7500 = vunpack.c.l.b16 %v2117
        %v7501 = vunpack.c.h.b16 %v2117
        %v7502 = vunpack.c.l.b16 %v2118
        %v7503 = vunpack.c.h.b16 %v2118
        %v7504 = vpack.c.b16 %v4056, %v4048
        %v7505 = vpack.c.b16 %v4057, %v4049
        %v7506 = vpack.c.b16 %v4058, %v4050
        %v7507 = vpack.c.b16 %v4059, %v4051
        %v7508 = vpack.c.b16 %v4060, %v4052
        %v7509 = vpack.c.b16 %v4061, %v4053
        %v7510 = vpack.c.b16 %v4062, %v4054
        %v7511 = vpack.c.b16 %v4063, %v4055
        %v7512 = vpack.c.b16 %v4072, %v4064
        %v7513 = vpack.c.b16 %v4073, %v4065
        %v7514 = vpack.c.b16 %v4074, %v4066
        %v7515 = vpack.c.b16 %v4075, %v4067
        %v7516 = vpack.c.b16 %v4076, %v4068
        %v7517 = vpack.c.b16 %v4077, %v4069
        %v7518 = vpack.c.b16 %v4078, %v4070
        %v7519 = vpack.c.b16 %v4079, %v4071
        %v7520 = vpack.c.b16 %v4088, %v4080
        %v7521 = vpack.c.b16 %v4089, %v4081
        %v7522 = vpack.c.b16 %v4090, %v4082
        %v7523 = vpack.c.b16 %v4091, %v4083
        %v7524 = vpack.c.b16 %v4092, %v4084
        %v7525 = vpack.c.b16 %v4093, %v4085
        %v7526 = vpack.c.b16 %v4094, %v4086
        %v7527 = vpack.c.b16 %v4095, %v4087
        %v7528 = vpack.c.b16 %v4104, %v4096
        %v7529 = vpack.c.b16 %v4105, %v4097
        %v7530 = vpack.c.b16 %v4106, %v4098
        %v7531 = vpack.c.b16 %v4107, %v4099
        %v7532 = vpack.c.b16 %v4108, %v4100
        %v7533 = vpack.c.b16 %v4109, %v4101
        %v7534 = vpack.c.b16 %v4110, %v4102
        %v7535 = vpack.c.b16 %v4111, %v4103
        %v7536 = vpack.c.b16 %v4120, %v4112
        %v7537 = vpack.c.b16 %v4121, %v4113
        %v7538 = vpack.c.b16 %v4122, %v4114
        %v7539 = vpack.c.b16 %v4123, %v4115
        %v7540 = vpack.c.b16 %v4124, %v4116
        %v7541 = vpack.c.b16 %v4125, %v4117
        %v7542 = vpack.c.b16 %v4126, %v4118
        %v7543 = vpack.c.b16 %v4127, %v4119
        %v7544 = vpack.c.b16 %v4136, %v4128
        %v7545 = vpack.c.b16 %v4137, %v4129
        %v7546 = vpack.c.b16 %v4138, %v4130
        %v7547 = vpack.c.b16 %v4139, %v4131
        %v7548 = vpack.c.b16 %v4140, %v4132
        %v7549 = vpack.c.b16 %v4141, %v4133
        %v7550 = vpack.c.b16 %v4142, %v4134
        %v7551 = vpack.c.b16 %v4143, %v4135
        %v7552 = vpack.c.b16 %v4152, %v4144
        %v7553 = vpack.c.b16 %v4153, %v4145
        %v7554 = vpack.c.b16 %v4154, %v4146
        %v7555 = vpack.c.b16 %v4155, %v4147
        %v7556 = vpack.c.b16 %v4156, %v4148
        %v7557 = vpack.c.b16 %v4157, %v4149
        %v7558 = vpack.c.b16 %v4158, %v4150
        %v7559 = vpack.c.b16 %v4159, %v4151
        %v7560 = vpack.c.b16 %v4168, %v4160
        %v7561 = vpack.c.b16 %v4169, %v4161
        %v7562 = vpack.c.b16 %v4170, %v4162
        %v7563 = vpack.c.b16 %v4171, %v4163
        %v7564 = vpack.c.b16 %v4172, %v4164
        %v7565 = vpack.c.b16 %v4173, %v4165
        %v7566 = vpack.c.b16 %v4174, %v4166
        %v7567 = vpack.c.b16 %v4175, %v4167
        %v7568 = vpack.c.b16 %v4184, %v4176
        %v7569 = vpack.c.b16 %v4185, %v4177
        %v7570 = vpack.c.b16 %v4186, %v4178
        %v7571 = vpack.c.b16 %v4187, %v4179
        %v7572 = vpack.c.b16 %v4188, %v4180
        %v7573 = vpack.c.b16 %v4189, %v4181
        %v7574 = vpack.c.b16 %v4190, %v4182
        %v7575 = vpack.c.b16 %v4191, %v4183
        %v7576 = vpack.c.b16 %v4200, %v4192
        %v7577 = vpack.c.b16 %v4201, %v4193
        %v7578 = vpack.c.b16 %v4202, %v4194
        %v7579 = vpack.c.b16 %v4203, %v4195
        %v7580 = vpack.c.b16 %v4204, %v4196
        %v7581 = vpack.c.b16 %v4205, %v4197
        %v7582 = vpack.c.b16 %v4206, %v4198
        %v7583 = vpack.c.b16 %v4207, %v4199
        %v7584 = vpack.c.b16 %v4216, %v4208
        %v7585 = vpack.c.b16 %v4217, %v4209
        %v7586 = vpack.c.b16 %v4218, %v4210
        %v7587 = vpack.c.b16 %v4219, %v4211
        %v7588 = vpack.c.b16 %v4220, %v4212
        %v7589 = vpack.c.b16 %v4221, %v4213
        %v7590 = vpack.c.b16 %v4222, %v4214
        %v7591 = vpack.c.b16 %v4223, %v4215
        %v7592 = vpack.c.b16 %v4232, %v4224
        %v7593 = vpack.c.b16 %v4233, %v4225
        %v7594 = vpack.c.b16 %v4234, %v4226
        %v7595 = vpack.c.b16 %v4235, %v4227
        %v7596 = vpack.c.b16 %v4236, %v4228
        %v7597 = vpack.c.b16 %v4237, %v4229
        %v7598 = vpack.c.b16 %v4238, %v4230
        %v7599 = vpack.c.b16 %v4239, %v4231
        %v7600 = vpack.c.b16 %v4248, %v4240
        %v7601 = vpack.c.b16 %v4249, %v4241
        %v7602 = vpack.c.b16 %v4250, %v4242
        %v7603 = vpack.c.b16 %v4251, %v4243
        %v7604 = vpack.c.b16 %v4252, %v4244
        %v7605 = vpack.c.b16 %v4253, %v4245
        %v7606 = vpack.c.b16 %v4254, %v4246
        %v7607 = vpack.c.b16 %v4255, %v4247
        %v7608 = vpack.c.b16 %v4264, %v4256
        %v7609 = vpack.c.b16 %v4265, %v4257
        %v7610 = vpack.c.b16 %v4266, %v4258
        %v7611 = vpack.c.b16 %v4267, %v4259
        %v7612 = vpack.c.b16 %v4268, %v4260
        %v7613 = vpack.c.b16 %v4269, %v4261
        %v7614 = vpack.c.b16 %v4270, %v4262
        %v7615 = vpack.c.b16 %v4271, %v4263
        %v7616 = vpack.c.b16 %v4280, %v4272
        %v7617 = vpack.c.b16 %v4281, %v4273
        %v7618 = vpack.c.b16 %v4282, %v4274
        %v7619 = vpack.c.b16 %v4283, %v4275
        %v7620 = vpack.c.b16 %v4284, %v4276
        %v7621 = vpack.c.b16 %v4285, %v4277
        %v7622 = vpack.c.b16 %v4286, %v4278
        %v7623 = vpack.c.b16 %v4287, %v4279
        %v7624 = vpack.c.b16 %v4296, %v4288
        %v7625 = vpack.c.b16 %v4297, %v4289
        %v7626 = vpack.c.b16 %v4298, %v4290
        %v7627 = vpack.c.b16 %v4299, %v4291
        %v7628 = vpack.c.b16 %v4300, %v4292
        %v7629 = vpack.c.b16 %v4301, %v4293
        %v7630 = vpack.c.b16 %v4302, %v4294
        %v7631 = vpack.c.b16 %v4303, %v4295
        %v7632 = vpack.c.b16 %v4312, %v4304
        %v7633 = vpack.c.b16 %v4313, %v4305
        %v7634 = vpack.c.b16 %v4314, %v4306
        %v7635 = vpack.c.b16 %v4315, %v4307
        %v7636 = vpack.c.b16 %v4316, %v4308
        %v7637 = vpack.c.b16 %v4317, %v4309
        %v7638 = vpack.c.b16 %v4318, %v4310
        %v7639 = vpack.c.b16 %v4319, %v4311
        %v7640 = vpack.c.b16 %v4328, %v4320
        %v7641 = vpack.c.b16 %v4329, %v4321
        %v7642 = vpack.c.b16 %v4330, %v4322
        %v7643 = vpack.c.b16 %v4331, %v4323
        %v7644 = vpack.c.b16 %v4332, %v4324
        %v7645 = vpack.c.b16 %v4333, %v4325
        %v7646 = vpack.c.b16 %v4334, %v4326
        %v7647 = vpack.c.b16 %v4335, %v4327
        %v7648 = vpack.c.b16 %v4344, %v4336
        %v7649 = vpack.c.b16 %v4345, %v4337
        %v7650 = vpack.c.b16 %v4346, %v4338
        %v7651 = vpack.c.b16 %v4347, %v4339
        %v7652 = vpack.c.b16 %v4348, %v4340
        %v7653 = vpack.c.b16 %v4349, %v4341
        %v7654 = vpack.c.b16 %v4350, %v4342
        %v7655 = vpack.c.b16 %v4351, %v4343
        %v7656 = vpack.c.b16 %v4360, %v4352
        %v7657 = vpack.c.b16 %v4361, %v4353
        %v7658 = vpack.c.b16 %v4362, %v4354
        %v7659 = vpack.c.b16 %v4363, %v4355
        %v7660 = vpack.c.b16 %v4364, %v4356
        %v7661 = vpack.c.b16 %v4365, %v4357
        %v7662 = vpack.c.b16 %v4366, %v4358
        %v7663 = vpack.c.b16 %v4367, %v4359
        %v7664 = vpack.c.b16 %v4376, %v4368
        %v7665 = vpack.c.b16 %v4377, %v4369
        %v7666 = vpack.c.b16 %v4378, %v4370
        %v7667 = vpack.c.b16 %v4379, %v4371
        %v7668 = vpack.c.b16 %v4380, %v4372
        %v7669 = vpack.c.b16 %v4381, %v4373
        %v7670 = vpack.c.b16 %v4382, %v4374
        %v7671 = vpack.c.b16 %v4383, %v4375
        %v7672 = vpack.c.b16 %v4392, %v4384
        %v7673 = vpack.c.b16 %v4393, %v4385
        %v7674 = vpack.c.b16 %v4394, %v4386
        %v7675 = vpack.c.b16 %v4395, %v4387
        %v7676 = vpack.c.b16 %v4396, %v4388
        %v7677 = vpack.c.b16 %v4397, %v4389
        %v7678 = vpack.c.b16 %v4398, %v4390
        %v7679 = vpack.c.b16 %v4399, %v4391
        %v7680 = vpack.c.b16 %v4408, %v4400
        %v7681 = vpack.c.b16 %v4409, %v4401
        %v7682 = vpack.c.b16 %v4410, %v4402
        %v7683 = vpack.c.b16 %v4411, %v4403
        %v7684 = vpack.c.b16 %v4412, %v4404
        %v7685 = vpack.c.b16 %v4413, %v4405
        %v7686 = vpack.c.b16 %v4414, %v4406
        %v7687 = vpack.c.b16 %v4415, %v4407
        %v7688 = vpack.c.b16 %v4424, %v4416
        %v7689 = vpack.c.b16 %v4425, %v4417
        %v7690 = vpack.c.b16 %v4426, %v4418
        %v7691 = vpack.c.b16 %v4427, %v4419
        %v7692 = vpack.c.b16 %v4428, %v4420
        %v7693 = vpack.c.b16 %v4429, %v4421
        %v7694 = vpack.c.b16 %v4430, %v4422
        %v7695 = vpack.c.b16 %v4431, %v4423
        %v7696 = vpack.c.b16 %v4440, %v4432
        %v7697 = vpack.c.b16 %v4441, %v4433
        %v7698 = vpack.c.b16 %v4442, %v4434
        %v7699 = vpack.c.b16 %v4443, %v4435
        %v7700 = vpack.c.b16 %v4444, %v4436
        %v7701 = vpack.c.b16 %v4445, %v4437
        %v7702 = vpack.c.b16 %v4446, %v4438
        %v7703 = vpack.c.b16 %v4447, %v4439
        %v7704 = vpack.c.b16 %v4456, %v4448
        %v7705 = vpack.c.b16 %v4457, %v4449
        %v7706 = vpack.c.b16 %v4458, %v4450
        %v7707 = vpack.c.b16 %v4459, %v4451
        %v7708 = vpack.c.b16 %v4460, %v4452
        %v7709 = vpack.c.b16 %v4461, %v4453
        %v7710 = vpack.c.b16 %v4462, %v4454
        %v7711 = vpack.c.b16 %v4463, %v4455
        %v7712 = vpack.c.b16 %v4472, %v4464
        %v7713 = vpack.c.b16 %v4473, %v4465
        %v7714 = vpack.c.b16 %v4474, %v4466
        %v7715 = vpack.c.b16 %v4475, %v4467
        %v7716 = vpack.c.b16 %v4476, %v4468
        %v7717 = vpack.c.b16 %v4477, %v4469
        %v7718 = vpack.c.b16 %v4478, %v4470
        %v7719 = vpack.c.b16 %v4479, %v4471
        %v7720 = vpack.c.b16 %v4488, %v4480
        %v7721 = vpack.c.b16 %v4489, %v4481
        %v7722 = vpack.c.b16 %v4490, %v4482
        %v7723 = vpack.c.b16 %v4491, %v4483
        %v7724 = vpack.c.b16 %v4492, %v4484
        %v7725 = vpack.c.b16 %v4493, %v4485
        %v7726 = vpack.c.b16 %v4494, %v4486
        %v7727 = vpack.c.b16 %v4495, %v4487
        %v7728 = vpack.c.b16 %v4504, %v4496
        %v7729 = vpack.c.b16 %v4505, %v4497
        %v7730 = vpack.c.b16 %v4506, %v4498
        %v7731 = vpack.c.b16 %v4507, %v4499
        %v7732 = vpack.c.b16 %v4508, %v4500
        %v7733 = vpack.c.b16 %v4509, %v4501
        %v7734 = vpack.c.b16 %v4510, %v4502
        %v7735 = vpack.c.b16 %v4511, %v4503
        %v7736 = vpack.c.b16 %v4520, %v4512
        %v7737 = vpack.c.b16 %v4521, %v4513
        %v7738 = vpack.c.b16 %v4522, %v4514
        %v7739 = vpack.c.b16 %v4523, %v4515
        %v7740 = vpack.c.b16 %v4524, %v4516
        %v7741 = vpack.c.b16 %v4525, %v4517
        %v7742 = vpack.c.b16 %v4526, %v4518
        %v7743 = vpack.c.b16 %v4527, %v4519
        %v7744 = vpack.c.b16 %v4536, %v4528
        %v7745 = vpack.c.b16 %v4537, %v4529
        %v7746 = vpack.c.b16 %v4538, %v4530
        %v7747 = vpack.c.b16 %v4539, %v4531
        %v7748 = vpack.c.b16 %v4540, %v4532
        %v7749 = vpack.c.b16 %v4541, %v4533
        %v7750 = vpack.c.b16 %v4542, %v4534
        %v7751 = vpack.c.b16 %v4543, %v4535
        %v7752 = vpack.c.b16 %v4552, %v4544
        %v7753 = vpack.c.b16 %v4553, %v4545
        %v7754 = vpack.c.b16 %v4554, %v4546
        %v7755 = vpack.c.b16 %v4555, %v4547
        %v7756 = vpack.c.b16 %v4556, %v4548
        %v7757 = vpack.c.b16 %v4557, %v4549
        %v7758 = vpack.c.b16 %v4558, %v4550
        %v7759 = vpack.c.b16 %v4559, %v4551
        %v7760 = vpack.c.b16 %v4568, %v4560
        %v7761 = vpack.c.b16 %v4569, %v4561
        %v7762 = vpack.c.b16 %v4570, %v4562
        %v7763 = vpack.c.b16 %v4571, %v4563
        %v7764 = vpack.c.b16 %v4572, %v4564
        %v7765 = vpack.c.b16 %v4573, %v4565
        %v7766 = vpack.c.b16 %v4574, %v4566
        %v7767 = vpack.c.b16 %v4575, %v4567
        %v7768 = vpack.c.b16 %v4584, %v4576
        %v7769 = vpack.c.b16 %v4585, %v4577
        %v7770 = vpack.c.b16 %v4586, %v4578
        %v7771 = vpack.c.b16 %v4587, %v4579
        %v7772 = vpack.c.b16 %v4588, %v4580
        %v7773 = vpack.c.b16 %v4589, %v4581
        %v7774 = vpack.c.b16 %v4590, %v4582
        %v7775 = vpack.c.b16 %v4591, %v4583
        %v7776 = vpack.c.b16 %v4600, %v4592
        %v7777 = vpack.c.b16 %v4601, %v4593
        %v7778 = vpack.c.b16 %v4602, %v4594
        %v7779 = vpack.c.b16 %v4603, %v4595
        %v7780 = vpack.c.b16 %v4604, %v4596
        %v7781 = vpack.c.b16 %v4605, %v4597
        %v7782 = vpack.c.b16 %v4606, %v4598
        %v7783 = vpack.c.b16 %v4607, %v4599
        %v7784 = vpack.c.b16 %v4616, %v4608
        %v7785 = vpack.c.b16 %v4617, %v4609
        %v7786 = vpack.c.b16 %v4618, %v4610
        %v7787 = vpack.c.b16 %v4619, %v4611
        %v7788 = vpack.c.b16 %v4620, %v4612
        %v7789 = vpack.c.b16 %v4621, %v4613
        %v7790 = vpack.c.b16 %v4622, %v4614
        %v7791 = vpack.c.b16 %v4623, %v4615
        %v7792 = vpack.c.b16 %v4632, %v4624
        %v7793 = vpack.c.b16 %v4633, %v4625
        %v7794 = vpack.c.b16 %v4634, %v4626
        %v7795 = vpack.c.b16 %v4635, %v4627
        %v7796 = vpack.c.b16 %v4636, %v4628
        %v7797 = vpack.c.b16 %v4637, %v4629
        %v7798 = vpack.c.b16 %v4638, %v4630
        %v7799 = vpack.c.b16 %v4639, %v4631
        %v7800 = vpack.c.b16 %v4648, %v4640
        %v7801 = vpack.c.b16 %v4649, %v4641
        %v7802 = vpack.c.b16 %v4650, %v4642
        %v7803 = vpack.c.b16 %v4651, %v4643
        %v7804 = vpack.c.b16 %v4652, %v4644
        %v7805 = vpack.c.b16 %v4653, %v4645
        %v7806 = vpack.c.b16 %v4654, %v4646
        %v7807 = vpack.c.b16 %v4655, %v4647
        %v7808 = vpack.c.b16 %v4664, %v4656
        %v7809 = vpack.c.b16 %v4665, %v4657
        %v7810 = vpack.c.b16 %v4666, %v4658
        %v7811 = vpack.c.b16 %v4667, %v4659
        %v7812 = vpack.c.b16 %v4668, %v4660
        %v7813 = vpack.c.b16 %v4669, %v4661
        %v7814 = vpack.c.b16 %v4670, %v4662
        %v7815 = vpack.c.b16 %v4671, %v4663
        %v7816 = vpack.c.b16 %v4680, %v4672
        %v7817 = vpack.c.b16 %v4681, %v4673
        %v7818 = vpack.c.b16 %v4682, %v4674
        %v7819 = vpack.c.b16 %v4683, %v4675
        %v7820 = vpack.c.b16 %v4684, %v4676
        %v7821 = vpack.c.b16 %v4685, %v4677
        %v7822 = vpack.c.b16 %v4686, %v4678
        %v7823 = vpack.c.b16 %v4687, %v4679
        %v7824 = vpack.c.b16 %v4696, %v4688
        %v7825 = vpack.c.b16 %v4697, %v4689
        %v7826 = vpack.c.b16 %v4698, %v4690
        %v7827 = vpack.c.b16 %v4699, %v4691
        %v7828 = vpack.c.b16 %v4700, %v4692
        %v7829 = vpack.c.b16 %v4701, %v4693
        %v7830 = vpack.c.b16 %v4702, %v4694
        %v7831 = vpack.c.b16 %v4703, %v4695
        %v7832 = vpack.c.b16 %v4712, %v4704
        %v7833 = vpack.c.b16 %v4713, %v4705
        %v7834 = vpack.c.b16 %v4714, %v4706
        %v7835 = vpack.c.b16 %v4715, %v4707
        %v7836 = vpack.c.b16 %v4716, %v4708
        %v7837 = vpack.c.b16 %v4717, %v4709
        %v7838 = vpack.c.b16 %v4718, %v4710
        %v7839 = vpack.c.b16 %v4719, %v4711
        %v7840 = vpack.c.b16 %v4728, %v4720
        %v7841 = vpack.c.b16 %v4729, %v4721
        %v7842 = vpack.c.b16 %v4730, %v4722
        %v7843 = vpack.c.b16 %v4731, %v4723
        %v7844 = vpack.c.b16 %v4732, %v4724
        %v7845 = vpack.c.b16 %v4733, %v4725
        %v7846 = vpack.c.b16 %v4734, %v4726
        %v7847 = vpack.c.b16 %v4735, %v4727
        %v7848 = vpack.c.b16 %v4744, %v4736
        %v7849 = vpack.c.b16 %v4745, %v4737
        %v7850 = vpack.c.b16 %v4746, %v4738
        %v7851 = vpack.c.b16 %v4747, %v4739
        %v7852 = vpack.c.b16 %v4748, %v4740
        %v7853 = vpack.c.b16 %v4749, %v4741
        %v7854 = vpack.c.b16 %v4750, %v4742
        %v7855 = vpack.c.b16 %v4751, %v4743
        %v7856 = vpack.c.b16 %v4760, %v4752
        %v7857 = vpack.c.b16 %v4761, %v4753
        %v7858 = vpack.c.b16 %v4762, %v4754
        %v7859 = vpack.c.b16 %v4763, %v4755
        %v7860 = vpack.c.b16 %v4764, %v4756
        %v7861 = vpack.c.b16 %v4765, %v4757
        %v7862 = vpack.c.b16 %v4766, %v4758
        %v7863 = vpack.c.b16 %v4767, %v4759
        %v7864 = vpack.c.b16 %v4776, %v4768
        %v7865 = vpack.c.b16 %v4777, %v4769
        %v7866 = vpack.c.b16 %v4778, %v4770
        %v7867 = vpack.c.b16 %v4779, %v4771
        %v7868 = vpack.c.b16 %v4780, %v4772
        %v7869 = vpack.c.b16 %v4781, %v4773
        %v7870 = vpack.c.b16 %v4782, %v4774
        %v7871 = vpack.c.b16 %v4783, %v4775
        %v7872 = vpack.c.b16 %v4792, %v4784
        %v7873 = vpack.c.b16 %v4793, %v4785
        %v7874 = vpack.c.b16 %v4794, %v4786
        %v7875 = vpack.c.b16 %v4795, %v4787
        %v7876 = vpack.c.b16 %v4796, %v4788
        %v7877 = vpack.c.b16 %v4797, %v4789
        %v7878 = vpack.c.b16 %v4798, %v4790
        %v7879 = vpack.c.b16 %v4799, %v4791
        %v7880 = vpack.c.b16 %v4808, %v4800
        %v7881 = vpack.c.b16 %v4809, %v4801
        %v7882 = vpack.c.b16 %v4810, %v4802
        %v7883 = vpack.c.b16 %v4811, %v4803
        %v7884 = vpack.c.b16 %v4812, %v4804
        %v7885 = vpack.c.b16 %v4813, %v4805
        %v7886 = vpack.c.b16 %v4814, %v4806
        %v7887 = vpack.c.b16 %v4815, %v4807
        %v7888 = vpack.c.b16 %v4824, %v4816
        %v7889 = vpack.c.b16 %v4825, %v4817
        %v7890 = vpack.c.b16 %v4826, %v4818
        %v7891 = vpack.c.b16 %v4827, %v4819
        %v7892 = vpack.c.b16 %v4828, %v4820
        %v7893 = vpack.c.b16 %v4829, %v4821
        %v7894 = vpack.c.b16 %v4830, %v4822
        %v7895 = vpack.c.b16 %v4831, %v4823
        %v7896 = vpack.c.b16 %v4840, %v4832
        %v7897 = vpack.c.b16 %v4841, %v4833
        %v7898 = vpack.c.b16 %v4842, %v4834
        %v7899 = vpack.c.b16 %v4843, %v4835
        %v7900 = vpack.c.b16 %v4844, %v4836
        %v7901 = vpack.c.b16 %v4845, %v4837
        %v7902 = vpack.c.b16 %v4846, %v4838
        %v7903 = vpack.c.b16 %v4847, %v4839
        %v7904 = vpack.c.b16 %v4856, %v4848
        %v7905 = vpack.c.b16 %v4857, %v4849
        %v7906 = vpack.c.b16 %v4858, %v4850
        %v7907 = vpack.c.b16 %v4859, %v4851
        %v7908 = vpack.c.b16 %v4860, %v4852
        %v7909 = vpack.c.b16 %v4861, %v4853
        %v7910 = vpack.c.b16 %v4862, %v4854
        %v7911 = vpack.c.b16 %v4863, %v4855
        %v7912 = vpack.c.b16 %v4872, %v4864
        %v7913 = vpack.c.b16 %v4873, %v4865
        %v7914 = vpack.c.b16 %v4874, %v4866
        %v7915 = vpack.c.b16 %v4875, %v4867
        %v7916 = vpack.c.b16 %v4876, %v4868
        %v7917 = vpack.c.b16 %v4877, %v4869
        %v7918 = vpack.c.b16 %v4878, %v4870
        %v7919 = vpack.c.b16 %v4879, %v4871
        %v7920 = vpack.c.b16 %v4888, %v4880
        %v7921 = vpack.c.b16 %v4889, %v4881
        %v7922 = vpack.c.b16 %v4890, %v4882
        %v7923 = vpack.c.b16 %v4891, %v4883
        %v7924 = vpack.c.b16 %v4892, %v4884
        %v7925 = vpack.c.b16 %v4893, %v4885
        %v7926 = vpack.c.b16 %v4894, %v4886
        %v7927 = vpack.c.b16 %v4895, %v4887
        %v7928 = vpack.c.b16 %v4904, %v4896
        %v7929 = vpack.c.b16 %v4905, %v4897
        %v7930 = vpack.c.b16 %v4906, %v4898
        %v7931 = vpack.c.b16 %v4907, %v4899
        %v7932 = vpack.c.b16 %v4908, %v4900
        %v7933 = vpack.c.b16 %v4909, %v4901
        %v7934 = vpack.c.b16 %v4910, %v4902
        %v7935 = vpack.c.b16 %v4911, %v4903
        %v7936 = vpack.c.b16 %v4920, %v4912
        %v7937 = vpack.c.b16 %v4921, %v4913
        %v7938 = vpack.c.b16 %v4922, %v4914
        %v7939 = vpack.c.b16 %v4923, %v4915
        %v7940 = vpack.c.b16 %v4924, %v4916
        %v7941 = vpack.c.b16 %v4925, %v4917
        %v7942 = vpack.c.b16 %v4926, %v4918
        %v7943 = vpack.c.b16 %v4927, %v4919
        %v7944 = vpack.c.b16 %v4936, %v4928
        %v7945 = vpack.c.b16 %v4937, %v4929
        %v7946 = vpack.c.b16 %v4938, %v4930
        %v7947 = vpack.c.b16 %v4939, %v4931
        %v7948 = vpack.c.b16 %v4940, %v4932
        %v7949 = vpack.c.b16 %v4941, %v4933
        %v7950 = vpack.c.b16 %v4942, %v4934
        %v7951 = vpack.c.b16 %v4943, %v4935
        %v7952 = vpack.c.b16 %v4952, %v4944
        %v7953 = vpack.c.b16 %v4953, %v4945
        %v7954 = vpack.c.b16 %v4954, %v4946
        %v7955 = vpack.c.b16 %v4955, %v4947
        %v7956 = vpack.c.b16 %v4956, %v4948
        %v7957 = vpack.c.b16 %v4957, %v4949
        %v7958 = vpack.c.b16 %v4958, %v4950
        %v7959 = vpack.c.b16 %v4959, %v4951
        %v7960 = vpack.c.b16 %v4968, %v4960
        %v7961 = vpack.c.b16 %v4969, %v4961
        %v7962 = vpack.c.b16 %v4970, %v4962
        %v7963 = vpack.c.b16 %v4971, %v4963
        %v7964 = vpack.c.b16 %v4972, %v4964
        %v7965 = vpack.c.b16 %v4973, %v4965
        %v7966 = vpack.c.b16 %v4974, %v4966
        %v7967 = vpack.c.b16 %v4975, %v4967
        %v7968 = vpack.c.b16 %v4984, %v4976
        %v7969 = vpack.c.b16 %v4985, %v4977
        %v7970 = vpack.c.b16 %v4986, %v4978
        %v7971 = vpack.c.b16 %v4987, %v4979
        %v7972 = vpack.c.b16 %v4988, %v4980
        %v7973 = vpack.c.b16 %v4989, %v4981
        %v7974 = vpack.c.b16 %v4990, %v4982
        %v7975 = vpack.c.b16 %v4991, %v4983
        %v7976 = vpack.c.b16 %v5000, %v4992
        %v7977 = vpack.c.b16 %v5001, %v4993
        %v7978 = vpack.c.b16 %v5002, %v4994
        %v7979 = vpack.c.b16 %v5003, %v4995
        %v7980 = vpack.c.b16 %v5004, %v4996
        %v7981 = vpack.c.b16 %v5005, %v4997
        %v7982 = vpack.c.b16 %v5006, %v4998
        %v7983 = vpack.c.b16 %v5007, %v4999
        %v7984 = vpack.c.b16 %v5016, %v5008
        %v7985 = vpack.c.b16 %v5017, %v5009
        %v7986 = vpack.c.b16 %v5018, %v5010
        %v7987 = vpack.c.b16 %v5019, %v5011
        %v7988 = vpack.c.b16 %v5020, %v5012
        %v7989 = vpack.c.b16 %v5021, %v5013
        %v7990 = vpack.c.b16 %v5022, %v5014
        %v7991 = vpack.c.b16 %v5023, %v5015
        %v7992 = vpack.c.b16 %v5032, %v5024
        %v7993 = vpack.c.b16 %v5033, %v5025
        %v7994 = vpack.c.b16 %v5034, %v5026
        %v7995 = vpack.c.b16 %v5035, %v5027
        %v7996 = vpack.c.b16 %v5036, %v5028
        %v7997 = vpack.c.b16 %v5037, %v5029
        %v7998 = vpack.c.b16 %v5038, %v5030
        %v7999 = vpack.c.b16 %v5039, %v5031
        %v8000 = vpack.c.b16 %v5048, %v5040
        %v8001 = vpack.c.b16 %v5049, %v5041
        %v8002 = vpack.c.b16 %v5050, %v5042
        %v8003 = vpack.c.b16 %v5051, %v5043
        %v8004 = vpack.c.b16 %v5052, %v5044
        %v8005 = vpack.c.b16 %v5053, %v5045
        %v8006 = vpack.c.b16 %v5054, %v5046
        %v8007 = vpack.c.b16 %v5055, %v5047
        %v8008 = vpack.c.b16 %v5064, %v5056
        %v8009 = vpack.c.b16 %v5065, %v5057
        %v8010 = vpack.c.b16 %v5066, %v5058
        %v8011 = vpack.c.b16 %v5067, %v5059
        %v8012 = vpack.c.b16 %v5068, %v5060
        %v8013 = vpack.c.b16 %v5069, %v5061
        %v8014 = vpack.c.b16 %v5070, %v5062
        %v8015 = vpack.c.b16 %v5071, %v5063
        %v8016 = vpack.c.b16 %v5080, %v5072
        %v8017 = vpack.c.b16 %v5081, %v5073
        %v8018 = vpack.c.b16 %v5082, %v5074
        %v8019 = vpack.c.b16 %v5083, %v5075
        %v8020 = vpack.c.b16 %v5084, %v5076
        %v8021 = vpack.c.b16 %v5085, %v5077
        %v8022 = vpack.c.b16 %v5086, %v5078
        %v8023 = vpack.c.b16 %v5087, %v5079
        %v8024 = vpack.c.b16 %v5096, %v5088
        %v8025 = vpack.c.b16 %v5097, %v5089
        %v8026 = vpack.c.b16 %v5098, %v5090
        %v8027 = vpack.c.b16 %v5099, %v5091
        %v8028 = vpack.c.b16 %v5100, %v5092
        %v8029 = vpack.c.b16 %v5101, %v5093
        %v8030 = vpack.c.b16 %v5102, %v5094
        %v8031 = vpack.c.b16 %v5103, %v5095
        %v8032 = vpack.c.b16 %v5112, %v5104
        %v8033 = vpack.c.b16 %v5113, %v5105
        %v8034 = vpack.c.b16 %v5114, %v5106
        %v8035 = vpack.c.b16 %v5115, %v5107
        %v8036 = vpack.c.b16 %v5116, %v5108
        %v8037 = vpack.c.b16 %v5117, %v5109
        %v8038 = vpack.c.b16 %v5118, %v5110
        %v8039 = vpack.c.b16 %v5119, %v5111
        %v8040 = vpack.c.b16 %v5128, %v5120
        %v8041 = vpack.c.b16 %v5129, %v5121
        %v8042 = vpack.c.b16 %v5130, %v5122
        %v8043 = vpack.c.b16 %v5131, %v5123
        %v8044 = vpack.c.b16 %v5132, %v5124
        %v8045 = vpack.c.b16 %v5133, %v5125
        %v8046 = vpack.c.b16 %v5134, %v5126
        %v8047 = vpack.c.b16 %v5135, %v5127
        %v8048 = vpack.c.b16 %v5144, %v5136
        %v8049 = vpack.c.b16 %v5145, %v5137
        %v8050 = vpack.c.b16 %v5146, %v5138
        %v8051 = vpack.c.b16 %v5147, %v5139
        %v8052 = vpack.c.b16 %v5148, %v5140
        %v8053 = vpack.c.b16 %v5149, %v5141
        %v8054 = vpack.c.b16 %v5150, %v5142
        %v8055 = vpack.c.b16 %v5151, %v5143
        %v8056 = vpack.c.b16 %v5160, %v5152
        %v8057 = vpack.c.b16 %v5161, %v5153
        %v8058 = vpack.c.b16 %v5162, %v5154
        %v8059 = vpack.c.b16 %v5163, %v5155
        %v8060 = vpack.c.b16 %v5164, %v5156
        %v8061 = vpack.c.b16 %v5165, %v5157
        %v8062 = vpack.c.b16 %v5166, %v5158
        %v8063 = vpack.c.b16 %v5167, %v5159
        %v8064 = vpack.c.b16 %v5176, %v5168
        %v8065 = vpack.c.b16 %v5177, %v5169
        %v8066 = vpack.c.b16 %v5178, %v5170
        %v8067 = vpack.c.b16 %v5179, %v5171
        %v8068 = vpack.c.b16 %v5180, %v5172
        %v8069 = vpack.c.b16 %v5181, %v5173
        %v8070 = vpack.c.b16 %v5182, %v5174
        %v8071 = vpack.c.b16 %v5183, %v5175
        %v8072 = vpack.c.b16 %v5192, %v5184
        %v8073 = vpack.c.b16 %v5193, %v5185
        %v8074 = vpack.c.b16 %v5194, %v5186
        %v8075 = vpack.c.b16 %v5195, %v5187
        %v8076 = vpack.c.b16 %v5196, %v5188
        %v8077 = vpack.c.b16 %v5197, %v5189
        %v8078 = vpack.c.b16 %v5198, %v5190
        %v8079 = vpack.c.b16 %v5199, %v5191
        %v8080 = vpack.c.b16 %v5208, %v5200
        %v8081 = vpack.c.b16 %v5209, %v5201
        %v8082 = vpack.c.b16 %v5210, %v5202
        %v8083 = vpack.c.b16 %v5211, %v5203
        %v8084 = vpack.c.b16 %v5212, %v5204
        %v8085 = vpack.c.b16 %v5213, %v5205
        %v8086 = vpack.c.b16 %v5214, %v5206
        %v8087 = vpack.c.b16 %v5215, %v5207
        %v8088 = vpack.c.b16 %v5224, %v5216
        %v8089 = vpack.c.b16 %v5225, %v5217
        %v8090 = vpack.c.b16 %v5226, %v5218
        %v8091 = vpack.c.b16 %v5227, %v5219
        %v8092 = vpack.c.b16 %v5228, %v5220
        %v8093 = vpack.c.b16 %v5229, %v5221
        %v8094 = vpack.c.b16 %v5230, %v5222
        %v8095 = vpack.c.b16 %v5231, %v5223
        %v8096 = vpack.c.b16 %v5240, %v5232
        %v8097 = vpack.c.b16 %v5241, %v5233
        %v8098 = vpack.c.b16 %v5242, %v5234
        %v8099 = vpack.c.b16 %v5243, %v5235
        %v8100 = vpack.c.b16 %v5244, %v5236
        %v8101 = vpack.c.b16 %v5245, %v5237
        %v8102 = vpack.c.b16 %v5246, %v5238
        %v8103 = vpack.c.b16 %v5247, %v5239
        %v8104 = vpack.c.b16 %v5256, %v5248
        %v8105 = vpack.c.b16 %v5257, %v5249
        %v8106 = vpack.c.b16 %v5258, %v5250
        %v8107 = vpack.c.b16 %v5259, %v5251
        %v8108 = vpack.c.b16 %v5260, %v5252
        %v8109 = vpack.c.b16 %v5261, %v5253
        %v8110 = vpack.c.b16 %v5262, %v5254
        %v8111 = vpack.c.b16 %v5263, %v5255
        %v8112 = vpack.c.b16 %v5272, %v5264
        %v8113 = vpack.c.b16 %v5273, %v5265
        %v8114 = vpack.c.b16 %v5274, %v5266
        %v8115 = vpack.c.b16 %v5275, %v5267
        %v8116 = vpack.c.b16 %v5276, %v5268
        %v8117 = vpack.c.b16 %v5277, %v5269
        %v8118 = vpack.c.b16 %v5278, %v5270
        %v8119 = vpack.c.b16 %v5279, %v5271
        %v8120 = vpack.c.b16 %v5288, %v5280
        %v8121 = vpack.c.b16 %v5289, %v5281
        %v8122 = vpack.c.b16 %v5290, %v5282
        %v8123 = vpack.c.b16 %v5291, %v5283
        %v8124 = vpack.c.b16 %v5292, %v5284
        %v8125 = vpack.c.b16 %v5293, %v5285
        %v8126 = vpack.c.b16 %v5294, %v5286
        %v8127 = vpack.c.b16 %v5295, %v5287
        %v8128 = vpack.c.b16 %v5304, %v5296
        %v8129 = vpack.c.b16 %v5305, %v5297
        %v8130 = vpack.c.b16 %v5306, %v5298
        %v8131 = vpack.c.b16 %v5307, %v5299
        %v8132 = vpack.c.b16 %v5308, %v5300
        %v8133 = vpack.c.b16 %v5309, %v5301
        %v8134 = vpack.c.b16 %v5310, %v5302
        %v8135 = vpack.c.b16 %v5311, %v5303
        %v8136 = vpack.c.b16 %v5320, %v5312
        %v8137 = vpack.c.b16 %v5321, %v5313
        %v8138 = vpack.c.b16 %v5322, %v5314
        %v8139 = vpack.c.b16 %v5323, %v5315
        %v8140 = vpack.c.b16 %v5324, %v5316
        %v8141 = vpack.c.b16 %v5325, %v5317
        %v8142 = vpack.c.b16 %v5326, %v5318
        %v8143 = vpack.c.b16 %v5327, %v5319
        %v8144 = vpack.c.b16 %v5336, %v5328
        %v8145 = vpack.c.b16 %v5337, %v5329
        %v8146 = vpack.c.b16 %v5338, %v5330
        %v8147 = vpack.c.b16 %v5339, %v5331
        %v8148 = vpack.c.b16 %v5340, %v5332
        %v8149 = vpack.c.b16 %v5341, %v5333
        %v8150 = vpack.c.b16 %v5342, %v5334
        %v8151 = vpack.c.b16 %v5343, %v5335
        %v8152 = vpack.c.b16 %v5352, %v5344
        %v8153 = vpack.c.b16 %v5353, %v5345
        %v8154 = vpack.c.b16 %v5354, %v5346
        %v8155 = vpack.c.b16 %v5355, %v5347
        %v8156 = vpack.c.b16 %v5356, %v5348
        %v8157 = vpack.c.b16 %v5357, %v5349
        %v8158 = vpack.c.b16 %v5358, %v5350
        %v8159 = vpack.c.b16 %v5359, %v5351
        %v8160 = vpack.c.b16 %v5368, %v5360
        %v8161 = vpack.c.b16 %v5369, %v5361
        %v8162 = vpack.c.b16 %v5370, %v5362
        %v8163 = vpack.c.b16 %v5371, %v5363
        %v8164 = vpack.c.b16 %v5372, %v5364
        %v8165 = vpack.c.b16 %v5373, %v5365
        %v8166 = vpack.c.b16 %v5374, %v5366
        %v8167 = vpack.c.b16 %v5375, %v5367
        %v8168 = vpack.c.b16 %v5384, %v5376
        %v8169 = vpack.c.b16 %v5385, %v5377
        %v8170 = vpack.c.b16 %v5386, %v5378
        %v8171 = vpack.c.b16 %v5387, %v5379
        %v8172 = vpack.c.b16 %v5388, %v5380
        %v8173 = vpack.c.b16 %v5389, %v5381
        %v8174 = vpack.c.b16 %v5390, %v5382
        %v8175 = vpack.c.b16 %v5391, %v5383
        %v8176 = vpack.c.b16 %v5400, %v5392
        %v8177 = vpack.c.b16 %v5401, %v5393
        %v8178 = vpack.c.b16 %v5402, %v5394
        %v8179 = vpack.c.b16 %v5403, %v5395
        %v8180 = vpack.c.b16 %v5404, %v5396
        %v8181 = vpack.c.b16 %v5405, %v5397
        %v8182 = vpack.c.b16 %v5406, %v5398
        %v8183 = vpack.c.b16 %v5407, %v5399
        %v8184 = vpack.c.b16 %v5416, %v5408
        %v8185 = vpack.c.b16 %v5417, %v5409
        %v8186 = vpack.c.b16 %v5418, %v5410
        %v8187 = vpack.c.b16 %v5419, %v5411
        %v8188 = vpack.c.b16 %v5420, %v5412
        %v8189 = vpack.c.b16 %v5421, %v5413
        %v8190 = vpack.c.b16 %v5422, %v5414
        %v8191 = vpack.c.b16 %v5423, %v5415
        %v8192 = vpack.c.b16 %v5432, %v5424
        %v8193 = vpack.c.b16 %v5433, %v5425
        %v8194 = vpack.c.b16 %v5434, %v5426
        %v8195 = vpack.c.b16 %v5435, %v5427
        %v8196 = vpack.c.b16 %v5436, %v5428
        %v8197 = vpack.c.b16 %v5437, %v5429
        %v8198 = vpack.c.b16 %v5438, %v5430
        %v8199 = vpack.c.b16 %v5439, %v5431
        %v8200 = vpack.c.b16 %v5448, %v5440
        %v8201 = vpack.c.b16 %v5449, %v5441
        %v8202 = vpack.c.b16 %v5450, %v5442
        %v8203 = vpack.c.b16 %v5451, %v5443
        %v8204 = vpack.c.b16 %v5452, %v5444
        %v8205 = vpack.c.b16 %v5453, %v5445
        %v8206 = vpack.c.b16 %v5454, %v5446
        %v8207 = vpack.c.b16 %v5455, %v5447
        %v8208 = vpack.c.b16 %v5464, %v5456
        %v8209 = vpack.c.b16 %v5465, %v5457
        %v8210 = vpack.c.b16 %v5466, %v5458
        %v8211 = vpack.c.b16 %v5467, %v5459
        %v8212 = vpack.c.b16 %v5468, %v5460
        %v8213 = vpack.c.b16 %v5469, %v5461
        %v8214 = vpack.c.b16 %v5470, %v5462
        %v8215 = vpack.c.b16 %v5471, %v5463
        %v8216 = vpack.c.b16 %v5480, %v5472
        %v8217 = vpack.c.b16 %v5481, %v5473
        %v8218 = vpack.c.b16 %v5482, %v5474
        %v8219 = vpack.c.b16 %v5483, %v5475
        %v8220 = vpack.c.b16 %v5484, %v5476
        %v8221 = vpack.c.b16 %v5485, %v5477
        %v8222 = vpack.c.b16 %v5486, %v5478
        %v8223 = vpack.c.b16 %v5487, %v5479
        %v8224 = vpack.c.b16 %v5496, %v5488
        %v8225 = vpack.c.b16 %v5497, %v5489
        %v8226 = vpack.c.b16 %v5498, %v5490
        %v8227 = vpack.c.b16 %v5499, %v5491
        %v8228 = vpack.c.b16 %v5500, %v5492
        %v8229 = vpack.c.b16 %v5501, %v5493
        %v8230 = vpack.c.b16 %v5502, %v5494
        %v8231 = vpack.c.b16 %v5503, %v5495
        %v8232 = vpack.c.b16 %v5512, %v5504
        %v8233 = vpack.c.b16 %v5513, %v5505
        %v8234 = vpack.c.b16 %v5514, %v5506
        %v8235 = vpack.c.b16 %v5515, %v5507
        %v8236 = vpack.c.b16 %v5516, %v5508
        %v8237 = vpack.c.b16 %v5517, %v5509
        %v8238 = vpack.c.b16 %v5518, %v5510
        %v8239 = vpack.c.b16 %v5519, %v5511
        %v8240 = vpack.c.b16 %v5528, %v5520
        %v8241 = vpack.c.b16 %v5529, %v5521
        %v8242 = vpack.c.b16 %v5530, %v5522
        %v8243 = vpack.c.b16 %v5531, %v5523
        %v8244 = vpack.c.b16 %v5532, %v5524
        %v8245 = vpack.c.b16 %v5533, %v5525
        %v8246 = vpack.c.b16 %v5534, %v5526
        %v8247 = vpack.c.b16 %v5535, %v5527
        %v8248 = vpack.c.b16 %v5544, %v5536
        %v8249 = vpack.c.b16 %v5545, %v5537
        %v8250 = vpack.c.b16 %v5546, %v5538
        %v8251 = vpack.c.b16 %v5547, %v5539
        %v8252 = vpack.c.b16 %v5548, %v5540
        %v8253 = vpack.c.b16 %v5549, %v5541
        %v8254 = vpack.c.b16 %v5550, %v5542
        %v8255 = vpack.c.b16 %v5551, %v5543
        %v8256 = vpack.c.b16 %v5560, %v5552
        %v8257 = vpack.c.b16 %v5561, %v5553
        %v8258 = vpack.c.b16 %v5562, %v5554
        %v8259 = vpack.c.b16 %v5563, %v5555
        %v8260 = vpack.c.b16 %v5564, %v5556
        %v8261 = vpack.c.b16 %v5565, %v5557
        %v8262 = vpack.c.b16 %v5566, %v5558
        %v8263 = vpack.c.b16 %v5567, %v5559
        %v8264 = vpack.c.b16 %v5576, %v5568
        %v8265 = vpack.c.b16 %v5577, %v5569
        %v8266 = vpack.c.b16 %v5578, %v5570
        %v8267 = vpack.c.b16 %v5579, %v5571
        %v8268 = vpack.c.b16 %v5580, %v5572
        %v8269 = vpack.c.b16 %v5581, %v5573
        %v8270 = vpack.c.b16 %v5582, %v5574
        %v8271 = vpack.c.b16 %v5583, %v5575
        %v8272 = vpack.c.b16 %v5592, %v5584
        %v8273 = vpack.c.b16 %v5593, %v5585
        %v8274 = vpack.c.b16 %v5594, %v5586
        %v8275 = vpack.c.b16 %v5595, %v5587
        %v8276 = vpack.c.b16 %v5596, %v5588
        %v8277 = vpack.c.b16 %v5597, %v5589
        %v8278 = vpack.c.b16 %v5598, %v5590
        %v8279 = vpack.c.b16 %v5599, %v5591
        %v8280 = vpack.c.b16 %v5608, %v5600
        %v8281 = vpack.c.b16 %v5609, %v5601
        %v8282 = vpack.c.b16 %v5610, %v5602
        %v8283 = vpack.c.b16 %v5611, %v5603
        %v8284 = vpack.c.b16 %v5612, %v5604
        %v8285 = vpack.c.b16 %v5613, %v5605
        %v8286 = vpack.c.b16 %v5614, %v5606
        %v8287 = vpack.c.b16 %v5615, %v5607
        %v8288 = vpack.c.b16 %v5624, %v5616
        %v8289 = vpack.c.b16 %v5625, %v5617
        %v8290 = vpack.c.b16 %v5626, %v5618
        %v8291 = vpack.c.b16 %v5627, %v5619
        %v8292 = vpack.c.b16 %v5628, %v5620
        %v8293 = vpack.c.b16 %v5629, %v5621
        %v8294 = vpack.c.b16 %v5630, %v5622
        %v8295 = vpack.c.b16 %v5631, %v5623
        %v8296 = vpack.c.b16 %v5640, %v5632
        %v8297 = vpack.c.b16 %v5641, %v5633
        %v8298 = vpack.c.b16 %v5642, %v5634
        %v8299 = vpack.c.b16 %v5643, %v5635
        %v8300 = vpack.c.b16 %v5644, %v5636
        %v8301 = vpack.c.b16 %v5645, %v5637
        %v8302 = vpack.c.b16 %v5646, %v5638
        %v8303 = vpack.c.b16 %v5647, %v5639
        %v8304 = vpack.c.b16 %v5656, %v5648
        %v8305 = vpack.c.b16 %v5657, %v5649
        %v8306 = vpack.c.b16 %v5658, %v5650
        %v8307 = vpack.c.b16 %v5659, %v5651
        %v8308 = vpack.c.b16 %v5660, %v5652
        %v8309 = vpack.c.b16 %v5661, %v5653
        %v8310 = vpack.c.b16 %v5662, %v5654
        %v8311 = vpack.c.b16 %v5663, %v5655
        %v8312 = vpack.c.b16 %v5672, %v5664
        %v8313 = vpack.c.b16 %v5673, %v5665
        %v8314 = vpack.c.b16 %v5674, %v5666
        %v8315 = vpack.c.b16 %v5675, %v5667
        %v8316 = vpack.c.b16 %v5676, %v5668
        %v8317 = vpack.c.b16 %v5677, %v5669
        %v8318 = vpack.c.b16 %v5678, %v5670
        %v8319 = vpack.c.b16 %v5679, %v5671
        %v8320 = vpack.c.b16 %v5688, %v5680
        %v8321 = vpack.c.b16 %v5689, %v5681
        %v8322 = vpack.c.b16 %v5690, %v5682
        %v8323 = vpack.c.b16 %v5691, %v5683
        %v8324 = vpack.c.b16 %v5692, %v5684
        %v8325 = vpack.c.b16 %v5693, %v5685
        %v8326 = vpack.c.b16 %v5694, %v5686
        %v8327 = vpack.c.b16 %v5695, %v5687
        %v8328 = vpack.c.b16 %v5704, %v5696
        %v8329 = vpack.c.b16 %v5705, %v5697
        %v8330 = vpack.c.b16 %v5706, %v5698
        %v8331 = vpack.c.b16 %v5707, %v5699
        %v8332 = vpack.c.b16 %v5708, %v5700
        %v8333 = vpack.c.b16 %v5709, %v5701
        %v8334 = vpack.c.b16 %v5710, %v5702
        %v8335 = vpack.c.b16 %v5711, %v5703
        %v8336 = vpack.c.b16 %v5720, %v5712
        %v8337 = vpack.c.b16 %v5721, %v5713
        %v8338 = vpack.c.b16 %v5722, %v5714
        %v8339 = vpack.c.b16 %v5723, %v5715
        %v8340 = vpack.c.b16 %v5724, %v5716
        %v8341 = vpack.c.b16 %v5725, %v5717
        %v8342 = vpack.c.b16 %v5726, %v5718
        %v8343 = vpack.c.b16 %v5727, %v5719
        %v8344 = vpack.c.b16 %v5736, %v5728
        %v8345 = vpack.c.b16 %v5737, %v5729
        %v8346 = vpack.c.b16 %v5738, %v5730
        %v8347 = vpack.c.b16 %v5739, %v5731
        %v8348 = vpack.c.b16 %v5740, %v5732
        %v8349 = vpack.c.b16 %v5741, %v5733
        %v8350 = vpack.c.b16 %v5742, %v5734
        %v8351 = vpack.c.b16 %v5743, %v5735
        %v8352 = vpack.c.b16 %v5752, %v5744
        %v8353 = vpack.c.b16 %v5753, %v5745
        %v8354 = vpack.c.b16 %v5754, %v5746
        %v8355 = vpack.c.b16 %v5755, %v5747
        %v8356 = vpack.c.b16 %v5756, %v5748
        %v8357 = vpack.c.b16 %v5757, %v5749
        %v8358 = vpack.c.b16 %v5758, %v5750
        %v8359 = vpack.c.b16 %v5759, %v5751
        %v8360 = vpack.c.b16 %v5768, %v5760
        %v8361 = vpack.c.b16 %v5769, %v5761
        %v8362 = vpack.c.b16 %v5770, %v5762
        %v8363 = vpack.c.b16 %v5771, %v5763
        %v8364 = vpack.c.b16 %v5772, %v5764
        %v8365 = vpack.c.b16 %v5773, %v5765
        %v8366 = vpack.c.b16 %v5774, %v5766
        %v8367 = vpack.c.b16 %v5775, %v5767
        %v8368 = vpack.c.b16 %v5784, %v5776
        %v8369 = vpack.c.b16 %v5785, %v5777
        %v8370 = vpack.c.b16 %v5786, %v5778
        %v8371 = vpack.c.b16 %v5787, %v5779
        %v8372 = vpack.c.b16 %v5788, %v5780
        %v8373 = vpack.c.b16 %v5789, %v5781
        %v8374 = vpack.c.b16 %v5790, %v5782
        %v8375 = vpack.c.b16 %v5791, %v5783
        %v8376 = vpack.c.b16 %v5800, %v5792
        %v8377 = vpack.c.b16 %v5801, %v5793
        %v8378 = vpack.c.b16 %v5802, %v5794
        %v8379 = vpack.c.b16 %v5803, %v5795
        %v8380 = vpack.c.b16 %v5804, %v5796
        %v8381 = vpack.c.b16 %v5805, %v5797
        %v8382 = vpack.c.b16 %v5806, %v5798
        %v8383 = vpack.c.b16 %v5807, %v5799
        %v8384 = vpack.c.b16 %v5816, %v5808
        %v8385 = vpack.c.b16 %v5817, %v5809
        %v8386 = vpack.c.b16 %v5818, %v5810
        %v8387 = vpack.c.b16 %v5819, %v5811
        %v8388 = vpack.c.b16 %v5820, %v5812
        %v8389 = vpack.c.b16 %v5821, %v5813
        %v8390 = vpack.c.b16 %v5822, %v5814
        %v8391 = vpack.c.b16 %v5823, %v5815
        %v8392 = vpack.c.b16 %v5832, %v5824
        %v8393 = vpack.c.b16 %v5833, %v5825
        %v8394 = vpack.c.b16 %v5834, %v5826
        %v8395 = vpack.c.b16 %v5835, %v5827
        %v8396 = vpack.c.b16 %v5836, %v5828
        %v8397 = vpack.c.b16 %v5837, %v5829
        %v8398 = vpack.c.b16 %v5838, %v5830
        %v8399 = vpack.c.b16 %v5839, %v5831
        %v8400 = vpack.c.b16 %v5848, %v5840
        %v8401 = vpack.c.b16 %v5849, %v5841
        %v8402 = vpack.c.b16 %v5850, %v5842
        %v8403 = vpack.c.b16 %v5851, %v5843
        %v8404 = vpack.c.b16 %v5852, %v5844
        %v8405 = vpack.c.b16 %v5853, %v5845
        %v8406 = vpack.c.b16 %v5854, %v5846
        %v8407 = vpack.c.b16 %v5855, %v5847
        %v8408 = vpack.c.b16 %v5864, %v5856
        %v8409 = vpack.c.b16 %v5865, %v5857
        %v8410 = vpack.c.b16 %v5866, %v5858
        %v8411 = vpack.c.b16 %v5867, %v5859
        %v8412 = vpack.c.b16 %v5868, %v5860
        %v8413 = vpack.c.b16 %v5869, %v5861
        %v8414 = vpack.c.b16 %v5870, %v5862
        %v8415 = vpack.c.b16 %v5871, %v5863
        %v8416 = vpack.c.b16 %v5880, %v5872
        %v8417 = vpack.c.b16 %v5881, %v5873
        %v8418 = vpack.c.b16 %v5882, %v5874
        %v8419 = vpack.c.b16 %v5883, %v5875
        %v8420 = vpack.c.b16 %v5884, %v5876
        %v8421 = vpack.c.b16 %v5885, %v5877
        %v8422 = vpack.c.b16 %v5886, %v5878
        %v8423 = vpack.c.b16 %v5887, %v5879
        %v8424 = vpack.c.b16 %v5896, %v5888
        %v8425 = vpack.c.b16 %v5897, %v5889
        %v8426 = vpack.c.b16 %v5898, %v5890
        %v8427 = vpack.c.b16 %v5899, %v5891
        %v8428 = vpack.c.b16 %v5900, %v5892
        %v8429 = vpack.c.b16 %v5901, %v5893
        %v8430 = vpack.c.b16 %v5902, %v5894
        %v8431 = vpack.c.b16 %v5903, %v5895
        %v8432 = vpack.c.b16 %v5912, %v5904
        %v8433 = vpack.c.b16 %v5913, %v5905
        %v8434 = vpack.c.b16 %v5914, %v5906
        %v8435 = vpack.c.b16 %v5915, %v5907
        %v8436 = vpack.c.b16 %v5916, %v5908
        %v8437 = vpack.c.b16 %v5917, %v5909
        %v8438 = vpack.c.b16 %v5918, %v5910
        %v8439 = vpack.c.b16 %v5919, %v5911
        %v8440 = vpack.c.b16 %v5928, %v5920
        %v8441 = vpack.c.b16 %v5929, %v5921
        %v8442 = vpack.c.b16 %v5930, %v5922
        %v8443 = vpack.c.b16 %v5931, %v5923
        %v8444 = vpack.c.b16 %v5932, %v5924
        %v8445 = vpack.c.b16 %v5933, %v5925
        %v8446 = vpack.c.b16 %v5934, %v5926
        %v8447 = vpack.c.b16 %v5935, %v5927
        %v8448 = vpack.c.b16 %v5944, %v5936
        %v8449 = vpack.c.b16 %v5945, %v5937
        %v8450 = vpack.c.b16 %v5946, %v5938
        %v8451 = vpack.c.b16 %v5947, %v5939
        %v8452 = vpack.c.b16 %v5948, %v5940
        %v8453 = vpack.c.b16 %v5949, %v5941
        %v8454 = vpack.c.b16 %v5950, %v5942
        %v8455 = vpack.c.b16 %v5951, %v5943
        %v8456 = vpack.c.b16 %v5960, %v5952
        %v8457 = vpack.c.b16 %v5961, %v5953
        %v8458 = vpack.c.b16 %v5962, %v5954
        %v8459 = vpack.c.b16 %v5963, %v5955
        %v8460 = vpack.c.b16 %v5964, %v5956
        %v8461 = vpack.c.b16 %v5965, %v5957
        %v8462 = vpack.c.b16 %v5966, %v5958
        %v8463 = vpack.c.b16 %v5967, %v5959
        %v8464 = vpack.c.b16 %v5976, %v5968
        %v8465 = vpack.c.b16 %v5977, %v5969
        %v8466 = vpack.c.b16 %v5978, %v5970
        %v8467 = vpack.c.b16 %v5979, %v5971
        %v8468 = vpack.c.b16 %v5980, %v5972
        %v8469 = vpack.c.b16 %v5981, %v5973
        %v8470 = vpack.c.b16 %v5982, %v5974
        %v8471 = vpack.c.b16 %v5983, %v5975
        %v8472 = vpack.c.b16 %v5992, %v5984
        %v8473 = vpack.c.b16 %v5993, %v5985
        %v8474 = vpack.c.b16 %v5994, %v5986
        %v8475 = vpack.c.b16 %v5995, %v5987
        %v8476 = vpack.c.b16 %v5996, %v5988
        %v8477 = vpack.c.b16 %v5997, %v5989
        %v8478 = vpack.c.b16 %v5998, %v5990
        %v8479 = vpack.c.b16 %v5999, %v5991
        %v8480 = vpack.c.b16 %v6008, %v6000
        %v8481 = vpack.c.b16 %v6009, %v6001
        %v8482 = vpack.c.b16 %v6010, %v6002
        %v8483 = vpack.c.b16 %v6011, %v6003
        %v8484 = vpack.c.b16 %v6012, %v6004
        %v8485 = vpack.c.b16 %v6013, %v6005
        %v8486 = vpack.c.b16 %v6014, %v6006
        %v8487 = vpack.c.b16 %v6015, %v6007
        %v8488 = vpack.c.b16 %v6024, %v6016
        %v8489 = vpack.c.b16 %v6025, %v6017
        %v8490 = vpack.c.b16 %v6026, %v6018
        %v8491 = vpack.c.b16 %v6027, %v6019
        %v8492 = vpack.c.b16 %v6028, %v6020
        %v8493 = vpack.c.b16 %v6029, %v6021
        %v8494 = vpack.c.b16 %v6030, %v6022
        %v8495 = vpack.c.b16 %v6031, %v6023
        %v8496 = vpack.c.b16 %v6040, %v6032
        %v8497 = vpack.c.b16 %v6041, %v6033
        %v8498 = vpack.c.b16 %v6042, %v6034
        %v8499 = vpack.c.b16 %v6043, %v6035
        %v8500 = vpack.c.b16 %v6044, %v6036
        %v8501 = vpack.c.b16 %v6045, %v6037
        %v8502 = vpack.c.b16 %v6046, %v6038
        %v8503 = vpack.c.b16 %v6047, %v6039
        %v8504 = vpack.c.b16 %v6056, %v6048
        %v8505 = vpack.c.b16 %v6057, %v6049
        %v8506 = vpack.c.b16 %v6058, %v6050
        %v8507 = vpack.c.b16 %v6059, %v6051
        %v8508 = vpack.c.b16 %v6060, %v6052
        %v8509 = vpack.c.b16 %v6061, %v6053
        %v8510 = vpack.c.b16 %v6062, %v6054
        %v8511 = vpack.c.b16 %v6063, %v6055
        %v8512 = vpack.c.b16 %v6072, %v6064
        %v8513 = vpack.c.b16 %v6073, %v6065
        %v8514 = vpack.c.b16 %v6074, %v6066
        %v8515 = vpack.c.b16 %v6075, %v6067
        %v8516 = vpack.c.b16 %v6076, %v6068
        %v8517 = vpack.c.b16 %v6077, %v6069
        %v8518 = vpack.c.b16 %v6078, %v6070
        %v8519 = vpack.c.b16 %v6079, %v6071
        %v8520 = vpack.c.b16 %v6088, %v6080
        %v8521 = vpack.c.b16 %v6089, %v6081
        %v8522 = vpack.c.b16 %v6090, %v6082
        %v8523 = vpack.c.b16 %v6091, %v6083
        %v8524 = vpack.c.b16 %v6092, %v6084
        %v8525 = vpack.c.b16 %v6093, %v6085
        %v8526 = vpack.c.b16 %v6094, %v6086
        %v8527 = vpack.c.b16 %v6095, %v6087
        %v8528 = vpack.c.b16 %v6104, %v6096
        %v8529 = vpack.c.b16 %v6105, %v6097
        %v8530 = vpack.c.b16 %v6106, %v6098
        %v8531 = vpack.c.b16 %v6107, %v6099
        %v8532 = vpack.c.b16 %v6108, %v6100
        %v8533 = vpack.c.b16 %v6109, %v6101
        %v8534 = vpack.c.b16 %v6110, %v6102
        %v8535 = vpack.c.b16 %v6111, %v6103
        %v8536 = vpack.c.b16 %v6120, %v6112
        %v8537 = vpack.c.b16 %v6121, %v6113
        %v8538 = vpack.c.b16 %v6122, %v6114
        %v8539 = vpack.c.b16 %v6123, %v6115
        %v8540 = vpack.c.b16 %v6124, %v6116
        %v8541 = vpack.c.b16 %v6125, %v6117
        %v8542 = vpack.c.b16 %v6126, %v6118
        %v8543 = vpack.c.b16 %v6127, %v6119
        %v8544 = vpack.c.b16 %v6136, %v6128
        %v8545 = vpack.c.b16 %v6137, %v6129
        %v8546 = vpack.c.b16 %v6138, %v6130
        %v8547 = vpack.c.b16 %v6139, %v6131
        %v8548 = vpack.c.b16 %v6140, %v6132
        %v8549 = vpack.c.b16 %v6141, %v6133
        %v8550 = vpack.c.b16 %v6142, %v6134
        %v8551 = vpack.c.b16 %v6143, %v6135
        %v8552 = vpack.c.b16 %v6152, %v6144
        %v8553 = vpack.c.b16 %v6153, %v6145
        %v8554 = vpack.c.b16 %v6154, %v6146
        %v8555 = vpack.c.b16 %v6155, %v6147
        %v8556 = vpack.c.b16 %v6156, %v6148
        %v8557 = vpack.c.b16 %v6157, %v6149
        %v8558 = vpack.c.b16 %v6158, %v6150
        %v8559 = vpack.c.b16 %v6159, %v6151
        %v8560 = vpack.c.b16 %v6168, %v6160
        %v8561 = vpack.c.b16 %v6169, %v6161
        %v8562 = vpack.c.b16 %v6170, %v6162
        %v8563 = vpack.c.b16 %v6171, %v6163
        %v8564 = vpack.c.b16 %v6172, %v6164
        %v8565 = vpack.c.b16 %v6173, %v6165
        %v8566 = vpack.c.b16 %v6174, %v6166
        %v8567 = vpack.c.b16 %v6175, %v6167
        %v8568 = vpack.c.b16 %v6184, %v6176
        %v8569 = vpack.c.b16 %v6185, %v6177
        %v8570 = vpack.c.b16 %v6186, %v6178
        %v8571 = vpack.c.b16 %v6187, %v6179
        %v8572 = vpack.c.b16 %v6188, %v6180
        %v8573 = vpack.c.b16 %v6189, %v6181
        %v8574 = vpack.c.b16 %v6190, %v6182
        %v8575 = vpack.c.b16 %v6191, %v6183
        %v8576 = vpack.c.b16 %v6200, %v6192
        %v8577 = vpack.c.b16 %v6201, %v6193
        %v8578 = vpack.c.b16 %v6202, %v6194
        %v8579 = vpack.c.b16 %v6203, %v6195
        %v8580 = vpack.c.b16 %v6204, %v6196
        %v8581 = vpack.c.b16 %v6205, %v6197
        %v8582 = vpack.c.b16 %v6206, %v6198
        %v8583 = vpack.c.b16 %v6207, %v6199
        %v8584 = vpack.c.b16 %v6216, %v6208
        %v8585 = vpack.c.b16 %v6217, %v6209
        %v8586 = vpack.c.b16 %v6218, %v6210
        %v8587 = vpack.c.b16 %v6219, %v6211
        %v8588 = vpack.c.b16 %v6220, %v6212
        %v8589 = vpack.c.b16 %v6221, %v6213
        %v8590 = vpack.c.b16 %v6222, %v6214
        %v8591 = vpack.c.b16 %v6223, %v6215
        %v8592 = vpack.c.b16 %v6232, %v6224
        %v8593 = vpack.c.b16 %v6233, %v6225
        %v8594 = vpack.c.b16 %v6234, %v6226
        %v8595 = vpack.c.b16 %v6235, %v6227
        %v8596 = vpack.c.b16 %v6236, %v6228
        %v8597 = vpack.c.b16 %v6237, %v6229
        %v8598 = vpack.c.b16 %v6238, %v6230
        %v8599 = vpack.c.b16 %v6239, %v6231
        %v8600 = vpack.c.b16 %v6248, %v6240
        %v8601 = vpack.c.b16 %v6249, %v6241
        %v8602 = vpack.c.b16 %v6250, %v6242
        %v8603 = vpack.c.b16 %v6251, %v6243
        %v8604 = vpack.c.b16 %v6252, %v6244
        %v8605 = vpack.c.b16 %v6253, %v6245
        %v8606 = vpack.c.b16 %v6254, %v6246
        %v8607 = vpack.c.b16 %v6255, %v6247
        %v8608 = vpack.c.b16 %v6264, %v6256
        %v8609 = vpack.c.b16 %v6265, %v6257
        %v8610 = vpack.c.b16 %v6266, %v6258
        %v8611 = vpack.c.b16 %v6267, %v6259
        %v8612 = vpack.c.b16 %v6268, %v6260
        %v8613 = vpack.c.b16 %v6269, %v6261
        %v8614 = vpack.c.b16 %v6270, %v6262
        %v8615 = vpack.c.b16 %v6271, %v6263
        %v8616 = vpack.c.b16 %v6280, %v6272
        %v8617 = vpack.c.b16 %v6281, %v6273
        %v8618 = vpack.c.b16 %v6282, %v6274
        %v8619 = vpack.c.b16 %v6283, %v6275
        %v8620 = vpack.c.b16 %v6284, %v6276
        %v8621 = vpack.c.b16 %v6285, %v6277
        %v8622 = vpack.c.b16 %v6286, %v6278
        %v8623 = vpack.c.b16 %v6287, %v6279
        %v8624 = vpack.c.b16 %v6296, %v6288
        %v8625 = vpack.c.b16 %v6297, %v6289
        %v8626 = vpack.c.b16 %v6298, %v6290
        %v8627 = vpack.c.b16 %v6299, %v6291
        %v8628 = vpack.c.b16 %v6300, %v6292
        %v8629 = vpack.c.b16 %v6301, %v6293
        %v8630 = vpack.c.b16 %v6302, %v6294
        %v8631 = vpack.c.b16 %v6303, %v6295
        %v8632 = vpack.c.b16 %v6312, %v6304
        %v8633 = vpack.c.b16 %v6313, %v6305
        %v8634 = vpack.c.b16 %v6314, %v6306
        %v8635 = vpack.c.b16 %v6315, %v6307
        %v8636 = vpack.c.b16 %v6316, %v6308
        %v8637 = vpack.c.b16 %v6317, %v6309
        %v8638 = vpack.c.b16 %v6318, %v6310
        %v8639 = vpack.c.b16 %v6319, %v6311
        %v8640 = vpack.c.b16 %v6328, %v6320
        %v8641 = vpack.c.b16 %v6329, %v6321
        %v8642 = vpack.c.b16 %v6330, %v6322
        %v8643 = vpack.c.b16 %v6331, %v6323
        %v8644 = vpack.c.b16 %v6332, %v6324
        %v8645 = vpack.c.b16 %v6333, %v6325
        %v8646 = vpack.c.b16 %v6334, %v6326
        %v8647 = vpack.c.b16 %v6335, %v6327
        %v8648 = vpack.c.b16 %v6344, %v6336
        %v8649 = vpack.c.b16 %v6345, %v6337
        %v8650 = vpack.c.b16 %v6346, %v6338
        %v8651 = vpack.c.b16 %v6347, %v6339
        %v8652 = vpack.c.b16 %v6348, %v6340
        %v8653 = vpack.c.b16 %v6349, %v6341
        %v8654 = vpack.c.b16 %v6350, %v6342
        %v8655 = vpack.c.b16 %v6351, %v6343
        %v8656 = vpack.c.b16 %v6360, %v6352
        %v8657 = vpack.c.b16 %v6361, %v6353
        %v8658 = vpack.c.b16 %v6362, %v6354
        %v8659 = vpack.c.b16 %v6363, %v6355
        %v8660 = vpack.c.b16 %v6364, %v6356
        %v8661 = vpack.c.b16 %v6365, %v6357
        %v8662 = vpack.c.b16 %v6366, %v6358
        %v8663 = vpack.c.b16 %v6367, %v6359
        %v8664 = vpack.c.b16 %v6376, %v6368
        %v8665 = vpack.c.b16 %v6377, %v6369
        %v8666 = vpack.c.b16 %v6378, %v6370
        %v8667 = vpack.c.b16 %v6379, %v6371
        %v8668 = vpack.c.b16 %v6380, %v6372
        %v8669 = vpack.c.b16 %v6381, %v6373
        %v8670 = vpack.c.b16 %v6382, %v6374
        %v8671 = vpack.c.b16 %v6383, %v6375
        %v8672 = vpack.c.b16 %v6392, %v6384
        %v8673 = vpack.c.b16 %v6393, %v6385
        %v8674 = vpack.c.b16 %v6394, %v6386
        %v8675 = vpack.c.b16 %v6395, %v6387
        %v8676 = vpack.c.b16 %v6396, %v6388
        %v8677 = vpack.c.b16 %v6397, %v6389
        %v8678 = vpack.c.b16 %v6398, %v6390
        %v8679 = vpack.c.b16 %v6399, %v6391
        %v8680 = vpack.c.b16 %v6408, %v6400
        %v8681 = vpack.c.b16 %v6409, %v6401
        %v8682 = vpack.c.b16 %v6410, %v6402
        %v8683 = vpack.c.b16 %v6411, %v6403
        %v8684 = vpack.c.b16 %v6412, %v6404
        %v8685 = vpack.c.b16 %v6413, %v6405
        %v8686 = vpack.c.b16 %v6414, %v6406
        %v8687 = vpack.c.b16 %v6415, %v6407
        %v8688 = vpack.c.b16 %v6424, %v6416
        %v8689 = vpack.c.b16 %v6425, %v6417
        %v8690 = vpack.c.b16 %v6426, %v6418
        %v8691 = vpack.c.b16 %v6427, %v6419
        %v8692 = vpack.c.b16 %v6428, %v6420
        %v8693 = vpack.c.b16 %v6429, %v6421
        %v8694 = vpack.c.b16 %v6430, %v6422
        %v8695 = vpack.c.b16 %v6431, %v6423
        %v8696 = vpack.c.b16 %v6440, %v6432
        %v8697 = vpack.c.b16 %v6441, %v6433
        %v8698 = vpack.c.b16 %v6442, %v6434
        %v8699 = vpack.c.b16 %v6443, %v6435
        %v8700 = vpack.c.b16 %v6444, %v6436
        %v8701 = vpack.c.b16 %v6445, %v6437
        %v8702 = vpack.c.b16 %v6446, %v6438
        %v8703 = vpack.c.b16 %v6447, %v6439
        %v8704 = vpack.c.b16 %v6456, %v6448
        %v8705 = vpack.c.b16 %v6457, %v6449
        %v8706 = vpack.c.b16 %v6458, %v6450
        %v8707 = vpack.c.b16 %v6459, %v6451
        %v8708 = vpack.c.b16 %v6460, %v6452
        %v8709 = vpack.c.b16 %v6461, %v6453
        %v8710 = vpack.c.b16 %v6462, %v6454
        %v8711 = vpack.c.b16 %v6463, %v6455
        %v8712 = vpack.c.b16 %v6472, %v6464
        %v8713 = vpack.c.b16 %v6473, %v6465
        %v8714 = vpack.c.b16 %v6474, %v6466
        %v8715 = vpack.c.b16 %v6475, %v6467
        %v8716 = vpack.c.b16 %v6476, %v6468
        %v8717 = vpack.c.b16 %v6477, %v6469
        %v8718 = vpack.c.b16 %v6478, %v6470
        %v8719 = vpack.c.b16 %v6479, %v6471
        %v8720 = vpack.c.b16 %v6488, %v6480
        %v8721 = vpack.c.b16 %v6489, %v6481
        %v8722 = vpack.c.b16 %v6490, %v6482
        %v8723 = vpack.c.b16 %v6491, %v6483
        %v8724 = vpack.c.b16 %v6492, %v6484
        %v8725 = vpack.c.b16 %v6493, %v6485
        %v8726 = vpack.c.b16 %v6494, %v6486
        %v8727 = vpack.c.b16 %v6495, %v6487
        %v8728 = vpack.c.b16 %v6504, %v6496
        %v8729 = vpack.c.b16 %v6505, %v6497
        %v8730 = vpack.c.b16 %v6506, %v6498
        %v8731 = vpack.c.b16 %v6507, %v6499
        %v8732 = vpack.c.b16 %v6508, %v6500
        %v8733 = vpack.c.b16 %v6509, %v6501
        %v8734 = vpack.c.b16 %v6510, %v6502
        %v8735 = vpack.c.b16 %v6511, %v6503
        %v8736 = vpack.c.b16 %v6520, %v6512
        %v8737 = vpack.c.b16 %v6521, %v6513
        %v8738 = vpack.c.b16 %v6522, %v6514
        %v8739 = vpack.c.b16 %v6523, %v6515
        %v8740 = vpack.c.b16 %v6524, %v6516
        %v8741 = vpack.c.b16 %v6525, %v6517
        %v8742 = vpack.c.b16 %v6526, %v6518
        %v8743 = vpack.c.b16 %v6527, %v6519
        %v8744 = vpack.c.b16 %v6536, %v6528
        %v8745 = vpack.c.b16 %v6537, %v6529
        %v8746 = vpack.c.b16 %v6538, %v6530
        %v8747 = vpack.c.b16 %v6539, %v6531
        %v8748 = vpack.c.b16 %v6540, %v6532
        %v8749 = vpack.c.b16 %v6541, %v6533
        %v8750 = vpack.c.b16 %v6542, %v6534
        %v8751 = vpack.c.b16 %v6543, %v6535
        %v8752 = vpack.c.b16 %v6552, %v6544
        %v8753 = vpack.c.b16 %v6553, %v6545
        %v8754 = vpack.c.b16 %v6554, %v6546
        %v8755 = vpack.c.b16 %v6555, %v6547
        %v8756 = vpack.c.b16 %v6556, %v6548
        %v8757 = vpack.c.b16 %v6557, %v6549
        %v8758 = vpack.c.b16 %v6558, %v6550
        %v8759 = vpack.c.b16 %v6559, %v6551
        %v8760 = vpack.c.b16 %v6568, %v6560
        %v8761 = vpack.c.b16 %v6569, %v6561
        %v8762 = vpack.c.b16 %v6570, %v6562
        %v8763 = vpack.c.b16 %v6571, %v6563
        %v8764 = vpack.c.b16 %v6572, %v6564
        %v8765 = vpack.c.b16 %v6573, %v6565
        %v8766 = vpack.c.b16 %v6574, %v6566
        %v8767 = vpack.c.b16 %v6575, %v6567
        %v8768 = vpack.c.b16 %v6584, %v6576
        %v8769 = vpack.c.b16 %v6585, %v6577
        %v8770 = vpack.c.b16 %v6586, %v6578
        %v8771 = vpack.c.b16 %v6587, %v6579
        %v8772 = vpack.c.b16 %v6588, %v6580
        %v8773 = vpack.c.b16 %v6589, %v6581
        %v8774 = vpack.c.b16 %v6590, %v6582
        %v8775 = vpack.c.b16 %v6591, %v6583
        %v8776 = vpack.c.b16 %v6600, %v6592
        %v8777 = vpack.c.b16 %v6601, %v6593
        %v8778 = vpack.c.b16 %v6602, %v6594
        %v8779 = vpack.c.b16 %v6603, %v6595
        %v8780 = vpack.c.b16 %v6604, %v6596
        %v8781 = vpack.c.b16 %v6605, %v6597
        %v8782 = vpack.c.b16 %v6606, %v6598
        %v8783 = vpack.c.b16 %v6607, %v6599
        %v8784 = vpack.c.b16 %v6616, %v6608
        %v8785 = vpack.c.b16 %v6617, %v6609
        %v8786 = vpack.c.b16 %v6618, %v6610
        %v8787 = vpack.c.b16 %v6619, %v6611
        %v8788 = vpack.c.b16 %v6620, %v6612
        %v8789 = vpack.c.b16 %v6621, %v6613
        %v8790 = vpack.c.b16 %v6622, %v6614
        %v8791 = vpack.c.b16 %v6623, %v6615
        %v8792 = vpack.c.b16 %v6632, %v6624
        %v8793 = vpack.c.b16 %v6633, %v6625
        %v8794 = vpack.c.b16 %v6634, %v6626
        %v8795 = vpack.c.b16 %v6635, %v6627
        %v8796 = vpack.c.b16 %v6636, %v6628
        %v8797 = vpack.c.b16 %v6637, %v6629
        %v8798 = vpack.c.b16 %v6638, %v6630
        %v8799 = vpack.c.b16 %v6639, %v6631
        %v8800 = vpack.c.b16 %v6648, %v6640
        %v8801 = vpack.c.b16 %v6649, %v6641
        %v8802 = vpack.c.b16 %v6650, %v6642
        %v8803 = vpack.c.b16 %v6651, %v6643
        %v8804 = vpack.c.b16 %v6652, %v6644
        %v8805 = vpack.c.b16 %v6653, %v6645
        %v8806 = vpack.c.b16 %v6654, %v6646
        %v8807 = vpack.c.b16 %v6655, %v6647
        %v8808 = vpack.c.b16 %v6664, %v6656
        %v8809 = vpack.c.b16 %v6665, %v6657
        %v8810 = vpack.c.b16 %v6666, %v6658
        %v8811 = vpack.c.b16 %v6667, %v6659
        %v8812 = vpack.c.b16 %v6668, %v6660
        %v8813 = vpack.c.b16 %v6669, %v6661
        %v8814 = vpack.c.b16 %v6670, %v6662
        %v8815 = vpack.c.b16 %v6671, %v6663
        %v8816 = vpack.c.b16 %v6680, %v6672
        %v8817 = vpack.c.b16 %v6681, %v6673
        %v8818 = vpack.c.b16 %v6682, %v6674
        %v8819 = vpack.c.b16 %v6683, %v6675
        %v8820 = vpack.c.b16 %v6684, %v6676
        %v8821 = vpack.c.b16 %v6685, %v6677
        %v8822 = vpack.c.b16 %v6686, %v6678
        %v8823 = vpack.c.b16 %v6687, %v6679
        %v8824 = vpack.c.b16 %v6696, %v6688
        %v8825 = vpack.c.b16 %v6697, %v6689
        %v8826 = vpack.c.b16 %v6698, %v6690
        %v8827 = vpack.c.b16 %v6699, %v6691
        %v8828 = vpack.c.b16 %v6700, %v6692
        %v8829 = vpack.c.b16 %v6701, %v6693
        %v8830 = vpack.c.b16 %v6702, %v6694
        %v8831 = vpack.c.b16 %v6703, %v6695
        %v8832 = vpack.c.b16 %v6712, %v6704
        %v8833 = vpack.c.b16 %v6713, %v6705
        %v8834 = vpack.c.b16 %v6714, %v6706
        %v8835 = vpack.c.b16 %v6715, %v6707
        %v8836 = vpack.c.b16 %v6716, %v6708
        %v8837 = vpack.c.b16 %v6717, %v6709
        %v8838 = vpack.c.b16 %v6718, %v6710
        %v8839 = vpack.c.b16 %v6719, %v6711
        %v8840 = vpack.c.b16 %v6728, %v6720
        %v8841 = vpack.c.b16 %v6729, %v6721
        %v8842 = vpack.c.b16 %v6730, %v6722
        %v8843 = vpack.c.b16 %v6731, %v6723
        %v8844 = vpack.c.b16 %v6732, %v6724
        %v8845 = vpack.c.b16 %v6733, %v6725
        %v8846 = vpack.c.b16 %v6734, %v6726
        %v8847 = vpack.c.b16 %v6735, %v6727
        %v8848 = vpack.c.b16 %v6744, %v6736
        %v8849 = vpack.c.b16 %v6745, %v6737
        %v8850 = vpack.c.b16 %v6746, %v6738
        %v8851 = vpack.c.b16 %v6747, %v6739
        %v8852 = vpack.c.b16 %v6748, %v6740
        %v8853 = vpack.c.b16 %v6749, %v6741
        %v8854 = vpack.c.b16 %v6750, %v6742
        %v8855 = vpack.c.b16 %v6751, %v6743
        %v8856 = vpack.c.b16 %v6760, %v6752
        %v8857 = vpack.c.b16 %v6761, %v6753
        %v8858 = vpack.c.b16 %v6762, %v6754
        %v8859 = vpack.c.b16 %v6763, %v6755
        %v8860 = vpack.c.b16 %v6764, %v6756
        %v8861 = vpack.c.b16 %v6765, %v6757
        %v8862 = vpack.c.b16 %v6766, %v6758
        %v8863 = vpack.c.b16 %v6767, %v6759
        %v8864 = vpack.c.b16 %v6776, %v6768
        %v8865 = vpack.c.b16 %v6777, %v6769
        %v8866 = vpack.c.b16 %v6778, %v6770
        %v8867 = vpack.c.b16 %v6779, %v6771
        %v8868 = vpack.c.b16 %v6780, %v6772
        %v8869 = vpack.c.b16 %v6781, %v6773
        %v8870 = vpack.c.b16 %v6782, %v6774
        %v8871 = vpack.c.b16 %v6783, %v6775
        %v8872 = vpack.c.b16 %v6792, %v6784
        %v8873 = vpack.c.b16 %v6793, %v6785
        %v8874 = vpack.c.b16 %v6794, %v6786
        %v8875 = vpack.c.b16 %v6795, %v6787
        %v8876 = vpack.c.b16 %v6796, %v6788
        %v8877 = vpack.c.b16 %v6797, %v6789
        %v8878 = vpack.c.b16 %v6798, %v6790
        %v8879 = vpack.c.b16 %v6799, %v6791
        %v8880 = vpack.c.b16 %v6808, %v6800
        %v8881 = vpack.c.b16 %v6809, %v6801
        %v8882 = vpack.c.b16 %v6810, %v6802
        %v8883 = vpack.c.b16 %v6811, %v6803
        %v8884 = vpack.c.b16 %v6812, %v6804
        %v8885 = vpack.c.b16 %v6813, %v6805
        %v8886 = vpack.c.b16 %v6814, %v6806
        %v8887 = vpack.c.b16 %v6815, %v6807
        %v8888 = vpack.c.b16 %v6824, %v6816
        %v8889 = vpack.c.b16 %v6825, %v6817
        %v8890 = vpack.c.b16 %v6826, %v6818
        %v8891 = vpack.c.b16 %v6827, %v6819
        %v8892 = vpack.c.b16 %v6828, %v6820
        %v8893 = vpack.c.b16 %v6829, %v6821
        %v8894 = vpack.c.b16 %v6830, %v6822
        %v8895 = vpack.c.b16 %v6831, %v6823
        %v8896 = vpack.c.b16 %v6840, %v6832
        %v8897 = vpack.c.b16 %v6841, %v6833
        %v8898 = vpack.c.b16 %v6842, %v6834
        %v8899 = vpack.c.b16 %v6843, %v6835
        %v8900 = vpack.c.b16 %v6844, %v6836
        %v8901 = vpack.c.b16 %v6845, %v6837
        %v8902 = vpack.c.b16 %v6846, %v6838
        %v8903 = vpack.c.b16 %v6847, %v6839
        %v8904 = vpack.c.b16 %v6856, %v6848
        %v8905 = vpack.c.b16 %v6857, %v6849
        %v8906 = vpack.c.b16 %v6858, %v6850
        %v8907 = vpack.c.b16 %v6859, %v6851
        %v8908 = vpack.c.b16 %v6860, %v6852
        %v8909 = vpack.c.b16 %v6861, %v6853
        %v8910 = vpack.c.b16 %v6862, %v6854
        %v8911 = vpack.c.b16 %v6863, %v6855
        %v8912 = vpack.c.b16 %v6872, %v6864
        %v8913 = vpack.c.b16 %v6873, %v6865
        %v8914 = vpack.c.b16 %v6874, %v6866
        %v8915 = vpack.c.b16 %v6875, %v6867
        %v8916 = vpack.c.b16 %v6876, %v6868
        %v8917 = vpack.c.b16 %v6877, %v6869
        %v8918 = vpack.c.b16 %v6878, %v6870
        %v8919 = vpack.c.b16 %v6879, %v6871
        %v8920 = vpack.c.b16 %v6888, %v6880
        %v8921 = vpack.c.b16 %v6889, %v6881
        %v8922 = vpack.c.b16 %v6890, %v6882
        %v8923 = vpack.c.b16 %v6891, %v6883
        %v8924 = vpack.c.b16 %v6892, %v6884
        %v8925 = vpack.c.b16 %v6893, %v6885
        %v8926 = vpack.c.b16 %v6894, %v6886
        %v8927 = vpack.c.b16 %v6895, %v6887
        %v8928 = vpack.c.b16 %v6904, %v6896
        %v8929 = vpack.c.b16 %v6905, %v6897
        %v8930 = vpack.c.b16 %v6906, %v6898
        %v8931 = vpack.c.b16 %v6907, %v6899
        %v8932 = vpack.c.b16 %v6908, %v6900
        %v8933 = vpack.c.b16 %v6909, %v6901
        %v8934 = vpack.c.b16 %v6910, %v6902
        %v8935 = vpack.c.b16 %v6911, %v6903
        %v8936 = vpack.c.b16 %v6920, %v6912
        %v8937 = vpack.c.b16 %v6921, %v6913
        %v8938 = vpack.c.b16 %v6922, %v6914
        %v8939 = vpack.c.b16 %v6923, %v6915
        %v8940 = vpack.c.b16 %v6924, %v6916
        %v8941 = vpack.c.b16 %v6925, %v6917
        %v8942 = vpack.c.b16 %v6926, %v6918
        %v8943 = vpack.c.b16 %v6927, %v6919
        %v8944 = vpack.c.b16 %v6936, %v6928
        %v8945 = vpack.c.b16 %v6937, %v6929
        %v8946 = vpack.c.b16 %v6938, %v6930
        %v8947 = vpack.c.b16 %v6939, %v6931
        %v8948 = vpack.c.b16 %v6940, %v6932
        %v8949 = vpack.c.b16 %v6941, %v6933
        %v8950 = vpack.c.b16 %v6942, %v6934
        %v8951 = vpack.c.b16 %v6943, %v6935
        %v8952 = vpack.c.b16 %v6952, %v6944
        %v8953 = vpack.c.b16 %v6953, %v6945
        %v8954 = vpack.c.b16 %v6954, %v6946
        %v8955 = vpack.c.b16 %v6955, %v6947
        %v8956 = vpack.c.b16 %v6956, %v6948
        %v8957 = vpack.c.b16 %v6957, %v6949
        %v8958 = vpack.c.b16 %v6958, %v6950
        %v8959 = vpack.c.b16 %v6959, %v6951
        %v8960 = vpack.c.b16 %v6968, %v6960
        %v8961 = vpack.c.b16 %v6969, %v6961
        %v8962 = vpack.c.b16 %v6970, %v6962
        %v8963 = vpack.c.b16 %v6971, %v6963
        %v8964 = vpack.c.b16 %v6972, %v6964
        %v8965 = vpack.c.b16 %v6973, %v6965
        %v8966 = vpack.c.b16 %v6974, %v6966
        %v8967 = vpack.c.b16 %v6975, %v6967
        %v8968 = vpack.c.b16 %v6984, %v6976
        %v8969 = vpack.c.b16 %v6985, %v6977
        %v8970 = vpack.c.b16 %v6986, %v6978
        %v8971 = vpack.c.b16 %v6987, %v6979
        %v8972 = vpack.c.b16 %v6988, %v6980
        %v8973 = vpack.c.b16 %v6989, %v6981
        %v8974 = vpack.c.b16 %v6990, %v6982
        %v8975 = vpack.c.b16 %v6991, %v6983
        %v8976 = vpack.c.b16 %v7000, %v6992
        %v8977 = vpack.c.b16 %v7001, %v6993
        %v8978 = vpack.c.b16 %v7002, %v6994
        %v8979 = vpack.c.b16 %v7003, %v6995
        %v8980 = vpack.c.b16 %v7004, %v6996
        %v8981 = vpack.c.b16 %v7005, %v6997
        %v8982 = vpack.c.b16 %v7006, %v6998
        %v8983 = vpack.c.b16 %v7007, %v6999
        %v8984 = vpack.c.b16 %v7016, %v7008
        %v8985 = vpack.c.b16 %v7017, %v7009
        %v8986 = vpack.c.b16 %v7018, %v7010
        %v8987 = vpack.c.b16 %v7019, %v7011
        %v8988 = vpack.c.b16 %v7020, %v7012
        %v8989 = vpack.c.b16 %v7021, %v7013
        %v8990 = vpack.c.b16 %v7022, %v7014
        %v8991 = vpack.c.b16 %v7023, %v7015
        %v8992 = vpack.c.b16 %v7032, %v7024
        %v8993 = vpack.c.b16 %v7033, %v7025
        %v8994 = vpack.c.b16 %v7034, %v7026
        %v8995 = vpack.c.b16 %v7035, %v7027
        %v8996 = vpack.c.b16 %v7036, %v7028
        %v8997 = vpack.c.b16 %v7037, %v7029
        %v8998 = vpack.c.b16 %v7038, %v7030
        %v8999 = vpack.c.b16 %v7039, %v7031
        %v9000 = vpack.c.b16 %v7048, %v7040
        %v9001 = vpack.c.b16 %v7049, %v7041
        %v9002 = vpack.c.b16 %v7050, %v7042
        %v9003 = vpack.c.b16 %v7051, %v7043
        %v9004 = vpack.c.b16 %v7052, %v7044
        %v9005 = vpack.c.b16 %v7053, %v7045
        %v9006 = vpack.c.b16 %v7054, %v7046
        %v9007 = vpack.c.b16 %v7055, %v7047
        %v9008 = vpack.c.b16 %v7064, %v7056
        %v9009 = vpack.c.b16 %v7065, %v7057
        %v9010 = vpack.c.b16 %v7066, %v7058
        %v9011 = vpack.c.b16 %v7067, %v7059
        %v9012 = vpack.c.b16 %v7068, %v7060
        %v9013 = vpack.c.b16 %v7069, %v7061
        %v9014 = vpack.c.b16 %v7070, %v7062
        %v9015 = vpack.c.b16 %v7071, %v7063
        %v9016 = vpack.c.b16 %v7080, %v7072
        %v9017 = vpack.c.b16 %v7081, %v7073
        %v9018 = vpack.c.b16 %v7082, %v7074
        %v9019 = vpack.c.b16 %v7083, %v7075
        %v9020 = vpack.c.b16 %v7084, %v7076
        %v9021 = vpack.c.b16 %v7085, %v7077
        %v9022 = vpack.c.b16 %v7086, %v7078
        %v9023 = vpack.c.b16 %v7087, %v7079
        %v9024 = vpack.c.b16 %v7096, %v7088
        %v9025 = vpack.c.b16 %v7097, %v7089
        %v9026 = vpack.c.b16 %v7098, %v7090
        %v9027 = vpack.c.b16 %v7099, %v7091
        %v9028 = vpack.c.b16 %v7100, %v7092
        %v9029 = vpack.c.b16 %v7101, %v7093
        %v9030 = vpack.c.b16 %v7102, %v7094
        %v9031 = vpack.c.b16 %v7103, %v7095
        %v9032 = vpack.c.b16 %v7112, %v7104
        %v9033 = vpack.c.b16 %v7113, %v7105
        %v9034 = vpack.c.b16 %v7114, %v7106
        %v9035 = vpack.c.b16 %v7115, %v7107
        %v9036 = vpack.c.b16 %v7116, %v7108
        %v9037 = vpack.c.b16 %v7117, %v7109
        %v9038 = vpack.c.b16 %v7118, %v7110
        %v9039 = vpack.c.b16 %v7119, %v7111
        %v9040 = vpack.c.b16 %v7128, %v7120
        %v9041 = vpack.c.b16 %v7129, %v7121
        %v9042 = vpack.c.b16 %v7130, %v7122
        %v9043 = vpack.c.b16 %v7131, %v7123
        %v9044 = vpack.c.b16 %v7132, %v7124
        %v9045 = vpack.c.b16 %v7133, %v7125
        %v9046 = vpack.c.b16 %v7134, %v7126
        %v9047 = vpack.c.b16 %v7135, %v7127
        %v9048 = vpack.c.b16 %v7144, %v7136
        %v9049 = vpack.c.b16 %v7145, %v7137
        %v9050 = vpack.c.b16 %v7146, %v7138
        %v9051 = vpack.c.b16 %v7147, %v7139
        %v9052 = vpack.c.b16 %v7148, %v7140
        %v9053 = vpack.c.b16 %v7149, %v7141
        %v9054 = vpack.c.b16 %v7150, %v7142
        %v9055 = vpack.c.b16 %v7151, %v7143
        %v9056 = vpack.c.b16 %v7160, %v7152
        %v9057 = vpack.c.b16 %v7161, %v7153
        %v9058 = vpack.c.b16 %v7162, %v7154
        %v9059 = vpack.c.b16 %v7163, %v7155
        %v9060 = vpack.c.b16 %v7164, %v7156
        %v9061 = vpack.c.b16 %v7165, %v7157
        %v9062 = vpack.c.b16 %v7166, %v7158
        %v9063 = vpack.c.b16 %v7167, %v7159
        %v9064 = vpack.c.b16 %v7176, %v7168
        %v9065 = vpack.c.b16 %v7177, %v7169
        %v9066 = vpack.c.b16 %v7178, %v7170
        %v9067 = vpack.c.b16 %v7179, %v7171
        %v9068 = vpack.c.b16 %v7180, %v7172
        %v9069 = vpack.c.b16 %v7181, %v7173
        %v9070 = vpack.c.b16 %v7182, %v7174
        %v9071 = vpack.c.b16 %v7183, %v7175
        %v9072 = vpack.c.b16 %v7192, %v7184
        %v9073 = vpack.c.b16 %v7193, %v7185
        %v9074 = vpack.c.b16 %v7194, %v7186
        %v9075 = vpack.c.b16 %v7195, %v7187
        %v9076 = vpack.c.b16 %v7196, %v7188
        %v9077 = vpack.c.b16 %v7197, %v7189
        %v9078 = vpack.c.b16 %v7198, %v7190
        %v9079 = vpack.c.b16 %v7199, %v7191
        %v9080 = vpack.c.b16 %v7208, %v7200
        %v9081 = vpack.c.b16 %v7209, %v7201
        %v9082 = vpack.c.b16 %v7210, %v7202
        %v9083 = vpack.c.b16 %v7211, %v7203
        %v9084 = vpack.c.b16 %v7212, %v7204
        %v9085 = vpack.c.b16 %v7213, %v7205
        %v9086 = vpack.c.b16 %v7214, %v7206
        %v9087 = vpack.c.b16 %v7215, %v7207
        %v9088 = vpack.c.b16 %v7224, %v7216
        %v9089 = vpack.c.b16 %v7225, %v7217
        %v9090 = vpack.c.b16 %v7226, %v7218
        %v9091 = vpack.c.b16 %v7227, %v7219
        %v9092 = vpack.c.b16 %v7228, %v7220
        %v9093 = vpack.c.b16 %v7229, %v7221
        %v9094 = vpack.c.b16 %v7230, %v7222
        %v9095 = vpack.c.b16 %v7231, %v7223
        %v9096 = vpack.c.b16 %v7240, %v7232
        %v9097 = vpack.c.b16 %v7241, %v7233
        %v9098 = vpack.c.b16 %v7242, %v7234
        %v9099 = vpack.c.b16 %v7243, %v7235
        %v9100 = vpack.c.b16 %v7244, %v7236
        %v9101 = vpack.c.b16 %v7245, %v7237
        %v9102 = vpack.c.b16 %v7246, %v7238
        %v9103 = vpack.c.b16 %v7247, %v7239
        %v9104 = vpack.c.b16 %v7256, %v7248
        %v9105 = vpack.c.b16 %v7257, %v7249
        %v9106 = vpack.c.b16 %v7258, %v7250
        %v9107 = vpack.c.b16 %v7259, %v7251
        %v9108 = vpack.c.b16 %v7260, %v7252
        %v9109 = vpack.c.b16 %v7261, %v7253
        %v9110 = vpack.c.b16 %v7262, %v7254
        %v9111 = vpack.c.b16 %v7263, %v7255
        %v9112 = vpack.c.b16 %v7272, %v7264
        %v9113 = vpack.c.b16 %v7273, %v7265
        %v9114 = vpack.c.b16 %v7274, %v7266
        %v9115 = vpack.c.b16 %v7275, %v7267
        %v9116 = vpack.c.b16 %v7276, %v7268
        %v9117 = vpack.c.b16 %v7277, %v7269
        %v9118 = vpack.c.b16 %v7278, %v7270
        %v9119 = vpack.c.b16 %v7279, %v7271
        %v9120 = vpack.c.b16 %v7288, %v7280
        %v9121 = vpack.c.b16 %v7289, %v7281
        %v9122 = vpack.c.b16 %v7290, %v7282
        %v9123 = vpack.c.b16 %v7291, %v7283
        %v9124 = vpack.c.b16 %v7292, %v7284
        %v9125 = vpack.c.b16 %v7293, %v7285
        %v9126 = vpack.c.b16 %v7294, %v7286
        %v9127 = vpack.c.b16 %v7295, %v7287
        %v9128 = vpack.c.b16 %v7304, %v7296
        %v9129 = vpack.c.b16 %v7305, %v7297
        %v9130 = vpack.c.b16 %v7306, %v7298
        %v9131 = vpack.c.b16 %v7307, %v7299
        %v9132 = vpack.c.b16 %v7308, %v7300
        %v9133 = vpack.c.b16 %v7309, %v7301
        %v9134 = vpack.c.b16 %v7310, %v7302
        %v9135 = vpack.c.b16 %v7311, %v7303
        %v9136 = vpack.c.b16 %v7320, %v7312
        %v9137 = vpack.c.b16 %v7321, %v7313
        %v9138 = vpack.c.b16 %v7322, %v7314
        %v9139 = vpack.c.b16 %v7323, %v7315
        %v9140 = vpack.c.b16 %v7324, %v7316
        %v9141 = vpack.c.b16 %v7325, %v7317
        %v9142 = vpack.c.b16 %v7326, %v7318
        %v9143 = vpack.c.b16 %v7327, %v7319
        %v9144 = vpack.c.b16 %v7336, %v7328
        %v9145 = vpack.c.b16 %v7337, %v7329
        %v9146 = vpack.c.b16 %v7338, %v7330
        %v9147 = vpack.c.b16 %v7339, %v7331
        %v9148 = vpack.c.b16 %v7340, %v7332
        %v9149 = vpack.c.b16 %v7341, %v7333
        %v9150 = vpack.c.b16 %v7342, %v7334
        %v9151 = vpack.c.b16 %v7343, %v7335
        %v9152 = vpack.c.b16 %v7352, %v7344
        %v9153 = vpack.c.b16 %v7353, %v7345
        %v9154 = vpack.c.b16 %v7354, %v7346
        %v9155 = vpack.c.b16 %v7355, %v7347
        %v9156 = vpack.c.b16 %v7356, %v7348
        %v9157 = vpack.c.b16 %v7357, %v7349
        %v9158 = vpack.c.b16 %v7358, %v7350
        %v9159 = vpack.c.b16 %v7359, %v7351
        %v9160 = vpack.c.b16 %v7368, %v7360
        %v9161 = vpack.c.b16 %v7369, %v7361
        %v9162 = vpack.c.b16 %v7370, %v7362
        %v9163 = vpack.c.b16 %v7371, %v7363
        %v9164 = vpack.c.b16 %v7372, %v7364
        %v9165 = vpack.c.b16 %v7373, %v7365
        %v9166 = vpack.c.b16 %v7374, %v7366
        %v9167 = vpack.c.b16 %v7375, %v7367
        %v9168 = vpack.c.b16 %v7384, %v7376
        %v9169 = vpack.c.b16 %v7385, %v7377
        %v9170 = vpack.c.b16 %v7386, %v7378
        %v9171 = vpack.c.b16 %v7387, %v7379
        %v9172 = vpack.c.b16 %v7388, %v7380
        %v9173 = vpack.c.b16 %v7389, %v7381
        %v9174 = vpack.c.b16 %v7390, %v7382
        %v9175 = vpack.c.b16 %v7391, %v7383
        %v9176 = vpack.c.b16 %v7400, %v7392
        %v9177 = vpack.c.b16 %v7401, %v7393
        %v9178 = vpack.c.b16 %v7402, %v7394
        %v9179 = vpack.c.b16 %v7403, %v7395
        %v9180 = vpack.c.b16 %v7404, %v7396
        %v9181 = vpack.c.b16 %v7405, %v7397
        %v9182 = vpack.c.b16 %v7406, %v7398
        %v9183 = vpack.c.b16 %v7407, %v7399
        %v9184 = vpack.c.b16 %v7416, %v7408
        %v9185 = vpack.c.b16 %v7417, %v7409
        %v9186 = vpack.c.b16 %v7418, %v7410
        %v9187 = vpack.c.b16 %v7419, %v7411
        %v9188 = vpack.c.b16 %v7420, %v7412
        %v9189 = vpack.c.b16 %v7421, %v7413
        %v9190 = vpack.c.b16 %v7422, %v7414
        %v9191 = vpack.c.b16 %v7423, %v7415
        %v9192 = vpack.c.b16 %v7432, %v7424
        %v9193 = vpack.c.b16 %v7433, %v7425
        %v9194 = vpack.c.b16 %v7434, %v7426
        %v9195 = vpack.c.b16 %v7435, %v7427
        %v9196 = vpack.c.b16 %v7436, %v7428
        %v9197 = vpack.c.b16 %v7437, %v7429
        %v9198 = vpack.c.b16 %v7438, %v7430
        %v9199 = vpack.c.b16 %v7439, %v7431
        %v9200 = vpack.c.b16 %v7448, %v7440
        %v9201 = vpack.c.b16 %v7449, %v7441
        %v9202 = vpack.c.b16 %v7450, %v7442
        %v9203 = vpack.c.b16 %v7451, %v7443
        %v9204 = vpack.c.b16 %v7452, %v7444
        %v9205 = vpack.c.b16 %v7453, %v7445
        %v9206 = vpack.c.b16 %v7454, %v7446
        %v9207 = vpack.c.b16 %v7455, %v7447
        %v9208 = vpack.c.b16 %v7464, %v7456
        %v9209 = vpack.c.b16 %v7465, %v7457
        %v9210 = vpack.c.b16 %v7466, %v7458
        %v9211 = vpack.c.b16 %v7467, %v7459
        %v9212 = vpack.c.b16 %v7468, %v7460
        %v9213 = vpack.c.b16 %v7469, %v7461
        %v9214 = vpack.c.b16 %v7470, %v7462
        %v9215 = vpack.c.b16 %v7471, %v7463
        %v9216 = vpack.c.b16 %v7480, %v7472
        %v9217 = vpack.c.b16 %v7481, %v7473
        %v9218 = vpack.c.b16 %v7482, %v7474
        %v9219 = vpack.c.b16 %v7483, %v7475
        %v9220 = vpack.c.b16 %v7484, %v7476
        %v9221 = vpack.c.b16 %v7485, %v7477
        %v9222 = vpack.c.b16 %v7486, %v7478
        %v9223 = vpack.c.b16 %v7487, %v7479
        %v9224 = vpack.c.b16 %v7496, %v7488
        %v9225 = vpack.c.b16 %v7497, %v7489
        %v9226 = vpack.c.b16 %v7498, %v7490
        %v9227 = vpack.c.b16 %v7499, %v7491
        %v9228 = vpack.c.b16 %v7500, %v7492
        %v9229 = vpack.c.b16 %v7501, %v7493
        %v9230 = vpack.c.b16 %v7502, %v7494
        %v9231 = vpack.c.b16 %v7503, %v7495
        %10960 = vmatprep.subr.bf16.mxu0 %v7505
        %10961 = vmatpush1.bf16.msra.mxu0 %v7504
        %10962 = vmatprep.subr.bf16.mxu0 %v7513
        %10963 = vmatpush1.bf16.msra.mxu0 %v7512
        %10964 = vmatprep.subr.bf16.mxu0 %v7521
        %10965 = vmatpush1.bf16.msra.mxu0 %v7520
        %10966 = vmatprep.subr.bf16.mxu0 %v7529
        %10967 = vmatpush1.bf16.msra.mxu0 %v7528
        %10968 = vmatprep.subr.bf16.mxu0 %v7537
        %10969 = vmatpush1.bf16.msra.mxu0 %v7536
        %10970 = vmatprep.subr.bf16.mxu0 %v7545
        %10971 = vmatpush1.bf16.msra.mxu0 %v7544
        %10972 = vmatprep.subr.bf16.mxu0 %v7553
        %10973 = vmatpush1.bf16.msra.mxu0 %v7552
        %10974 = vmatprep.subr.bf16.mxu0 %v7561
        %10975 = vmatpush1.bf16.msra.mxu0 %v7560
        %10976 = vmatprep.subr.bf16.mxu0 %v7569
        %10977 = vmatpush1.bf16.msra.mxu0 %v7568
        %10978 = vmatprep.subr.bf16.mxu0 %v7577
        %10979 = vmatpush1.bf16.msra.mxu0 %v7576
        %10980 = vmatprep.subr.bf16.mxu0 %v7585
        %10981 = vmatpush1.bf16.msra.mxu0 %v7584
        %10982 = vmatprep.subr.bf16.mxu0 %v7593
        %10983 = vmatpush1.bf16.msra.mxu0 %v7592
        %10984 = vmatprep.subr.bf16.mxu0 %v7601
        %10985 = vmatpush1.bf16.msra.mxu0 %v7600
        %10986 = vmatprep.subr.bf16.mxu0 %v7609
        %10987 = vmatpush1.bf16.msra.mxu0 %v7608
        %10988 = vmatprep.subr.bf16.mxu0 %v7617
        %10989 = vmatpush1.bf16.msra.mxu0 %v7616
        %10990 = vmatprep.subr.bf16.mxu0 %v7625
        %10991 = vmatpush1.bf16.msra.mxu0 %v7624
        %10992 = vmatprep.mubr.bf16.mxu0 %v2160
        %10993 = vmatmul.mubr.bf16.gmra.mrb[0].mxu0 %v2146
        %v10994 = vpop.f32.mrb[0].mxu0
        %v10995 = vadd.f32 0.0, %v10994
        %v10996 = vpop.f32.mrb[0].mxu0
        %v10997 = vadd.f32 0.0, %v10996
        %v10998 = vpop.f32.mrb[0].mxu0
        %v10999 = vpop.f32.mrb[0].mxu0
        %11000 = vdwg.mxu0
        %11001 = vmatprep.subr.bf16.mxu0 %v7633
        %11002 = vmatpush1.bf16.msra.mxu0 %v7632
        %11003 = vmatprep.subr.bf16.mxu0 %v7641
        %11004 = vmatpush1.bf16.msra.mxu0 %v7640
        %11005 = vmatprep.subr.bf16.mxu0 %v7649
        %11006 = vmatpush1.bf16.msra.mxu0 %v7648
        %11007 = vmatprep.subr.bf16.mxu0 %v7657
        %11008 = vmatpush1.bf16.msra.mxu0 %v7656
        %11009 = vmatprep.subr.bf16.mxu0 %v7665
        %11010 = vmatpush1.bf16.msra.mxu0 %v7664
        %11011 = vmatprep.subr.bf16.mxu0 %v7673
        %11012 = vmatpush1.bf16.msra.mxu0 %v7672
        %11013 = vmatprep.subr.bf16.mxu0 %v7681
        %11014 = vmatpush1.bf16.msra.mxu0 %v7680
        %11015 = vmatprep.subr.bf16.mxu0 %v7689
        %11016 = vmatpush1.bf16.msra.mxu0 %v7688
        %11017 = vmatprep.subr.bf16.mxu0 %v7697
        %11018 = vmatpush1.bf16.msra.mxu0 %v7696
        %11019 = vmatprep.subr.bf16.mxu0 %v7705
        %11020 = vmatpush1.bf16.msra.mxu0 %v7704
        %11021 = vmatprep.subr.bf16.mxu0 %v7713
        %11022 = vmatpush1.bf16.msra.mxu0 %v7712
        %11023 = vmatprep.subr.bf16.mxu0 %v7721
        %11024 = vmatpush1.bf16.msra.mxu0 %v7720
        %11025 = vmatprep.subr.bf16.mxu0 %v7729
        %11026 = vmatpush1.bf16.msra.mxu0 %v7728
        %11027 = vmatprep.subr.bf16.mxu0 %v7737
        %11028 = vmatpush1.bf16.msra.mxu0 %v7736
        %11029 = vmatprep.subr.bf16.mxu0 %v7745
        %11030 = vmatpush1.bf16.msra.mxu0 %v7744
        %11031 = vmatprep.subr.bf16.mxu0 %v7753
        %11032 = vmatpush1.bf16.msra.mxu0 %v7752
        %11033 = vmatprep.mubr.bf16.mxu0 %v2170
        %11034 = vmatmul.mubr.bf16.gmra.mrb[0].mxu0 %v2168
        %v11035 = vpop.f32.mrb[0].mxu0
        %v11036 = vadd.f32 %v10995, %v11035
        %v11037 = vpop.f32.mrb[0].mxu0
        %v11038 = vadd.f32 %v10997, %v11037
        %v11039 = vpop.f32.mrb[0].mxu0
        %v11040 = vpop.f32.mrb[0].mxu0
        %11041 = vdwg.mxu0
        %11042 = vmatprep.subr.bf16.mxu0 %v7761
        %11043 = vmatpush1.bf16.msra.mxu0 %v7760
        %11044 = vmatprep.subr.bf16.mxu0 %v7769
        %11045 = vmatpush1.bf16.msra.mxu0 %v7768
        %11046 = vmatprep.subr.bf16.mxu0 %v7777
        %11047 = vmatpush1.bf16.msra.mxu0 %v7776
        %11048 = vmatprep.subr.bf16.mxu0 %v7785
        %11049 = vmatpush1.bf16.msra.mxu0 %v7784
        %11050 = vmatprep.subr.bf16.mxu0 %v7793
        %11051 = vmatpush1.bf16.msra.mxu0 %v7792
        %11052 = vmatprep.subr.bf16.mxu0 %v7801
        %11053 = vmatpush1.bf16.msra.mxu0 %v7800
        %11054 = vmatprep.subr.bf16.mxu0 %v7809
        %11055 = vmatpush1.bf16.msra.mxu0 %v7808
        %11056 = vmatprep.subr.bf16.mxu0 %v7817
        %11057 = vmatpush1.bf16.msra.mxu0 %v7816
        %11058 = vmatprep.subr.bf16.mxu0 %v7825
        %11059 = vmatpush1.bf16.msra.mxu0 %v7824
        %11060 = vmatprep.subr.bf16.mxu0 %v7833
        %11061 = vmatpush1.bf16.msra.mxu0 %v7832
        %11062 = vmatprep.subr.bf16.mxu0 %v7841
        %11063 = vmatpush1.bf16.msra.mxu0 %v7840
        %11064 = vmatprep.subr.bf16.mxu0 %v7849
        %11065 = vmatpush1.bf16.msra.mxu0 %v7848
        %11066 = vmatprep.subr.bf16.mxu0 %v7857
        %11067 = vmatpush1.bf16.msra.mxu0 %v7856
        %11068 = vmatprep.subr.bf16.mxu0 %v7865
        %11069 = vmatpush1.bf16.msra.mxu0 %v7864
        %11070 = vmatprep.subr.bf16.mxu0 %v7873
        %11071 = vmatpush1.bf16.msra.mxu0 %v7872
        %11072 = vmatprep.subr.bf16.mxu0 %v7881
        %11073 = vmatpush1.bf16.msra.mxu0 %v7880
        %11074 = vmatprep.mubr.bf16.mxu0 %v2167
        %11075 = vmatmul.mubr.bf16.gmra.mrb[0].mxu0 %v2153
        %v11076 = vpop.f32.mrb[0].mxu0
        %v11077 = vadd.f32 %v11036, %v11076
        %v11078 = vpop.f32.mrb[0].mxu0
        %v11079 = vadd.f32 %v11038, %v11078
        %v11080 = vpop.f32.mrb[0].mxu0
        %v11081 = vpop.f32.mrb[0].mxu0
        %11082 = vdwg.mxu0
        %11083 = vmatprep.subr.bf16.mxu0 %v7889
        %11084 = vmatpush1.bf16.msra.mxu0 %v7888
        %11085 = vmatprep.subr.bf16.mxu0 %v7897
        %11086 = vmatpush1.bf16.msra.mxu0 %v7896
        %11087 = vmatprep.subr.bf16.mxu0 %v7905
        %11088 = vmatpush1.bf16.msra.mxu0 %v7904
        %11089 = vmatprep.subr.bf16.mxu0 %v7913
        %11090 = vmatpush1.bf16.msra.mxu0 %v7912
        %11091 = vmatprep.subr.bf16.mxu0 %v7921
        %11092 = vmatpush1.bf16.msra.mxu0 %v7920
        %11093 = vmatprep.subr.bf16.mxu0 %v7929
        %11094 = vmatpush1.bf16.msra.mxu0 %v7928
        %11095 = vmatprep.subr.bf16.mxu0 %v7937
        %11096 = vmatpush1.bf16.msra.mxu0 %v7936
        %11097 = vmatprep.subr.bf16.mxu0 %v7945
        %11098 = vmatpush1.bf16.msra.mxu0 %v7944
        %11099 = vmatprep.subr.bf16.mxu0 %v7953
        %11100 = vmatpush1.bf16.msra.mxu0 %v7952
        %11101 = vmatprep.subr.bf16.mxu0 %v7961
        %11102 = vmatpush1.bf16.msra.mxu0 %v7960
        %11103 = vmatprep.subr.bf16.mxu0 %v7969
        %11104 = vmatpush1.bf16.msra.mxu0 %v7968
        %11105 = vmatprep.subr.bf16.mxu0 %v7977
        %11106 = vmatpush1.bf16.msra.mxu0 %v7976
        %11107 = vmatprep.subr.bf16.mxu0 %v7985
        %11108 = vmatpush1.bf16.msra.mxu0 %v7984
        %11109 = vmatprep.subr.bf16.mxu0 %v7993
        %11110 = vmatpush1.bf16.msra.mxu0 %v7992
        %11111 = vmatprep.subr.bf16.mxu0 %v8001
        %11112 = vmatpush1.bf16.msra.mxu0 %v8000
        %11113 = vmatprep.subr.bf16.mxu0 %v8009
        %11114 = vmatpush1.bf16.msra.mxu0 %v8008
        %11115 = vmatprep.mubr.bf16.mxu0 %v2171
        %11116 = vmatmul.mubr.bf16.gmra.mrb[0].mxu0 %v2169
        %v11117 = vpop.f32.mrb[0].mxu0
        %v11118 = vadd.f32 %v11077, %v11117
        %v11119 = vpop.f32.mrb[0].mxu0
        %v11120 = vadd.f32 %v11079, %v11119
        %v11121 = vpop.f32.mrb[0].mxu0
        %v11122 = vpop.f32.mrb[0].mxu0
        %11123 = vdwg.mxu0
        %11124 = vmatprep.subr.bf16.mxu0 %v8017
        %11125 = vmatpush1.bf16.msra.mxu0 %v8016
        %11126 = vmatprep.subr.bf16.mxu0 %v8025
        %11127 = vmatpush1.bf16.msra.mxu0 %v8024
        %11128 = vmatprep.subr.bf16.mxu0 %v8033
        %11129 = vmatpush1.bf16.msra.mxu0 %v8032
        %11130 = vmatprep.subr.bf16.mxu0 %v8041
        %11131 = vmatpush1.bf16.msra.mxu0 %v8040
        %11132 = vmatprep.subr.bf16.mxu0 %v8049
        %11133 = vmatpush1.bf16.msra.mxu0 %v8048
        %11134 = vmatprep.subr.bf16.mxu0 %v8057
        %11135 = vmatpush1.bf16.msra.mxu0 %v8056
        %11136 = vmatprep.subr.bf16.mxu0 %v8065
        %11137 = vmatpush1.bf16.msra.mxu0 %v8064
        %11138 = vmatprep.subr.bf16.mxu0 %v8073
        %11139 = vmatpush1.bf16.msra.mxu0 %v8072
        %11140 = vmatprep.subr.bf16.mxu0 %v8081
        %11141 = vmatpush1.bf16.msra.mxu0 %v8080
        %11142 = vmatprep.subr.bf16.mxu0 %v8089
        %11143 = vmatpush1.bf16.msra.mxu0 %v8088
        %11144 = vmatprep.subr.bf16.mxu0 %v8097
        %11145 = vmatpush1.bf16.msra.mxu0 %v8096
        %11146 = vmatprep.subr.bf16.mxu0 %v8105
        %11147 = vmatpush1.bf16.msra.mxu0 %v8104
        %11148 = vmatprep.subr.bf16.mxu0 %v8113
        %11149 = vmatpush1.bf16.msra.mxu0 %v8112
        %11150 = vmatprep.subr.bf16.mxu0 %v8121
        %11151 = vmatpush1.bf16.msra.mxu0 %v8120
        %11152 = vmatprep.subr.bf16.mxu0 %v8129
        %11153 = vmatpush1.bf16.msra.mxu0 %v8128
        %11154 = vmatprep.subr.bf16.mxu0 %v8137
        %11155 = vmatpush1.bf16.msra.mxu0 %v8136
        %11156 = vmatprep.mubr.bf16.mxu0 %v2209
        %11157 = vmatmul.mubr.bf16.gmra.mrb[0].mxu0 %v2195
        %v11158 = vpop.f32.mrb[0].mxu0
        %v11159 = vadd.f32 %v11118, %v11158
        %v11160 = vpop.f32.mrb[0].mxu0
        %v11161 = vadd.f32 %v11120, %v11160
        %v11162 = vpop.f32.mrb[0].mxu0
        %v11163 = vpop.f32.mrb[0].mxu0
        %11164 = vdwg.mxu0
        %11165 = vmatprep.subr.bf16.mxu0 %v8145
        %11166 = vmatpush1.bf16.msra.mxu0 %v8144
        %11167 = vmatprep.subr.bf16.mxu0 %v8153
        %11168 = vmatpush1.bf16.msra.mxu0 %v8152
        %11169 = vmatprep.subr.bf16.mxu0 %v8161
        %11170 = vmatpush1.bf16.msra.mxu0 %v8160
        %11171 = vmatprep.subr.bf16.mxu0 %v8169
        %11172 = vmatpush1.bf16.msra.mxu0 %v8168
        %11173 = vmatprep.subr.bf16.mxu0 %v8177
        %11174 = vmatpush1.bf16.msra.mxu0 %v8176
        %11175 = vmatprep.subr.bf16.mxu0 %v8185
        %11176 = vmatpush1.bf16.msra.mxu0 %v8184
        %11177 = vmatprep.subr.bf16.mxu0 %v8193
        %11178 = vmatpush1.bf16.msra.mxu0 %v8192
        %11179 = vmatprep.subr.bf16.mxu0 %v8201
        %11180 = vmatpush1.bf16.msra.mxu0 %v8200
        %11181 = vmatprep.subr.bf16.mxu0 %v8209
        %11182 = vmatpush1.bf16.msra.mxu0 %v8208
        %11183 = vmatprep.subr.bf16.mxu0 %v8217
        %11184 = vmatpush1.bf16.msra.mxu0 %v8216
        %11185 = vmatprep.subr.bf16.mxu0 %v8225
        %11186 = vmatpush1.bf16.msra.mxu0 %v8224
        %11187 = vmatprep.subr.bf16.mxu0 %v8233
        %11188 = vmatpush1.bf16.msra.mxu0 %v8232
        %11189 = vmatprep.subr.bf16.mxu0 %v8241
        %11190 = vmatpush1.bf16.msra.mxu0 %v8240
        %11191 = vmatprep.subr.bf16.mxu0 %v8249
        %11192 = vmatpush1.bf16.msra.mxu0 %v8248
        %11193 = vmatprep.subr.bf16.mxu0 %v8257
        %11194 = vmatpush1.bf16.msra.mxu0 %v8256
        %11195 = vmatprep.subr.bf16.mxu0 %v8265
        %11196 = vmatpush1.bf16.msra.mxu0 %v8264
        %11197 = vmatprep.mubr.bf16.mxu0 %v2219
        %11198 = vmatmul.mubr.bf16.gmra.mrb[0].mxu0 %v2217
        %v11199 = vpop.f32.mrb[0].mxu0
        %v11200 = vadd.f32 %v11159, %v11199
        %v11201 = vpop.f32.mrb[0].mxu0
        %v11202 = vadd.f32 %v11161, %v11201
        %v11203 = vpop.f32.mrb[0].mxu0
        %v11204 = vpop.f32.mrb[0].mxu0
        %11205 = vdwg.mxu0
        %11206 = vmatprep.subr.bf16.mxu0 %v8273
        %11207 = vmatpush1.bf16.msra.mxu0 %v8272
        %11208 = vmatprep.subr.bf16.mxu0 %v8281
        %11209 = vmatpush1.bf16.msra.mxu0 %v8280
        %11210 = vmatprep.subr.bf16.mxu0 %v8289
        %11211 = vmatpush1.bf16.msra.mxu0 %v8288
        %11212 = vmatprep.subr.bf16.mxu0 %v8297
        %11213 = vmatpush1.bf16.msra.mxu0 %v8296
        %11214 = vmatprep.subr.bf16.mxu0 %v8305
        %11215 = vmatpush1.bf16.msra.mxu0 %v8304
        %11216 = vmatprep.subr.bf16.mxu0 %v8313
        %11217 = vmatpush1.bf16.msra.mxu0 %v8312
        %11218 = vmatprep.subr.bf16.mxu0 %v8321
        %11219 = vmatpush1.bf16.msra.mxu0 %v8320
        %11220 = vmatprep.subr.bf16.mxu0 %v8329
        %11221 = vmatpush1.bf16.msra.mxu0 %v8328
        %11222 = vmatprep.subr.bf16.mxu0 %v8337
        %11223 = vmatpush1.bf16.msra.mxu0 %v8336
        %11224 = vmatprep.subr.bf16.mxu0 %v8345
        %11225 = vmatpush1.bf16.msra.mxu0 %v8344
        %11226 = vmatprep.subr.bf16.mxu0 %v8353
        %11227 = vmatpush1.bf16.msra.mxu0 %v8352
        %11228 = vmatprep.subr.bf16.mxu0 %v8361
        %11229 = vmatpush1.bf16.msra.mxu0 %v8360
        %11230 = vmatprep.subr.bf16.mxu0 %v8369
        %11231 = vmatpush1.bf16.msra.mxu0 %v8368
        %11232 = vmatprep.subr.bf16.mxu0 %v8377
        %11233 = vmatpush1.bf16.msra.mxu0 %v8376
        %11234 = vmatprep.subr.bf16.mxu0 %v8385
        %11235 = vmatpush1.bf16.msra.mxu0 %v8384
        %11236 = vmatprep.subr.bf16.mxu0 %v8393
        %11237 = vmatpush1.bf16.msra.mxu0 %v8392
        %11238 = vmatprep.mubr.bf16.mxu0 %v2216
        %11239 = vmatmul.mubr.bf16.gmra.mrb[0].mxu0 %v2202
        %v11240 = vpop.f32.mrb[0].mxu0
        %v11241 = vadd.f32 %v11200, %v11240
        %v11242 = vpop.f32.mrb[0].mxu0
        %v11243 = vadd.f32 %v11202, %v11242
        %v11244 = vpop.f32.mrb[0].mxu0
        %v11245 = vpop.f32.mrb[0].mxu0
        %11246 = vdwg.mxu0
        %11247 = vmatprep.subr.bf16.mxu0 %v8401
        %11248 = vmatpush1.bf16.msra.mxu0 %v8400
        %11249 = vmatprep.subr.bf16.mxu0 %v8409
        %11250 = vmatpush1.bf16.msra.mxu0 %v8408
        %11251 = vmatprep.subr.bf16.mxu0 %v8417
        %11252 = vmatpush1.bf16.msra.mxu0 %v8416
        %11253 = vmatprep.subr.bf16.mxu0 %v8425
        %11254 = vmatpush1.bf16.msra.mxu0 %v8424
        %11255 = vmatprep.subr.bf16.mxu0 %v8433
        %11256 = vmatpush1.bf16.msra.mxu0 %v8432
        %11257 = vmatprep.subr.bf16.mxu0 %v8441
        %11258 = vmatpush1.bf16.msra.mxu0 %v8440
        %11259 = vmatprep.subr.bf16.mxu0 %v8449
        %11260 = vmatpush1.bf16.msra.mxu0 %v8448
        %11261 = vmatprep.subr.bf16.mxu0 %v8457
        %11262 = vmatpush1.bf16.msra.mxu0 %v8456
        %11263 = vmatprep.subr.bf16.mxu0 %v8465
        %11264 = vmatpush1.bf16.msra.mxu0 %v8464
        %11265 = vmatprep.subr.bf16.mxu0 %v8473
        %11266 = vmatpush1.bf16.msra.mxu0 %v8472
        %11267 = vmatprep.subr.bf16.mxu0 %v8481
        %11268 = vmatpush1.bf16.msra.mxu0 %v8480
        %11269 = vmatprep.subr.bf16.mxu0 %v8489
        %11270 = vmatpush1.bf16.msra.mxu0 %v8488
        %11271 = vmatprep.subr.bf16.mxu0 %v8497
        %11272 = vmatpush1.bf16.msra.mxu0 %v8496
        %11273 = vmatprep.subr.bf16.mxu0 %v8505
        %11274 = vmatpush1.bf16.msra.mxu0 %v8504
        %11275 = vmatprep.subr.bf16.mxu0 %v8513
        %11276 = vmatpush1.bf16.msra.mxu0 %v8512
        %11277 = vmatprep.subr.bf16.mxu0 %v8521
        %11278 = vmatpush1.bf16.msra.mxu0 %v8520
        %11279 = vmatprep.mubr.bf16.mxu0 %v2220
        %11280 = vmatmul.mubr.bf16.gmra.mrb[0].mxu0 %v2218
        %v11281 = vpop.f32.mrb[0].mxu0
        %v11282 = vadd.f32 %v11241, %v11281
        %v11283 = vpop.f32.mrb[0].mxu0
        %v11284 = vadd.f32 %v11243, %v11283
        %v11285 = vpop.f32.mrb[0].mxu0
        %v11286 = vpop.f32.mrb[0].mxu0
        %11287 = vdwg.mxu0
        %11288 = vmatprep.subr.bf16.mxu0 %v8529
        %11289 = vmatpush1.bf16.msra.mxu0 %v8528
        %11290 = vmatprep.subr.bf16.mxu0 %v8537
        %11291 = vmatpush1.bf16.msra.mxu0 %v8536
        %11292 = vmatprep.subr.bf16.mxu0 %v8545
        %11293 = vmatpush1.bf16.msra.mxu0 %v8544
        %11294 = vmatprep.subr.bf16.mxu0 %v8553
        %11295 = vmatpush1.bf16.msra.mxu0 %v8552
        %11296 = vmatprep.subr.bf16.mxu0 %v8561
        %11297 = vmatpush1.bf16.msra.mxu0 %v8560
        %11298 = vmatprep.subr.bf16.mxu0 %v8569
        %11299 = vmatpush1.bf16.msra.mxu0 %v8568
        %11300 = vmatprep.subr.bf16.mxu0 %v8577
        %11301 = vmatpush1.bf16.msra.mxu0 %v8576
        %11302 = vmatprep.subr.bf16.mxu0 %v8585
        %11303 = vmatpush1.bf16.msra.mxu0 %v8584
        %11304 = vmatprep.subr.bf16.mxu0 %v8593
        %11305 = vmatpush1.bf16.msra.mxu0 %v8592
        %11306 = vmatprep.subr.bf16.mxu0 %v8601
        %11307 = vmatpush1.bf16.msra.mxu0 %v8600
        %11308 = vmatprep.subr.bf16.mxu0 %v8609
        %11309 = vmatpush1.bf16.msra.mxu0 %v8608
        %11310 = vmatprep.subr.bf16.mxu0 %v8617
        %11311 = vmatpush1.bf16.msra.mxu0 %v8616
        %11312 = vmatprep.subr.bf16.mxu0 %v8625
        %11313 = vmatpush1.bf16.msra.mxu0 %v8624
        %11314 = vmatprep.subr.bf16.mxu0 %v8633
        %11315 = vmatpush1.bf16.msra.mxu0 %v8632
        %11316 = vmatprep.subr.bf16.mxu0 %v8641
        %11317 = vmatpush1.bf16.msra.mxu0 %v8640
        %11318 = vmatprep.subr.bf16.mxu0 %v8649
        %11319 = vmatpush1.bf16.msra.mxu0 %v8648
        %11320 = vmatprep.mubr.bf16.mxu0 %v2258
        %11321 = vmatmul.mubr.bf16.gmra.mrb[0].mxu0 %v2244
        %v11322 = vpop.f32.mrb[0].mxu0
        %v11323 = vadd.f32 %v11282, %v11322
        %v11324 = vpop.f32.mrb[0].mxu0
        %v11325 = vadd.f32 %v11284, %v11324
        %v11326 = vpop.f32.mrb[0].mxu0
        %v11327 = vpop.f32.mrb[0].mxu0
        %11328 = vdwg.mxu0
        %11329 = vmatprep.subr.bf16.mxu0 %v8657
        %11330 = vmatpush1.bf16.msra.mxu0 %v8656
        %11331 = vmatprep.subr.bf16.mxu0 %v8665
        %11332 = vmatpush1.bf16.msra.mxu0 %v8664
        %11333 = vmatprep.subr.bf16.mxu0 %v8673
        %11334 = vmatpush1.bf16.msra.mxu0 %v8672
        %11335 = vmatprep.subr.bf16.mxu0 %v8681
        %11336 = vmatpush1.bf16.msra.mxu0 %v8680
        %11337 = vmatprep.subr.bf16.mxu0 %v8689
        %11338 = vmatpush1.bf16.msra.mxu0 %v8688
        %11339 = vmatprep.subr.bf16.mxu0 %v8697
        %11340 = vmatpush1.bf16.msra.mxu0 %v8696
        %11341 = vmatprep.subr.bf16.mxu0 %v8705
        %11342 = vmatpush1.bf16.msra.mxu0 %v8704
        %11343 = vmatprep.subr.bf16.mxu0 %v8713
        %11344 = vmatpush1.bf16.msra.mxu0 %v8712
        %11345 = vmatprep.subr.bf16.mxu0 %v8721
        %11346 = vmatpush1.bf16.msra.mxu0 %v8720
        %11347 = vmatprep.subr.bf16.mxu0 %v8729
        %11348 = vmatpush1.bf16.msra.mxu0 %v8728
        %11349 = vmatprep.subr.bf16.mxu0 %v8737
        %11350 = vmatpush1.bf16.msra.mxu0 %v8736
        %11351 = vmatprep.subr.bf16.mxu0 %v8745
        %11352 = vmatpush1.bf16.msra.mxu0 %v8744
        %11353 = vmatprep.subr.bf16.mxu0 %v8753
        %11354 = vmatpush1.bf16.msra.mxu0 %v8752
        %11355 = vmatprep.subr.bf16.mxu0 %v8761
        %11356 = vmatpush1.bf16.msra.mxu0 %v8760
        %11357 = vmatprep.subr.bf16.mxu0 %v8769
        %11358 = vmatpush1.bf16.msra.mxu0 %v8768
        %11359 = vmatprep.subr.bf16.mxu0 %v8777
        %11360 = vmatpush1.bf16.msra.mxu0 %v8776
        %11361 = vmatprep.mubr.bf16.mxu0 %v2268
        %11362 = vmatmul.mubr.bf16.gmra.mrb[0].mxu0 %v2266
        %v11363 = vpop.f32.mrb[0].mxu0
        %v11364 = vadd.f32 %v11323, %v11363
        %v11365 = vpop.f32.mrb[0].mxu0
        %v11366 = vadd.f32 %v11325, %v11365
        %v11367 = vpop.f32.mrb[0].mxu0
        %v11368 = vpop.f32.mrb[0].mxu0
        %11369 = vdwg.mxu0
        %11370 = vmatprep.subr.bf16.mxu0 %v8785
        %11371 = vmatpush1.bf16.msra.mxu0 %v8784
        %11372 = vmatprep.subr.bf16.mxu0 %v8793
        %11373 = vmatpush1.bf16.msra.mxu0 %v8792
        %11374 = vmatprep.subr.bf16.mxu0 %v8801
        %11375 = vmatpush1.bf16.msra.mxu0 %v8800
        %11376 = vmatprep.subr.bf16.mxu0 %v8809
        %11377 = vmatpush1.bf16.msra.mxu0 %v8808
        %11378 = vmatprep.subr.bf16.mxu0 %v8817
        %11379 = vmatpush1.bf16.msra.mxu0 %v8816
        %11380 = vmatprep.subr.bf16.mxu0 %v8825
        %11381 = vmatpush1.bf16.msra.mxu0 %v8824
        %11382 = vmatprep.subr.bf16.mxu0 %v8833
        %11383 = vmatpush1.bf16.msra.mxu0 %v8832
        %11384 = vmatprep.subr.bf16.mxu0 %v8841
        %11385 = vmatpush1.bf16.msra.mxu0 %v8840
        %11386 = vmatprep.subr.bf16.mxu0 %v8849
        %11387 = vmatpush1.bf16.msra.mxu0 %v8848
        %11388 = vmatprep.subr.bf16.mxu0 %v8857
        %11389 = vmatpush1.bf16.msra.mxu0 %v8856
        %11390 = vmatprep.subr.bf16.mxu0 %v8865
        %11391 = vmatpush1.bf16.msra.mxu0 %v8864
        %11392 = vmatprep.subr.bf16.mxu0 %v8873
        %11393 = vmatpush1.bf16.msra.mxu0 %v8872
        %11394 = vmatprep.subr.bf16.mxu0 %v8881
        %11395 = vmatpush1.bf16.msra.mxu0 %v8880
        %11396 = vmatprep.subr.bf16.mxu0 %v8889
        %11397 = vmatpush1.bf16.msra.mxu0 %v8888
        %11398 = vmatprep.subr.bf16.mxu0 %v8897
        %11399 = vmatpush1.bf16.msra.mxu0 %v8896
        %11400 = vmatprep.subr.bf16.mxu0 %v8905
        %11401 = vmatpush1.bf16.msra.mxu0 %v8904
        %11402 = vmatprep.mubr.bf16.mxu0 %v2265
        %11403 = vmatmul.mubr.bf16.gmra.mrb[0].mxu0 %v2251
        %v11404 = vpop.f32.mrb[0].mxu0
        %v11405 = vadd.f32 %v11364, %v11404
        %v11406 = vpop.f32.mrb[0].mxu0
        %v11407 = vadd.f32 %v11366, %v11406
        %v11408 = vpop.f32.mrb[0].mxu0
        %v11409 = vpop.f32.mrb[0].mxu0
        %11410 = vdwg.mxu0
        %11411 = vmatprep.subr.bf16.mxu0 %v8913
        %11412 = vmatpush1.bf16.msra.mxu0 %v8912
        %11413 = vmatprep.subr.bf16.mxu0 %v8921
        %11414 = vmatpush1.bf16.msra.mxu0 %v8920
        %11415 = vmatprep.subr.bf16.mxu0 %v8929
        %11416 = vmatpush1.bf16.msra.mxu0 %v8928
        %11417 = vmatprep.subr.bf16.mxu0 %v8937
        %11418 = vmatpush1.bf16.msra.mxu0 %v8936
        %11419 = vmatprep.subr.bf16.mxu0 %v8945
        %11420 = vmatpush1.bf16.msra.mxu0 %v8944
        %11421 = vmatprep.subr.bf16.mxu0 %v8953
        %11422 = vmatpush1.bf16.msra.mxu0 %v8952
        %11423 = vmatprep.subr.bf16.mxu0 %v8961
        %11424 = vmatpush1.bf16.msra.mxu0 %v8960
        %11425 = vmatprep.subr.bf16.mxu0 %v8969
        %11426 = vmatpush1.bf16.msra.mxu0 %v8968
        %11427 = vmatprep.subr.bf16.mxu0 %v8977
        %11428 = vmatpush1.bf16.msra.mxu0 %v8976
        %11429 = vmatprep.subr.bf16.mxu0 %v8985
        %11430 = vmatpush1.bf16.msra.mxu0 %v8984
        %11431 = vmatprep.subr.bf16.mxu0 %v8993
        %11432 = vmatpush1.bf16.msra.mxu0 %v8992
        %11433 = vmatprep.subr.bf16.mxu0 %v9001
        %11434 = vmatpush1.bf16.msra.mxu0 %v9000
        %11435 = vmatprep.subr.bf16.mxu0 %v9009
        %11436 = vmatpush1.bf16.msra.mxu0 %v9008
        %11437 = vmatprep.subr.bf16.mxu0 %v9017
        %11438 = vmatpush1.bf16.msra.mxu0 %v9016
        %11439 = vmatprep.subr.bf16.mxu0 %v9025
        %11440 = vmatpush1.bf16.msra.mxu0 %v9024
        %11441 = vmatprep.subr.bf16.mxu0 %v9033
        %11442 = vmatpush1.bf16.msra.mxu0 %v9032
        %11443 = vmatprep.mubr.bf16.mxu0 %v2269
        %11444 = vmatmul.mubr.bf16.gmra.mrb[0].mxu0 %v2267
        %v11445 = vpop.f32.mrb[0].mxu0
        %v11446 = vadd.f32 %v11405, %v11445
        %v11447 = vpop.f32.mrb[0].mxu0
        %v11448 = vadd.f32 %v11407, %v11447
        %v11449 = vpop.f32.mrb[0].mxu0
        %v11450 = vpop.f32.mrb[0].mxu0
        %11451 = vdwg.mxu0
        %11452 = vmatprep.subr.bf16.mxu0 %v9041
        %11453 = vmatpush1.bf16.msra.mxu0 %v9040
        %11454 = vmatprep.subr.bf16.mxu0 %v9049
        %11455 = vmatpush1.bf16.msra.mxu0 %v9048
        %11456 = vmatprep.subr.bf16.mxu0 %v9057
        %11457 = vmatpush1.bf16.msra.mxu0 %v9056
        %11458 = vmatprep.subr.bf16.mxu0 %v9065
        %11459 = vmatpush1.bf16.msra.mxu0 %v9064
        %11460 = vmatprep.subr.bf16.mxu0 %v9073
        %11461 = vmatpush1.bf16.msra.mxu0 %v9072
        %11462 = vmatprep.subr.bf16.mxu0 %v9081
        %11463 = vmatpush1.bf16.msra.mxu0 %v9080
        %11464 = vmatprep.subr.bf16.mxu0 %v9089
        %11465 = vmatpush1.bf16.msra.mxu0 %v9088
        %11466 = vmatprep.subr.bf16.mxu0 %v9097
        %11467 = vmatpush1.bf16.msra.mxu0 %v9096
        %11468 = vmatprep.subr.bf16.mxu0 %v9105
        %11469 = vmatpush1.bf16.msra.mxu0 %v9104
        %11470 = vmatprep.subr.bf16.mxu0 %v9113
        %11471 = vmatpush1.bf16.msra.mxu0 %v9112
        %11472 = vmatprep.subr.bf16.mxu0 %v9121
        %11473 = vmatpush1.bf16.msra.mxu0 %v9120
        %11474 = vmatprep.subr.bf16.mxu0 %v9129
        %11475 = vmatpush1.bf16.msra.mxu0 %v9128
        %11476 = vmatprep.subr.bf16.mxu0 %v9137
        %11477 = vmatpush1.bf16.msra.mxu0 %v9136
        %11478 = vmatprep.subr.bf16.mxu0 %v9145
        %11479 = vmatpush1.bf16.msra.mxu0 %v9144
        %11480 = vmatprep.subr.bf16.mxu0 %v9153
        %11481 = vmatpush1.bf16.msra.mxu0 %v9152
        %11482 = vmatprep.subr.bf16.mxu0 %v9161
        %11483 = vmatpush1.bf16.msra.mxu0 %v9160
        %11484 = vmatprep.mubr.bf16.mxu0 %v2291
        %11485 = vmatmul.mubr.bf16.gmra.mrb[0].mxu0 %v2284
        %v11486 = vpop.f32.mrb[0].mxu0
        %v11487 = vadd.f32 %v11446, %v11486
        %v11488 = vpop.f32.mrb[0].mxu0
        %v11489 = vadd.f32 %v11448, %v11488
        %v11490 = vpop.f32.mrb[0].mxu0
        %v11491 = vpop.f32.mrb[0].mxu0
        %11492 = vdwg.mxu0
        %11493 = vmatprep.subr.bf16.mxu0 %v9169
        %11494 = vmatpush1.bf16.msra.mxu0 %v9168
        %11495 = vmatprep.subr.bf16.mxu0 %v9177
        %11496 = vmatpush1.bf16.msra.mxu0 %v9176
        %11497 = vmatprep.subr.bf16.mxu0 %v9185
        %11498 = vmatpush1.bf16.msra.mxu0 %v9184
        %11499 = vmatprep.subr.bf16.mxu0 %v9193
        %11500 = vmatpush1.bf16.msra.mxu0 %v9192
        %11501 = vmatprep.subr.bf16.mxu0 %v9201
        %11502 = vmatpush1.bf16.msra.mxu0 %v9200
        %11503 = vmatprep.subr.bf16.mxu0 %v9209
        %11504 = vmatpush1.bf16.msra.mxu0 %v9208
        %11505 = vmatprep.subr.bf16.mxu0 %v9217
        %11506 = vmatpush1.bf16.msra.mxu0 %v9216
        %11507 = vmatprep.subr.bf16.mxu0 %v9225
        %11508 = vmatpush1.bf16.msra.mxu0 %v9224
        %11509 = vmatprep.subr.bf16.mxu0 0
        %11510 = vmatpush1.bf16.msra.mxu0 0
        %11511 = vmatprep.subr.bf16.mxu0 0
        %11512 = vmatpush1.bf16.msra.mxu0 0
        %11513 = vmatprep.subr.bf16.mxu0 0
        %11514 = vmatpush1.bf16.msra.mxu0 0
        %11515 = vmatprep.subr.bf16.mxu0 0
        %11516 = vmatpush1.bf16.msra.mxu0 0
        %11517 = vmatprep.subr.bf16.mxu0 0
        %11518 = vmatpush1.bf16.msra.mxu0 0
        %11519 = vmatprep.subr.bf16.mxu0 0
        %11520 = vmatpush1.bf16.msra.mxu0 0
        %11521 = vmatprep.subr.bf16.mxu0 0
        %11522 = vmatpush1.bf16.msra.mxu0 0
        %11523 = vmatprep.subr.bf16.mxu0 0
        %11524 = vmatpush1.bf16.msra.mxu0 0
        %11525 = vmatprep.mubr.bf16.mxu0 0
        %11526 = vmatmul.mubr.bf16.gmra.mrb[0].mxu0 %v2292
        %v11527 = vpop.f32.mrb[0].mxu0
        %v11528 = vadd.f32 %v11487, %v11527
        %v11529 = vpop.f32.mrb[0].mxu0
        %v11530 = vadd.f32 %v11489, %v11529
        %v11531 = vpop.f32.mrb[0].mxu0
        %v11532 = vpop.f32.mrb[0].mxu0
        %11533 = vdwg.mxu0
        %11534 = vmatprep.subr.bf16.mxu0 %v7507
        %11535 = vmatpush1.bf16.msra.mxu0 %v7506
        %11536 = vmatprep.subr.bf16.mxu0 %v7515
        %11537 = vmatpush1.bf16.msra.mxu0 %v7514
        %11538 = vmatprep.subr.bf16.mxu0 %v7523
        %11539 = vmatpush1.bf16.msra.mxu0 %v7522
        %11540 = vmatprep.subr.bf16.mxu0 %v7531
        %11541 = vmatpush1.bf16.msra.mxu0 %v7530
        %11542 = vmatprep.subr.bf16.mxu0 %v7539
        %11543 = vmatpush1.bf16.msra.mxu0 %v7538
        %11544 = vmatprep.subr.bf16.mxu0 %v7547
        %11545 = vmatpush1.bf16.msra.mxu0 %v7546
        %11546 = vmatprep.subr.bf16.mxu0 %v7555
        %11547 = vmatpush1.bf16.msra.mxu0 %v7554
        %11548 = vmatprep.subr.bf16.mxu0 %v7563
        %11549 = vmatpush1.bf16.msra.mxu0 %v7562
        %11550 = vmatprep.subr.bf16.mxu0 %v7571
        %11551 = vmatpush1.bf16.msra.mxu0 %v7570
        %11552 = vmatprep.subr.bf16.mxu0 %v7579
        %11553 = vmatpush1.bf16.msra.mxu0 %v7578
        %11554 = vmatprep.subr.bf16.mxu0 %v7587
        %11555 = vmatpush1.bf16.msra.mxu0 %v7586
        %11556 = vmatprep.subr.bf16.mxu0 %v7595
        %11557 = vmatpush1.bf16.msra.mxu0 %v7594
        %11558 = vmatprep.subr.bf16.mxu0 %v7603
        %11559 = vmatpush1.bf16.msra.mxu0 %v7602
        %11560 = vmatprep.subr.bf16.mxu0 %v7611
        %11561 = vmatpush1.bf16.msra.mxu0 %v7610
        %11562 = vmatprep.subr.bf16.mxu0 %v7619
        %11563 = vmatpush1.bf16.msra.mxu0 %v7618
        %11564 = vmatprep.subr.bf16.mxu0 %v7627
        %11565 = vmatpush1.bf16.msra.mxu0 %v7626
        %11566 = vmatprep.mubr.bf16.mxu0 %v2160
        %11567 = vmatmul.mubr.bf16.gmra.mrb[0].mxu0 %v2146
        %v11568 = vpop.f32.mrb[0].mxu0
        %v11569 = vadd.f32 0.0, %v11568
        %v11570 = vpop.f32.mrb[0].mxu0
        %v11571 = vadd.f32 0.0, %v11570
        %v11572 = vpop.f32.mrb[0].mxu0
        %v11573 = vpop.f32.mrb[0].mxu0
        %11574 = vdwg.mxu0
        %11575 = vmatprep.subr.bf16.mxu0 %v7635
        %11576 = vmatpush1.bf16.msra.mxu0 %v7634
        %11577 = vmatprep.subr.bf16.mxu0 %v7643
        %11578 = vmatpush1.bf16.msra.mxu0 %v7642
        %11579 = vmatprep.subr.bf16.mxu0 %v7651
        %11580 = vmatpush1.bf16.msra.mxu0 %v7650
        %11581 = vmatprep.subr.bf16.mxu0 %v7659
        %11582 = vmatpush1.bf16.msra.mxu0 %v7658
        %11583 = vmatprep.subr.bf16.mxu0 %v7667
        %11584 = vmatpush1.bf16.msra.mxu0 %v7666
        %11585 = vmatprep.subr.bf16.mxu0 %v7675
        %11586 = vmatpush1.bf16.msra.mxu0 %v7674
        %11587 = vmatprep.subr.bf16.mxu0 %v7683
        %11588 = vmatpush1.bf16.msra.mxu0 %v7682
        %11589 = vmatprep.subr.bf16.mxu0 %v7691
        %11590 = vmatpush1.bf16.msra.mxu0 %v7690
        %11591 = vmatprep.subr.bf16.mxu0 %v7699
        %11592 = vmatpush1.bf16.msra.mxu0 %v7698
        %11593 = vmatprep.subr.bf16.mxu0 %v7707
        %11594 = vmatpush1.bf16.msra.mxu0 %v7706
        %11595 = vmatprep.subr.bf16.mxu0 %v7715
        %11596 = vmatpush1.bf16.msra.mxu0 %v7714
        %11597 = vmatprep.subr.bf16.mxu0 %v7723
        %11598 = vmatpush1.bf16.msra.mxu0 %v7722
        %11599 = vmatprep.subr.bf16.mxu0 %v7731
        %11600 = vmatpush1.bf16.msra.mxu0 %v7730
        %11601 = vmatprep.subr.bf16.mxu0 %v7739
        %11602 = vmatpush1.bf16.msra.mxu0 %v7738
        %11603 = vmatprep.subr.bf16.mxu0 %v7747
        %11604 = vmatpush1.bf16.msra.mxu0 %v7746
        %11605 = vmatprep.subr.bf16.mxu0 %v7755
        %11606 = vmatpush1.bf16.msra.mxu0 %v7754
        %11607 = vmatprep.mubr.bf16.mxu0 %v2170
        %11608 = vmatmul.mubr.bf16.gmra.mrb[0].mxu0 %v2168
        %v11609 = vpop.f32.mrb[0].mxu0
        %v11610 = vadd.f32 %v11569, %v11609
        %v11611 = vpop.f32.mrb[0].mxu0
        %v11612 = vadd.f32 %v11571, %v11611
        %v11613 = vpop.f32.mrb[0].mxu0
        %v11614 = vpop.f32.mrb[0].mxu0
        %11615 = vdwg.mxu0
        %11616 = vmatprep.subr.bf16.mxu0 %v7763
        %11617 = vmatpush1.bf16.msra.mxu0 %v7762
        %11618 = vmatprep.subr.bf16.mxu0 %v7771
        %11619 = vmatpush1.bf16.msra.mxu0 %v7770
        %11620 = vmatprep.subr.bf16.mxu0 %v7779
        %11621 = vmatpush1.bf16.msra.mxu0 %v7778
        %11622 = vmatprep.subr.bf16.mxu0 %v7787
        %11623 = vmatpush1.bf16.msra.mxu0 %v7786
        %11624 = vmatprep.subr.bf16.mxu0 %v7795
        %11625 = vmatpush1.bf16.msra.mxu0 %v7794
        %11626 = vmatprep.subr.bf16.mxu0 %v7803
        %11627 = vmatpush1.bf16.msra.mxu0 %v7802
        %11628 = vmatprep.subr.bf16.mxu0 %v7811
        %11629 = vmatpush1.bf16.msra.mxu0 %v7810
        %11630 = vmatprep.subr.bf16.mxu0 %v7819
        %11631 = vmatpush1.bf16.msra.mxu0 %v7818
        %11632 = vmatprep.subr.bf16.mxu0 %v7827
        %11633 = vmatpush1.bf16.msra.mxu0 %v7826
        %11634 = vmatprep.subr.bf16.mxu0 %v7835
        %11635 = vmatpush1.bf16.msra.mxu0 %v7834
        %11636 = vmatprep.subr.bf16.mxu0 %v7843
        %11637 = vmatpush1.bf16.msra.mxu0 %v7842
        %11638 = vmatprep.subr.bf16.mxu0 %v7851
        %11639 = vmatpush1.bf16.msra.mxu0 %v7850
        %11640 = vmatprep.subr.bf16.mxu0 %v7859
        %11641 = vmatpush1.bf16.msra.mxu0 %v7858
        %11642 = vmatprep.subr.bf16.mxu0 %v7867
        %11643 = vmatpush1.bf16.msra.mxu0 %v7866
        %11644 = vmatprep.subr.bf16.mxu0 %v7875
        %11645 = vmatpush1.bf16.msra.mxu0 %v7874
        %11646 = vmatprep.subr.bf16.mxu0 %v7883
        %11647 = vmatpush1.bf16.msra.mxu0 %v7882
        %11648 = vmatprep.mubr.bf16.mxu0 %v2167
        %11649 = vmatmul.mubr.bf16.gmra.mrb[0].mxu0 %v2153
        %v11650 = vpop.f32.mrb[0].mxu0
        %v11651 = vadd.f32 %v11610, %v11650
        %v11652 = vpop.f32.mrb[0].mxu0
        %v11653 = vadd.f32 %v11612, %v11652
        %v11654 = vpop.f32.mrb[0].mxu0
        %v11655 = vpop.f32.mrb[0].mxu0
        %11656 = vdwg.mxu0
        %11657 = vmatprep.subr.bf16.mxu0 %v7891
        %11658 = vmatpush1.bf16.msra.mxu0 %v7890
        %11659 = vmatprep.subr.bf16.mxu0 %v7899
        %11660 = vmatpush1.bf16.msra.mxu0 %v7898
        %11661 = vmatprep.subr.bf16.mxu0 %v7907
        %11662 = vmatpush1.bf16.msra.mxu0 %v7906
        %11663 = vmatprep.subr.bf16.mxu0 %v7915
        %11664 = vmatpush1.bf16.msra.mxu0 %v7914
        %11665 = vmatprep.subr.bf16.mxu0 %v7923
        %11666 = vmatpush1.bf16.msra.mxu0 %v7922
        %11667 = vmatprep.subr.bf16.mxu0 %v7931
        %11668 = vmatpush1.bf16.msra.mxu0 %v7930
        %11669 = vmatprep.subr.bf16.mxu0 %v7939
        %11670 = vmatpush1.bf16.msra.mxu0 %v7938
        %11671 = vmatprep.subr.bf16.mxu0 %v7947
        %11672 = vmatpush1.bf16.msra.mxu0 %v7946
        %11673 = vmatprep.subr.bf16.mxu0 %v7955
        %11674 = vmatpush1.bf16.msra.mxu0 %v7954
        %11675 = vmatprep.subr.bf16.mxu0 %v7963
        %11676 = vmatpush1.bf16.msra.mxu0 %v7962
        %11677 = vmatprep.subr.bf16.mxu0 %v7971
        %11678 = vmatpush1.bf16.msra.mxu0 %v7970
        %11679 = vmatprep.subr.bf16.mxu0 %v7979
        %11680 = vmatpush1.bf16.msra.mxu0 %v7978
        %11681 = vmatprep.subr.bf16.mxu0 %v7987
        %11682 = vmatpush1.bf16.msra.mxu0 %v7986
        %11683 = vmatprep.subr.bf16.mxu0 %v7995
        %11684 = vmatpush1.bf16.msra.mxu0 %v7994
        %11685 = vmatprep.subr.bf16.mxu0 %v8003
        %11686 = vmatpush1.bf16.msra.mxu0 %v8002
        %11687 = vmatprep.subr.bf16.mxu0 %v8011
        %11688 = vmatpush1.bf16.msra.mxu0 %v8010
        %11689 = vmatprep.mubr.bf16.mxu0 %v2171
        %11690 = vmatmul.mubr.bf16.gmra.mrb[0].mxu0 %v2169
        %v11691 = vpop.f32.mrb[0].mxu0
        %v11692 = vadd.f32 %v11651, %v11691
        %v11693 = vpop.f32.mrb[0].mxu0
        %v11694 = vadd.f32 %v11653, %v11693
        %v11695 = vpop.f32.mrb[0].mxu0
        %v11696 = vpop.f32.mrb[0].mxu0
        %11697 = vdwg.mxu0
        %11698 = vmatprep.subr.bf16.mxu0 %v8019
        %11699 = vmatpush1.bf16.msra.mxu0 %v8018
        %11700 = vmatprep.subr.bf16.mxu0 %v8027
        %11701 = vmatpush1.bf16.msra.mxu0 %v8026
        %11702 = vmatprep.subr.bf16.mxu0 %v8035
        %11703 = vmatpush1.bf16.msra.mxu0 %v8034
        %11704 = vmatprep.subr.bf16.mxu0 %v8043
        %11705 = vmatpush1.bf16.msra.mxu0 %v8042
        %11706 = vmatprep.subr.bf16.mxu0 %v8051
        %11707 = vmatpush1.bf16.msra.mxu0 %v8050
        %11708 = vmatprep.subr.bf16.mxu0 %v8059
        %11709 = vmatpush1.bf16.msra.mxu0 %v8058
        %11710 = vmatprep.subr.bf16.mxu0 %v8067
        %11711 = vmatpush1.bf16.msra.mxu0 %v8066
        %11712 = vmatprep.subr.bf16.mxu0 %v8075
        %11713 = vmatpush1.bf16.msra.mxu0 %v8074
        %11714 = vmatprep.subr.bf16.mxu0 %v8083
        %11715 = vmatpush1.bf16.msra.mxu0 %v8082
        %11716 = vmatprep.subr.bf16.mxu0 %v8091
        %11717 = vmatpush1.bf16.msra.mxu0 %v8090
        %11718 = vmatprep.subr.bf16.mxu0 %v8099
        %11719 = vmatpush1.bf16.msra.mxu0 %v8098
        %11720 = vmatprep.subr.bf16.mxu0 %v8107
        %11721 = vmatpush1.bf16.msra.mxu0 %v8106
        %11722 = vmatprep.subr.bf16.mxu0 %v8115
        %11723 = vmatpush1.bf16.msra.mxu0 %v8114
        %11724 = vmatprep.subr.bf16.mxu0 %v8123
        %11725 = vmatpush1.bf16.msra.mxu0 %v8122
        %11726 = vmatprep.subr.bf16.mxu0 %v8131
        %11727 = vmatpush1.bf16.msra.mxu0 %v8130
        %11728 = vmatprep.subr.bf16.mxu0 %v8139
        %11729 = vmatpush1.bf16.msra.mxu0 %v8138
        %11730 = vmatprep.mubr.bf16.mxu0 %v2209
        %11731 = vmatmul.mubr.bf16.gmra.mrb[0].mxu0 %v2195
        %v11732 = vpop.f32.mrb[0].mxu0
        %v11733 = vadd.f32 %v11692, %v11732
        %v11734 = vpop.f32.mrb[0].mxu0
        %v11735 = vadd.f32 %v11694, %v11734
        %v11736 = vpop.f32.mrb[0].mxu0
        %v11737 = vpop.f32.mrb[0].mxu0
        %11738 = vdwg.mxu0
        %11739 = vmatprep.subr.bf16.mxu0 %v8147
        %11740 = vmatpush1.bf16.msra.mxu0 %v8146
        %11741 = vmatprep.subr.bf16.mxu0 %v8155
        %11742 = vmatpush1.bf16.msra.mxu0 %v8154
        %11743 = vmatprep.subr.bf16.mxu0 %v8163
        %11744 = vmatpush1.bf16.msra.mxu0 %v8162
        %11745 = vmatprep.subr.bf16.mxu0 %v8171
        %11746 = vmatpush1.bf16.msra.mxu0 %v8170
        %11747 = vmatprep.subr.bf16.mxu0 %v8179
        %11748 = vmatpush1.bf16.msra.mxu0 %v8178
        %11749 = vmatprep.subr.bf16.mxu0 %v8187
        %11750 = vmatpush1.bf16.msra.mxu0 %v8186
        %11751 = vmatprep.subr.bf16.mxu0 %v8195
        %11752 = vmatpush1.bf16.msra.mxu0 %v8194
        %11753 = vmatprep.subr.bf16.mxu0 %v8203
        %11754 = vmatpush1.bf16.msra.mxu0 %v8202
        %11755 = vmatprep.subr.bf16.mxu0 %v8211
        %11756 = vmatpush1.bf16.msra.mxu0 %v8210
        %11757 = vmatprep.subr.bf16.mxu0 %v8219
        %11758 = vmatpush1.bf16.msra.mxu0 %v8218
        %11759 = vmatprep.subr.bf16.mxu0 %v8227
        %11760 = vmatpush1.bf16.msra.mxu0 %v8226
        %11761 = vmatprep.subr.bf16.mxu0 %v8235
        %11762 = vmatpush1.bf16.msra.mxu0 %v8234
        %11763 = vmatprep.subr.bf16.mxu0 %v8243
        %11764 = vmatpush1.bf16.msra.mxu0 %v8242
        %11765 = vmatprep.subr.bf16.mxu0 %v8251
        %11766 = vmatpush1.bf16.msra.mxu0 %v8250
        %11767 = vmatprep.subr.bf16.mxu0 %v8259
        %11768 = vmatpush1.bf16.msra.mxu0 %v8258
        %11769 = vmatprep.subr.bf16.mxu0 %v8267
        %11770 = vmatpush1.bf16.msra.mxu0 %v8266
        %11771 = vmatprep.mubr.bf16.mxu0 %v2219
        %11772 = vmatmul.mubr.bf16.gmra.mrb[0].mxu0 %v2217
        %v11773 = vpop.f32.mrb[0].mxu0
        %v11774 = vadd.f32 %v11733, %v11773
        %v11775 = vpop.f32.mrb[0].mxu0
        %v11776 = vadd.f32 %v11735, %v11775
        %v11777 = vpop.f32.mrb[0].mxu0
        %v11778 = vpop.f32.mrb[0].mxu0
        %11779 = vdwg.mxu0
        %11780 = vmatprep.subr.bf16.mxu0 %v8275
        %11781 = vmatpush1.bf16.msra.mxu0 %v8274
        %11782 = vmatprep.subr.bf16.mxu0 %v8283
        %11783 = vmatpush1.bf16.msra.mxu0 %v8282
        %11784 = vmatprep.subr.bf16.mxu0 %v8291
        %11785 = vmatpush1.bf16.msra.mxu0 %v8290
        %11786 = vmatprep.subr.bf16.mxu0 %v8299
        %11787 = vmatpush1.bf16.msra.mxu0 %v8298
        %11788 = vmatprep.subr.bf16.mxu0 %v8307
        %11789 = vmatpush1.bf16.msra.mxu0 %v8306
        %11790 = vmatprep.subr.bf16.mxu0 %v8315
        %11791 = vmatpush1.bf16.msra.mxu0 %v8314
        %11792 = vmatprep.subr.bf16.mxu0 %v8323
        %11793 = vmatpush1.bf16.msra.mxu0 %v8322
        %11794 = vmatprep.subr.bf16.mxu0 %v8331
        %11795 = vmatpush1.bf16.msra.mxu0 %v8330
        %11796 = vmatprep.subr.bf16.mxu0 %v8339
        %11797 = vmatpush1.bf16.msra.mxu0 %v8338
        %11798 = vmatprep.subr.bf16.mxu0 %v8347
        %11799 = vmatpush1.bf16.msra.mxu0 %v8346
        %11800 = vmatprep.subr.bf16.mxu0 %v8355
        %11801 = vmatpush1.bf16.msra.mxu0 %v8354
        %11802 = vmatprep.subr.bf16.mxu0 %v8363
        %11803 = vmatpush1.bf16.msra.mxu0 %v8362
        %11804 = vmatprep.subr.bf16.mxu0 %v8371
        %11805 = vmatpush1.bf16.msra.mxu0 %v8370
        %11806 = vmatprep.subr.bf16.mxu0 %v8379
        %11807 = vmatpush1.bf16.msra.mxu0 %v8378
        %11808 = vmatprep.subr.bf16.mxu0 %v8387
        %11809 = vmatpush1.bf16.msra.mxu0 %v8386
        %11810 = vmatprep.subr.bf16.mxu0 %v8395
        %11811 = vmatpush1.bf16.msra.mxu0 %v8394
        %11812 = vmatprep.mubr.bf16.mxu0 %v2216
        %11813 = vmatmul.mubr.bf16.gmra.mrb[0].mxu0 %v2202
        %v11814 = vpop.f32.mrb[0].mxu0
        %v11815 = vadd.f32 %v11774, %v11814
        %v11816 = vpop.f32.mrb[0].mxu0
        %v11817 = vadd.f32 %v11776, %v11816
        %v11818 = vpop.f32.mrb[0].mxu0
        %v11819 = vpop.f32.mrb[0].mxu0
        %11820 = vdwg.mxu0
        %11821 = vmatprep.subr.bf16.mxu0 %v8403
        %11822 = vmatpush1.bf16.msra.mxu0 %v8402
        %11823 = vmatprep.subr.bf16.mxu0 %v8411
        %11824 = vmatpush1.bf16.msra.mxu0 %v8410
        %11825 = vmatprep.subr.bf16.mxu0 %v8419
        %11826 = vmatpush1.bf16.msra.mxu0 %v8418
        %11827 = vmatprep.subr.bf16.mxu0 %v8427
        %11828 = vmatpush1.bf16.msra.mxu0 %v8426
        %11829 = vmatprep.subr.bf16.mxu0 %v8435
        %11830 = vmatpush1.bf16.msra.mxu0 %v8434
        %11831 = vmatprep.subr.bf16.mxu0 %v8443
        %11832 = vmatpush1.bf16.msra.mxu0 %v8442
        %11833 = vmatprep.subr.bf16.mxu0 %v8451
        %11834 = vmatpush1.bf16.msra.mxu0 %v8450
        %11835 = vmatprep.subr.bf16.mxu0 %v8459
        %11836 = vmatpush1.bf16.msra.mxu0 %v8458
        %11837 = vmatprep.subr.bf16.mxu0 %v8467
        %11838 = vmatpush1.bf16.msra.mxu0 %v8466
        %11839 = vmatprep.subr.bf16.mxu0 %v8475
        %11840 = vmatpush1.bf16.msra.mxu0 %v8474
        %11841 = vmatprep.subr.bf16.mxu0 %v8483
        %11842 = vmatpush1.bf16.msra.mxu0 %v8482
        %11843 = vmatprep.subr.bf16.mxu0 %v8491
        %11844 = vmatpush1.bf16.msra.mxu0 %v8490
        %11845 = vmatprep.subr.bf16.mxu0 %v8499
        %11846 = vmatpush1.bf16.msra.mxu0 %v8498
        %11847 = vmatprep.subr.bf16.mxu0 %v8507
        %11848 = vmatpush1.bf16.msra.mxu0 %v8506
        %11849 = vmatprep.subr.bf16.mxu0 %v8515
        %11850 = vmatpush1.bf16.msra.mxu0 %v8514
        %11851 = vmatprep.subr.bf16.mxu0 %v8523
        %11852 = vmatpush1.bf16.msra.mxu0 %v8522
        %11853 = vmatprep.mubr.bf16.mxu0 %v2220
        %11854 = vmatmul.mubr.bf16.gmra.mrb[0].mxu0 %v2218
        %v11855 = vpop.f32.mrb[0].mxu0
        %v11856 = vadd.f32 %v11815, %v11855
        %v11857 = vpop.f32.mrb[0].mxu0
        %v11858 = vadd.f32 %v11817, %v11857
        %v11859 = vpop.f32.mrb[0].mxu0
        %v11860 = vpop.f32.mrb[0].mxu0
        %11861 = vdwg.mxu0
        %11862 = vmatprep.subr.bf16.mxu0 %v8531
        %11863 = vmatpush1.bf16.msra.mxu0 %v8530
        %11864 = vmatprep.subr.bf16.mxu0 %v8539
        %11865 = vmatpush1.bf16.msra.mxu0 %v8538
        %11866 = vmatprep.subr.bf16.mxu0 %v8547
        %11867 = vmatpush1.bf16.msra.mxu0 %v8546
        %11868 = vmatprep.subr.bf16.mxu0 %v8555
        %11869 = vmatpush1.bf16.msra.mxu0 %v8554
        %11870 = vmatprep.subr.bf16.mxu0 %v8563
        %11871 = vmatpush1.bf16.msra.mxu0 %v8562
        %11872 = vmatprep.subr.bf16.mxu0 %v8571
        %11873 = vmatpush1.bf16.msra.mxu0 %v8570
        %11874 = vmatprep.subr.bf16.mxu0 %v8579
        %11875 = vmatpush1.bf16.msra.mxu0 %v8578
        %11876 = vmatprep.subr.bf16.mxu0 %v8587
        %11877 = vmatpush1.bf16.msra.mxu0 %v8586
        %11878 = vmatprep.subr.bf16.mxu0 %v8595
        %11879 = vmatpush1.bf16.msra.mxu0 %v8594
        %11880 = vmatprep.subr.bf16.mxu0 %v8603
        %11881 = vmatpush1.bf16.msra.mxu0 %v8602
        %11882 = vmatprep.subr.bf16.mxu0 %v8611
        %11883 = vmatpush1.bf16.msra.mxu0 %v8610
        %11884 = vmatprep.subr.bf16.mxu0 %v8619
        %11885 = vmatpush1.bf16.msra.mxu0 %v8618
        %11886 = vmatprep.subr.bf16.mxu0 %v8627
        %11887 = vmatpush1.bf16.msra.mxu0 %v8626
        %11888 = vmatprep.subr.bf16.mxu0 %v8635
        %11889 = vmatpush1.bf16.msra.mxu0 %v8634
        %11890 = vmatprep.subr.bf16.mxu0 %v8643
        %11891 = vmatpush1.bf16.msra.mxu0 %v8642
        %11892 = vmatprep.subr.bf16.mxu0 %v8651
        %11893 = vmatpush1.bf16.msra.mxu0 %v8650
        %11894 = vmatprep.mubr.bf16.mxu0 %v2258
        %11895 = vmatmul.mubr.bf16.gmra.mrb[0].mxu0 %v2244
        %v11896 = vpop.f32.mrb[0].mxu0
        %v11897 = vadd.f32 %v11856, %v11896
        %v11898 = vpop.f32.mrb[0].mxu0
        %v11899 = vadd.f32 %v11858, %v11898
        %v11900 = vpop.f32.mrb[0].mxu0
        %v11901 = vpop.f32.mrb[0].mxu0
        %11902 = vdwg.mxu0
        %11903 = vmatprep.subr.bf16.mxu0 %v8659
        %11904 = vmatpush1.bf16.msra.mxu0 %v8658
        %11905 = vmatprep.subr.bf16.mxu0 %v8667
        %11906 = vmatpush1.bf16.msra.mxu0 %v8666
        %11907 = vmatprep.subr.bf16.mxu0 %v8675
        %11908 = vmatpush1.bf16.msra.mxu0 %v8674
        %11909 = vmatprep.subr.bf16.mxu0 %v8683
        %11910 = vmatpush1.bf16.msra.mxu0 %v8682
        %11911 = vmatprep.subr.bf16.mxu0 %v8691
        %11912 = vmatpush1.bf16.msra.mxu0 %v8690
        %11913 = vmatprep.subr.bf16.mxu0 %v8699
        %11914 = vmatpush1.bf16.msra.mxu0 %v8698
        %11915 = vmatprep.subr.bf16.mxu0 %v8707
        %11916 = vmatpush1.bf16.msra.mxu0 %v8706
        %11917 = vmatprep.subr.bf16.mxu0 %v8715
        %11918 = vmatpush1.bf16.msra.mxu0 %v8714
        %11919 = vmatprep.subr.bf16.mxu0 %v8723
        %11920 = vmatpush1.bf16.msra.mxu0 %v8722
        %11921 = vmatprep.subr.bf16.mxu0 %v8731
        %11922 = vmatpush1.bf16.msra.mxu0 %v8730
        %11923 = vmatprep.subr.bf16.mxu0 %v8739
        %11924 = vmatpush1.bf16.msra.mxu0 %v8738
        %11925 = vmatprep.subr.bf16.mxu0 %v8747
        %11926 = vmatpush1.bf16.msra.mxu0 %v8746
        %11927 = vmatprep.subr.bf16.mxu0 %v8755
        %11928 = vmatpush1.bf16.msra.mxu0 %v8754
        %11929 = vmatprep.subr.bf16.mxu0 %v8763
        %11930 = vmatpush1.bf16.msra.mxu0 %v8762
        %11931 = vmatprep.subr.bf16.mxu0 %v8771
        %11932 = vmatpush1.bf16.msra.mxu0 %v8770
        %11933 = vmatprep.subr.bf16.mxu0 %v8779
        %11934 = vmatpush1.bf16.msra.mxu0 %v8778
        %11935 = vmatprep.mubr.bf16.mxu0 %v2268
        %11936 = vmatmul.mubr.bf16.gmra.mrb[0].mxu0 %v2266
        %v11937 = vpop.f32.mrb[0].mxu0
        %v11938 = vadd.f32 %v11897, %v11937
        %v11939 = vpop.f32.mrb[0].mxu0
        %v11940 = vadd.f32 %v11899, %v11939
        %v11941 = vpop.f32.mrb[0].mxu0
        %v11942 = vpop.f32.mrb[0].mxu0
        %11943 = vdwg.mxu0
        %11944 = vmatprep.subr.bf16.mxu0 %v8787
        %11945 = vmatpush1.bf16.msra.mxu0 %v8786
        %11946 = vmatprep.subr.bf16.mxu0 %v8795
        %11947 = vmatpush1.bf16.msra.mxu0 %v8794
        %11948 = vmatprep.subr.bf16.mxu0 %v8803
        %11949 = vmatpush1.bf16.msra.mxu0 %v8802
        %11950 = vmatprep.subr.bf16.mxu0 %v8811
        %11951 = vmatpush1.bf16.msra.mxu0 %v8810
        %11952 = vmatprep.subr.bf16.mxu0 %v8819
        %11953 = vmatpush1.bf16.msra.mxu0 %v8818
        %11954 = vmatprep.subr.bf16.mxu0 %v8827
        %11955 = vmatpush1.bf16.msra.mxu0 %v8826
        %11956 = vmatprep.subr.bf16.mxu0 %v8835
        %11957 = vmatpush1.bf16.msra.mxu0 %v8834
        %11958 = vmatprep.subr.bf16.mxu0 %v8843
        %11959 = vmatpush1.bf16.msra.mxu0 %v8842
        %11960 = vmatprep.subr.bf16.mxu0 %v8851
        %11961 = vmatpush1.bf16.msra.mxu0 %v8850
        %11962 = vmatprep.subr.bf16.mxu0 %v8859
        %11963 = vmatpush1.bf16.msra.mxu0 %v8858
        %11964 = vmatprep.subr.bf16.mxu0 %v8867
        %11965 = vmatpush1.bf16.msra.mxu0 %v8866
        %11966 = vmatprep.subr.bf16.mxu0 %v8875
        %11967 = vmatpush1.bf16.msra.mxu0 %v8874
        %11968 = vmatprep.subr.bf16.mxu0 %v8883
        %11969 = vmatpush1.bf16.msra.mxu0 %v8882
        %11970 = vmatprep.subr.bf16.mxu0 %v8891
        %11971 = vmatpush1.bf16.msra.mxu0 %v8890
        %11972 = vmatprep.subr.bf16.mxu0 %v8899
        %11973 = vmatpush1.bf16.msra.mxu0 %v8898
        %11974 = vmatprep.subr.bf16.mxu0 %v8907
        %11975 = vmatpush1.bf16.msra.mxu0 %v8906
        %11976 = vmatprep.mubr.bf16.mxu0 %v2265
        %11977 = vmatmul.mubr.bf16.gmra.mrb[0].mxu0 %v2251
        %v11978 = vpop.f32.mrb[0].mxu0
        %v11979 = vadd.f32 %v11938, %v11978
        %v11980 = vpop.f32.mrb[0].mxu0
        %v11981 = vadd.f32 %v11940, %v11980
        %v11982 = vpop.f32.mrb[0].mxu0
        %v11983 = vpop.f32.mrb[0].mxu0
        %11984 = vdwg.mxu0
        %11985 = vmatprep.subr.bf16.mxu0 %v8915
        %11986 = vmatpush1.bf16.msra.mxu0 %v8914
        %11987 = vmatprep.subr.bf16.mxu0 %v8923
        %11988 = vmatpush1.bf16.msra.mxu0 %v8922
        %11989 = vmatprep.subr.bf16.mxu0 %v8931
        %11990 = vmatpush1.bf16.msra.mxu0 %v8930
        %11991 = vmatprep.subr.bf16.mxu0 %v8939
        %11992 = vmatpush1.bf16.msra.mxu0 %v8938
        %11993 = vmatprep.subr.bf16.mxu0 %v8947
        %11994 = vmatpush1.bf16.msra.mxu0 %v8946
        %11995 = vmatprep.subr.bf16.mxu0 %v8955
        %11996 = vmatpush1.bf16.msra.mxu0 %v8954
        %11997 = vmatprep.subr.bf16.mxu0 %v8963
        %11998 = vmatpush1.bf16.msra.mxu0 %v8962
        %11999 = vmatprep.subr.bf16.mxu0 %v8971
        %12000 = vmatpush1.bf16.msra.mxu0 %v8970
        %12001 = vmatprep.subr.bf16.mxu0 %v8979
        %12002 = vmatpush1.bf16.msra.mxu0 %v8978
        %12003 = vmatprep.subr.bf16.mxu0 %v8987
        %12004 = vmatpush1.bf16.msra.mxu0 %v8986
        %12005 = vmatprep.subr.bf16.mxu0 %v8995
        %12006 = vmatpush1.bf16.msra.mxu0 %v8994
        %12007 = vmatprep.subr.bf16.mxu0 %v9003
        %12008 = vmatpush1.bf16.msra.mxu0 %v9002
        %12009 = vmatprep.subr.bf16.mxu0 %v9011
        %12010 = vmatpush1.bf16.msra.mxu0 %v9010
        %12011 = vmatprep.subr.bf16.mxu0 %v9019
        %12012 = vmatpush1.bf16.msra.mxu0 %v9018
        %12013 = vmatprep.subr.bf16.mxu0 %v9027
        %12014 = vmatpush1.bf16.msra.mxu0 %v9026
        %12015 = vmatprep.subr.bf16.mxu0 %v9035
        %12016 = vmatpush1.bf16.msra.mxu0 %v9034
        %12017 = vmatprep.mubr.bf16.mxu0 %v2269
        %12018 = vmatmul.mubr.bf16.gmra.mrb[0].mxu0 %v2267
        %v12019 = vpop.f32.mrb[0].mxu0
        %v12020 = vadd.f32 %v11979, %v12019
        %v12021 = vpop.f32.mrb[0].mxu0
        %v12022 = vadd.f32 %v11981, %v12021
        %v12023 = vpop.f32.mrb[0].mxu0
        %v12024 = vpop.f32.mrb[0].mxu0
        %12025 = vdwg.mxu0
        %12026 = vmatprep.subr.bf16.mxu0 %v9043
        %12027 = vmatpush1.bf16.msra.mxu0 %v9042
        %12028 = vmatprep.subr.bf16.mxu0 %v9051
        %12029 = vmatpush1.bf16.msra.mxu0 %v9050
        %12030 = vmatprep.subr.bf16.mxu0 %v9059
        %12031 = vmatpush1.bf16.msra.mxu0 %v9058
        %12032 = vmatprep.subr.bf16.mxu0 %v9067
        %12033 = vmatpush1.bf16.msra.mxu0 %v9066
        %12034 = vmatprep.subr.bf16.mxu0 %v9075
        %12035 = vmatpush1.bf16.msra.mxu0 %v9074
        %12036 = vmatprep.subr.bf16.mxu0 %v9083
        %12037 = vmatpush1.bf16.msra.mxu0 %v9082
        %12038 = vmatprep.subr.bf16.mxu0 %v9091
        %12039 = vmatpush1.bf16.msra.mxu0 %v9090
        %12040 = vmatprep.subr.bf16.mxu0 %v9099
        %12041 = vmatpush1.bf16.msra.mxu0 %v9098
        %12042 = vmatprep.subr.bf16.mxu0 %v9107
        %12043 = vmatpush1.bf16.msra.mxu0 %v9106
        %12044 = vmatprep.subr.bf16.mxu0 %v9115
        %12045 = vmatpush1.bf16.msra.mxu0 %v9114
        %12046 = vmatprep.subr.bf16.mxu0 %v9123
        %12047 = vmatpush1.bf16.msra.mxu0 %v9122
        %12048 = vmatprep.subr.bf16.mxu0 %v9131
        %12049 = vmatpush1.bf16.msra.mxu0 %v9130
        %12050 = vmatprep.subr.bf16.mxu0 %v9139
        %12051 = vmatpush1.bf16.msra.mxu0 %v9138
        %12052 = vmatprep.subr.bf16.mxu0 %v9147
        %12053 = vmatpush1.bf16.msra.mxu0 %v9146
        %12054 = vmatprep.subr.bf16.mxu0 %v9155
        %12055 = vmatpush1.bf16.msra.mxu0 %v9154
        %12056 = vmatprep.subr.bf16.mxu0 %v9163
        %12057 = vmatpush1.bf16.msra.mxu0 %v9162
        %12058 = vmatprep.mubr.bf16.mxu0 %v2291
        %12059 = vmatmul.mubr.bf16.gmra.mrb[0].mxu0 %v2284
        %v12060 = vpop.f32.mrb[0].mxu0
        %v12061 = vadd.f32 %v12020, %v12060
        %v12062 = vpop.f32.mrb[0].mxu0
        %v12063 = vadd.f32 %v12022, %v12062
        %v12064 = vpop.f32.mrb[0].mxu0
        %v12065 = vpop.f32.mrb[0].mxu0
        %12066 = vdwg.mxu0
        %12067 = vmatprep.subr.bf16.mxu0 %v9171
        %12068 = vmatpush1.bf16.msra.mxu0 %v9170
        %12069 = vmatprep.subr.bf16.mxu0 %v9179
        %12070 = vmatpush1.bf16.msra.mxu0 %v9178
        %12071 = vmatprep.subr.bf16.mxu0 %v9187
        %12072 = vmatpush1.bf16.msra.mxu0 %v9186
        %12073 = vmatprep.subr.bf16.mxu0 %v9195
        %12074 = vmatpush1.bf16.msra.mxu0 %v9194
        %12075 = vmatprep.subr.bf16.mxu0 %v9203
        %12076 = vmatpush1.bf16.msra.mxu0 %v9202
        %12077 = vmatprep.subr.bf16.mxu0 %v9211
        %12078 = vmatpush1.bf16.msra.mxu0 %v9210
        %12079 = vmatprep.subr.bf16.mxu0 %v9219
        %12080 = vmatpush1.bf16.msra.mxu0 %v9218
        %12081 = vmatprep.subr.bf16.mxu0 %v9227
        %12082 = vmatpush1.bf16.msra.mxu0 %v9226
        %12083 = vmatprep.subr.bf16.mxu0 0
        %12084 = vmatpush1.bf16.msra.mxu0 0
        %12085 = vmatprep.subr.bf16.mxu0 0
        %12086 = vmatpush1.bf16.msra.mxu0 0
        %12087 = vmatprep.subr.bf16.mxu0 0
        %12088 = vmatpush1.bf16.msra.mxu0 0
        %12089 = vmatprep.subr.bf16.mxu0 0
        %12090 = vmatpush1.bf16.msra.mxu0 0
        %12091 = vmatprep.subr.bf16.mxu0 0
        %12092 = vmatpush1.bf16.msra.mxu0 0
        %12093 = vmatprep.subr.bf16.mxu0 0
        %12094 = vmatpush1.bf16.msra.mxu0 0
        %12095 = vmatprep.subr.bf16.mxu0 0
        %12096 = vmatpush1.bf16.msra.mxu0 0
        %12097 = vmatprep.subr.bf16.mxu0 0
        %12098 = vmatpush1.bf16.msra.mxu0 0
        %12099 = vmatprep.mubr.bf16.mxu0 0
        %12100 = vmatmul.mubr.bf16.gmra.mrb[0].mxu0 %v2292
        %v12101 = vpop.f32.mrb[0].mxu0
        %v12102 = vadd.f32 %v12061, %v12101
        %v12103 = vpop.f32.mrb[0].mxu0
        %v12104 = vadd.f32 %v12063, %v12103
        %v12105 = vpop.f32.mrb[0].mxu0
        %v12106 = vpop.f32.mrb[0].mxu0
        %12107 = vdwg.mxu0
        %12108 = vmatprep.subr.bf16.mxu0 %v7509
        %12109 = vmatpush1.bf16.msra.mxu0 %v7508
        %12110 = vmatprep.subr.bf16.mxu0 %v7517
        %12111 = vmatpush1.bf16.msra.mxu0 %v7516
        %12112 = vmatprep.subr.bf16.mxu0 %v7525
        %12113 = vmatpush1.bf16.msra.mxu0 %v7524
        %12114 = vmatprep.subr.bf16.mxu0 %v7533
        %12115 = vmatpush1.bf16.msra.mxu0 %v7532
        %12116 = vmatprep.subr.bf16.mxu0 %v7541
        %12117 = vmatpush1.bf16.msra.mxu0 %v7540
        %12118 = vmatprep.subr.bf16.mxu0 %v7549
        %12119 = vmatpush1.bf16.msra.mxu0 %v7548
        %12120 = vmatprep.subr.bf16.mxu0 %v7557
        %12121 = vmatpush1.bf16.msra.mxu0 %v7556
        %12122 = vmatprep.subr.bf16.mxu0 %v7565
        %12123 = vmatpush1.bf16.msra.mxu0 %v7564
        %12124 = vmatprep.subr.bf16.mxu0 %v7573
        %12125 = vmatpush1.bf16.msra.mxu0 %v7572
        %12126 = vmatprep.subr.bf16.mxu0 %v7581
        %12127 = vmatpush1.bf16.msra.mxu0 %v7580
        %12128 = vmatprep.subr.bf16.mxu0 %v7589
        %12129 = vmatpush1.bf16.msra.mxu0 %v7588
        %12130 = vmatprep.subr.bf16.mxu0 %v7597
        %12131 = vmatpush1.bf16.msra.mxu0 %v7596
        %12132 = vmatprep.subr.bf16.mxu0 %v7605
        %12133 = vmatpush1.bf16.msra.mxu0 %v7604
        %12134 = vmatprep.subr.bf16.mxu0 %v7613
        %12135 = vmatpush1.bf16.msra.mxu0 %v7612
        %12136 = vmatprep.subr.bf16.mxu0 %v7621
        %12137 = vmatpush1.bf16.msra.mxu0 %v7620
        %12138 = vmatprep.subr.bf16.mxu0 %v7629
        %12139 = vmatpush1.bf16.msra.mxu0 %v7628
        %12140 = vmatprep.mubr.bf16.mxu0 %v2160
        %12141 = vmatmul.mubr.bf16.gmra.mrb[0].mxu0 %v2146
        %v12142 = vpop.f32.mrb[0].mxu0
        %v12143 = vadd.f32 0.0, %v12142
        %v12144 = vpop.f32.mrb[0].mxu0
        %v12145 = vadd.f32 0.0, %v12144
        %v12146 = vpop.f32.mrb[0].mxu0
        %v12147 = vpop.f32.mrb[0].mxu0
        %12148 = vdwg.mxu0
        %12149 = vmatprep.subr.bf16.mxu0 %v7637
        %12150 = vmatpush1.bf16.msra.mxu0 %v7636
        %12151 = vmatprep.subr.bf16.mxu0 %v7645
        %12152 = vmatpush1.bf16.msra.mxu0 %v7644
        %12153 = vmatprep.subr.bf16.mxu0 %v7653
        %12154 = vmatpush1.bf16.msra.mxu0 %v7652
        %12155 = vmatprep.subr.bf16.mxu0 %v7661
        %12156 = vmatpush1.bf16.msra.mxu0 %v7660
        %12157 = vmatprep.subr.bf16.mxu0 %v7669
        %12158 = vmatpush1.bf16.msra.mxu0 %v7668
        %12159 = vmatprep.subr.bf16.mxu0 %v7677
        %12160 = vmatpush1.bf16.msra.mxu0 %v7676
        %12161 = vmatprep.subr.bf16.mxu0 %v7685
        %12162 = vmatpush1.bf16.msra.mxu0 %v7684
        %12163 = vmatprep.subr.bf16.mxu0 %v7693
        %12164 = vmatpush1.bf16.msra.mxu0 %v7692
        %12165 = vmatprep.subr.bf16.mxu0 %v7701
        %12166 = vmatpush1.bf16.msra.mxu0 %v7700
        %12167 = vmatprep.subr.bf16.mxu0 %v7709
        %12168 = vmatpush1.bf16.msra.mxu0 %v7708
        %12169 = vmatprep.subr.bf16.mxu0 %v7717
        %12170 = vmatpush1.bf16.msra.mxu0 %v7716
        %12171 = vmatprep.subr.bf16.mxu0 %v7725
        %12172 = vmatpush1.bf16.msra.mxu0 %v7724
        %12173 = vmatprep.subr.bf16.mxu0 %v7733
        %12174 = vmatpush1.bf16.msra.mxu0 %v7732
        %12175 = vmatprep.subr.bf16.mxu0 %v7741
        %12176 = vmatpush1.bf16.msra.mxu0 %v7740
        %12177 = vmatprep.subr.bf16.mxu0 %v7749
        %12178 = vmatpush1.bf16.msra.mxu0 %v7748
        %12179 = vmatprep.subr.bf16.mxu0 %v7757
        %12180 = vmatpush1.bf16.msra.mxu0 %v7756
        %12181 = vmatprep.mubr.bf16.mxu0 %v2170
        %12182 = vmatmul.mubr.bf16.gmra.mrb[0].mxu0 %v2168
        %v12183 = vpop.f32.mrb[0].mxu0
        %v12184 = vadd.f32 %v12143, %v12183
        %v12185 = vpop.f32.mrb[0].mxu0
        %v12186 = vadd.f32 %v12145, %v12185
        %v12187 = vpop.f32.mrb[0].mxu0
        %v12188 = vpop.f32.mrb[0].mxu0
        %12189 = vdwg.mxu0
        %12190 = vmatprep.subr.bf16.mxu0 %v7765
        %12191 = vmatpush1.bf16.msra.mxu0 %v7764
        %12192 = vmatprep.subr.bf16.mxu0 %v7773
        %12193 = vmatpush1.bf16.msra.mxu0 %v7772
        %12194 = vmatprep.subr.bf16.mxu0 %v7781
        %12195 = vmatpush1.bf16.msra.mxu0 %v7780
        %12196 = vmatprep.subr.bf16.mxu0 %v7789
        %12197 = vmatpush1.bf16.msra.mxu0 %v7788
        %12198 = vmatprep.subr.bf16.mxu0 %v7797
        %12199 = vmatpush1.bf16.msra.mxu0 %v7796
        %12200 = vmatprep.subr.bf16.mxu0 %v7805
        %12201 = vmatpush1.bf16.msra.mxu0 %v7804
        %12202 = vmatprep.subr.bf16.mxu0 %v7813
        %12203 = vmatpush1.bf16.msra.mxu0 %v7812
        %12204 = vmatprep.subr.bf16.mxu0 %v7821
        %12205 = vmatpush1.bf16.msra.mxu0 %v7820
        %12206 = vmatprep.subr.bf16.mxu0 %v7829
        %12207 = vmatpush1.bf16.msra.mxu0 %v7828
        %12208 = vmatprep.subr.bf16.mxu0 %v7837
        %12209 = vmatpush1.bf16.msra.mxu0 %v7836
        %12210 = vmatprep.subr.bf16.mxu0 %v7845
        %12211 = vmatpush1.bf16.msra.mxu0 %v7844
        %12212 = vmatprep.subr.bf16.mxu0 %v7853
        %12213 = vmatpush1.bf16.msra.mxu0 %v7852
        %12214 = vmatprep.subr.bf16.mxu0 %v7861
        %12215 = vmatpush1.bf16.msra.mxu0 %v7860
        %12216 = vmatprep.subr.bf16.mxu0 %v7869
        %12217 = vmatpush1.bf16.msra.mxu0 %v7868
        %12218 = vmatprep.subr.bf16.mxu0 %v7877
        %12219 = vmatpush1.bf16.msra.mxu0 %v7876
        %12220 = vmatprep.subr.bf16.mxu0 %v7885
        %12221 = vmatpush1.bf16.msra.mxu0 %v7884
        %12222 = vmatprep.mubr.bf16.mxu0 %v2167
        %12223 = vmatmul.mubr.bf16.gmra.mrb[0].mxu0 %v2153
        %v12224 = vpop.f32.mrb[0].mxu0
        %v12225 = vadd.f32 %v12184, %v12224
        %v12226 = vpop.f32.mrb[0].mxu0
        %v12227 = vadd.f32 %v12186, %v12226
        %v12228 = vpop.f32.mrb[0].mxu0
        %v12229 = vpop.f32.mrb[0].mxu0
        %12230 = vdwg.mxu0
        %12231 = vmatprep.subr.bf16.mxu0 %v7893
        %12232 = vmatpush1.bf16.msra.mxu0 %v7892
        %12233 = vmatprep.subr.bf16.mxu0 %v7901
        %12234 = vmatpush1.bf16.msra.mxu0 %v7900
        %12235 = vmatprep.subr.bf16.mxu0 %v7909
        %12236 = vmatpush1.bf16.msra.mxu0 %v7908
        %12237 = vmatprep.subr.bf16.mxu0 %v7917
        %12238 = vmatpush1.bf16.msra.mxu0 %v7916
        %12239 = vmatprep.subr.bf16.mxu0 %v7925
        %12240 = vmatpush1.bf16.msra.mxu0 %v7924
        %12241 = vmatprep.subr.bf16.mxu0 %v7933
        %12242 = vmatpush1.bf16.msra.mxu0 %v7932
        %12243 = vmatprep.subr.bf16.mxu0 %v7941
        %12244 = vmatpush1.bf16.msra.mxu0 %v7940
        %12245 = vmatprep.subr.bf16.mxu0 %v7949
        %12246 = vmatpush1.bf16.msra.mxu0 %v7948
        %12247 = vmatprep.subr.bf16.mxu0 %v7957
        %12248 = vmatpush1.bf16.msra.mxu0 %v7956
        %12249 = vmatprep.subr.bf16.mxu0 %v7965
        %12250 = vmatpush1.bf16.msra.mxu0 %v7964
        %12251 = vmatprep.subr.bf16.mxu0 %v7973
        %12252 = vmatpush1.bf16.msra.mxu0 %v7972
        %12253 = vmatprep.subr.bf16.mxu0 %v7981
        %12254 = vmatpush1.bf16.msra.mxu0 %v7980
        %12255 = vmatprep.subr.bf16.mxu0 %v7989
        %12256 = vmatpush1.bf16.msra.mxu0 %v7988
        %12257 = vmatprep.subr.bf16.mxu0 %v7997
        %12258 = vmatpush1.bf16.msra.mxu0 %v7996
        %12259 = vmatprep.subr.bf16.mxu0 %v8005
        %12260 = vmatpush1.bf16.msra.mxu0 %v8004
        %12261 = vmatprep.subr.bf16.mxu0 %v8013
        %12262 = vmatpush1.bf16.msra.mxu0 %v8012
        %12263 = vmatprep.mubr.bf16.mxu0 %v2171
        %12264 = vmatmul.mubr.bf16.gmra.mrb[0].mxu0 %v2169
        %v12265 = vpop.f32.mrb[0].mxu0
        %v12266 = vadd.f32 %v12225, %v12265
        %v12267 = vpop.f32.mrb[0].mxu0
        %v12268 = vadd.f32 %v12227, %v12267
        %v12269 = vpop.f32.mrb[0].mxu0
        %v12270 = vpop.f32.mrb[0].mxu0
        %12271 = vdwg.mxu0
        %12272 = vmatprep.subr.bf16.mxu0 %v8021
        %12273 = vmatpush1.bf16.msra.mxu0 %v8020
        %12274 = vmatprep.subr.bf16.mxu0 %v8029
        %12275 = vmatpush1.bf16.msra.mxu0 %v8028
        %12276 = vmatprep.subr.bf16.mxu0 %v8037
        %12277 = vmatpush1.bf16.msra.mxu0 %v8036
        %12278 = vmatprep.subr.bf16.mxu0 %v8045
        %12279 = vmatpush1.bf16.msra.mxu0 %v8044
        %12280 = vmatprep.subr.bf16.mxu0 %v8053
        %12281 = vmatpush1.bf16.msra.mxu0 %v8052
        %12282 = vmatprep.subr.bf16.mxu0 %v8061
        %12283 = vmatpush1.bf16.msra.mxu0 %v8060
        %12284 = vmatprep.subr.bf16.mxu0 %v8069
        %12285 = vmatpush1.bf16.msra.mxu0 %v8068
        %12286 = vmatprep.subr.bf16.mxu0 %v8077
        %12287 = vmatpush1.bf16.msra.mxu0 %v8076
        %12288 = vmatprep.subr.bf16.mxu0 %v8085
        %12289 = vmatpush1.bf16.msra.mxu0 %v8084
        %12290 = vmatprep.subr.bf16.mxu0 %v8093
        %12291 = vmatpush1.bf16.msra.mxu0 %v8092
        %12292 = vmatprep.subr.bf16.mxu0 %v8101
        %12293 = vmatpush1.bf16.msra.mxu0 %v8100
        %12294 = vmatprep.subr.bf16.mxu0 %v8109
        %12295 = vmatpush1.bf16.msra.mxu0 %v8108
        %12296 = vmatprep.subr.bf16.mxu0 %v8117
        %12297 = vmatpush1.bf16.msra.mxu0 %v8116
        %12298 = vmatprep.subr.bf16.mxu0 %v8125
        %12299 = vmatpush1.bf16.msra.mxu0 %v8124
        %12300 = vmatprep.subr.bf16.mxu0 %v8133
        %12301 = vmatpush1.bf16.msra.mxu0 %v8132
        %12302 = vmatprep.subr.bf16.mxu0 %v8141
        %12303 = vmatpush1.bf16.msra.mxu0 %v8140
        %12304 = vmatprep.mubr.bf16.mxu0 %v2209
        %12305 = vmatmul.mubr.bf16.gmra.mrb[0].mxu0 %v2195
        %v12306 = vpop.f32.mrb[0].mxu0
        %v12307 = vadd.f32 %v12266, %v12306
        %v12308 = vpop.f32.mrb[0].mxu0
        %v12309 = vadd.f32 %v12268, %v12308
        %v12310 = vpop.f32.mrb[0].mxu0
        %v12311 = vpop.f32.mrb[0].mxu0
        %12312 = vdwg.mxu0
        %12313 = vmatprep.subr.bf16.mxu0 %v8149
        %12314 = vmatpush1.bf16.msra.mxu0 %v8148
        %12315 = vmatprep.subr.bf16.mxu0 %v8157
        %12316 = vmatpush1.bf16.msra.mxu0 %v8156
        %12317 = vmatprep.subr.bf16.mxu0 %v8165
        %12318 = vmatpush1.bf16.msra.mxu0 %v8164
        %12319 = vmatprep.subr.bf16.mxu0 %v8173
        %12320 = vmatpush1.bf16.msra.mxu0 %v8172
        %12321 = vmatprep.subr.bf16.mxu0 %v8181
        %12322 = vmatpush1.bf16.msra.mxu0 %v8180
        %12323 = vmatprep.subr.bf16.mxu0 %v8189
        %12324 = vmatpush1.bf16.msra.mxu0 %v8188
        %12325 = vmatprep.subr.bf16.mxu0 %v8197
        %12326 = vmatpush1.bf16.msra.mxu0 %v8196
        %12327 = vmatprep.subr.bf16.mxu0 %v8205
        %12328 = vmatpush1.bf16.msra.mxu0 %v8204
        %12329 = vmatprep.subr.bf16.mxu0 %v8213
        %12330 = vmatpush1.bf16.msra.mxu0 %v8212
        %12331 = vmatprep.subr.bf16.mxu0 %v8221
        %12332 = vmatpush1.bf16.msra.mxu0 %v8220
        %12333 = vmatprep.subr.bf16.mxu0 %v8229
        %12334 = vmatpush1.bf16.msra.mxu0 %v8228
        %12335 = vmatprep.subr.bf16.mxu0 %v8237
        %12336 = vmatpush1.bf16.msra.mxu0 %v8236
        %12337 = vmatprep.subr.bf16.mxu0 %v8245
        %12338 = vmatpush1.bf16.msra.mxu0 %v8244
        %12339 = vmatprep.subr.bf16.mxu0 %v8253
        %12340 = vmatpush1.bf16.msra.mxu0 %v8252
        %12341 = vmatprep.subr.bf16.mxu0 %v8261
        %12342 = vmatpush1.bf16.msra.mxu0 %v8260
        %12343 = vmatprep.subr.bf16.mxu0 %v8269
        %12344 = vmatpush1.bf16.msra.mxu0 %v8268
        %12345 = vmatprep.mubr.bf16.mxu0 %v2219
        %12346 = vmatmul.mubr.bf16.gmra.mrb[0].mxu0 %v2217
        %v12347 = vpop.f32.mrb[0].mxu0
        %v12348 = vadd.f32 %v12307, %v12347
        %v12349 = vpop.f32.mrb[0].mxu0
        %v12350 = vadd.f32 %v12309, %v12349
        %v12351 = vpop.f32.mrb[0].mxu0
        %v12352 = vpop.f32.mrb[0].mxu0
        %12353 = vdwg.mxu0
        %12354 = vmatprep.subr.bf16.mxu0 %v8277
        %12355 = vmatpush1.bf16.msra.mxu0 %v8276
        %12356 = vmatprep.subr.bf16.mxu0 %v8285
        %12357 = vmatpush1.bf16.msra.mxu0 %v8284
        %12358 = vmatprep.subr.bf16.mxu0 %v8293
        %12359 = vmatpush1.bf16.msra.mxu0 %v8292
        %12360 = vmatprep.subr.bf16.mxu0 %v8301
        %12361 = vmatpush1.bf16.msra.mxu0 %v8300
        %12362 = vmatprep.subr.bf16.mxu0 %v8309
        %12363 = vmatpush1.bf16.msra.mxu0 %v8308
        %12364 = vmatprep.subr.bf16.mxu0 %v8317
        %12365 = vmatpush1.bf16.msra.mxu0 %v8316
        %12366 = vmatprep.subr.bf16.mxu0 %v8325
        %12367 = vmatpush1.bf16.msra.mxu0 %v8324
        %12368 = vmatprep.subr.bf16.mxu0 %v8333
        %12369 = vmatpush1.bf16.msra.mxu0 %v8332
        %12370 = vmatprep.subr.bf16.mxu0 %v8341
        %12371 = vmatpush1.bf16.msra.mxu0 %v8340
        %12372 = vmatprep.subr.bf16.mxu0 %v8349
        %12373 = vmatpush1.bf16.msra.mxu0 %v8348
        %12374 = vmatprep.subr.bf16.mxu0 %v8357
        %12375 = vmatpush1.bf16.msra.mxu0 %v8356
        %12376 = vmatprep.subr.bf16.mxu0 %v8365
        %12377 = vmatpush1.bf16.msra.mxu0 %v8364
        %12378 = vmatprep.subr.bf16.mxu0 %v8373
        %12379 = vmatpush1.bf16.msra.mxu0 %v8372
        %12380 = vmatprep.subr.bf16.mxu0 %v8381
        %12381 = vmatpush1.bf16.msra.mxu0 %v8380
        %12382 = vmatprep.subr.bf16.mxu0 %v8389
        %12383 = vmatpush1.bf16.msra.mxu0 %v8388
        %12384 = vmatprep.subr.bf16.mxu0 %v8397
        %12385 = vmatpush1.bf16.msra.mxu0 %v8396
        %12386 = vmatprep.mubr.bf16.mxu0 %v2216
        %12387 = vmatmul.mubr.bf16.gmra.mrb[0].mxu0 %v2202
        %v12388 = vpop.f32.mrb[0].mxu0
        %v12389 = vadd.f32 %v12348, %v12388
        %v12390 = vpop.f32.mrb[0].mxu0
        %v12391 = vadd.f32 %v12350, %v12390
        %v12392 = vpop.f32.mrb[0].mxu0
        %v12393 = vpop.f32.mrb[0].mxu0
        %12394 = vdwg.mxu0
        %12395 = vmatprep.subr.bf16.mxu0 %v8405
        %12396 = vmatpush1.bf16.msra.mxu0 %v8404
        %12397 = vmatprep.subr.bf16.mxu0 %v8413
        %12398 = vmatpush1.bf16.msra.mxu0 %v8412
        %12399 = vmatprep.subr.bf16.mxu0 %v8421
        %12400 = vmatpush1.bf16.msra.mxu0 %v8420
        %12401 = vmatprep.subr.bf16.mxu0 %v8429
        %12402 = vmatpush1.bf16.msra.mxu0 %v8428
        %12403 = vmatprep.subr.bf16.mxu0 %v8437
        %12404 = vmatpush1.bf16.msra.mxu0 %v8436
        %12405 = vmatprep.subr.bf16.mxu0 %v8445
        %12406 = vmatpush1.bf16.msra.mxu0 %v8444
        %12407 = vmatprep.subr.bf16.mxu0 %v8453
        %12408 = vmatpush1.bf16.msra.mxu0 %v8452
        %12409 = vmatprep.subr.bf16.mxu0 %v8461
        %12410 = vmatpush1.bf16.msra.mxu0 %v8460
        %12411 = vmatprep.subr.bf16.mxu0 %v8469
        %12412 = vmatpush1.bf16.msra.mxu0 %v8468
        %12413 = vmatprep.subr.bf16.mxu0 %v8477
        %12414 = vmatpush1.bf16.msra.mxu0 %v8476
        %12415 = vmatprep.subr.bf16.mxu0 %v8485
        %12416 = vmatpush1.bf16.msra.mxu0 %v8484
        %12417 = vmatprep.subr.bf16.mxu0 %v8493
        %12418 = vmatpush1.bf16.msra.mxu0 %v8492
        %12419 = vmatprep.subr.bf16.mxu0 %v8501
        %12420 = vmatpush1.bf16.msra.mxu0 %v8500
        %12421 = vmatprep.subr.bf16.mxu0 %v8509
        %12422 = vmatpush1.bf16.msra.mxu0 %v8508
        %12423 = vmatprep.subr.bf16.mxu0 %v8517
        %12424 = vmatpush1.bf16.msra.mxu0 %v8516
        %12425 = vmatprep.subr.bf16.mxu0 %v8525
        %12426 = vmatpush1.bf16.msra.mxu0 %v8524
        %12427 = vmatprep.mubr.bf16.mxu0 %v2220
        %12428 = vmatmul.mubr.bf16.gmra.mrb[0].mxu0 %v2218
        %v12429 = vpop.f32.mrb[0].mxu0
        %v12430 = vadd.f32 %v12389, %v12429
        %v12431 = vpop.f32.mrb[0].mxu0
        %v12432 = vadd.f32 %v12391, %v12431
        %v12433 = vpop.f32.mrb[0].mxu0
        %v12434 = vpop.f32.mrb[0].mxu0
        %12435 = vdwg.mxu0
        %12436 = vmatprep.subr.bf16.mxu0 %v8533
        %12437 = vmatpush1.bf16.msra.mxu0 %v8532
        %12438 = vmatprep.subr.bf16.mxu0 %v8541
        %12439 = vmatpush1.bf16.msra.mxu0 %v8540
        %12440 = vmatprep.subr.bf16.mxu0 %v8549
        %12441 = vmatpush1.bf16.msra.mxu0 %v8548
        %12442 = vmatprep.subr.bf16.mxu0 %v8557
        %12443 = vmatpush1.bf16.msra.mxu0 %v8556
        %12444 = vmatprep.subr.bf16.mxu0 %v8565
        %12445 = vmatpush1.bf16.msra.mxu0 %v8564
        %12446 = vmatprep.subr.bf16.mxu0 %v8573
        %12447 = vmatpush1.bf16.msra.mxu0 %v8572
        %12448 = vmatprep.subr.bf16.mxu0 %v8581
        %12449 = vmatpush1.bf16.msra.mxu0 %v8580
        %12450 = vmatprep.subr.bf16.mxu0 %v8589
        %12451 = vmatpush1.bf16.msra.mxu0 %v8588
        %12452 = vmatprep.subr.bf16.mxu0 %v8597
        %12453 = vmatpush1.bf16.msra.mxu0 %v8596
        %12454 = vmatprep.subr.bf16.mxu0 %v8605
        %12455 = vmatpush1.bf16.msra.mxu0 %v8604
        %12456 = vmatprep.subr.bf16.mxu0 %v8613
        %12457 = vmatpush1.bf16.msra.mxu0 %v8612
        %12458 = vmatprep.subr.bf16.mxu0 %v8621
        %12459 = vmatpush1.bf16.msra.mxu0 %v8620
        %12460 = vmatprep.subr.bf16.mxu0 %v8629
        %12461 = vmatpush1.bf16.msra.mxu0 %v8628
        %12462 = vmatprep.subr.bf16.mxu0 %v8637
        %12463 = vmatpush1.bf16.msra.mxu0 %v8636
        %12464 = vmatprep.subr.bf16.mxu0 %v8645
        %12465 = vmatpush1.bf16.msra.mxu0 %v8644
        %12466 = vmatprep.subr.bf16.mxu0 %v8653
        %12467 = vmatpush1.bf16.msra.mxu0 %v8652
        %12468 = vmatprep.mubr.bf16.mxu0 %v2258
        %12469 = vmatmul.mubr.bf16.gmra.mrb[0].mxu0 %v2244
        %v12470 = vpop.f32.mrb[0].mxu0
        %v12471 = vadd.f32 %v12430, %v12470
        %v12472 = vpop.f32.mrb[0].mxu0
        %v12473 = vadd.f32 %v12432, %v12472
        %v12474 = vpop.f32.mrb[0].mxu0
        %v12475 = vpop.f32.mrb[0].mxu0
        %12476 = vdwg.mxu0
        %12477 = vmatprep.subr.bf16.mxu0 %v8661
        %12478 = vmatpush1.bf16.msra.mxu0 %v8660
        %12479 = vmatprep.subr.bf16.mxu0 %v8669
        %12480 = vmatpush1.bf16.msra.mxu0 %v8668
        %12481 = vmatprep.subr.bf16.mxu0 %v8677
        %12482 = vmatpush1.bf16.msra.mxu0 %v8676
        %12483 = vmatprep.subr.bf16.mxu0 %v8685
        %12484 = vmatpush1.bf16.msra.mxu0 %v8684
        %12485 = vmatprep.subr.bf16.mxu0 %v8693
        %12486 = vmatpush1.bf16.msra.mxu0 %v8692
        %12487 = vmatprep.subr.bf16.mxu0 %v8701
        %12488 = vmatpush1.bf16.msra.mxu0 %v8700
        %12489 = vmatprep.subr.bf16.mxu0 %v8709
        %12490 = vmatpush1.bf16.msra.mxu0 %v8708
        %12491 = vmatprep.subr.bf16.mxu0 %v8717
        %12492 = vmatpush1.bf16.msra.mxu0 %v8716
        %12493 = vmatprep.subr.bf16.mxu0 %v8725
        %12494 = vmatpush1.bf16.msra.mxu0 %v8724
        %12495 = vmatprep.subr.bf16.mxu0 %v8733
        %12496 = vmatpush1.bf16.msra.mxu0 %v8732
        %12497 = vmatprep.subr.bf16.mxu0 %v8741
        %12498 = vmatpush1.bf16.msra.mxu0 %v8740
        %12499 = vmatprep.subr.bf16.mxu0 %v8749
        %12500 = vmatpush1.bf16.msra.mxu0 %v8748
        %12501 = vmatprep.subr.bf16.mxu0 %v8757
        %12502 = vmatpush1.bf16.msra.mxu0 %v8756
        %12503 = vmatprep.subr.bf16.mxu0 %v8765
        %12504 = vmatpush1.bf16.msra.mxu0 %v8764
        %12505 = vmatprep.subr.bf16.mxu0 %v8773
        %12506 = vmatpush1.bf16.msra.mxu0 %v8772
        %12507 = vmatprep.subr.bf16.mxu0 %v8781
        %12508 = vmatpush1.bf16.msra.mxu0 %v8780
        %12509 = vmatprep.mubr.bf16.mxu0 %v2268
        %12510 = vmatmul.mubr.bf16.gmra.mrb[0].mxu0 %v2266
        %v12511 = vpop.f32.mrb[0].mxu0
        %v12512 = vadd.f32 %v12471, %v12511
        %v12513 = vpop.f32.mrb[0].mxu0
        %v12514 = vadd.f32 %v12473, %v12513
        %v12515 = vpop.f32.mrb[0].mxu0
        %v12516 = vpop.f32.mrb[0].mxu0
        %12517 = vdwg.mxu0
        %12518 = vmatprep.subr.bf16.mxu0 %v8789
        %12519 = vmatpush1.bf16.msra.mxu0 %v8788
        %12520 = vmatprep.subr.bf16.mxu0 %v8797
        %12521 = vmatpush1.bf16.msra.mxu0 %v8796
        %12522 = vmatprep.subr.bf16.mxu0 %v8805
        %12523 = vmatpush1.bf16.msra.mxu0 %v8804
        %12524 = vmatprep.subr.bf16.mxu0 %v8813
        %12525 = vmatpush1.bf16.msra.mxu0 %v8812
        %12526 = vmatprep.subr.bf16.mxu0 %v8821
        %12527 = vmatpush1.bf16.msra.mxu0 %v8820
        %12528 = vmatprep.subr.bf16.mxu0 %v8829
        %12529 = vmatpush1.bf16.msra.mxu0 %v8828
        %12530 = vmatprep.subr.bf16.mxu0 %v8837
        %12531 = vmatpush1.bf16.msra.mxu0 %v8836
        %12532 = vmatprep.subr.bf16.mxu0 %v8845
        %12533 = vmatpush1.bf16.msra.mxu0 %v8844
        %12534 = vmatprep.subr.bf16.mxu0 %v8853
        %12535 = vmatpush1.bf16.msra.mxu0 %v8852
        %12536 = vmatprep.subr.bf16.mxu0 %v8861
        %12537 = vmatpush1.bf16.msra.mxu0 %v8860
        %12538 = vmatprep.subr.bf16.mxu0 %v8869
        %12539 = vmatpush1.bf16.msra.mxu0 %v8868
        %12540 = vmatprep.subr.bf16.mxu0 %v8877
        %12541 = vmatpush1.bf16.msra.mxu0 %v8876
        %12542 = vmatprep.subr.bf16.mxu0 %v8885
        %12543 = vmatpush1.bf16.msra.mxu0 %v8884
        %12544 = vmatprep.subr.bf16.mxu0 %v8893
        %12545 = vmatpush1.bf16.msra.mxu0 %v8892
        %12546 = vmatprep.subr.bf16.mxu0 %v8901
        %12547 = vmatpush1.bf16.msra.mxu0 %v8900
        %12548 = vmatprep.subr.bf16.mxu0 %v8909
        %12549 = vmatpush1.bf16.msra.mxu0 %v8908
        %12550 = vmatprep.mubr.bf16.mxu0 %v2265
        %12551 = vmatmul.mubr.bf16.gmra.mrb[0].mxu0 %v2251
        %v12552 = vpop.f32.mrb[0].mxu0
        %v12553 = vadd.f32 %v12512, %v12552
        %v12554 = vpop.f32.mrb[0].mxu0
        %v12555 = vadd.f32 %v12514, %v12554
        %v12556 = vpop.f32.mrb[0].mxu0
        %v12557 = vpop.f32.mrb[0].mxu0
        %12558 = vdwg.mxu0
        %12559 = vmatprep.subr.bf16.mxu0 %v8917
        %12560 = vmatpush1.bf16.msra.mxu0 %v8916
        %12561 = vmatprep.subr.bf16.mxu0 %v8925
        %12562 = vmatpush1.bf16.msra.mxu0 %v8924
        %12563 = vmatprep.subr.bf16.mxu0 %v8933
        %12564 = vmatpush1.bf16.msra.mxu0 %v8932
        %12565 = vmatprep.subr.bf16.mxu0 %v8941
        %12566 = vmatpush1.bf16.msra.mxu0 %v8940
        %12567 = vmatprep.subr.bf16.mxu0 %v8949
        %12568 = vmatpush1.bf16.msra.mxu0 %v8948
        %12569 = vmatprep.subr.bf16.mxu0 %v8957
        %12570 = vmatpush1.bf16.msra.mxu0 %v8956
        %12571 = vmatprep.subr.bf16.mxu0 %v8965
        %12572 = vmatpush1.bf16.msra.mxu0 %v8964
        %12573 = vmatprep.subr.bf16.mxu0 %v8973
        %12574 = vmatpush1.bf16.msra.mxu0 %v8972
        %12575 = vmatprep.subr.bf16.mxu0 %v8981
        %12576 = vmatpush1.bf16.msra.mxu0 %v8980
        %12577 = vmatprep.subr.bf16.mxu0 %v8989
        %12578 = vmatpush1.bf16.msra.mxu0 %v8988
        %12579 = vmatprep.subr.bf16.mxu0 %v8997
        %12580 = vmatpush1.bf16.msra.mxu0 %v8996
        %12581 = vmatprep.subr.bf16.mxu0 %v9005
        %12582 = vmatpush1.bf16.msra.mxu0 %v9004
        %12583 = vmatprep.subr.bf16.mxu0 %v9013
        %12584 = vmatpush1.bf16.msra.mxu0 %v9012
        %12585 = vmatprep.subr.bf16.mxu0 %v9021
        %12586 = vmatpush1.bf16.msra.mxu0 %v9020
        %12587 = vmatprep.subr.bf16.mxu0 %v9029
        %12588 = vmatpush1.bf16.msra.mxu0 %v9028
        %12589 = vmatprep.subr.bf16.mxu0 %v9037
        %12590 = vmatpush1.bf16.msra.mxu0 %v9036
        %12591 = vmatprep.mubr.bf16.mxu0 %v2269
        %12592 = vmatmul.mubr.bf16.gmra.mrb[0].mxu0 %v2267
        %v12593 = vpop.f32.mrb[0].mxu0
        %v12594 = vadd.f32 %v12553, %v12593
        %v12595 = vpop.f32.mrb[0].mxu0
        %v12596 = vadd.f32 %v12555, %v12595
        %v12597 = vpop.f32.mrb[0].mxu0
        %v12598 = vpop.f32.mrb[0].mxu0
        %12599 = vdwg.mxu0
        %12600 = vmatprep.subr.bf16.mxu0 %v9045
        %12601 = vmatpush1.bf16.msra.mxu0 %v9044
        %12602 = vmatprep.subr.bf16.mxu0 %v9053
        %12603 = vmatpush1.bf16.msra.mxu0 %v9052
        %12604 = vmatprep.subr.bf16.mxu0 %v9061
        %12605 = vmatpush1.bf16.msra.mxu0 %v9060
        %12606 = vmatprep.subr.bf16.mxu0 %v9069
        %12607 = vmatpush1.bf16.msra.mxu0 %v9068
        %12608 = vmatprep.subr.bf16.mxu0 %v9077
        %12609 = vmatpush1.bf16.msra.mxu0 %v9076
        %12610 = vmatprep.subr.bf16.mxu0 %v9085
        %12611 = vmatpush1.bf16.msra.mxu0 %v9084
        %12612 = vmatprep.subr.bf16.mxu0 %v9093
        %12613 = vmatpush1.bf16.msra.mxu0 %v9092
        %12614 = vmatprep.subr.bf16.mxu0 %v9101
        %12615 = vmatpush1.bf16.msra.mxu0 %v9100
        %12616 = vmatprep.subr.bf16.mxu0 %v9109
        %12617 = vmatpush1.bf16.msra.mxu0 %v9108
        %12618 = vmatprep.subr.bf16.mxu0 %v9117
        %12619 = vmatpush1.bf16.msra.mxu0 %v9116
        %12620 = vmatprep.subr.bf16.mxu0 %v9125
        %12621 = vmatpush1.bf16.msra.mxu0 %v9124
        %12622 = vmatprep.subr.bf16.mxu0 %v9133
        %12623 = vmatpush1.bf16.msra.mxu0 %v9132
        %12624 = vmatprep.subr.bf16.mxu0 %v9141
        %12625 = vmatpush1.bf16.msra.mxu0 %v9140
        %12626 = vmatprep.subr.bf16.mxu0 %v9149
        %12627 = vmatpush1.bf16.msra.mxu0 %v9148
        %12628 = vmatprep.subr.bf16.mxu0 %v9157
        %12629 = vmatpush1.bf16.msra.mxu0 %v9156
        %12630 = vmatprep.subr.bf16.mxu0 %v9165
        %12631 = vmatpush1.bf16.msra.mxu0 %v9164
        %12632 = vmatprep.mubr.bf16.mxu0 %v2291
        %12633 = vmatmul.mubr.bf16.gmra.mrb[0].mxu0 %v2284
        %v12634 = vpop.f32.mrb[0].mxu0
        %v12635 = vadd.f32 %v12594, %v12634
        %v12636 = vpop.f32.mrb[0].mxu0
        %v12637 = vadd.f32 %v12596, %v12636
        %v12638 = vpop.f32.mrb[0].mxu0
        %v12639 = vpop.f32.mrb[0].mxu0
        %12640 = vdwg.mxu0
        %12641 = vmatprep.subr.bf16.mxu0 %v9173
        %12642 = vmatpush1.bf16.msra.mxu0 %v9172
        %12643 = vmatprep.subr.bf16.mxu0 %v9181
        %12644 = vmatpush1.bf16.msra.mxu0 %v9180
        %12645 = vmatprep.subr.bf16.mxu0 %v9189
        %12646 = vmatpush1.bf16.msra.mxu0 %v9188
        %12647 = vmatprep.subr.bf16.mxu0 %v9197
        %12648 = vmatpush1.bf16.msra.mxu0 %v9196
        %12649 = vmatprep.subr.bf16.mxu0 %v9205
        %12650 = vmatpush1.bf16.msra.mxu0 %v9204
        %12651 = vmatprep.subr.bf16.mxu0 %v9213
        %12652 = vmatpush1.bf16.msra.mxu0 %v9212
        %12653 = vmatprep.subr.bf16.mxu0 %v9221
        %12654 = vmatpush1.bf16.msra.mxu0 %v9220
        %12655 = vmatprep.subr.bf16.mxu0 %v9229
        %12656 = vmatpush1.bf16.msra.mxu0 %v9228
        %12657 = vmatprep.subr.bf16.mxu0 0
        %12658 = vmatpush1.bf16.msra.mxu0 0
        %12659 = vmatprep.subr.bf16.mxu0 0
        %12660 = vmatpush1.bf16.msra.mxu0 0
        %12661 = vmatprep.subr.bf16.mxu0 0
        %12662 = vmatpush1.bf16.msra.mxu0 0
        %12663 = vmatprep.subr.bf16.mxu0 0
        %12664 = vmatpush1.bf16.msra.mxu0 0
        %12665 = vmatprep.subr.bf16.mxu0 0
        %12666 = vmatpush1.bf16.msra.mxu0 0
        %12667 = vmatprep.subr.bf16.mxu0 0
        %12668 = vmatpush1.bf16.msra.mxu0 0
        %12669 = vmatprep.subr.bf16.mxu0 0
        %12670 = vmatpush1.bf16.msra.mxu0 0
        %12671 = vmatprep.subr.bf16.mxu0 0
        %12672 = vmatpush1.bf16.msra.mxu0 0
        %12673 = vmatprep.mubr.bf16.mxu0 0
        %12674 = vmatmul.mubr.bf16.gmra.mrb[0].mxu0 %v2292
        %v12675 = vpop.f32.mrb[0].mxu0
        %v12676 = vadd.f32 %v12635, %v12675
        %v12677 = vpop.f32.mrb[0].mxu0
        %v12678 = vadd.f32 %v12637, %v12677
        %v12679 = vpop.f32.mrb[0].mxu0
        %v12680 = vpop.f32.mrb[0].mxu0
        %12681 = vdwg.mxu0
        %12682 = vmatprep.subr.bf16.mxu0 %v7511
        %12683 = vmatpush1.bf16.msra.mxu0 %v7510
        %12684 = vmatprep.subr.bf16.mxu0 %v7519
        %12685 = vmatpush1.bf16.msra.mxu0 %v7518
        %12686 = vmatprep.subr.bf16.mxu0 %v7527
        %12687 = vmatpush1.bf16.msra.mxu0 %v7526
        %12688 = vmatprep.subr.bf16.mxu0 %v7535
        %12689 = vmatpush1.bf16.msra.mxu0 %v7534
        %12690 = vmatprep.subr.bf16.mxu0 %v7543
        %12691 = vmatpush1.bf16.msra.mxu0 %v7542
        %12692 = vmatprep.subr.bf16.mxu0 %v7551
        %12693 = vmatpush1.bf16.msra.mxu0 %v7550
        %12694 = vmatprep.subr.bf16.mxu0 %v7559
        %12695 = vmatpush1.bf16.msra.mxu0 %v7558
        %12696 = vmatprep.subr.bf16.mxu0 %v7567
        %12697 = vmatpush1.bf16.msra.mxu0 %v7566
        %12698 = vmatprep.subr.bf16.mxu0 %v7575
        %12699 = vmatpush1.bf16.msra.mxu0 %v7574
        %12700 = vmatprep.subr.bf16.mxu0 %v7583
        %12701 = vmatpush1.bf16.msra.mxu0 %v7582
        %12702 = vmatprep.subr.bf16.mxu0 %v7591
        %12703 = vmatpush1.bf16.msra.mxu0 %v7590
        %12704 = vmatprep.subr.bf16.mxu0 %v7599
        %12705 = vmatpush1.bf16.msra.mxu0 %v7598
        %12706 = vmatprep.subr.bf16.mxu0 %v7607
        %12707 = vmatpush1.bf16.msra.mxu0 %v7606
        %12708 = vmatprep.subr.bf16.mxu0 %v7615
        %12709 = vmatpush1.bf16.msra.mxu0 %v7614
        %12710 = vmatprep.subr.bf16.mxu0 %v7623
        %12711 = vmatpush1.bf16.msra.mxu0 %v7622
        %12712 = vmatprep.subr.bf16.mxu0 %v7631
        %12713 = vmatpush1.bf16.msra.mxu0 %v7630
        %12714 = vmatprep.mubr.bf16.mxu0 %v2160
        %12715 = vmatmul.mubr.bf16.gmra.mrb[0].mxu0 %v2146
        %v12716 = vpop.f32.mrb[0].mxu0
        %v12717 = vadd.f32 0.0, %v12716
        %v12718 = vpop.f32.mrb[0].mxu0
        %v12719 = vadd.f32 0.0, %v12718
        %v12720 = vpop.f32.mrb[0].mxu0
        %v12721 = vpop.f32.mrb[0].mxu0
        %12722 = vdwg.mxu0
        %12723 = vmatprep.subr.bf16.mxu0 %v7639
        %12724 = vmatpush1.bf16.msra.mxu0 %v7638
        %12725 = vmatprep.subr.bf16.mxu0 %v7647
        %12726 = vmatpush1.bf16.msra.mxu0 %v7646
        %12727 = vmatprep.subr.bf16.mxu0 %v7655
        %12728 = vmatpush1.bf16.msra.mxu0 %v7654
        %12729 = vmatprep.subr.bf16.mxu0 %v7663
        %12730 = vmatpush1.bf16.msra.mxu0 %v7662
        %12731 = vmatprep.subr.bf16.mxu0 %v7671
        %12732 = vmatpush1.bf16.msra.mxu0 %v7670
        %12733 = vmatprep.subr.bf16.mxu0 %v7679
        %12734 = vmatpush1.bf16.msra.mxu0 %v7678
        %12735 = vmatprep.subr.bf16.mxu0 %v7687
        %12736 = vmatpush1.bf16.msra.mxu0 %v7686
        %12737 = vmatprep.subr.bf16.mxu0 %v7695
        %12738 = vmatpush1.bf16.msra.mxu0 %v7694
        %12739 = vmatprep.subr.bf16.mxu0 %v7703
        %12740 = vmatpush1.bf16.msra.mxu0 %v7702
        %12741 = vmatprep.subr.bf16.mxu0 %v7711
        %12742 = vmatpush1.bf16.msra.mxu0 %v7710
        %12743 = vmatprep.subr.bf16.mxu0 %v7719
        %12744 = vmatpush1.bf16.msra.mxu0 %v7718
        %12745 = vmatprep.subr.bf16.mxu0 %v7727
        %12746 = vmatpush1.bf16.msra.mxu0 %v7726
        %12747 = vmatprep.subr.bf16.mxu0 %v7735
        %12748 = vmatpush1.bf16.msra.mxu0 %v7734
        %12749 = vmatprep.subr.bf16.mxu0 %v7743
        %12750 = vmatpush1.bf16.msra.mxu0 %v7742
        %12751 = vmatprep.subr.bf16.mxu0 %v7751
        %12752 = vmatpush1.bf16.msra.mxu0 %v7750
        %12753 = vmatprep.subr.bf16.mxu0 %v7759
        %12754 = vmatpush1.bf16.msra.mxu0 %v7758
        %12755 = vmatprep.mubr.bf16.mxu0 %v2170
        %12756 = vmatmul.mubr.bf16.gmra.mrb[0].mxu0 %v2168
        %v12757 = vpop.f32.mrb[0].mxu0
        %v12758 = vadd.f32 %v12717, %v12757
        %v12759 = vpop.f32.mrb[0].mxu0
        %v12760 = vadd.f32 %v12719, %v12759
        %v12761 = vpop.f32.mrb[0].mxu0
        %v12762 = vpop.f32.mrb[0].mxu0
        %12763 = vdwg.mxu0
        %12764 = vmatprep.subr.bf16.mxu0 %v7767
        %12765 = vmatpush1.bf16.msra.mxu0 %v7766
        %12766 = vmatprep.subr.bf16.mxu0 %v7775
        %12767 = vmatpush1.bf16.msra.mxu0 %v7774
        %12768 = vmatprep.subr.bf16.mxu0 %v7783
        %12769 = vmatpush1.bf16.msra.mxu0 %v7782
        %12770 = vmatprep.subr.bf16.mxu0 %v7791
        %12771 = vmatpush1.bf16.msra.mxu0 %v7790
        %12772 = vmatprep.subr.bf16.mxu0 %v7799
        %12773 = vmatpush1.bf16.msra.mxu0 %v7798
        %12774 = vmatprep.subr.bf16.mxu0 %v7807
        %12775 = vmatpush1.bf16.msra.mxu0 %v7806
        %12776 = vmatprep.subr.bf16.mxu0 %v7815
        %12777 = vmatpush1.bf16.msra.mxu0 %v7814
        %12778 = vmatprep.subr.bf16.mxu0 %v7823
        %12779 = vmatpush1.bf16.msra.mxu0 %v7822
        %12780 = vmatprep.subr.bf16.mxu0 %v7831
        %12781 = vmatpush1.bf16.msra.mxu0 %v7830
        %12782 = vmatprep.subr.bf16.mxu0 %v7839
        %12783 = vmatpush1.bf16.msra.mxu0 %v7838
        %12784 = vmatprep.subr.bf16.mxu0 %v7847
        %12785 = vmatpush1.bf16.msra.mxu0 %v7846
        %12786 = vmatprep.subr.bf16.mxu0 %v7855
        %12787 = vmatpush1.bf16.msra.mxu0 %v7854
        %12788 = vmatprep.subr.bf16.mxu0 %v7863
        %12789 = vmatpush1.bf16.msra.mxu0 %v7862
        %12790 = vmatprep.subr.bf16.mxu0 %v7871
        %12791 = vmatpush1.bf16.msra.mxu0 %v7870
        %12792 = vmatprep.subr.bf16.mxu0 %v7879
        %12793 = vmatpush1.bf16.msra.mxu0 %v7878
        %12794 = vmatprep.subr.bf16.mxu0 %v7887
        %12795 = vmatpush1.bf16.msra.mxu0 %v7886
        %12796 = vmatprep.mubr.bf16.mxu0 %v2167
        %12797 = vmatmul.mubr.bf16.gmra.mrb[0].mxu0 %v2153
        %v12798 = vpop.f32.mrb[0].mxu0
        %v12799 = vadd.f32 %v12758, %v12798
        %v12800 = vpop.f32.mrb[0].mxu0
        %v12801 = vadd.f32 %v12760, %v12800
        %v12802 = vpop.f32.mrb[0].mxu0
        %v12803 = vpop.f32.mrb[0].mxu0
        %12804 = vdwg.mxu0
        %12805 = vmatprep.subr.bf16.mxu0 %v7895
        %12806 = vmatpush1.bf16.msra.mxu0 %v7894
        %12807 = vmatprep.subr.bf16.mxu0 %v7903
        %12808 = vmatpush1.bf16.msra.mxu0 %v7902
        %12809 = vmatprep.subr.bf16.mxu0 %v7911
        %12810 = vmatpush1.bf16.msra.mxu0 %v7910
        %12811 = vmatprep.subr.bf16.mxu0 %v7919
        %12812 = vmatpush1.bf16.msra.mxu0 %v7918
        %12813 = vmatprep.subr.bf16.mxu0 %v7927
        %12814 = vmatpush1.bf16.msra.mxu0 %v7926
        %12815 = vmatprep.subr.bf16.mxu0 %v7935
        %12816 = vmatpush1.bf16.msra.mxu0 %v7934
        %12817 = vmatprep.subr.bf16.mxu0 %v7943
        %12818 = vmatpush1.bf16.msra.mxu0 %v7942
        %12819 = vmatprep.subr.bf16.mxu0 %v7951
        %12820 = vmatpush1.bf16.msra.mxu0 %v7950
        %12821 = vmatprep.subr.bf16.mxu0 %v7959
        %12822 = vmatpush1.bf16.msra.mxu0 %v7958
        %12823 = vmatprep.subr.bf16.mxu0 %v7967
        %12824 = vmatpush1.bf16.msra.mxu0 %v7966
        %12825 = vmatprep.subr.bf16.mxu0 %v7975
        %12826 = vmatpush1.bf16.msra.mxu0 %v7974
        %12827 = vmatprep.subr.bf16.mxu0 %v7983
        %12828 = vmatpush1.bf16.msra.mxu0 %v7982
        %12829 = vmatprep.subr.bf16.mxu0 %v7991
        %12830 = vmatpush1.bf16.msra.mxu0 %v7990
        %12831 = vmatprep.subr.bf16.mxu0 %v7999
        %12832 = vmatpush1.bf16.msra.mxu0 %v7998
        %12833 = vmatprep.subr.bf16.mxu0 %v8007
        %12834 = vmatpush1.bf16.msra.mxu0 %v8006
        %12835 = vmatprep.subr.bf16.mxu0 %v8015
        %12836 = vmatpush1.bf16.msra.mxu0 %v8014
        %12837 = vmatprep.mubr.bf16.mxu0 %v2171
        %12838 = vmatmul.mubr.bf16.gmra.mrb[0].mxu0 %v2169
        %v12839 = vpop.f32.mrb[0].mxu0
        %v12840 = vadd.f32 %v12799, %v12839
        %v12841 = vpop.f32.mrb[0].mxu0
        %v12842 = vadd.f32 %v12801, %v12841
        %v12843 = vpop.f32.mrb[0].mxu0
        %v12844 = vpop.f32.mrb[0].mxu0
        %12845 = vdwg.mxu0
        %12846 = vmatprep.subr.bf16.mxu0 %v8023
        %12847 = vmatpush1.bf16.msra.mxu0 %v8022
        %12848 = vmatprep.subr.bf16.mxu0 %v8031
        %12849 = vmatpush1.bf16.msra.mxu0 %v8030
        %12850 = vmatprep.subr.bf16.mxu0 %v8039
        %12851 = vmatpush1.bf16.msra.mxu0 %v8038
        %12852 = vmatprep.subr.bf16.mxu0 %v8047
        %12853 = vmatpush1.bf16.msra.mxu0 %v8046
        %12854 = vmatprep.subr.bf16.mxu0 %v8055
        %12855 = vmatpush1.bf16.msra.mxu0 %v8054
        %12856 = vmatprep.subr.bf16.mxu0 %v8063
        %12857 = vmatpush1.bf16.msra.mxu0 %v8062
        %12858 = vmatprep.subr.bf16.mxu0 %v8071
        %12859 = vmatpush1.bf16.msra.mxu0 %v8070
        %12860 = vmatprep.subr.bf16.mxu0 %v8079
        %12861 = vmatpush1.bf16.msra.mxu0 %v8078
        %12862 = vmatprep.subr.bf16.mxu0 %v8087
        %12863 = vmatpush1.bf16.msra.mxu0 %v8086
        %12864 = vmatprep.subr.bf16.mxu0 %v8095
        %12865 = vmatpush1.bf16.msra.mxu0 %v8094
        %12866 = vmatprep.subr.bf16.mxu0 %v8103
        %12867 = vmatpush1.bf16.msra.mxu0 %v8102
        %12868 = vmatprep.subr.bf16.mxu0 %v8111
        %12869 = vmatpush1.bf16.msra.mxu0 %v8110
        %12870 = vmatprep.subr.bf16.mxu0 %v8119
        %12871 = vmatpush1.bf16.msra.mxu0 %v8118
        %12872 = vmatprep.subr.bf16.mxu0 %v8127
        %12873 = vmatpush1.bf16.msra.mxu0 %v8126
        %12874 = vmatprep.subr.bf16.mxu0 %v8135
        %12875 = vmatpush1.bf16.msra.mxu0 %v8134
        %12876 = vmatprep.subr.bf16.mxu0 %v8143
        %12877 = vmatpush1.bf16.msra.mxu0 %v8142
        %12878 = vmatprep.mubr.bf16.mxu0 %v2209
        %12879 = vmatmul.mubr.bf16.gmra.mrb[0].mxu0 %v2195
        %v12880 = vpop.f32.mrb[0].mxu0
        %v12881 = vadd.f32 %v12840, %v12880
        %v12882 = vpop.f32.mrb[0].mxu0
        %v12883 = vadd.f32 %v12842, %v12882
        %v12884 = vpop.f32.mrb[0].mxu0
        %v12885 = vpop.f32.mrb[0].mxu0
        %12886 = vdwg.mxu0
        %12887 = vmatprep.subr.bf16.mxu0 %v8151
        %12888 = vmatpush1.bf16.msra.mxu0 %v8150
        %12889 = vmatprep.subr.bf16.mxu0 %v8159
        %12890 = vmatpush1.bf16.msra.mxu0 %v8158
        %12891 = vmatprep.subr.bf16.mxu0 %v8167
        %12892 = vmatpush1.bf16.msra.mxu0 %v8166
        %12893 = vmatprep.subr.bf16.mxu0 %v8175
        %12894 = vmatpush1.bf16.msra.mxu0 %v8174
        %12895 = vmatprep.subr.bf16.mxu0 %v8183
        %12896 = vmatpush1.bf16.msra.mxu0 %v8182
        %12897 = vmatprep.subr.bf16.mxu0 %v8191
        %12898 = vmatpush1.bf16.msra.mxu0 %v8190
        %12899 = vmatprep.subr.bf16.mxu0 %v8199
        %12900 = vmatpush1.bf16.msra.mxu0 %v8198
        %12901 = vmatprep.subr.bf16.mxu0 %v8207
        %12902 = vmatpush1.bf16.msra.mxu0 %v8206
        %12903 = vmatprep.subr.bf16.mxu0 %v8215
        %12904 = vmatpush1.bf16.msra.mxu0 %v8214
        %12905 = vmatprep.subr.bf16.mxu0 %v8223
        %12906 = vmatpush1.bf16.msra.mxu0 %v8222
        %12907 = vmatprep.subr.bf16.mxu0 %v8231
        %12908 = vmatpush1.bf16.msra.mxu0 %v8230
        %12909 = vmatprep.subr.bf16.mxu0 %v8239
        %12910 = vmatpush1.bf16.msra.mxu0 %v8238
        %12911 = vmatprep.subr.bf16.mxu0 %v8247
        %12912 = vmatpush1.bf16.msra.mxu0 %v8246
        %12913 = vmatprep.subr.bf16.mxu0 %v8255
        %12914 = vmatpush1.bf16.msra.mxu0 %v8254
        %12915 = vmatprep.subr.bf16.mxu0 %v8263
        %12916 = vmatpush1.bf16.msra.mxu0 %v8262
        %12917 = vmatprep.subr.bf16.mxu0 %v8271
        %12918 = vmatpush1.bf16.msra.mxu0 %v8270
        %12919 = vmatprep.mubr.bf16.mxu0 %v2219
        %12920 = vmatmul.mubr.bf16.gmra.mrb[0].mxu0 %v2217
        %v12921 = vpop.f32.mrb[0].mxu0
        %v12922 = vadd.f32 %v12881, %v12921
        %v12923 = vpop.f32.mrb[0].mxu0
        %v12924 = vadd.f32 %v12883, %v12923
        %v12925 = vpop.f32.mrb[0].mxu0
        %v12926 = vpop.f32.mrb[0].mxu0
        %12927 = vdwg.mxu0
        %12928 = vmatprep.subr.bf16.mxu0 %v8279
        %12929 = vmatpush1.bf16.msra.mxu0 %v8278
        %12930 = vmatprep.subr.bf16.mxu0 %v8287
        %12931 = vmatpush1.bf16.msra.mxu0 %v8286
        %12932 = vmatprep.subr.bf16.mxu0 %v8295
        %12933 = vmatpush1.bf16.msra.mxu0 %v8294
        %12934 = vmatprep.subr.bf16.mxu0 %v8303
        %12935 = vmatpush1.bf16.msra.mxu0 %v8302
        %12936 = vmatprep.subr.bf16.mxu0 %v8311
        %12937 = vmatpush1.bf16.msra.mxu0 %v8310
        %12938 = vmatprep.subr.bf16.mxu0 %v8319
        %12939 = vmatpush1.bf16.msra.mxu0 %v8318
        %12940 = vmatprep.subr.bf16.mxu0 %v8327
        %12941 = vmatpush1.bf16.msra.mxu0 %v8326
        %12942 = vmatprep.subr.bf16.mxu0 %v8335
        %12943 = vmatpush1.bf16.msra.mxu0 %v8334
        %12944 = vmatprep.subr.bf16.mxu0 %v8343
        %12945 = vmatpush1.bf16.msra.mxu0 %v8342
        %12946 = vmatprep.subr.bf16.mxu0 %v8351
        %12947 = vmatpush1.bf16.msra.mxu0 %v8350
        %12948 = vmatprep.subr.bf16.mxu0 %v8359
        %12949 = vmatpush1.bf16.msra.mxu0 %v8358
        %12950 = vmatprep.subr.bf16.mxu0 %v8367
        %12951 = vmatpush1.bf16.msra.mxu0 %v8366
        %12952 = vmatprep.subr.bf16.mxu0 %v8375
        %12953 = vmatpush1.bf16.msra.mxu0 %v8374
        %12954 = vmatprep.subr.bf16.mxu0 %v8383
        %12955 = vmatpush1.bf16.msra.mxu0 %v8382
        %12956 = vmatprep.subr.bf16.mxu0 %v8391
        %12957 = vmatpush1.bf16.msra.mxu0 %v8390
        %12958 = vmatprep.subr.bf16.mxu0 %v8399
        %12959 = vmatpush1.bf16.msra.mxu0 %v8398
        %12960 = vmatprep.mubr.bf16.mxu0 %v2216
        %12961 = vmatmul.mubr.bf16.gmra.mrb[0].mxu0 %v2202
        %v12962 = vpop.f32.mrb[0].mxu0
        %v12963 = vadd.f32 %v12922, %v12962
        %v12964 = vpop.f32.mrb[0].mxu0
        %v12965 = vadd.f32 %v12924, %v12964
        %v12966 = vpop.f32.mrb[0].mxu0
        %v12967 = vpop.f32.mrb[0].mxu0
        %12968 = vdwg.mxu0
        %12969 = vmatprep.subr.bf16.mxu0 %v8407
        %12970 = vmatpush1.bf16.msra.mxu0 %v8406
        %12971 = vmatprep.subr.bf16.mxu0 %v8415
        %12972 = vmatpush1.bf16.msra.mxu0 %v8414
        %12973 = vmatprep.subr.bf16.mxu0 %v8423
        %12974 = vmatpush1.bf16.msra.mxu0 %v8422
        %12975 = vmatprep.subr.bf16.mxu0 %v8431
        %12976 = vmatpush1.bf16.msra.mxu0 %v8430
        %12977 = vmatprep.subr.bf16.mxu0 %v8439
        %12978 = vmatpush1.bf16.msra.mxu0 %v8438
        %12979 = vmatprep.subr.bf16.mxu0 %v8447
        %12980 = vmatpush1.bf16.msra.mxu0 %v8446
        %12981 = vmatprep.subr.bf16.mxu0 %v8455
        %12982 = vmatpush1.bf16.msra.mxu0 %v8454
        %12983 = vmatprep.subr.bf16.mxu0 %v8463
        %12984 = vmatpush1.bf16.msra.mxu0 %v8462
        %12985 = vmatprep.subr.bf16.mxu0 %v8471
        %12986 = vmatpush1.bf16.msra.mxu0 %v8470
        %12987 = vmatprep.subr.bf16.mxu0 %v8479
        %12988 = vmatpush1.bf16.msra.mxu0 %v8478
        %12989 = vmatprep.subr.bf16.mxu0 %v8487
        %12990 = vmatpush1.bf16.msra.mxu0 %v8486
        %12991 = vmatprep.subr.bf16.mxu0 %v8495
        %12992 = vmatpush1.bf16.msra.mxu0 %v8494
        %12993 = vmatprep.subr.bf16.mxu0 %v8503
        %12994 = vmatpush1.bf16.msra.mxu0 %v8502
        %12995 = vmatprep.subr.bf16.mxu0 %v8511
        %12996 = vmatpush1.bf16.msra.mxu0 %v8510
        %12997 = vmatprep.subr.bf16.mxu0 %v8519
        %12998 = vmatpush1.bf16.msra.mxu0 %v8518
        %12999 = vmatprep.subr.bf16.mxu0 %v8527
        %13000 = vmatpush1.bf16.msra.mxu0 %v8526
        %13001 = vmatprep.mubr.bf16.mxu0 %v2220
        %13002 = vmatmul.mubr.bf16.gmra.mrb[0].mxu0 %v2218
        %v13003 = vpop.f32.mrb[0].mxu0
        %v13004 = vadd.f32 %v12963, %v13003
        %v13005 = vpop.f32.mrb[0].mxu0
        %v13006 = vadd.f32 %v12965, %v13005
        %v13007 = vpop.f32.mrb[0].mxu0
        %v13008 = vpop.f32.mrb[0].mxu0
        %13009 = vdwg.mxu0
        %13010 = vmatprep.subr.bf16.mxu0 %v8535
        %13011 = vmatpush1.bf16.msra.mxu0 %v8534
        %13012 = vmatprep.subr.bf16.mxu0 %v8543
        %13013 = vmatpush1.bf16.msra.mxu0 %v8542
        %13014 = vmatprep.subr.bf16.mxu0 %v8551
        %13015 = vmatpush1.bf16.msra.mxu0 %v8550
        %13016 = vmatprep.subr.bf16.mxu0 %v8559
        %13017 = vmatpush1.bf16.msra.mxu0 %v8558
        %13018 = vmatprep.subr.bf16.mxu0 %v8567
        %13019 = vmatpush1.bf16.msra.mxu0 %v8566
        %13020 = vmatprep.subr.bf16.mxu0 %v8575
        %13021 = vmatpush1.bf16.msra.mxu0 %v8574
        %13022 = vmatprep.subr.bf16.mxu0 %v8583
        %13023 = vmatpush1.bf16.msra.mxu0 %v8582
        %13024 = vmatprep.subr.bf16.mxu0 %v8591
        %13025 = vmatpush1.bf16.msra.mxu0 %v8590
        %13026 = vmatprep.subr.bf16.mxu0 %v8599
        %13027 = vmatpush1.bf16.msra.mxu0 %v8598
        %13028 = vmatprep.subr.bf16.mxu0 %v8607
        %13029 = vmatpush1.bf16.msra.mxu0 %v8606
        %13030 = vmatprep.subr.bf16.mxu0 %v8615
        %13031 = vmatpush1.bf16.msra.mxu0 %v8614
        %13032 = vmatprep.subr.bf16.mxu0 %v8623
        %13033 = vmatpush1.bf16.msra.mxu0 %v8622
        %13034 = vmatprep.subr.bf16.mxu0 %v8631
        %13035 = vmatpush1.bf16.msra.mxu0 %v8630
        %13036 = vmatprep.subr.bf16.mxu0 %v8639
        %13037 = vmatpush1.bf16.msra.mxu0 %v8638
        %13038 = vmatprep.subr.bf16.mxu0 %v8647
        %13039 = vmatpush1.bf16.msra.mxu0 %v8646
        %13040 = vmatprep.subr.bf16.mxu0 %v8655
        %13041 = vmatpush1.bf16.msra.mxu0 %v8654
        %13042 = vmatprep.mubr.bf16.mxu0 %v2258
        %13043 = vmatmul.mubr.bf16.gmra.mrb[0].mxu0 %v2244
        %v13044 = vpop.f32.mrb[0].mxu0
        %v13045 = vadd.f32 %v13004, %v13044
        %v13046 = vpop.f32.mrb[0].mxu0
        %v13047 = vadd.f32 %v13006, %v13046
        %v13048 = vpop.f32.mrb[0].mxu0
        %v13049 = vpop.f32.mrb[0].mxu0
        %13050 = vdwg.mxu0
        %13051 = vmatprep.subr.bf16.mxu0 %v8663
        %13052 = vmatpush1.bf16.msra.mxu0 %v8662
        %13053 = vmatprep.subr.bf16.mxu0 %v8671
        %13054 = vmatpush1.bf16.msra.mxu0 %v8670
        %13055 = vmatprep.subr.bf16.mxu0 %v8679
        %13056 = vmatpush1.bf16.msra.mxu0 %v8678
        %13057 = vmatprep.subr.bf16.mxu0 %v8687
        %13058 = vmatpush1.bf16.msra.mxu0 %v8686
        %13059 = vmatprep.subr.bf16.mxu0 %v8695
        %13060 = vmatpush1.bf16.msra.mxu0 %v8694
        %13061 = vmatprep.subr.bf16.mxu0 %v8703
        %13062 = vmatpush1.bf16.msra.mxu0 %v8702
        %13063 = vmatprep.subr.bf16.mxu0 %v8711
        %13064 = vmatpush1.bf16.msra.mxu0 %v8710
        %13065 = vmatprep.subr.bf16.mxu0 %v8719
        %13066 = vmatpush1.bf16.msra.mxu0 %v8718
        %13067 = vmatprep.subr.bf16.mxu0 %v8727
        %13068 = vmatpush1.bf16.msra.mxu0 %v8726
        %13069 = vmatprep.subr.bf16.mxu0 %v8735
        %13070 = vmatpush1.bf16.msra.mxu0 %v8734
        %13071 = vmatprep.subr.bf16.mxu0 %v8743
        %13072 = vmatpush1.bf16.msra.mxu0 %v8742
        %13073 = vmatprep.subr.bf16.mxu0 %v8751
        %13074 = vmatpush1.bf16.msra.mxu0 %v8750
        %13075 = vmatprep.subr.bf16.mxu0 %v8759
        %13076 = vmatpush1.bf16.msra.mxu0 %v8758
        %13077 = vmatprep.subr.bf16.mxu0 %v8767
        %13078 = vmatpush1.bf16.msra.mxu0 %v8766
        %13079 = vmatprep.subr.bf16.mxu0 %v8775
        %13080 = vmatpush1.bf16.msra.mxu0 %v8774
        %13081 = vmatprep.subr.bf16.mxu0 %v8783
        %13082 = vmatpush1.bf16.msra.mxu0 %v8782
        %13083 = vmatprep.mubr.bf16.mxu0 %v2268
        %13084 = vmatmul.mubr.bf16.gmra.mrb[0].mxu0 %v2266
        %v13085 = vpop.f32.mrb[0].mxu0
        %v13086 = vadd.f32 %v13045, %v13085
        %v13087 = vpop.f32.mrb[0].mxu0
        %v13088 = vadd.f32 %v13047, %v13087
        %v13089 = vpop.f32.mrb[0].mxu0
        %v13090 = vpop.f32.mrb[0].mxu0
        %13091 = vdwg.mxu0
        %13092 = vmatprep.subr.bf16.mxu0 %v8791
        %13093 = vmatpush1.bf16.msra.mxu0 %v8790
        %13094 = vmatprep.subr.bf16.mxu0 %v8799
        %13095 = vmatpush1.bf16.msra.mxu0 %v8798
        %13096 = vmatprep.subr.bf16.mxu0 %v8807
        %13097 = vmatpush1.bf16.msra.mxu0 %v8806
        %13098 = vmatprep.subr.bf16.mxu0 %v8815
        %13099 = vmatpush1.bf16.msra.mxu0 %v8814
        %13100 = vmatprep.subr.bf16.mxu0 %v8823
        %13101 = vmatpush1.bf16.msra.mxu0 %v8822
        %13102 = vmatprep.subr.bf16.mxu0 %v8831
        %13103 = vmatpush1.bf16.msra.mxu0 %v8830
        %13104 = vmatprep.subr.bf16.mxu0 %v8839
        %13105 = vmatpush1.bf16.msra.mxu0 %v8838
        %13106 = vmatprep.subr.bf16.mxu0 %v8847
        %13107 = vmatpush1.bf16.msra.mxu0 %v8846
        %13108 = vmatprep.subr.bf16.mxu0 %v8855
        %13109 = vmatpush1.bf16.msra.mxu0 %v8854
        %13110 = vmatprep.subr.bf16.mxu0 %v8863
        %13111 = vmatpush1.bf16.msra.mxu0 %v8862
        %13112 = vmatprep.subr.bf16.mxu0 %v8871
        %13113 = vmatpush1.bf16.msra.mxu0 %v8870
        %13114 = vmatprep.subr.bf16.mxu0 %v8879
        %13115 = vmatpush1.bf16.msra.mxu0 %v8878
        %13116 = vmatprep.subr.bf16.mxu0 %v8887
        %13117 = vmatpush1.bf16.msra.mxu0 %v8886
        %13118 = vmatprep.subr.bf16.mxu0 %v8895
        %13119 = vmatpush1.bf16.msra.mxu0 %v8894
        %13120 = vmatprep.subr.bf16.mxu0 %v8903
        %13121 = vmatpush1.bf16.msra.mxu0 %v8902
        %13122 = vmatprep.subr.bf16.mxu0 %v8911
        %13123 = vmatpush1.bf16.msra.mxu0 %v8910
        %13124 = vmatprep.mubr.bf16.mxu0 %v2265
        %13125 = vmatmul.mubr.bf16.gmra.mrb[0].mxu0 %v2251
        %v13126 = vpop.f32.mrb[0].mxu0
        %v13127 = vadd.f32 %v13086, %v13126
        %v13128 = vpop.f32.mrb[0].mxu0
        %v13129 = vadd.f32 %v13088, %v13128
        %v13130 = vpop.f32.mrb[0].mxu0
        %v13131 = vpop.f32.mrb[0].mxu0
        %13132 = vdwg.mxu0
        %13133 = vmatprep.subr.bf16.mxu0 %v8919
        %13134 = vmatpush1.bf16.msra.mxu0 %v8918
        %13135 = vmatprep.subr.bf16.mxu0 %v8927
        %13136 = vmatpush1.bf16.msra.mxu0 %v8926
        %13137 = vmatprep.subr.bf16.mxu0 %v8935
        %13138 = vmatpush1.bf16.msra.mxu0 %v8934
        %13139 = vmatprep.subr.bf16.mxu0 %v8943
        %13140 = vmatpush1.bf16.msra.mxu0 %v8942
        %13141 = vmatprep.subr.bf16.mxu0 %v8951
        %13142 = vmatpush1.bf16.msra.mxu0 %v8950
        %13143 = vmatprep.subr.bf16.mxu0 %v8959
        %13144 = vmatpush1.bf16.msra.mxu0 %v8958
        %13145 = vmatprep.subr.bf16.mxu0 %v8967
        %13146 = vmatpush1.bf16.msra.mxu0 %v8966
        %13147 = vmatprep.subr.bf16.mxu0 %v8975
        %13148 = vmatpush1.bf16.msra.mxu0 %v8974
        %13149 = vmatprep.subr.bf16.mxu0 %v8983
        %13150 = vmatpush1.bf16.msra.mxu0 %v8982
        %13151 = vmatprep.subr.bf16.mxu0 %v8991
        %13152 = vmatpush1.bf16.msra.mxu0 %v8990
        %13153 = vmatprep.subr.bf16.mxu0 %v8999
        %13154 = vmatpush1.bf16.msra.mxu0 %v8998
        %13155 = vmatprep.subr.bf16.mxu0 %v9007
        %13156 = vmatpush1.bf16.msra.mxu0 %v9006
        %13157 = vmatprep.subr.bf16.mxu0 %v9015
        %13158 = vmatpush1.bf16.msra.mxu0 %v9014
        %13159 = vmatprep.subr.bf16.mxu0 %v9023
        %13160 = vmatpush1.bf16.msra.mxu0 %v9022
        %13161 = vmatprep.subr.bf16.mxu0 %v9031
        %13162 = vmatpush1.bf16.msra.mxu0 %v9030
        %13163 = vmatprep.subr.bf16.mxu0 %v9039
        %13164 = vmatpush1.bf16.msra.mxu0 %v9038
        %13165 = vmatprep.mubr.bf16.mxu0 %v2269
        %13166 = vmatmul.mubr.bf16.gmra.mrb[0].mxu0 %v2267
        %v13167 = vpop.f32.mrb[0].mxu0
        %v13168 = vadd.f32 %v13127, %v13167
        %v13169 = vpop.f32.mrb[0].mxu0
        %v13170 = vadd.f32 %v13129, %v13169
        %v13171 = vpop.f32.mrb[0].mxu0
        %v13172 = vpop.f32.mrb[0].mxu0
        %13173 = vdwg.mxu0
        %13174 = vmatprep.subr.bf16.mxu0 %v9047
        %13175 = vmatpush1.bf16.msra.mxu0 %v9046
        %13176 = vmatprep.subr.bf16.mxu0 %v9055
        %13177 = vmatpush1.bf16.msra.mxu0 %v9054
        %13178 = vmatprep.subr.bf16.mxu0 %v9063
        %13179 = vmatpush1.bf16.msra.mxu0 %v9062
        %13180 = vmatprep.subr.bf16.mxu0 %v9071
        %13181 = vmatpush1.bf16.msra.mxu0 %v9070
        %13182 = vmatprep.subr.bf16.mxu0 %v9079
        %13183 = vmatpush1.bf16.msra.mxu0 %v9078
        %13184 = vmatprep.subr.bf16.mxu0 %v9087
        %13185 = vmatpush1.bf16.msra.mxu0 %v9086
        %13186 = vmatprep.subr.bf16.mxu0 %v9095
        %13187 = vmatpush1.bf16.msra.mxu0 %v9094
        %13188 = vmatprep.subr.bf16.mxu0 %v9103
        %13189 = vmatpush1.bf16.msra.mxu0 %v9102
        %13190 = vmatprep.subr.bf16.mxu0 %v9111
        %13191 = vmatpush1.bf16.msra.mxu0 %v9110
        %13192 = vmatprep.subr.bf16.mxu0 %v9119
        %13193 = vmatpush1.bf16.msra.mxu0 %v9118
        %13194 = vmatprep.subr.bf16.mxu0 %v9127
        %13195 = vmatpush1.bf16.msra.mxu0 %v9126
        %13196 = vmatprep.subr.bf16.mxu0 %v9135
        %13197 = vmatpush1.bf16.msra.mxu0 %v9134
        %13198 = vmatprep.subr.bf16.mxu0 %v9143
        %13199 = vmatpush1.bf16.msra.mxu0 %v9142
        %13200 = vmatprep.subr.bf16.mxu0 %v9151
        %13201 = vmatpush1.bf16.msra.mxu0 %v9150
        %13202 = vmatprep.subr.bf16.mxu0 %v9159
        %13203 = vmatpush1.bf16.msra.mxu0 %v9158
        %13204 = vmatprep.subr.bf16.mxu0 %v9167
        %13205 = vmatpush1.bf16.msra.mxu0 %v9166
        %13206 = vmatprep.mubr.bf16.mxu0 %v2291
        %13207 = vmatmul.mubr.bf16.gmra.mrb[0].mxu0 %v2284
        %v13208 = vpop.f32.mrb[0].mxu0
        %v13209 = vadd.f32 %v13168, %v13208
        %v13210 = vpop.f32.mrb[0].mxu0
        %v13211 = vadd.f32 %v13170, %v13210
        %v13212 = vpop.f32.mrb[0].mxu0
        %v13213 = vpop.f32.mrb[0].mxu0
        %13214 = vdwg.mxu0
        %13215 = vmatprep.subr.bf16.mxu0 %v9175
        %13216 = vmatpush1.bf16.msra.mxu0 %v9174
        %13217 = vmatprep.subr.bf16.mxu0 %v9183
        %13218 = vmatpush1.bf16.msra.mxu0 %v9182
        %13219 = vmatprep.subr.bf16.mxu0 %v9191
        %13220 = vmatpush1.bf16.msra.mxu0 %v9190
        %13221 = vmatprep.subr.bf16.mxu0 %v9199
        %13222 = vmatpush1.bf16.msra.mxu0 %v9198
        %13223 = vmatprep.subr.bf16.mxu0 %v9207
        %13224 = vmatpush1.bf16.msra.mxu0 %v9206
        %13225 = vmatprep.subr.bf16.mxu0 %v9215
        %13226 = vmatpush1.bf16.msra.mxu0 %v9214
        %13227 = vmatprep.subr.bf16.mxu0 %v9223
        %13228 = vmatpush1.bf16.msra.mxu0 %v9222
        %13229 = vmatprep.subr.bf16.mxu0 %v9231
        %13230 = vmatpush1.bf16.msra.mxu0 %v9230
        %13231 = vmatprep.subr.bf16.mxu0 0
        %13232 = vmatpush1.bf16.msra.mxu0 0
        %13233 = vmatprep.subr.bf16.mxu0 0
        %13234 = vmatpush1.bf16.msra.mxu0 0
        %13235 = vmatprep.subr.bf16.mxu0 0
        %13236 = vmatpush1.bf16.msra.mxu0 0
        %13237 = vmatprep.subr.bf16.mxu0 0
        %13238 = vmatpush1.bf16.msra.mxu0 0
        %13239 = vmatprep.subr.bf16.mxu0 0
        %13240 = vmatpush1.bf16.msra.mxu0 0
        %13241 = vmatprep.subr.bf16.mxu0 0
        %13242 = vmatpush1.bf16.msra.mxu0 0
        %13243 = vmatprep.subr.bf16.mxu0 0
        %13244 = vmatpush1.bf16.msra.mxu0 0
        %13245 = vmatprep.subr.bf16.mxu0 0
        %13246 = vmatpush1.bf16.msra.mxu0 0
        %13247 = vmatprep.mubr.bf16.mxu0 0
        %13248 = vmatmul.mubr.bf16.gmra.mrb[0].mxu0 %v2292
        %v13249 = vpop.f32.mrb[0].mxu0
        %v13250 = vadd.f32 %v13209, %v13249
        %v13251 = vpop.f32.mrb[0].mxu0
        %v13252 = vadd.f32 %v13211, %v13251
        %v13253 = vpop.f32.mrb[0].mxu0
        %v13254 = vpop.f32.mrb[0].mxu0
        %13255 = vdwg.mxu0
        %v13264 = vcombine.low %v11528, %v11530
        %v13265 = vcombine.low %v12102, %v12104
        %v13267 = vunpack.c.l.s4 1983009808
        %v13268 = vunpack.c.0.s8 %v13267
        %v13269 = vlaneseq
        %v13270 = vshrl.u32 %v13269, 7
        %v13271 = vsub.s32 %v13268, %v13270
        %v13272 = vrot.slane %v13264, %v13271
        %v13274 = vunpack.c.l.s4 1983009808
        %v13275 = vunpack.c.0.s8 %v13274
        %v13276 = vlaneseq
        %v13277 = vshrl.u32 %v13276, 7
        %v13278 = vsub.s32 %v13275, %v13277
        %v13279 = vrot.slane %v13265, %v13278
        %v13280 = vcombine.low %v13272, %v13279
        %v13281 = vcombine.low %v12676, %v12678
        %v13282 = vcombine.low %v13250, %v13252
        %v13284 = vunpack.c.l.s4 1983009808
        %v13285 = vunpack.c.0.s8 %v13284
        %v13286 = vlaneseq
        %v13287 = vshrl.u32 %v13286, 7
        %v13288 = vsub.s32 %v13285, %v13287
        %v13289 = vrot.slane %v13281, %v13288
        %v13291 = vunpack.c.l.s4 1983009808
        %v13292 = vunpack.c.0.s8 %v13291
        %v13293 = vlaneseq
        %v13294 = vshrl.u32 %v13293, 7
        %v13295 = vsub.s32 %v13292, %v13294
        %v13296 = vrot.slane %v13282, %v13295
        %v13297 = vcombine.low %v13289, %v13296
        %v13300 = vadd.f32 %v385, %v13280
        %v13301 = vadd.f32 %v386, %v13297
        %13302 = vst [vmem:[#allocation2] sm:$0xff] %v13300
        %13303 = vst [vmem:[#allocation2 + $0x8] sm:$0xff] %v13301
        %p13304 = scmp.eq.s32.totalorder %s27, 7
        // Predicated region
        $region77: #{tpu_custom_call.1} parent=47 // pred_check
          %p13305 = pneg %p13304
        $region78: #{tpu_custom_call.1} parent=47 // pred_check_branch
          %13307 = sbr.rel (%p13305) target = $region80
        $region79: #{tpu_custom_call.1} parent=47 // pred_region
          %v13308 = vld [vmem:[#allocation2] sm:$0xff]
          %v13309 = vld [vmem:[#allocation2 + $0x8] sm:$0xff]
          %v13310 = vld [vmem:[#allocation8] sm:$0xff]
          %v13312 = vlaneseq
          %v13313 = vshrl.u32 %v13312, 7
          %v13314 = vsub.s32 0, %v13313
          %v13315 = vrot.slane %v13310, %v13314
          %v13316 = vlaneseq
          %v13317 = vshrl.u32 %v13316, 7
          %v13318 = vsub.s32 1, %v13317
          %v13319 = vrot.slane %v13310, %v13318
          %v13320 = vlaneseq
          %v13321 = vshrl.u32 %v13320, 7
          %v13322 = vsub.s32 2, %v13321
          %v13323 = vrot.slane %v13310, %v13322
          %v13324 = vlaneseq
          %v13325 = vshrl.u32 %v13324, 7
          %v13326 = vsub.s32 3, %v13325
          %v13327 = vrot.slane %v13310, %v13326
          %v13328 = vlaneseq
          %v13329 = vshrl.u32 %v13328, 7
          %v13330 = vsub.s32 4, %v13329
          %v13331 = vrot.slane %v13310, %v13330
          %v13332 = vlaneseq
          %v13333 = vshrl.u32 %v13332, 7
          %v13334 = vsub.s32 5, %v13333
          %v13335 = vrot.slane %v13310, %v13334
          %v13336 = vlaneseq
          %v13337 = vshrl.u32 %v13336, 7
          %v13338 = vsub.s32 6, %v13337
          %v13339 = vrot.slane %v13310, %v13338
          %v13340 = vlaneseq
          %v13341 = vshrl.u32 %v13340, 7
          %v13342 = vsub.s32 7, %v13341
          %v13343 = vrot.slane %v13310, %v13342
          %v13344 = vcombine.low %v13315, %v13319
          %v13345 = vcombine.low %v13323, %v13327
          %v13347 = vunpack.c.l.s4 1983009808
          %v13348 = vunpack.c.0.s8 %v13347
          %v13349 = vlaneseq
          %v13350 = vshrl.u32 %v13349, 7
          %v13351 = vsub.s32 %v13348, %v13350
          %v13352 = vrot.slane %v13344, %v13351
          %v13354 = vunpack.c.l.s4 1983009808
          %v13355 = vunpack.c.0.s8 %v13354
          %v13356 = vlaneseq
          %v13357 = vshrl.u32 %v13356, 7
          %v13358 = vsub.s32 %v13355, %v13357
          %v13359 = vrot.slane %v13345, %v13358
          %v13360 = vcombine.low %v13352, %v13359
          %v13361 = vcombine.low %v13331, %v13335
          %v13362 = vcombine.low %v13339, %v13343
          %v13364 = vunpack.c.l.s4 1983009808
          %v13365 = vunpack.c.0.s8 %v13364
          %v13366 = vlaneseq
          %v13367 = vshrl.u32 %v13366, 7
          %v13368 = vsub.s32 %v13365, %v13367
          %v13369 = vrot.slane %v13361, %v13368
          %v13371 = vunpack.c.l.s4 1983009808
          %v13372 = vunpack.c.0.s8 %v13371
          %v13373 = vlaneseq
          %v13374 = vshrl.u32 %v13373, 7
          %v13375 = vsub.s32 %v13372, %v13374
          %v13376 = vrot.slane %v13362, %v13375
          %v13377 = vcombine.low %v13369, %v13376
          %v13380 = vadd.f32 %v13308, %v13360
          %v13381 = vadd.f32 %v13309, %v13377
          %v13382 = vmax.f32 %v13380, 0.0
          %v13383 = vmax.f32 %v13381, 0.0
          %v13384 = vld [vmem:[#allocation9] sm:$0xff]
          %v13385 = vld [vmem:[#allocation9 + $0x8] sm:$0xff]
          %v13386 = vld [vmem:[#allocation9 + $0x10] sm:$0xff]
          %v13387 = vld [vmem:[#allocation9 + $0x18] sm:$0xff]
          %v13388 = vld [vmem:[#allocation9 + $0x20] sm:$0xff]
          %v13389 = vld [vmem:[#allocation9 + $0x28] sm:$0xff]
          %v13390 = vld [vmem:[#allocation9 + $0x30] sm:$0xff]
          %v13391 = vld [vmem:[#allocation9 + $0x38] sm:$0xff]
          %v13392 = vld [vmem:[#allocation9 + $0x40] sm:$0xff]
          %v13393 = vld [vmem:[#allocation9 + $0x48] sm:$0xff]
          %v13394 = vld [vmem:[#allocation9 + $0x50] sm:$0xff]
          %v13395 = vld [vmem:[#allocation9 + $0x58] sm:$0xff]
          %v13396 = vld [vmem:[#allocation9 + $0x60] sm:$0xff]
          %v13397 = vld [vmem:[#allocation9 + $0x68] sm:$0xff]
          %v13398 = vld [vmem:[#allocation9 + $0x70] sm:$0xff]
          %v13399 = vld [vmem:[#allocation9 + $0x78] sm:$0xff]
          %v13400 = vld [vmem:[#allocation9 + $0x80] sm:$0xff]
          %v13401 = vld [vmem:[#allocation9 + $0x88] sm:$0xff]
          %v13402 = vld [vmem:[#allocation9 + $0x90] sm:$0xff]
          %v13403 = vld [vmem:[#allocation9 + $0x98] sm:$0xff]
          %v13404 = vld [vmem:[#allocation9 + $0xa0] sm:$0xff]
          %v13405 = vld [vmem:[#allocation9 + $0xa8] sm:$0xff]
          %v13406 = vld [vmem:[#allocation9 + $0xb0] sm:$0xff]
          %v13407 = vld [vmem:[#allocation9 + $0xb8] sm:$0xff]
          %v13408 = vld [vmem:[#allocation9 + $0xc0] sm:$0xff]
          %v13409 = vld [vmem:[#allocation9 + $0xc8] sm:$0xff]
          %v13410 = vld [vmem:[#allocation9 + $0xd0] sm:$0xff]
          %v13411 = vld [vmem:[#allocation9 + $0xd8] sm:$0xff]
          %v13412 = vld [vmem:[#allocation9 + $0xe0] sm:$0xff]
          %v13413 = vld [vmem:[#allocation9 + $0xe8] sm:$0xff]
          %v13414 = vld [vmem:[#allocation9 + $0xf0] sm:$0xff]
          %v13415 = vld [vmem:[#allocation9 + $0xf8] sm:$0xff]
          %v13416 = vld [vmem:[#allocation9 + $0x100] sm:$0xff]
          %v13417 = vld [vmem:[#allocation9 + $0x108] sm:$0xff]
          %v13418 = vld [vmem:[#allocation9 + $0x110] sm:$0xff]
          %v13419 = vld [vmem:[#allocation9 + $0x118] sm:$0xff]
          %v13420 = vld [vmem:[#allocation9 + $0x120] sm:$0xff]
          %v13421 = vld [vmem:[#allocation9 + $0x128] sm:$0xff]
          %v13422 = vld [vmem:[#allocation9 + $0x130] sm:$0xff]
          %v13423 = vld [vmem:[#allocation9 + $0x138] sm:$0xff]
          %v13424 = vld [vmem:[#allocation9 + $0x140] sm:$0xff]
          %v13425 = vld [vmem:[#allocation9 + $0x148] sm:$0xff]
          %v13426 = vld [vmem:[#allocation9 + $0x150] sm:$0xff]
          %v13427 = vld [vmem:[#allocation9 + $0x158] sm:$0xff]
          %v13428 = vld [vmem:[#allocation9 + $0x160] sm:$0xff]
          %v13429 = vld [vmem:[#allocation9 + $0x168] sm:$0xff]
          %v13430 = vld [vmem:[#allocation9 + $0x170] sm:$0xff]
          %v13431 = vld [vmem:[#allocation9 + $0x178] sm:$0xff]
          %v13432 = vld [vmem:[#allocation9 + $0x180] sm:$0xff]
          %v13433 = vld [vmem:[#allocation9 + $0x188] sm:$0xff]
          %v13434 = vld [vmem:[#allocation9 + $0x190] sm:$0xff]
          %v13435 = vld [vmem:[#allocation9 + $0x198] sm:$0xff]
          %v13436 = vld [vmem:[#allocation9 + $0x1a0] sm:$0xff]
          %v13437 = vld [vmem:[#allocation9 + $0x1a8] sm:$0xff]
          %v13438 = vld [vmem:[#allocation9 + $0x1b0] sm:$0xff]
          %v13439 = vld [vmem:[#allocation9 + $0x1b8] sm:$0xff]
          %v13440 = vld [vmem:[#allocation9 + $0x1c0] sm:$0xff]
          %v13441 = vld [vmem:[#allocation9 + $0x1c8] sm:$0xff]
          %v13442 = vld [vmem:[#allocation9 + $0x1d0] sm:$0xff]
          %v13443 = vld [vmem:[#allocation9 + $0x1d8] sm:$0xff]
          %v13444 = vld [vmem:[#allocation9 + $0x1e0] sm:$0xff]
          %v13445 = vld [vmem:[#allocation9 + $0x1e8] sm:$0xff]
          %v13446 = vld [vmem:[#allocation9 + $0x1f0] sm:$0xff]
          %v13447 = vld [vmem:[#allocation9 + $0x1f8] sm:$0xff]
          %v13448 = vld [vmem:[#allocation9 + $0x200] sm:$0xff]
          %v13449 = vld [vmem:[#allocation9 + $0x208] sm:$0xff]
          %v13450 = vld [vmem:[#allocation9 + $0x210] sm:$0xff]
          %v13451 = vld [vmem:[#allocation9 + $0x218] sm:$0xff]
          %v13452 = vld [vmem:[#allocation9 + $0x220] sm:$0xff]
          %v13453 = vld [vmem:[#allocation9 + $0x228] sm:$0xff]
          %v13454 = vld [vmem:[#allocation9 + $0x230] sm:$0xff]
          %v13455 = vld [vmem:[#allocation9 + $0x238] sm:$0xff]
          %v13456 = vld [vmem:[#allocation9 + $0x240] sm:$0xff]
          %v13457 = vld [vmem:[#allocation9 + $0x248] sm:$0xff]
          %v13458 = vld [vmem:[#allocation9 + $0x250] sm:$0xff]
          %v13459 = vld [vmem:[#allocation9 + $0x258] sm:$0xff]
          %v13460 = vld [vmem:[#allocation9 + $0x260] sm:$0xff]
          %v13461 = vld [vmem:[#allocation9 + $0x268] sm:$0xff]
          %v13462 = vld [vmem:[#allocation9 + $0x270] sm:$0xff]
          %v13463 = vld [vmem:[#allocation9 + $0x278] sm:$0xff]
          %v13464 = vld [vmem:[#allocation9 + $0x280] sm:$0xff]
          %v13465 = vld [vmem:[#allocation9 + $0x288] sm:$0xff]
          %v13466 = vld [vmem:[#allocation9 + $0x290] sm:$0xff]
          %v13467 = vld [vmem:[#allocation9 + $0x298] sm:$0xff]
          %v13468 = vld [vmem:[#allocation9 + $0x2a0] sm:$0xff]
          %v13469 = vld [vmem:[#allocation9 + $0x2a8] sm:$0xff]
          %v13470 = vld [vmem:[#allocation9 + $0x2b0] sm:$0xff]
          %v13471 = vld [vmem:[#allocation9 + $0x2b8] sm:$0xff]
          %v13472 = vld [vmem:[#allocation9 + $0x2c0] sm:$0xff]
          %v13473 = vld [vmem:[#allocation9 + $0x2c8] sm:$0xff]
          %v13474 = vld [vmem:[#allocation9 + $0x2d0] sm:$0xff]
          %v13475 = vld [vmem:[#allocation9 + $0x2d8] sm:$0xff]
          %v13476 = vld [vmem:[#allocation9 + $0x2e0] sm:$0xff]
          %v13477 = vld [vmem:[#allocation9 + $0x2e8] sm:$0xff]
          %v13478 = vld [vmem:[#allocation9 + $0x2f0] sm:$0xff]
          %v13479 = vld [vmem:[#allocation9 + $0x2f8] sm:$0xff]
          %v13480 = vld [vmem:[#allocation9 + $0x300] sm:$0xff]
          %v13481 = vld [vmem:[#allocation9 + $0x308] sm:$0xff]
          %v13482 = vld [vmem:[#allocation9 + $0x310] sm:$0xff]
          %v13483 = vld [vmem:[#allocation9 + $0x318] sm:$0xff]
          %v13484 = vld [vmem:[#allocation9 + $0x320] sm:$0xff]
          %v13485 = vld [vmem:[#allocation9 + $0x328] sm:$0xff]
          %v13486 = vld [vmem:[#allocation9 + $0x330] sm:$0xff]
          %v13487 = vld [vmem:[#allocation9 + $0x338] sm:$0xff]
          %v13488 = vld [vmem:[#allocation9 + $0x340] sm:$0xff]
          %v13489 = vld [vmem:[#allocation9 + $0x348] sm:$0xff]
          %v13490 = vld [vmem:[#allocation9 + $0x350] sm:$0xff]
          %v13491 = vld [vmem:[#allocation9 + $0x358] sm:$0xff]
          %v13492 = vld [vmem:[#allocation9 + $0x360] sm:$0xff]
          %v13493 = vld [vmem:[#allocation9 + $0x368] sm:$0xff]
          %v13494 = vld [vmem:[#allocation9 + $0x370] sm:$0xff]
          %v13495 = vld [vmem:[#allocation9 + $0x378] sm:$0xff]
          %v13496 = vld [vmem:[#allocation9 + $0x380] sm:$0xff]
          %v13497 = vld [vmem:[#allocation9 + $0x388] sm:$0xff]
          %v13498 = vld [vmem:[#allocation9 + $0x390] sm:$0xff]
          %v13499 = vld [vmem:[#allocation9 + $0x398] sm:$0xff]
          %v13500 = vld [vmem:[#allocation9 + $0x3a0] sm:$0xff]
          %v13501 = vld [vmem:[#allocation9 + $0x3a8] sm:$0xff]
          %v13502 = vld [vmem:[#allocation9 + $0x3b0] sm:$0xff]
          %v13503 = vld [vmem:[#allocation9 + $0x3b8] sm:$0xff]
          %v13504 = vld [vmem:[#allocation9 + $0x3c0] sm:$0xff]
          %v13505 = vld [vmem:[#allocation9 + $0x3c8] sm:$0xff]
          %v13506 = vld [vmem:[#allocation9 + $0x3d0] sm:$0xff]
          %v13507 = vld [vmem:[#allocation9 + $0x3d8] sm:$0xff]
          %v13508 = vld [vmem:[#allocation9 + $0x3e0] sm:$0xff]
          %v13509 = vld [vmem:[#allocation9 + $0x3e8] sm:$0xff]
          %v13510 = vld [vmem:[#allocation9 + $0x3f0] sm:$0xff]
          %v13511 = vld [vmem:[#allocation9 + $0x3f8] sm:$0xff]
          %v13512 = vld [vmem:[#allocation11] sm:$0x1]
          %v13514 = vlaneseq
          %v13515 = vshrl.u32 %v13514, 7
          %v13516 = vsub.s32 0, %v13515
          %v13517 = vrot.slane %v13512, %v13516
          %v13521 = vcombine.high %v13382, %v13382
          %v13523 = vunpack.c.l.s4 1983009808
          %v13524 = vunpack.c.0.s8 %v13523
          %v13525 = vlaneseq
          %v13526 = vshrl.u32 %v13525, 7
          %v13527 = vsub.s32 %v13524, %v13526
          %v13528 = vrot.slane %v13382, %v13527
          %v13530 = vunpack.c.l.s4 1983009808
          %v13531 = vunpack.c.0.s8 %v13530
          %v13532 = vlaneseq
          %v13533 = vshrl.u32 %v13532, 7
          %v13534 = vsub.s32 %v13531, %v13533
          %v13535 = vrot.slane %v13521, %v13534
          %v13536 = vcombine.high %v13528, %v13528
          %v13537 = vcombine.high %v13535, %v13535
          %v13538 = vcombine.high %v13383, %v13383
          %v13540 = vunpack.c.l.s4 1983009808
          %v13541 = vunpack.c.0.s8 %v13540
          %v13542 = vlaneseq
          %v13543 = vshrl.u32 %v13542, 7
          %v13544 = vsub.s32 %v13541, %v13543
          %v13545 = vrot.slane %v13383, %v13544
          %v13547 = vunpack.c.l.s4 1983009808
          %v13548 = vunpack.c.0.s8 %v13547
          %v13549 = vlaneseq
          %v13550 = vshrl.u32 %v13549, 7
          %v13551 = vsub.s32 %v13548, %v13550
          %v13552 = vrot.slane %v13538, %v13551
          %v13553 = vcombine.high %v13545, %v13545
          %v13554 = vcombine.high %v13552, %v13552
          %13563 = vmatprep.subr.mxu0 0.0
          %13564 = vmatpush1.msra.mxu0 %v13384
          %13565 = vmatprep.subr.mxu0 0.0
          %13566 = vmatpush1.msra.mxu0 %v13385
          %13567 = vmatprep.subr.mxu0 0.0
          %13568 = vmatpush1.msra.mxu0 %v13386
          %13569 = vmatprep.subr.mxu0 0.0
          %13570 = vmatpush1.msra.mxu0 %v13387
          %13571 = vmatprep.subr.mxu0 0.0
          %13572 = vmatpush1.msra.mxu0 %v13388
          %13573 = vmatprep.subr.mxu0 0.0
          %13574 = vmatpush1.msra.mxu0 %v13389
          %13575 = vmatprep.subr.mxu0 0.0
          %13576 = vmatpush1.msra.mxu0 %v13390
          %13577 = vmatprep.subr.mxu0 0.0
          %13578 = vmatpush1.msra.mxu0 %v13391
          %13579 = vmatprep.subr.mxu0 0.0
          %13580 = vmatpush1.msra.mxu0 %v13392
          %13581 = vmatprep.subr.mxu0 0.0
          %13582 = vmatpush1.msra.mxu0 %v13393
          %13583 = vmatprep.subr.mxu0 0.0
          %13584 = vmatpush1.msra.mxu0 %v13394
          %13585 = vmatprep.subr.mxu0 0.0
          %13586 = vmatpush1.msra.mxu0 %v13395
          %13587 = vmatprep.subr.mxu0 0.0
          %13588 = vmatpush1.msra.mxu0 %v13396
          %13589 = vmatprep.subr.mxu0 0.0
          %13590 = vmatpush1.msra.mxu0 %v13397
          %13591 = vmatprep.subr.mxu0 0.0
          %13592 = vmatpush1.msra.mxu0 %v13398
          %13593 = vmatprep.subr.mxu0 0.0
          %13594 = vmatpush1.msra.mxu0 %v13399
          %13595 = vmatprep.subr.mxu0 0.0
          %13596 = vmatpush1.msra.mxu0 %v13400
          %13597 = vmatprep.subr.mxu0 0.0
          %13598 = vmatpush1.msra.mxu0 %v13401
          %13599 = vmatprep.subr.mxu0 0.0
          %13600 = vmatpush1.msra.mxu0 %v13402
          %13601 = vmatprep.subr.mxu0 0.0
          %13602 = vmatpush1.msra.mxu0 %v13403
          %13603 = vmatprep.subr.mxu0 0.0
          %13604 = vmatpush1.msra.mxu0 %v13404
          %13605 = vmatprep.subr.mxu0 0.0
          %13606 = vmatpush1.msra.mxu0 %v13405
          %13607 = vmatprep.subr.mxu0 0.0
          %13608 = vmatpush1.msra.mxu0 %v13406
          %13609 = vmatprep.subr.mxu0 0.0
          %13610 = vmatpush1.msra.mxu0 %v13407
          %13611 = vmatprep.subr.mxu0 0.0
          %13612 = vmatpush1.msra.mxu0 %v13408
          %13613 = vmatprep.subr.mxu0 0.0
          %13614 = vmatpush1.msra.mxu0 %v13409
          %13615 = vmatprep.subr.mxu0 0.0
          %13616 = vmatpush1.msra.mxu0 %v13410
          %13617 = vmatprep.subr.mxu0 0.0
          %13618 = vmatpush1.msra.mxu0 %v13411
          %13619 = vmatprep.subr.mxu0 0.0
          %13620 = vmatpush1.msra.mxu0 %v13412
          %13621 = vmatprep.subr.mxu0 0.0
          %13622 = vmatpush1.msra.mxu0 %v13413
          %13623 = vmatprep.subr.mxu0 0.0
          %13624 = vmatpush1.msra.mxu0 %v13414
          %13625 = vmatprep.subr.mxu0 0.0
          %13626 = vmatpush1.msra.mxu0 %v13415
          %13627 = vmatprep.mubr.f32.mxu0 %v13536
          %13628 = vmatmul.mubr.f32.gmra.mrb[0].mxu0 %v13528
          %v13629 = vpop.f32.mrb[0].mxu0
          %v13630 = vadd.f32 %v13517, %v13629
          %v13631 = vpop.f32.mrb[0].mxu0
          %13632 = vdwg.mxu0
          %13633 = vmatprep.subr.mxu0 0.0
          %13634 = vmatpush1.msra.mxu0 %v13416
          %13635 = vmatprep.subr.mxu0 0.0
          %13636 = vmatpush1.msra.mxu0 %v13417
          %13637 = vmatprep.subr.mxu0 0.0
          %13638 = vmatpush1.msra.mxu0 %v13418
          %13639 = vmatprep.subr.mxu0 0.0
          %13640 = vmatpush1.msra.mxu0 %v13419
          %13641 = vmatprep.subr.mxu0 0.0
          %13642 = vmatpush1.msra.mxu0 %v13420
          %13643 = vmatprep.subr.mxu0 0.0
          %13644 = vmatpush1.msra.mxu0 %v13421
          %13645 = vmatprep.subr.mxu0 0.0
          %13646 = vmatpush1.msra.mxu0 %v13422
          %13647 = vmatprep.subr.mxu0 0.0
          %13648 = vmatpush1.msra.mxu0 %v13423
          %13649 = vmatprep.subr.mxu0 0.0
          %13650 = vmatpush1.msra.mxu0 %v13424
          %13651 = vmatprep.subr.mxu0 0.0
          %13652 = vmatpush1.msra.mxu0 %v13425
          %13653 = vmatprep.subr.mxu0 0.0
          %13654 = vmatpush1.msra.mxu0 %v13426
          %13655 = vmatprep.subr.mxu0 0.0
          %13656 = vmatpush1.msra.mxu0 %v13427
          %13657 = vmatprep.subr.mxu0 0.0
          %13658 = vmatpush1.msra.mxu0 %v13428
          %13659 = vmatprep.subr.mxu0 0.0
          %13660 = vmatpush1.msra.mxu0 %v13429
          %13661 = vmatprep.subr.mxu0 0.0
          %13662 = vmatpush1.msra.mxu0 %v13430
          %13663 = vmatprep.subr.mxu0 0.0
          %13664 = vmatpush1.msra.mxu0 %v13431
          %13665 = vmatprep.subr.mxu0 0.0
          %13666 = vmatpush1.msra.mxu0 %v13432
          %13667 = vmatprep.subr.mxu0 0.0
          %13668 = vmatpush1.msra.mxu0 %v13433
          %13669 = vmatprep.subr.mxu0 0.0
          %13670 = vmatpush1.msra.mxu0 %v13434
          %13671 = vmatprep.subr.mxu0 0.0
          %13672 = vmatpush1.msra.mxu0 %v13435
          %13673 = vmatprep.subr.mxu0 0.0
          %13674 = vmatpush1.msra.mxu0 %v13436
          %13675 = vmatprep.subr.mxu0 0.0
          %13676 = vmatpush1.msra.mxu0 %v13437
          %13677 = vmatprep.subr.mxu0 0.0
          %13678 = vmatpush1.msra.mxu0 %v13438
          %13679 = vmatprep.subr.mxu0 0.0
          %13680 = vmatpush1.msra.mxu0 %v13439
          %13681 = vmatprep.subr.mxu0 0.0
          %13682 = vmatpush1.msra.mxu0 %v13440
          %13683 = vmatprep.subr.mxu0 0.0
          %13684 = vmatpush1.msra.mxu0 %v13441
          %13685 = vmatprep.subr.mxu0 0.0
          %13686 = vmatpush1.msra.mxu0 %v13442
          %13687 = vmatprep.subr.mxu0 0.0
          %13688 = vmatpush1.msra.mxu0 %v13443
          %13689 = vmatprep.subr.mxu0 0.0
          %13690 = vmatpush1.msra.mxu0 %v13444
          %13691 = vmatprep.subr.mxu0 0.0
          %13692 = vmatpush1.msra.mxu0 %v13445
          %13693 = vmatprep.subr.mxu0 0.0
          %13694 = vmatpush1.msra.mxu0 %v13446
          %13695 = vmatprep.subr.mxu0 0.0
          %13696 = vmatpush1.msra.mxu0 %v13447
          %13697 = vmatprep.mubr.f32.mxu0 %v13537
          %13698 = vmatmul.mubr.f32.gmra.mrb[0].mxu0 %v13535
          %v13699 = vpop.f32.mrb[0].mxu0
          %v13700 = vadd.f32 %v13630, %v13699
          %v13701 = vpop.f32.mrb[0].mxu0
          %13702 = vdwg.mxu0
          %13703 = vmatprep.subr.mxu0 0.0
          %13704 = vmatpush1.msra.mxu0 %v13448
          %13705 = vmatprep.subr.mxu0 0.0
          %13706 = vmatpush1.msra.mxu0 %v13449
          %13707 = vmatprep.subr.mxu0 0.0
          %13708 = vmatpush1.msra.mxu0 %v13450
          %13709 = vmatprep.subr.mxu0 0.0
          %13710 = vmatpush1.msra.mxu0 %v13451
          %13711 = vmatprep.subr.mxu0 0.0
          %13712 = vmatpush1.msra.mxu0 %v13452
          %13713 = vmatprep.subr.mxu0 0.0
          %13714 = vmatpush1.msra.mxu0 %v13453
          %13715 = vmatprep.subr.mxu0 0.0
          %13716 = vmatpush1.msra.mxu0 %v13454
          %13717 = vmatprep.subr.mxu0 0.0
          %13718 = vmatpush1.msra.mxu0 %v13455
          %13719 = vmatprep.subr.mxu0 0.0
          %13720 = vmatpush1.msra.mxu0 %v13456
          %13721 = vmatprep.subr.mxu0 0.0
          %13722 = vmatpush1.msra.mxu0 %v13457
          %13723 = vmatprep.subr.mxu0 0.0
          %13724 = vmatpush1.msra.mxu0 %v13458
          %13725 = vmatprep.subr.mxu0 0.0
          %13726 = vmatpush1.msra.mxu0 %v13459
          %13727 = vmatprep.subr.mxu0 0.0
          %13728 = vmatpush1.msra.mxu0 %v13460
          %13729 = vmatprep.subr.mxu0 0.0
          %13730 = vmatpush1.msra.mxu0 %v13461
          %13731 = vmatprep.subr.mxu0 0.0
          %13732 = vmatpush1.msra.mxu0 %v13462
          %13733 = vmatprep.subr.mxu0 0.0
          %13734 = vmatpush1.msra.mxu0 %v13463
          %13735 = vmatprep.subr.mxu0 0.0
          %13736 = vmatpush1.msra.mxu0 %v13464
          %13737 = vmatprep.subr.mxu0 0.0
          %13738 = vmatpush1.msra.mxu0 %v13465
          %13739 = vmatprep.subr.mxu0 0.0
          %13740 = vmatpush1.msra.mxu0 %v13466
          %13741 = vmatprep.subr.mxu0 0.0
          %13742 = vmatpush1.msra.mxu0 %v13467
          %13743 = vmatprep.subr.mxu0 0.0
          %13744 = vmatpush1.msra.mxu0 %v13468
          %13745 = vmatprep.subr.mxu0 0.0
          %13746 = vmatpush1.msra.mxu0 %v13469
          %13747 = vmatprep.subr.mxu0 0.0
          %13748 = vmatpush1.msra.mxu0 %v13470
          %13749 = vmatprep.subr.mxu0 0.0
          %13750 = vmatpush1.msra.mxu0 %v13471
          %13751 = vmatprep.subr.mxu0 0.0
          %13752 = vmatpush1.msra.mxu0 %v13472
          %13753 = vmatprep.subr.mxu0 0.0
          %13754 = vmatpush1.msra.mxu0 %v13473
          %13755 = vmatprep.subr.mxu0 0.0
          %13756 = vmatpush1.msra.mxu0 %v13474
          %13757 = vmatprep.subr.mxu0 0.0
          %13758 = vmatpush1.msra.mxu0 %v13475
          %13759 = vmatprep.subr.mxu0 0.0
          %13760 = vmatpush1.msra.mxu0 %v13476
          %13761 = vmatprep.subr.mxu0 0.0
          %13762 = vmatpush1.msra.mxu0 %v13477
          %13763 = vmatprep.subr.mxu0 0.0
          %13764 = vmatpush1.msra.mxu0 %v13478
          %13765 = vmatprep.subr.mxu0 0.0
          %13766 = vmatpush1.msra.mxu0 %v13479
          %13767 = vmatprep.mubr.f32.mxu0 %v13553
          %13768 = vmatmul.mubr.f32.gmra.mrb[0].mxu0 %v13545
          %v13769 = vpop.f32.mrb[0].mxu0
          %v13770 = vadd.f32 %v13700, %v13769
          %v13771 = vpop.f32.mrb[0].mxu0
          %13772 = vdwg.mxu0
          %13773 = vmatprep.subr.mxu0 0.0
          %13774 = vmatpush1.msra.mxu0 %v13480
          %13775 = vmatprep.subr.mxu0 0.0
          %13776 = vmatpush1.msra.mxu0 %v13481
          %13777 = vmatprep.subr.mxu0 0.0
          %13778 = vmatpush1.msra.mxu0 %v13482
          %13779 = vmatprep.subr.mxu0 0.0
          %13780 = vmatpush1.msra.mxu0 %v13483
          %13781 = vmatprep.subr.mxu0 0.0
          %13782 = vmatpush1.msra.mxu0 %v13484
          %13783 = vmatprep.subr.mxu0 0.0
          %13784 = vmatpush1.msra.mxu0 %v13485
          %13785 = vmatprep.subr.mxu0 0.0
          %13786 = vmatpush1.msra.mxu0 %v13486
          %13787 = vmatprep.subr.mxu0 0.0
          %13788 = vmatpush1.msra.mxu0 %v13487
          %13789 = vmatprep.subr.mxu0 0.0
          %13790 = vmatpush1.msra.mxu0 %v13488
          %13791 = vmatprep.subr.mxu0 0.0
          %13792 = vmatpush1.msra.mxu0 %v13489
          %13793 = vmatprep.subr.mxu0 0.0
          %13794 = vmatpush1.msra.mxu0 %v13490
          %13795 = vmatprep.subr.mxu0 0.0
          %13796 = vmatpush1.msra.mxu0 %v13491
          %13797 = vmatprep.subr.mxu0 0.0
          %13798 = vmatpush1.msra.mxu0 %v13492
          %13799 = vmatprep.subr.mxu0 0.0
          %13800 = vmatpush1.msra.mxu0 %v13493
          %13801 = vmatprep.subr.mxu0 0.0
          %13802 = vmatpush1.msra.mxu0 %v13494
          %13803 = vmatprep.subr.mxu0 0.0
          %13804 = vmatpush1.msra.mxu0 %v13495
          %13805 = vmatprep.subr.mxu0 0.0
          %13806 = vmatpush1.msra.mxu0 %v13496
          %13807 = vmatprep.subr.mxu0 0.0
          %13808 = vmatpush1.msra.mxu0 %v13497
          %13809 = vmatprep.subr.mxu0 0.0
          %13810 = vmatpush1.msra.mxu0 %v13498
          %13811 = vmatprep.subr.mxu0 0.0
          %13812 = vmatpush1.msra.mxu0 %v13499
          %13813 = vmatprep.subr.mxu0 0.0
          %13814 = vmatpush1.msra.mxu0 %v13500
          %13815 = vmatprep.subr.mxu0 0.0
          %13816 = vmatpush1.msra.mxu0 %v13501
          %13817 = vmatprep.subr.mxu0 0.0
          %13818 = vmatpush1.msra.mxu0 %v13502
          %13819 = vmatprep.subr.mxu0 0.0
          %13820 = vmatpush1.msra.mxu0 %v13503
          %13821 = vmatprep.subr.mxu0 0.0
          %13822 = vmatpush1.msra.mxu0 %v13504
          %13823 = vmatprep.subr.mxu0 0.0
          %13824 = vmatpush1.msra.mxu0 %v13505
          %13825 = vmatprep.subr.mxu0 0.0
          %13826 = vmatpush1.msra.mxu0 %v13506
          %13827 = vmatprep.subr.mxu0 0.0
          %13828 = vmatpush1.msra.mxu0 %v13507
          %13829 = vmatprep.subr.mxu0 0.0
          %13830 = vmatpush1.msra.mxu0 %v13508
          %13831 = vmatprep.subr.mxu0 0.0
          %13832 = vmatpush1.msra.mxu0 %v13509
          %13833 = vmatprep.subr.mxu0 0.0
          %13834 = vmatpush1.msra.mxu0 %v13510
          %13835 = vmatprep.subr.mxu0 0.0
          %13836 = vmatpush1.msra.mxu0 %v13511
          %13837 = vmatprep.mubr.f32.mxu0 %v13554
          %13838 = vmatmul.mubr.f32.gmra.mrb[0].mxu0 %v13552
          %v13839 = vpop.f32.mrb[0].mxu0
          %v13840 = vadd.f32 %v13770, %v13839
          %v13841 = vpop.f32.mrb[0].mxu0
          %13842 = vdwg.mxu0
          %v13843 = vxor.u32 %v13840, 2147483648
          %v13844 = vmul.f32 %v13843, 1.442695
          %v13845 = vpow.pop %v13844
          %v13846 = vadd.f32 %v13845, 1.0
          %v13847 = vrcp.pop %v13846
          %v13848 = vmul.f32 1.0, %v13847
          %v13849 = vld [vmem:[%s5] sm:$0xff]
          %v13850 = vld [vmem:[%s5 + $0x8] sm:$0xff]
          %v13851 = vld [vmem:[%s5 + $0x10] sm:$0xff]
          %v13852 = vld [vmem:[%s5 + $0x18] sm:$0xff]
          %v13853 = vld [vmem:[%s5 + $0x20] sm:$0xff]
          %v13854 = vld [vmem:[%s5 + $0x28] sm:$0xff]
          %v13855 = vld [vmem:[%s5 + $0x30] sm:$0xff]
          %v13856 = vld [vmem:[%s5 + $0x38] sm:$0xff]
          %v13857 = vld [vmem:[%s5 + $0x40] sm:$0xff]
          %v13858 = vld [vmem:[%s5 + $0x48] sm:$0xff]
          %v13859 = vld [vmem:[%s5 + $0x50] sm:$0xff]
          %v13860 = vld [vmem:[%s5 + $0x58] sm:$0xff]
          %v13861 = vld [vmem:[%s5 + $0x60] sm:$0xff]
          %v13862 = vld [vmem:[%s5 + $0x68] sm:$0xff]
          %v13863 = vld [vmem:[%s5 + $0x70] sm:$0xff]
          %v13864 = vld [vmem:[%s5 + $0x78] sm:$0xff]
          %v13865 = vld [vmem:[#allocation12] sm:$0x1]
          %v13867 = vlaneseq
          %v13868 = vshrl.u32 %v13867, 7
          %v13869 = vsub.s32 0, %v13868
          %v13870 = vrot.slane %v13865, %v13869
          %13872 = vmatprep.subr.mxu0 0.0
          %13873 = vmatpush1.msra.mxu0 %v13849
          %13874 = vmatprep.subr.mxu0 0.0
          %13875 = vmatpush1.msra.mxu0 %v13850
          %13876 = vmatprep.subr.mxu0 0.0
          %13877 = vmatpush1.msra.mxu0 %v13851
          %13878 = vmatprep.subr.mxu0 0.0
          %13879 = vmatpush1.msra.mxu0 %v13852
          %13880 = vmatprep.subr.mxu0 0.0
          %13881 = vmatpush1.msra.mxu0 %v13853
          %13882 = vmatprep.subr.mxu0 0.0
          %13883 = vmatpush1.msra.mxu0 %v13854
          %13884 = vmatprep.subr.mxu0 0.0
          %13885 = vmatpush1.msra.mxu0 %v13855
          %13886 = vmatprep.subr.mxu0 0.0
          %13887 = vmatpush1.msra.mxu0 %v13856
          %13888 = vmatprep.subr.mxu0 0.0
          %13889 = vmatpush1.msra.mxu0 %v13857
          %13890 = vmatprep.subr.mxu0 0.0
          %13891 = vmatpush1.msra.mxu0 %v13858
          %13892 = vmatprep.subr.mxu0 0.0
          %13893 = vmatpush1.msra.mxu0 %v13859
          %13894 = vmatprep.subr.mxu0 0.0
          %13895 = vmatpush1.msra.mxu0 %v13860
          %13896 = vmatprep.subr.mxu0 0.0
          %13897 = vmatpush1.msra.mxu0 %v13861
          %13898 = vmatprep.subr.mxu0 0.0
          %13899 = vmatpush1.msra.mxu0 %v13862
          %13900 = vmatprep.subr.mxu0 0.0
          %13901 = vmatpush1.msra.mxu0 %v13863
          %13902 = vmatprep.subr.mxu0 0.0
          %13903 = vmatpush1.msra.mxu0 %v13864
          %13904 = vmatprep.subr.mxu0 0.0
          %13905 = vmatpush1.msra.mxu0 0.0
          %13906 = vmatprep.subr.mxu0 0.0
          %13907 = vmatpush1.msra.mxu0 0.0
          %13908 = vmatprep.subr.mxu0 0.0
          %13909 = vmatpush1.msra.mxu0 0.0
          %13910 = vmatprep.subr.mxu0 0.0
          %13911 = vmatpush1.msra.mxu0 0.0
          %13912 = vmatprep.subr.mxu0 0.0
          %13913 = vmatpush1.msra.mxu0 0.0
          %13914 = vmatprep.subr.mxu0 0.0
          %13915 = vmatpush1.msra.mxu0 0.0
          %13916 = vmatprep.subr.mxu0 0.0
          %13917 = vmatpush1.msra.mxu0 0.0
          %13918 = vmatprep.subr.mxu0 0.0
          %13919 = vmatpush1.msra.mxu0 0.0
          %13920 = vmatprep.subr.mxu0 0.0
          %13921 = vmatpush1.msra.mxu0 0.0
          %13922 = vmatprep.subr.mxu0 0.0
          %13923 = vmatpush1.msra.mxu0 0.0
          %13924 = vmatprep.subr.mxu0 0.0
          %13925 = vmatpush1.msra.mxu0 0.0
          %13926 = vmatprep.subr.mxu0 0.0
          %13927 = vmatpush1.msra.mxu0 0.0
          %13928 = vmatprep.subr.mxu0 0.0
          %13929 = vmatpush1.msra.mxu0 0.0
          %13930 = vmatprep.subr.mxu0 0.0
          %13931 = vmatpush1.msra.mxu0 0.0
          %13932 = vmatprep.subr.mxu0 0.0
          %13933 = vmatpush1.msra.mxu0 0.0
          %13934 = vmatprep.subr.mxu0 0.0
          %13935 = vmatpush1.msra.mxu0 0.0
          %13936 = vmatprep.mubr.f32.mxu0 0.0
          %13937 = vmatmul.mubr.f32.gmra.mrb[0].mxu0 %v13848
          %v13938 = vpop.f32.mrb[0].mxu0
          %v13939 = vadd.f32 %v13870, %v13938
          %v13940 = vpop.f32.mrb[0].mxu0
          %13941 = vdwg.mxu0
          %vm13942 = vcmask 9216
          %13943 = vst.msk [vmem:[#allocation14] sm:$0x3] %vm13942, %v13939
        $region80: #{tpu_custom_call.1} parent=47 // pred_fallthru
          _
        // Predicated region
        $region81: #{tpu_custom_call.1} parent=47 // pred_check
          %p13944 = pneg %p197
        $region82: #{tpu_custom_call.1} parent=47 // pred_check_branch
          %13946 = sbr.rel (%p13944) target = $region84
        $region83: #{tpu_custom_call.1} parent=47 // pred_region
          %s13948 = ssub.s32 32, 32
          %13949 = vsyncadd [#allocation5], %s13948
          %s13951 = sshll.u32 [#allocation14], 4
          %s13952 = int_to_ptr.vmem [resolvable:$true] %s13951
          %13954 = dma.vmem_to_hbm [thread:$0]  %s13952, 32, %s7, [#allocation5]
        $region84: #{tpu_custom_call.1} parent=47 // pred_fallthru
          _
        // Predicated region
        $region85: #{tpu_custom_call.1} parent=47 // pred_check
          %p13955 = pneg %p197
        $region86: #{tpu_custom_call.1} parent=47 // pred_check_branch
          %13957 = sbr.rel (%p13955) target = $region88
        $region87: #{tpu_custom_call.1} parent=47 // pred_region
          %13958 = dma.done [#allocation5], 32
        $region88: #{tpu_custom_call.1} parent=47 // pred_fallthru
          _
      $region48: #{tpu_custom_call.1} parent=5 // pred_fallthru
        _
      %p13959 = scmp.le.s32.totalorder 2, %s22
      // Predicated region
      $region89: #{tpu_custom_call.1} parent=5 // pred_check
        %p13960 = pneg %p13959
      $region90: #{tpu_custom_call.1} parent=5 // pred_check_branch
        %13962 = sbr.rel (%p13960) target = $region92
      $region91: #{tpu_custom_call.1} parent=5 // pred_region
        %s13963 = ssub.s32 %s22, 2
      $region92: #{tpu_custom_call.1} parent=5 // pred_fallthru
        _
    $region6: #{tpu_custom_call.1} parent=1 // loop_footer
      %s26 = sadd.s32 1, %s22
    $region7: #{tpu_custom_call.1} parent=1 // loop_footer_branch
      %21 = sbr.rel target = $region3
    $region8: #{tpu_custom_call.1} parent=1 // loop_exit
      _
    %13964 = vsyncpa [#allocation4], 1
    %s13965 = scalar_lea.sflag [#allocation4], 1
    %13966 = vsyncpa %s13965, 1
    %13967 = vsyncpa [#allocation7], 1
    %s13968 = scalar_lea.sflag [#allocation7], 1
    %13969 = vsyncpa %s13968, 1
    %13970 = vsyncpa [#allocation10], 1
    %13971 = vsyncpa [#allocation13], 1
    %13972 = vsyncpa [#allocation5], 1
    %s13973 = scalar_lea.sflag [#allocation5], 1
    %13974 = vsyncpa %s13973, 1

</llo_original>
